<compile_context>
chip_gen: v7x
topology: tpu7x:2x2x1
jax: 0.10.0
libtpu: 0.0.40
codegen_flags: <defaults>
</compile_context>

<pallas_src>
import functools
import math

import jax
import jax.numpy as jnp
from jax.experimental import pallas as pl
from jax.experimental.pallas import tpu as pltpu


# --------------------------------------------------------------------------
# Host-side table construction (parameter-init time)
# --------------------------------------------------------------------------

def _build_tables(C, gc, w_hw, b_hw, w_w, b_w, w_h, b_h,
                  square_kernel_size, band_kernel_size, cb):
    """Per-channel tap-weight table (C, NT), bias (C,), block-type table (G,).

    Channel layout (torch.split order): [C-3gc id | gc hw | gc w | gc h].
    Tap ordering per branch (must match the kernel's static tap loops):
      hw : t = (dy+rs)*sq + (dx+rs)   (row-major 3x3)
      w  : t = dx + rb                (1 x band)
      h  : t = dy + rb                (band x 1)
    """
    sq, band = square_kernel_size, band_kernel_size
    NT = max(sq * sq, band)
    n_id = C - 3 * gc
    off_hw, off_w, off_h = n_id, n_id + gc, n_id + 2 * gc

    wtab = jnp.zeros((C, NT), jnp.float32)
    wtab = wtab.at[off_hw:off_w, :sq * sq].set(w_hw.reshape(sq * sq, gc).T)
    wtab = wtab.at[off_w:off_h, :band].set(w_w.reshape(band, gc).T)
    wtab = wtab.at[off_h:, :band].set(w_h.reshape(band, gc).T)

    btab = jnp.concatenate([jnp.zeros((n_id,), jnp.float32),
                            b_hw.astype(jnp.float32),
                            b_w.astype(jnp.float32),
                            b_h.astype(jnp.float32)])

    G = C // cb
    btype = []
    for g in range(G):
        c0 = g * cb
        if c0 < off_hw:
            btype.append(0)          # identity
        elif c0 < off_w:
            btype.append(1)          # 3x3
        elif c0 < off_h:
            btype.append(2)          # 1 x band
        else:
            btype.append(3)          # band x 1
    return wtab, btab, jnp.array(btype, jnp.int32)


# --------------------------------------------------------------------------
# Pallas kernel
# --------------------------------------------------------------------------

def _inception_dw_kernel(CB, H, W, sq, band, hoff, woff,
                         x_ref, btype_ref, w_ref, b_ref, o_ref, xp_ref):
    """One (batch, channel-block) grid step of the fused InceptionDWConv2d.

    x_ref    : (1, CB, H, W)  VMEM input block (native NCHW, W on lanes)
    btype_ref: (G,)   int32   SMEM, branch type of each channel block
    w_ref    : (C, NT) f32    SMEM, per-channel tap weights (scalar splats)
    b_ref    : (C,)   f32     SMEM, per-channel bias
    o_ref    : (1, CB, H, W)  VMEM output block
    xp_ref   : (CB, HP, WP)   f32 VMEM scratch holding the zero-halo'd block
    """
    rs, rb = sq // 2, band // 2
    ph = max(rs, rb)                       # halo extent (5 for the defaults)
    f32 = jnp.float32
    HP, WP = xp_ref.shape[1], xp_ref.shape[2]

    g = pl.program_id(1)
    bt = btype_ref[g]                      # 0 id, 1 hw, 2 w-band, 3 h-band
    c0 = g * CB                            # global channel offset of the block

    # ---- identity channels: pure pass-through copy (no VALU work) ----------
    @pl.when(bt == 0)
    def _():
        o_ref[...] = x_ref[...]

    # ---- conv channels: build the zero halo in VMEM (strips only) ----------
    @pl.when(bt != 0)
    def _():
        if ph:
            xp_ref[:, hoff - ph:hoff, :] = jnp.zeros((CB, ph, WP), f32)
            xp_ref[:, hoff + H:hoff + H + ph, :] = jnp.zeros((CB, ph, WP), f32)
            xp_ref[:, hoff:hoff + H, :woff] = jnp.zeros((CB, H, woff), f32)
            xp_ref[:, hoff:hoff + H, woff + W:woff + W + ph] = (
                jnp.zeros((CB, H, ph), f32))
        # interior stored exactly once, at a sublane-aligned row offset
        xp_ref[:, hoff:hoff + H, woff:woff + W] = x_ref[0].astype(f32)

    def accumulate(taps):
        # Per-channel accumulation: each channel's (H, W) accumulator is live
        # only inside its own unrolled tap loop (bounds vreg pressure), and
        # each tap weight is a scalar splat read from SMEM (no cross-lane
        # relayout of a weight row).
        for c in range(CB):
            cg = c0 + c
            acc = jnp.zeros((H, W), f32)
            for t, (dy, dx) in enumerate(taps):
                win = xp_ref[c, hoff + dy:hoff + dy + H,
                             woff + dx:woff + dx + W]
                acc = acc + win * w_ref[cg, t]
            o_ref[0, c] = (acc + b_ref[cg]).astype(o_ref.dtype)

    sq_taps = tuple((dy, dx) for dy in range(-rs, rs + 1)
                    for dx in range(-rs, rs + 1))
    wb_taps = tuple((0, dx) for dx in range(-rb, rb + 1))
    hb_taps = tuple((dy, 0) for dy in range(-rb, rb + 1))

    @pl.when(bt == 1)                      # 3x3 depthwise
    def _():
        accumulate(sq_taps)

    @pl.when(bt == 2)                      # 1 x band depthwise (W band)
    def _():
        accumulate(wb_taps)

    @pl.when(bt == 3)                      # band x 1 depthwise (H band)
    def _():
        accumulate(hb_taps)


# --------------------------------------------------------------------------
# Wrapper
# --------------------------------------------------------------------------

def _pick_vmem_limit():
    """Generation-aware scoped-VMEM budget (3/4 of physical, capped)."""
    try:
        cap = getattr(pltpu.get_tpu_info(), "vmem_capacity_bytes", None)
        if cap:
            return int(min(cap * 3 // 4, 100 * 1024 * 1024))
    except Exception:
        pass
    return 32 * 1024 * 1024


def inception_dw_conv2d(params, x):
    """Fused InceptionDWConv2d forward.  x: (B, C, H, W) NCHW, no transposes."""
    B, C, H, W = x.shape
    gc = params["gc"]
    sq = params["square_kernel_size"]
    band = params["band_kernel_size"]
    cb = params["cb"]
    G = C // cb

    rs, rb = sq // 2, band // 2
    ph = max(rs, rb)
    hoff = ((ph + 7) // 8) * 8            # sublane-aligned interior row offset
    woff = ph
    HP = hoff + H + ph
    WP = woff + W + ph

    kernel = functools.partial(_inception_dw_kernel, cb, H, W, sq, band,
                               hoff, woff)

    flops = 2 * B * H * W * gc * (sq * sq + 2 * band)
    bytes_accessed = 2 * B * C * H * W * x.dtype.itemsize

    return pl.pallas_call(
        kernel,
        out_shape=jax.ShapeDtypeStruct((B, C, H, W), x.dtype),
        grid=(B, G),
        in_specs=[
            pl.BlockSpec((1, cb, H, W), lambda b, g: (b, g, 0, 0)),
            # small per-channel tables live in SMEM: cheap scalar-indexed reads
            pl.BlockSpec(memory_space=pltpu.MemorySpace.SMEM),   # btype (G,)
            pl.BlockSpec(memory_space=pltpu.MemorySpace.SMEM),   # wtab  (C,NT)
            pl.BlockSpec(memory_space=pltpu.MemorySpace.SMEM),   # btab  (C,)
        ],
        out_specs=pl.BlockSpec((1, cb, H, W), lambda b, g: (b, g, 0, 0)),
        scratch_shapes=[pltpu.VMEM((cb, HP, WP), jnp.float32)],
        compiler_params=pltpu.CompilerParams(
            dimension_semantics=("parallel", "parallel"),
            vmem_limit_bytes=_pick_vmem_limit(),
        ),
        cost_estimate=pl.CostEstimate(
            flops=flops, transcendentals=0, bytes_accessed=bytes_accessed),
    )(x, params["btype"], params["wtab"], params["btab"])


# --------------------------------------------------------------------------
# Pure-JAX reference (correctness checking only), native NCHW
# --------------------------------------------------------------------------

def _ref_dwconv_nchw(x, w, b, pad):
    kh, kw, c = w.shape
    y = jax.lax.conv_general_dilated(
        x, w[:, :, None, :], window_strides=(1, 1), padding=pad,
        dimension_numbers=("NCHW", "HWIO", "NCHW"), feature_group_count=c)
    return y + b[None, :, None, None]


def inception_dw_reference(params, x):
    C = x.shape[1]
    gc = params["gc"]
    rs = params["square_kernel_size"] // 2
    rb = params["band_kernel_size"] // 2
    s0 = C - 3 * gc
    x_id = x[:, :s0]
    x_hw = x[:, s0:s0 + gc]
    x_w = x[:, s0 + gc:s0 + 2 * gc]
    x_h = x[:, s0 + 2 * gc:]
    y_hw = _ref_dwconv_nchw(x_hw, params["dwconv_hw"]["w"],
                            params["dwconv_hw"]["b"], ((rs, rs), (rs, rs)))
    y_w = _ref_dwconv_nchw(x_w, params["dwconv_w"]["w"],
                           params["dwconv_w"]["b"], ((0, 0), (rb, rb)))
    y_h = _ref_dwconv_nchw(x_h, params["dwconv_h"]["w"],
                           params["dwconv_h"]["b"], ((rb, rb), (0, 0)))
    return jnp.concatenate([x_id, y_hw, y_w, y_h], axis=1)


# --------------------------------------------------------------------------
# Deterministic parameter init (mirrors the module's shapes)
# --------------------------------------------------------------------------

def init_inception_dw(key, in_channels, square_kernel_size=3,
                      band_kernel_size=11, branch_ratio=0.125):
    gc = int(in_channels * branch_ratio)
    n_id = in_channels - 3 * gc
    assert gc > 0 and n_id >= 0, "pick in_channels >= 8"
    ks = jax.random.split(key, 6)

    def uconv(k, shape, fan_in):
        bound = 1.0 / (fan_in ** 0.5)
        return jax.random.uniform(k, shape, jnp.float32, -bound, bound)

    w_hw = uconv(ks[0], (square_kernel_size, square_kernel_size, gc),
                 square_kernel_size * square_kernel_size)
    b_hw = uconv(ks[1], (gc,), square_kernel_size * square_kernel_size)
    w_w = uconv(ks[2], (1, band_kernel_size, gc), band_kernel_size)
    b_w = uconv(ks[3], (gc,), band_kernel_size)
    w_h = uconv(ks[4], (band_kernel_size, 1, gc), band_kernel_size)
    b_h = uconv(ks[5], (gc,), band_kernel_size)

    cb = gc if n_id == 0 else math.gcd(gc, n_id)   # homogeneous channel blocks
    wtab, btab, btype = _build_tables(in_channels, gc, w_hw, b_hw, w_w, b_w,
                                      w_h, b_h, square_kernel_size,
                                      band_kernel_size, cb)
    return {
        "gc": gc,
        "cb": cb,
        "square_kernel_size": square_kernel_size,
        "band_kernel_size": band_kernel_size,
        "dwconv_hw": {"w": w_hw, "b": b_hw},
        "dwconv_w": {"w": w_w, "b": b_w},
        "dwconv_h": {"w": w_h, "b": b_h},
        "wtab": wtab,       # (C, NT) per-channel tap weights
        "btab": btab,       # (C,)    per-channel bias (0 on identity channels)
        "btype": btype,     # (G,)    branch type per channel block
    }


# --------------------------------------------------------------------------
# Main
# --------------------------------------------------------------------------

if __name__ == "__main__":
    key = jax.random.PRNGKey(0)
    pkey, xkey = jax.random.split(key)

    B, C, H, W = 2, 64, 16, 16            # branch_ratio=0.125 -> gc = 8
    params = init_inception_dw(pkey, C)

    x = jax.random.normal(xkey, (B, C, H, W), jnp.float32)   # NCHW like PyTorch

    fwd = jax.jit(functools.partial(inception_dw_conv2d, params))
    out = jax.block_until_ready(fwd(x))
    assert out.shape == (B, C, H, W), out.shape
    assert bool(jnp.all(jnp.isfinite(out)))

    # correctness vs a pure-JAX reference of the PyTorch module
    ref = inception_dw_reference(params, x)
    max_err = float(jnp.max(jnp.abs(out - ref)))
    assert max_err < 1e-4, f"max abs error vs reference: {max_err}"

    print("KERNEL_OK")
</pallas_src>

<mosaic_0001>
module attributes {stable_mosaic.version = 11 : i64} {
  func.func @_inception_dw_kernel(%arg0: i32, %arg1: i32, %arg2: memref<1x8x16x16xf32, #tpu.memory_space<vmem>>, %arg3: memref<8xi32, #tpu.memory_space<smem>>, %arg4: memref<64x11xf32, #tpu.memory_space<smem>>, %arg5: memref<64xf32, #tpu.memory_space<smem>>, %arg6: memref<1x8x16x16xf32, #tpu.memory_space<vmem>>, %arg7: memref<8x29x26xf32, #tpu.memory_space<vmem>>) attributes {dimension_semantics = [#tpu.dimension_semantics<parallel>, #tpu.dimension_semantics<parallel>], iteration_bounds = array<i64: 2, 8>, scalar_prefetch = 0 : i64, scratch_operands = 1 : i64, tpu.core_type = #tpu.core_type<tc>, window_params = [{transform_indices = @transform_0, window_bounds = array<i64: 1, 8, 16, 16>}, {transform_indices = @transform_1, window_bounds = array<i64: 8>}, {transform_indices = @transform_2, window_bounds = array<i64: 64, 11>}, {transform_indices = @transform_3, window_bounds = array<i64: 64>}, {transform_indices = @transform_4, window_bounds = array<i64: 1, 8, 16, 16>}]} {
    %0 = arith.index_cast %arg1 : i32 to index
    %1 = memref.load %arg3[%0] : memref<8xi32, #tpu.memory_space<smem>>
    %c8_i32 = arith.constant 8 : i32
    %2 = arith.muli %arg1, %c8_i32 : i32
    %c0_i32 = arith.constant 0 : i32
    %3 = arith.cmpi eq, %1, %c0_i32 : i32
    %4 = arith.extui %3 : i1 to i32
    %c0_i32_0 = arith.constant 0 : i32
    %5 = arith.cmpi ne, %4, %c0_i32_0 : i32
    scf.if %5 {
      %c0 = arith.constant 0 : index
      %c0_6 = arith.constant 0 : index
      %c0_7 = arith.constant 0 : index
      %c0_8 = arith.constant 0 : index
      %18 = vector.load %arg2[%c0, %c0_6, %c0_7, %c0_8] : memref<1x8x16x16xf32, #tpu.memory_space<vmem>>, vector<1x8x16x16xf32>
      %c0_9 = arith.constant 0 : index
      %c0_10 = arith.constant 0 : index
      %c0_11 = arith.constant 0 : index
      %c0_12 = arith.constant 0 : index
      %19 = vector.load %arg6[%c0_9, %c0_10, %c0_11, %c0_12] : memref<1x8x16x16xf32, #tpu.memory_space<vmem>>, vector<1x8x16x16xf32>
      tpu.vector_store %arg6[%c0_9, %c0_10, %c0_11, %c0_12], %18 {strides = array<i32>} : memref<1x8x16x16xf32, #tpu.memory_space<vmem>>, vector<1x8x16x16xf32>,
    } else {
    }
    %c0_i32_1 = arith.constant 0 : i32
    %6 = arith.cmpi ne, %1, %c0_i32_1 : i32
    %7 = arith.extui %6 : i1 to i32
    %c0_i32_2 = arith.constant 0 : i32
    %8 = arith.cmpi ne, %7, %c0_i32_2 : i32
    scf.if %8 {
      %cst = arith.constant 0.000000e+00 : f32
      %18 = vector.broadcast %cst : f32 to vector<8x5x26xf32>
      %c0 = arith.constant 0 : index
      %c3 = arith.constant 3 : index
      %c0_6 = arith.constant 0 : index
      %19 = vector.load %arg7[%c0, %c3, %c0_6] : memref<8x29x26xf32, #tpu.memory_space<vmem>>, vector<8x5x26xf32>
      tpu.vector_store %arg7[%c0, %c3, %c0_6], %18 {strides = array<i32>} : memref<8x29x26xf32, #tpu.memory_space<vmem>>, vector<8x5x26xf32>,
      %cst_7 = arith.constant 0.000000e+00 : f32
      %20 = vector.broadcast %cst_7 : f32 to vector<8x5x26xf32>
      %c0_8 = arith.constant 0 : index
      %c24 = arith.constant 24 : index
      %c0_9 = arith.constant 0 : index
      %21 = vector.load %arg7[%c0_8, %c24, %c0_9] : memref<8x29x26xf32, #tpu.memory_space<vmem>>, vector<8x5x26xf32>
      tpu.vector_store %arg7[%c0_8, %c24, %c0_9], %20 {strides = array<i32>} : memref<8x29x26xf32, #tpu.memory_space<vmem>>, vector<8x5x26xf32>,
      %cst_10 = arith.constant 0.000000e+00 : f32
      %22 = vector.broadcast %cst_10 : f32 to vector<8x16x5xf32>
      %c0_11 = arith.constant 0 : index
      %c8 = arith.constant 8 : index
      %c0_12 = arith.constant 0 : index
      %23 = vector.load %arg7[%c0_11, %c8, %c0_12] : memref<8x29x26xf32, #tpu.memory_space<vmem>>, vector<8x16x5xf32>
      tpu.vector_store %arg7[%c0_11, %c8, %c0_12], %22 {strides = array<i32>} : memref<8x29x26xf32, #tpu.memory_space<vmem>>, vector<8x16x5xf32>,
      %cst_13 = arith.constant 0.000000e+00 : f32
      %24 = vector.broadcast %cst_13 : f32 to vector<8x16x5xf32>
      %c0_14 = arith.constant 0 : index
      %c8_15 = arith.constant 8 : index
      %c21 = arith.constant 21 : index
      %25 = vector.load %arg7[%c0_14, %c8_15, %c21] : memref<8x29x26xf32, #tpu.memory_space<vmem>>, vector<8x16x5xf32>
      tpu.vector_store %arg7[%c0_14, %c8_15, %c21], %24 {strides = array<i32>} : memref<8x29x26xf32, #tpu.memory_space<vmem>>, vector<8x16x5xf32>,
      %c0_16 = arith.constant 0 : index
      %c0_17 = arith.constant 0 : index
      %c0_18 = arith.constant 0 : index
      %c0_19 = arith.constant 0 : index
      %26 = vector.load %arg2[%c0_16, %c0_17, %c0_18, %c0_19] : memref<1x8x16x16xf32, #tpu.memory_space<vmem>>, vector<1x8x16x16xf32>
      %27 = vector.shape_cast %26 : vector<1x8x16x16xf32> to vector<8x16x16xf32>
      %c0_20 = arith.constant 0 : index
      %c8_21 = arith.constant 8 : index
      %c5 = arith.constant 5 : index
      %28 = vector.load %arg7[%c0_20, %c8_21, %c5] : memref<8x29x26xf32, #tpu.memory_space<vmem>>, vector<8x16x16xf32>
      tpu.vector_store %arg7[%c0_20, %c8_21, %c5], %27 {strides = array<i32>} : memref<8x29x26xf32, #tpu.memory_space<vmem>>, vector<8x16x16xf32>,
    } else {
    }
    %c1_i32 = arith.constant 1 : i32
    %9 = arith.cmpi eq, %1, %c1_i32 : i32
    %10 = arith.extui %9 : i1 to i32
    %c0_i32_3 = arith.constant 0 : i32
    %11 = arith.cmpi ne, %10, %c0_i32_3 : i32
    scf.if %11 {
      %c0_i32_6 = arith.constant 0 : i32
      %18 = arith.addi %2, %c0_i32_6 : i32
      %cst = arith.constant 0.000000e+00 : f32
      %19 = vector.broadcast %cst : f32 to vector<16x16xf32>
      %c0 = arith.constant 0 : index
      %c7 = arith.constant 7 : index
      %c4 = arith.constant 4 : index
      %20 = vector.load %arg7[%c0, %c7, %c4] : memref<8x29x26xf32, #tpu.memory_space<vmem>>, vector<1x16x16xf32>
      %21 = vector.shape_cast %20 : vector<1x16x16xf32> to vector<16x16xf32>
      %22 = arith.index_cast %18 : i32 to index
      %c0_7 = arith.constant 0 : index
      %23 = memref.load %arg4[%22, %c0_7] : memref<64x11xf32, #tpu.memory_space<smem>>
      %24 = vector.broadcast %23 : f32 to vector<16x16xf32>
      %25 = arith.mulf %21, %24 : vector<16x16xf32>
      %26 = arith.addf %19, %25 : vector<16x16xf32>
      %c0_8 = arith.constant 0 : index
      %c7_9 = arith.constant 7 : index
      %c5 = arith.constant 5 : index
      %27 = vector.load %arg7[%c0_8, %c7_9, %c5] : memref<8x29x26xf32, #tpu.memory_space<vmem>>, vector<1x16x16xf32>
      %28 = vector.shape_cast %27 : vector<1x16x16xf32> to vector<16x16xf32>
      %29 = arith.index_cast %18 : i32 to index
      %c1 = arith.constant 1 : index
      %30 = memref.load %arg4[%29, %c1] : memref<64x11xf32, #tpu.memory_space<smem>>
      %31 = vector.broadcast %30 : f32 to vector<16x16xf32>
      %32 = arith.mulf %28, %31 : vector<16x16xf32>
      %33 = arith.addf %26, %32 : vector<16x16xf32>
      %c0_10 = arith.constant 0 : index
      %c7_11 = arith.constant 7 : index
      %c6 = arith.constant 6 : index
      %34 = vector.load %arg7[%c0_10, %c7_11, %c6] : memref<8x29x26xf32, #tpu.memory_space<vmem>>, vector<1x16x16xf32>
      %35 = vector.shape_cast %34 : vector<1x16x16xf32> to vector<16x16xf32>
      %36 = arith.index_cast %18 : i32 to index
      %c2 = arith.constant 2 : index
      %37 = memref.load %arg4[%36, %c2] : memref<64x11xf32, #tpu.memory_space<smem>>
      %38 = vector.broadcast %37 : f32 to vector<16x16xf32>
      %39 = arith.mulf %35, %38 : vector<16x16xf32>
      %40 = arith.addf %33, %39 : vector<16x16xf32>
      %c0_12 = arith.constant 0 : index
      %c8 = arith.constant 8 : index
      %c4_13 = arith.constant 4 : index
      %41 = vector.load %arg7[%c0_12, %c8, %c4_13] : memref<8x29x26xf32, #tpu.memory_space<vmem>>, vector<1x16x16xf32>
      %42 = vector.shape_cast %41 : vector<1x16x16xf32> to vector<16x16xf32>
      %43 = arith.index_cast %18 : i32 to index
      %c3 = arith.constant 3 : index
      %44 = memref.load %arg4[%43, %c3] : memref<64x11xf32, #tpu.memory_space<smem>>
      %45 = vector.broadcast %44 : f32 to vector<16x16xf32>
      %46 = arith.mulf %42, %45 : vector<16x16xf32>
      %47 = arith.addf %40, %46 : vector<16x16xf32>
      %c0_14 = arith.constant 0 : index
      %c8_15 = arith.constant 8 : index
      %c5_16 = arith.constant 5 : index
      %48 = vector.load %arg7[%c0_14, %c8_15, %c5_16] : memref<8x29x26xf32, #tpu.memory_space<vmem>>, vector<1x16x16xf32>
      %49 = vector.shape_cast %48 : vector<1x16x16xf32> to vector<16x16xf32>
      %50 = arith.index_cast %18 : i32 to index
      %c4_17 = arith.constant 4 : index
      %51 = memref.load %arg4[%50, %c4_17] : memref<64x11xf32, #tpu.memory_space<smem>>
      %52 = vector.broadcast %51 : f32 to vector<16x16xf32>
      %53 = arith.mulf %49, %52 : vector<16x16xf32>
      %54 = arith.addf %47, %53 : vector<16x16xf32>
      %c0_18 = arith.constant 0 : index
      %c8_19 = arith.constant 8 : index
      %c6_20 = arith.constant 6 : index
      %55 = vector.load %arg7[%c0_18, %c8_19, %c6_20] : memref<8x29x26xf32, #tpu.memory_space<vmem>>, vector<1x16x16xf32>
      %56 = vector.shape_cast %55 : vector<1x16x16xf32> to vector<16x16xf32>
      %57 = arith.index_cast %18 : i32 to index
      %c5_21 = arith.constant 5 : index
      %58 = memref.load %arg4[%57, %c5_21] : memref<64x11xf32, #tpu.memory_space<smem>>
      %59 = vector.broadcast %58 : f32 to vector<16x16xf32>
      %60 = arith.mulf %56, %59 : vector<16x16xf32>
      %61 = arith.addf %54, %60 : vector<16x16xf32>
      %c0_22 = arith.constant 0 : index
      %c9 = arith.constant 9 : index
      %c4_23 = arith.constant 4 : index
      %62 = vector.load %arg7[%c0_22, %c9, %c4_23] : memref<8x29x26xf32, #tpu.memory_space<vmem>>, vector<1x16x16xf32>
      %63 = vector.shape_cast %62 : vector<1x16x16xf32> to vector<16x16xf32>
      %64 = arith.index_cast %18 : i32 to index
      %c6_24 = arith.constant 6 : index
      %65 = memref.load %arg4[%64, %c6_24] : memref<64x11xf32, #tpu.memory_space<smem>>
      %66 = vector.broadcast %65 : f32 to vector<16x16xf32>
      %67 = arith.mulf %63, %66 : vector<16x16xf32>
      %68 = arith.addf %61, %67 : vector<16x16xf32>
      %c0_25 = arith.constant 0 : index
      %c9_26 = arith.constant 9 : index
      %c5_27 = arith.constant 5 : index
      %69 = vector.load %arg7[%c0_25, %c9_26, %c5_27] : memref<8x29x26xf32, #tpu.memory_space<vmem>>, vector<1x16x16xf32>
      %70 = vector.shape_cast %69 : vector<1x16x16xf32> to vector<16x16xf32>
      %71 = arith.index_cast %18 : i32 to index
      %c7_28 = arith.constant 7 : index
      %72 = memref.load %arg4[%71, %c7_28] : memref<64x11xf32, #tpu.memory_space<smem>>
      %73 = vector.broadcast %72 : f32 to vector<16x16xf32>
      %74 = arith.mulf %70, %73 : vector<16x16xf32>
      %75 = arith.addf %68, %74 : vector<16x16xf32>
      %c0_29 = arith.constant 0 : index
      %c9_30 = arith.constant 9 : index
      %c6_31 = arith.constant 6 : index
      %76 = vector.load %arg7[%c0_29, %c9_30, %c6_31] : memref<8x29x26xf32, #tpu.memory_space<vmem>>, vector<1x16x16xf32>
      %77 = vector.shape_cast %76 : vector<1x16x16xf32> to vector<16x16xf32>
      %78 = arith.index_cast %18 : i32 to index
      %c8_32 = arith.constant 8 : index
      %79 = memref.load %arg4[%78, %c8_32] : memref<64x11xf32, #tpu.memory_space<smem>>
      %80 = vector.broadcast %79 : f32 to vector<16x16xf32>
      %81 = arith.mulf %77, %80 : vector<16x16xf32>
      %82 = arith.addf %75, %81 : vector<16x16xf32>
      %83 = arith.index_cast %18 : i32 to index
      %84 = memref.load %arg5[%83] : memref<64xf32, #tpu.memory_space<smem>>
      %85 = vector.broadcast %84 : f32 to vector<16x16xf32>
      %86 = arith.addf %82, %85 : vector<16x16xf32>
      %c0_33 = arith.constant 0 : index
      %c0_34 = arith.constant 0 : index
      %c0_35 = arith.constant 0 : index
      %c0_36 = arith.constant 0 : index
      %87 = vector.load %arg6[%c0_33, %c0_34, %c0_35, %c0_36] : memref<1x8x16x16xf32, #tpu.memory_space<vmem>>, vector<1x1x16x16xf32>
      %88 = vector.shape_cast %87 : vector<1x1x16x16xf32> to vector<16x16xf32>
      %89 = vector.shape_cast %86 : vector<16x16xf32> to vector<1x1x16x16xf32>
      tpu.vector_store %arg6[%c0_33, %c0_34, %c0_35, %c0_36], %89 {strides = array<i32>} : memref<1x8x16x16xf32, #tpu.memory_space<vmem>>, vector<1x1x16x16xf32>,
      %c1_i32_37 = arith.constant 1 : i32
      %90 = arith.addi %2, %c1_i32_37 : i32
      %cst_38 = arith.constant 0.000000e+00 : f32
      %91 = vector.broadcast %cst_38 : f32 to vector<16x16xf32>
      %c1_39 = arith.constant 1 : index
      %c7_40 = arith.constant 7 : index
      %c4_41 = arith.constant 4 : index
      %92 = vector.load %arg7[%c1_39, %c7_40, %c4_41] : memref<8x29x26xf32, #tpu.memory_space<vmem>>, vector<1x16x16xf32>
      %93 = vector.shape_cast %92 : vector<1x16x16xf32> to vector<16x16xf32>
      %94 = arith.index_cast %90 : i32 to index
      %c0_42 = arith.constant 0 : index
      %95 = memref.load %arg4[%94, %c0_42] : memref<64x11xf32, #tpu.memory_space<smem>>
      %96 = vector.broadcast %95 : f32 to vector<16x16xf32>
      %97 = arith.mulf %93, %96 : vector<16x16xf32>
      %98 = arith.addf %91, %97 : vector<16x16xf32>
      %c1_43 = arith.constant 1 : index
      %c7_44 = arith.constant 7 : index
      %c5_45 = arith.constant 5 : index
      %99 = vector.load %arg7[%c1_43, %c7_44, %c5_45] : memref<8x29x26xf32, #tpu.memory_space<vmem>>, vector<1x16x16xf32>
      %100 = vector.shape_cast %99 : vector<1x16x16xf32> to vector<16x16xf32>
      %101 = arith.index_cast %90 : i32 to index
      %c1_46 = arith.constant 1 : index
      %102 = memref.load %arg4[%101, %c1_46] : memref<64x11xf32, #tpu.memory_space<smem>>
      %103 = vector.broadcast %102 : f32 to vector<16x16xf32>
      %104 = arith.mulf %100, %103 : vector<16x16xf32>
      %105 = arith.addf %98, %104 : vector<16x16xf32>
      %c1_47 = arith.constant 1 : index
      %c7_48 = arith.constant 7 : index
      %c6_49 = arith.constant 6 : index
      %106 = vector.load %arg7[%c1_47, %c7_48, %c6_49] : memref<8x29x26xf32, #tpu.memory_space<vmem>>, vector<1x16x16xf32>
      %107 = vector.shape_cast %106 : vector<1x16x16xf32> to vector<16x16xf32>
      %108 = arith.index_cast %90 : i32 to index
      %c2_50 = arith.constant 2 : index
      %109 = memref.load %arg4[%108, %c2_50] : memref<64x11xf32, #tpu.memory_space<smem>>
      %110 = vector.broadcast %109 : f32 to vector<16x16xf32>
      %111 = arith.mulf %107, %110 : vector<16x16xf32>
      %112 = arith.addf %105, %111 : vector<16x16xf32>
      %c1_51 = arith.constant 1 : index
      %c8_52 = arith.constant 8 : index
      %c4_53 = arith.constant 4 : index
      %113 = vector.load %arg7[%c1_51, %c8_52, %c4_53] : memref<8x29x26xf32, #tpu.memory_space<vmem>>, vector<1x16x16xf32>
      %114 = vector.shape_cast %113 : vector<1x16x16xf32> to vector<16x16xf32>
      %115 = arith.index_cast %90 : i32 to index
      %c3_54 = arith.constant 3 : index
      %116 = memref.load %arg4[%115, %c3_54] : memref<64x11xf32, #tpu.memory_space<smem>>
      %117 = vector.broadcast %116 : f32 to vector<16x16xf32>
      %118 = arith.mulf %114, %117 : vector<16x16xf32>
      %119 = arith.addf %112, %118 : vector<16x16xf32>
      %c1_55 = arith.constant 1 : index
      %c8_56 = arith.constant 8 : index
      %c5_57 = arith.constant 5 : index
      %120 = vector.load %arg7[%c1_55, %c8_56, %c5_57] : memref<8x29x26xf32, #tpu.memory_space<vmem>>, vector<1x16x16xf32>
      %121 = vector.shape_cast %120 : vector<1x16x16xf32> to vector<16x16xf32>
      %122 = arith.index_cast %90 : i32 to index
      %c4_58 = arith.constant 4 : index
      %123 = memref.load %arg4[%122, %c4_58] : memref<64x11xf32, #tpu.memory_space<smem>>
      %124 = vector.broadcast %123 : f32 to vector<16x16xf32>
      %125 = arith.mulf %121, %124 : vector<16x16xf32>
      %126 = arith.addf %119, %125 : vector<16x16xf32>
      %c1_59 = arith.constant 1 : index
      %c8_60 = arith.constant 8 : index
      %c6_61 = arith.constant 6 : index
      %127 = vector.load %arg7[%c1_59, %c8_60, %c6_61] : memref<8x29x26xf32, #tpu.memory_space<vmem>>, vector<1x16x16xf32>
      %128 = vector.shape_cast %127 : vector<1x16x16xf32> to vector<16x16xf32>
      %129 = arith.index_cast %90 : i32 to index
      %c5_62 = arith.constant 5 : index
      %130 = memref.load %arg4[%129, %c5_62] : memref<64x11xf32, #tpu.memory_space<smem>>
      %131 = vector.broadcast %130 : f32 to vector<16x16xf32>
      %132 = arith.mulf %128, %131 : vector<16x16xf32>
      %133 = arith.addf %126, %132 : vector<16x16xf32>
      %c1_63 = arith.constant 1 : index
      %c9_64 = arith.constant 9 : index
      %c4_65 = arith.constant 4 : index
      %134 = vector.load %arg7[%c1_63, %c9_64, %c4_65] : memref<8x29x26xf32, #tpu.memory_space<vmem>>, vector<1x16x16xf32>
      %135 = vector.shape_cast %134 : vector<1x16x16xf32> to vector<16x16xf32>
      %136 = arith.index_cast %90 : i32 to index
      %c6_66 = arith.constant 6 : index
      %137 = memref.load %arg4[%136, %c6_66] : memref<64x11xf32, #tpu.memory_space<smem>>
      %138 = vector.broadcast %137 : f32 to vector<16x16xf32>
      %139 = arith.mulf %135, %138 : vector<16x16xf32>
      %140 = arith.addf %133, %139 : vector<16x16xf32>
      %c1_67 = arith.constant 1 : index
      %c9_68 = arith.constant 9 : index
      %c5_69 = arith.constant 5 : index
      %141 = vector.load %arg7[%c1_67, %c9_68, %c5_69] : memref<8x29x26xf32, #tpu.memory_space<vmem>>, vector<1x16x16xf32>
      %142 = vector.shape_cast %141 : vector<1x16x16xf32> to vector<16x16xf32>
      %143 = arith.index_cast %90 : i32 to index
      %c7_70 = arith.constant 7 : index
      %144 = memref.load %arg4[%143, %c7_70] : memref<64x11xf32, #tpu.memory_space<smem>>
      %145 = vector.broadcast %144 : f32 to vector<16x16xf32>
      %146 = arith.mulf %142, %145 : vector<16x16xf32>
      %147 = arith.addf %140, %146 : vector<16x16xf32>
      %c1_71 = arith.constant 1 : index
      %c9_72 = arith.constant 9 : index
      %c6_73 = arith.constant 6 : index
      %148 = vector.load %arg7[%c1_71, %c9_72, %c6_73] : memref<8x29x26xf32, #tpu.memory_space<vmem>>, vector<1x16x16xf32>
      %149 = vector.shape_cast %148 : vector<1x16x16xf32> to vector<16x16xf32>
      %150 = arith.index_cast %90 : i32 to index
      %c8_74 = arith.constant 8 : index
      %151 = memref.load %arg4[%150, %c8_74] : memref<64x11xf32, #tpu.memory_space<smem>>
      %152 = vector.broadcast %151 : f32 to vector<16x16xf32>
      %153 = arith.mulf %149, %152 : vector<16x16xf32>
      %154 = arith.addf %147, %153 : vector<16x16xf32>
      %155 = arith.index_cast %90 : i32 to index
      %156 = memref.load %arg5[%155] : memref<64xf32, #tpu.memory_space<smem>>
      %157 = vector.broadcast %156 : f32 to vector<16x16xf32>
      %158 = arith.addf %154, %157 : vector<16x16xf32>
      %c0_75 = arith.constant 0 : index
      %c1_76 = arith.constant 1 : index
      %c0_77 = arith.constant 0 : index
      %c0_78 = arith.constant 0 : index
      %159 = vector.load %arg6[%c0_75, %c1_76, %c0_77, %c0_78] : memref<1x8x16x16xf32, #tpu.memory_space<vmem>>, vector<1x1x16x16xf32>
      %160 = vector.shape_cast %159 : vector<1x1x16x16xf32> to vector<16x16xf32>
      %161 = vector.shape_cast %158 : vector<16x16xf32> to vector<1x1x16x16xf32>
      tpu.vector_store %arg6[%c0_75, %c1_76, %c0_77, %c0_78], %161 {strides = array<i32>} : memref<1x8x16x16xf32, #tpu.memory_space<vmem>>, vector<1x1x16x16xf32>,
      %c2_i32_79 = arith.constant 2 : i32
      %162 = arith.addi %2, %c2_i32_79 : i32
      %cst_80 = arith.constant 0.000000e+00 : f32
      %163 = vector.broadcast %cst_80 : f32 to vector<16x16xf32>
      %c2_81 = arith.constant 2 : index
      %c7_82 = arith.constant 7 : index
      %c4_83 = arith.constant 4 : index
      %164 = vector.load %arg7[%c2_81, %c7_82, %c4_83] : memref<8x29x26xf32, #tpu.memory_space<vmem>>, vector<1x16x16xf32>
      %165 = vector.shape_cast %164 : vector<1x16x16xf32> to vector<16x16xf32>
      %166 = arith.index_cast %162 : i32 to index
      %c0_84 = arith.constant 0 : index
      %167 = memref.load %arg4[%166, %c0_84] : memref<64x11xf32, #tpu.memory_space<smem>>
      %168 = vector.broadcast %167 : f32 to vector<16x16xf32>
      %169 = arith.mulf %165, %168 : vector<16x16xf32>
      %170 = arith.addf %163, %169 : vector<16x16xf32>
      %c2_85 = arith.constant 2 : index
      %c7_86 = arith.constant 7 : index
      %c5_87 = arith.constant 5 : index
      %171 = vector.load %arg7[%c2_85, %c7_86, %c5_87] : memref<8x29x26xf32, #tpu.memory_space<vmem>>, vector<1x16x16xf32>
      %172 = vector.shape_cast %171 : vector<1x16x16xf32> to vector<16x16xf32>
      %173 = arith.index_cast %162 : i32 to index
      %c1_88 = arith.constant 1 : index
      %174 = memref.load %arg4[%173, %c1_88] : memref<64x11xf32, #tpu.memory_space<smem>>
      %175 = vector.broadcast %174 : f32 to vector<16x16xf32>
      %176 = arith.mulf %172, %175 : vector<16x16xf32>
      %177 = arith.addf %170, %176 : vector<16x16xf32>
      %c2_89 = arith.constant 2 : index
      %c7_90 = arith.constant 7 : index
      %c6_91 = arith.constant 6 : index
      %178 = vector.load %arg7[%c2_89, %c7_90, %c6_91] : memref<8x29x26xf32, #tpu.memory_space<vmem>>, vector<1x16x16xf32>
      %179 = vector.shape_cast %178 : vector<1x16x16xf32> to vector<16x16xf32>
      %180 = arith.index_cast %162 : i32 to index
      %c2_92 = arith.constant 2 : index
      %181 = memref.load %arg4[%180, %c2_92] : memref<64x11xf32, #tpu.memory_space<smem>>
      %182 = vector.broadcast %181 : f32 to vector<16x16xf32>
      %183 = arith.mulf %179, %182 : vector<16x16xf32>
      %184 = arith.addf %177, %183 : vector<16x16xf32>
      %c2_93 = arith.constant 2 : index
      %c8_94 = arith.constant 8 : index
      %c4_95 = arith.constant 4 : index
      %185 = vector.load %arg7[%c2_93, %c8_94, %c4_95] : memref<8x29x26xf32, #tpu.memory_space<vmem>>, vector<1x16x16xf32>
      %186 = vector.shape_cast %185 : vector<1x16x16xf32> to vector<16x16xf32>
      %187 = arith.index_cast %162 : i32 to index
      %c3_96 = arith.constant 3 : index
      %188 = memref.load %arg4[%187, %c3_96] : memref<64x11xf32, #tpu.memory_space<smem>>
      %189 = vector.broadcast %188 : f32 to vector<16x16xf32>
      %190 = arith.mulf %186, %189 : vector<16x16xf32>
      %191 = arith.addf %184, %190 : vector<16x16xf32>
      %c2_97 = arith.constant 2 : index
      %c8_98 = arith.constant 8 : index
      %c5_99 = arith.constant 5 : index
      %192 = vector.load %arg7[%c2_97, %c8_98, %c5_99] : memref<8x29x26xf32, #tpu.memory_space<vmem>>, vector<1x16x16xf32>
      %193 = vector.shape_cast %192 : vector<1x16x16xf32> to vector<16x16xf32>
      %194 = arith.index_cast %162 : i32 to index
      %c4_100 = arith.constant 4 : index
      %195 = memref.load %arg4[%194, %c4_100] : memref<64x11xf32, #tpu.memory_space<smem>>
      %196 = vector.broadcast %195 : f32 to vector<16x16xf32>
      %197 = arith.mulf %193, %196 : vector<16x16xf32>
      %198 = arith.addf %191, %197 : vector<16x16xf32>
      %c2_101 = arith.constant 2 : index
      %c8_102 = arith.constant 8 : index
      %c6_103 = arith.constant 6 : index
      %199 = vector.load %arg7[%c2_101, %c8_102, %c6_103] : memref<8x29x26xf32, #tpu.memory_space<vmem>>, vector<1x16x16xf32>
      %200 = vector.shape_cast %199 : vector<1x16x16xf32> to vector<16x16xf32>
      %201 = arith.index_cast %162 : i32 to index
      %c5_104 = arith.constant 5 : index
      %202 = memref.load %arg4[%201, %c5_104] : memref<64x11xf32, #tpu.memory_space<smem>>
      %203 = vector.broadcast %202 : f32 to vector<16x16xf32>
      %204 = arith.mulf %200, %203 : vector<16x16xf32>
      %205 = arith.addf %198, %204 : vector<16x16xf32>
      %c2_105 = arith.constant 2 : index
      %c9_106 = arith.constant 9 : index
      %c4_107 = arith.constant 4 : index
      %206 = vector.load %arg7[%c2_105, %c9_106, %c4_107] : memref<8x29x26xf32, #tpu.memory_space<vmem>>, vector<1x16x16xf32>
      %207 = vector.shape_cast %206 : vector<1x16x16xf32> to vector<16x16xf32>
      %208 = arith.index_cast %162 : i32 to index
      %c6_108 = arith.constant 6 : index
      %209 = memref.load %arg4[%208, %c6_108] : memref<64x11xf32, #tpu.memory_space<smem>>
      %210 = vector.broadcast %209 : f32 to vector<16x16xf32>
      %211 = arith.mulf %207, %210 : vector<16x16xf32>
      %212 = arith.addf %205, %211 : vector<16x16xf32>
      %c2_109 = arith.constant 2 : index
      %c9_110 = arith.constant 9 : index
      %c5_111 = arith.constant 5 : index
      %213 = vector.load %arg7[%c2_109, %c9_110, %c5_111] : memref<8x29x26xf32, #tpu.memory_space<vmem>>, vector<1x16x16xf32>
      %214 = vector.shape_cast %213 : vector<1x16x16xf32> to vector<16x16xf32>
      %215 = arith.index_cast %162 : i32 to index
      %c7_112 = arith.constant 7 : index
      %216 = memref.load %arg4[%215, %c7_112] : memref<64x11xf32, #tpu.memory_space<smem>>
      %217 = vector.broadcast %216 : f32 to vector<16x16xf32>
      %218 = arith.mulf %214, %217 : vector<16x16xf32>
      %219 = arith.addf %212, %218 : vector<16x16xf32>
      %c2_113 = arith.constant 2 : index
      %c9_114 = arith.constant 9 : index
      %c6_115 = arith.constant 6 : index
      %220 = vector.load %arg7[%c2_113, %c9_114, %c6_115] : memref<8x29x26xf32, #tpu.memory_space<vmem>>, vector<1x16x16xf32>
      %221 = vector.shape_cast %220 : vector<1x16x16xf32> to vector<16x16xf32>
      %222 = arith.index_cast %162 : i32 to index
      %c8_116 = arith.constant 8 : index
      %223 = memref.load %arg4[%222, %c8_116] : memref<64x11xf32, #tpu.memory_space<smem>>
      %224 = vector.broadcast %223 : f32 to vector<16x16xf32>
      %225 = arith.mulf %221, %224 : vector<16x16xf32>
      %226 = arith.addf %219, %225 : vector<16x16xf32>
      %227 = arith.index_cast %162 : i32 to index
      %228 = memref.load %arg5[%227] : memref<64xf32, #tpu.memory_space<smem>>
      %229 = vector.broadcast %228 : f32 to vector<16x16xf32>
      %230 = arith.addf %226, %229 : vector<16x16xf32>
      %c0_117 = arith.constant 0 : index
      %c2_118 = arith.constant 2 : index
      %c0_119 = arith.constant 0 : index
      %c0_120 = arith.constant 0 : index
      %231 = vector.load %arg6[%c0_117, %c2_118, %c0_119, %c0_120] : memref<1x8x16x16xf32, #tpu.memory_space<vmem>>, vector<1x1x16x16xf32>
      %232 = vector.shape_cast %231 : vector<1x1x16x16xf32> to vector<16x16xf32>
      %233 = vector.shape_cast %230 : vector<16x16xf32> to vector<1x1x16x16xf32>
      tpu.vector_store %arg6[%c0_117, %c2_118, %c0_119, %c0_120], %233 {strides = array<i32>} : memref<1x8x16x16xf32, #tpu.memory_space<vmem>>, vector<1x1x16x16xf32>,
      %c3_i32_121 = arith.constant 3 : i32
      %234 = arith.addi %2, %c3_i32_121 : i32
      %cst_122 = arith.constant 0.000000e+00 : f32
      %235 = vector.broadcast %cst_122 : f32 to vector<16x16xf32>
      %c3_123 = arith.constant 3 : index
      %c7_124 = arith.constant 7 : index
      %c4_125 = arith.constant 4 : index
      %236 = vector.load %arg7[%c3_123, %c7_124, %c4_125] : memref<8x29x26xf32, #tpu.memory_space<vmem>>, vector<1x16x16xf32>
      %237 = vector.shape_cast %236 : vector<1x16x16xf32> to vector<16x16xf32>
      %238 = arith.index_cast %234 : i32 to index
      %c0_126 = arith.constant 0 : index
      %239 = memref.load %arg4[%238, %c0_126] : memref<64x11xf32, #tpu.memory_space<smem>>
      %240 = vector.broadcast %239 : f32 to vector<16x16xf32>
      %241 = arith.mulf %237, %240 : vector<16x16xf32>
      %242 = arith.addf %235, %241 : vector<16x16xf32>
      %c3_127 = arith.constant 3 : index
      %c7_128 = arith.constant 7 : index
      %c5_129 = arith.constant 5 : index
      %243 = vector.load %arg7[%c3_127, %c7_128, %c5_129] : memref<8x29x26xf32, #tpu.memory_space<vmem>>, vector<1x16x16xf32>
      %244 = vector.shape_cast %243 : vector<1x16x16xf32> to vector<16x16xf32>
      %245 = arith.index_cast %234 : i32 to index
      %c1_130 = arith.constant 1 : index
      %246 = memref.load %arg4[%245, %c1_130] : memref<64x11xf32, #tpu.memory_space<smem>>
      %247 = vector.broadcast %246 : f32 to vector<16x16xf32>
      %248 = arith.mulf %244, %247 : vector<16x16xf32>
      %249 = arith.addf %242, %248 : vector<16x16xf32>
      %c3_131 = arith.constant 3 : index
      %c7_132 = arith.constant 7 : index
      %c6_133 = arith.constant 6 : index
      %250 = vector.load %arg7[%c3_131, %c7_132, %c6_133] : memref<8x29x26xf32, #tpu.memory_space<vmem>>, vector<1x16x16xf32>
      %251 = vector.shape_cast %250 : vector<1x16x16xf32> to vector<16x16xf32>
      %252 = arith.index_cast %234 : i32 to index
      %c2_134 = arith.constant 2 : index
      %253 = memref.load %arg4[%252, %c2_134] : memref<64x11xf32, #tpu.memory_space<smem>>
      %254 = vector.broadcast %253 : f32 to vector<16x16xf32>
      %255 = arith.mulf %251, %254 : vector<16x16xf32>
      %256 = arith.addf %249, %255 : vector<16x16xf32>
      %c3_135 = arith.constant 3 : index
      %c8_136 = arith.constant 8 : index
      %c4_137 = arith.constant 4 : index
      %257 = vector.load %arg7[%c3_135, %c8_136, %c4_137] : memref<8x29x26xf32, #tpu.memory_space<vmem>>, vector<1x16x16xf32>
      %258 = vector.shape_cast %257 : vector<1x16x16xf32> to vector<16x16xf32>
      %259 = arith.index_cast %234 : i32 to index
      %c3_138 = arith.constant 3 : index
      %260 = memref.load %arg4[%259, %c3_138] : memref<64x11xf32, #tpu.memory_space<smem>>
      %261 = vector.broadcast %260 : f32 to vector<16x16xf32>
      %262 = arith.mulf %258, %261 : vector<16x16xf32>
      %263 = arith.addf %256, %262 : vector<16x16xf32>
      %c3_139 = arith.constant 3 : index
      %c8_140 = arith.constant 8 : index
      %c5_141 = arith.constant 5 : index
      %264 = vector.load %arg7[%c3_139, %c8_140, %c5_141] : memref<8x29x26xf32, #tpu.memory_space<vmem>>, vector<1x16x16xf32>
      %265 = vector.shape_cast %264 : vector<1x16x16xf32> to vector<16x16xf32>
      %266 = arith.index_cast %234 : i32 to index
      %c4_142 = arith.constant 4 : index
      %267 = memref.load %arg4[%266, %c4_142] : memref<64x11xf32, #tpu.memory_space<smem>>
      %268 = vector.broadcast %267 : f32 to vector<16x16xf32>
      %269 = arith.mulf %265, %268 : vector<16x16xf32>
      %270 = arith.addf %263, %269 : vector<16x16xf32>
      %c3_143 = arith.constant 3 : index
      %c8_144 = arith.constant 8 : index
      %c6_145 = arith.constant 6 : index
      %271 = vector.load %arg7[%c3_143, %c8_144, %c6_145] : memref<8x29x26xf32, #tpu.memory_space<vmem>>, vector<1x16x16xf32>
      %272 = vector.shape_cast %271 : vector<1x16x16xf32> to vector<16x16xf32>
      %273 = arith.index_cast %234 : i32 to index
      %c5_146 = arith.constant 5 : index
      %274 = memref.load %arg4[%273, %c5_146] : memref<64x11xf32, #tpu.memory_space<smem>>
      %275 = vector.broadcast %274 : f32 to vector<16x16xf32>
      %276 = arith.mulf %272, %275 : vector<16x16xf32>
      %277 = arith.addf %270, %276 : vector<16x16xf32>
      %c3_147 = arith.constant 3 : index
      %c9_148 = arith.constant 9 : index
      %c4_149 = arith.constant 4 : index
      %278 = vector.load %arg7[%c3_147, %c9_148, %c4_149] : memref<8x29x26xf32, #tpu.memory_space<vmem>>, vector<1x16x16xf32>
      %279 = vector.shape_cast %278 : vector<1x16x16xf32> to vector<16x16xf32>
      %280 = arith.index_cast %234 : i32 to index
      %c6_150 = arith.constant 6 : index
      %281 = memref.load %arg4[%280, %c6_150] : memref<64x11xf32, #tpu.memory_space<smem>>
      %282 = vector.broadcast %281 : f32 to vector<16x16xf32>
      %283 = arith.mulf %279, %282 : vector<16x16xf32>
      %284 = arith.addf %277, %283 : vector<16x16xf32>
      %c3_151 = arith.constant 3 : index
      %c9_152 = arith.constant 9 : index
      %c5_153 = arith.constant 5 : index
      %285 = vector.load %arg7[%c3_151, %c9_152, %c5_153] : memref<8x29x26xf32, #tpu.memory_space<vmem>>, vector<1x16x16xf32>
      %286 = vector.shape_cast %285 : vector<1x16x16xf32> to vector<16x16xf32>
      %287 = arith.index_cast %234 : i32 to index
      %c7_154 = arith.constant 7 : index
      %288 = memref.load %arg4[%287, %c7_154] : memref<64x11xf32, #tpu.memory_space<smem>>
      %289 = vector.broadcast %288 : f32 to vector<16x16xf32>
      %290 = arith.mulf %286, %289 : vector<16x16xf32>
      %291 = arith.addf %284, %290 : vector<16x16xf32>
      %c3_155 = arith.constant 3 : index
      %c9_156 = arith.constant 9 : index
      %c6_157 = arith.constant 6 : index
      %292 = vector.load %arg7[%c3_155, %c9_156, %c6_157] : memref<8x29x26xf32, #tpu.memory_space<vmem>>, vector<1x16x16xf32>
      %293 = vector.shape_cast %292 : vector<1x16x16xf32> to vector<16x16xf32>
      %294 = arith.index_cast %234 : i32 to index
      %c8_158 = arith.constant 8 : index
      %295 = memref.load %arg4[%294, %c8_158] : memref<64x11xf32, #tpu.memory_space<smem>>
      %296 = vector.broadcast %295 : f32 to vector<16x16xf32>
      %297 = arith.mulf %293, %296 : vector<16x16xf32>
      %298 = arith.addf %291, %297 : vector<16x16xf32>
      %299 = arith.index_cast %234 : i32 to index
      %300 = memref.load %arg5[%299] : memref<64xf32, #tpu.memory_space<smem>>
      %301 = vector.broadcast %300 : f32 to vector<16x16xf32>
      %302 = arith.addf %298, %301 : vector<16x16xf32>
      %c0_159 = arith.constant 0 : index
      %c3_160 = arith.constant 3 : index
      %c0_161 = arith.constant 0 : index
      %c0_162 = arith.constant 0 : index
      %303 = vector.load %arg6[%c0_159, %c3_160, %c0_161, %c0_162] : memref<1x8x16x16xf32, #tpu.memory_space<vmem>>, vector<1x1x16x16xf32>
      %304 = vector.shape_cast %303 : vector<1x1x16x16xf32> to vector<16x16xf32>
      %305 = vector.shape_cast %302 : vector<16x16xf32> to vector<1x1x16x16xf32>
      tpu.vector_store %arg6[%c0_159, %c3_160, %c0_161, %c0_162], %305 {strides = array<i32>} : memref<1x8x16x16xf32, #tpu.memory_space<vmem>>, vector<1x1x16x16xf32>,
      %c4_i32 = arith.constant 4 : i32
      %306 = arith.addi %2, %c4_i32 : i32
      %cst_163 = arith.constant 0.000000e+00 : f32
      %307 = vector.broadcast %cst_163 : f32 to vector<16x16xf32>
      %c4_164 = arith.constant 4 : index
      %c7_165 = arith.constant 7 : index
      %c4_166 = arith.constant 4 : index
      %308 = vector.load %arg7[%c4_164, %c7_165, %c4_166] : memref<8x29x26xf32, #tpu.memory_space<vmem>>, vector<1x16x16xf32>
      %309 = vector.shape_cast %308 : vector<1x16x16xf32> to vector<16x16xf32>
      %310 = arith.index_cast %306 : i32 to index
      %c0_167 = arith.constant 0 : index
      %311 = memref.load %arg4[%310, %c0_167] : memref<64x11xf32, #tpu.memory_space<smem>>
      %312 = vector.broadcast %311 : f32 to vector<16x16xf32>
      %313 = arith.mulf %309, %312 : vector<16x16xf32>
      %314 = arith.addf %307, %313 : vector<16x16xf32>
      %c4_168 = arith.constant 4 : index
      %c7_169 = arith.constant 7 : index
      %c5_170 = arith.constant 5 : index
      %315 = vector.load %arg7[%c4_168, %c7_169, %c5_170] : memref<8x29x26xf32, #tpu.memory_space<vmem>>, vector<1x16x16xf32>
      %316 = vector.shape_cast %315 : vector<1x16x16xf32> to vector<16x16xf32>
      %317 = arith.index_cast %306 : i32 to index
      %c1_171 = arith.constant 1 : index
      %318 = memref.load %arg4[%317, %c1_171] : memref<64x11xf32, #tpu.memory_space<smem>>
      %319 = vector.broadcast %318 : f32 to vector<16x16xf32>
      %320 = arith.mulf %316, %319 : vector<16x16xf32>
      %321 = arith.addf %314, %320 : vector<16x16xf32>
      %c4_172 = arith.constant 4 : index
      %c7_173 = arith.constant 7 : index
      %c6_174 = arith.constant 6 : index
      %322 = vector.load %arg7[%c4_172, %c7_173, %c6_174] : memref<8x29x26xf32, #tpu.memory_space<vmem>>, vector<1x16x16xf32>
      %323 = vector.shape_cast %322 : vector<1x16x16xf32> to vector<16x16xf32>
      %324 = arith.index_cast %306 : i32 to index
      %c2_175 = arith.constant 2 : index
      %325 = memref.load %arg4[%324, %c2_175] : memref<64x11xf32, #tpu.memory_space<smem>>
      %326 = vector.broadcast %325 : f32 to vector<16x16xf32>
      %327 = arith.mulf %323, %326 : vector<16x16xf32>
      %328 = arith.addf %321, %327 : vector<16x16xf32>
      %c4_176 = arith.constant 4 : index
      %c8_177 = arith.constant 8 : index
      %c4_178 = arith.constant 4 : index
      %329 = vector.load %arg7[%c4_176, %c8_177, %c4_178] : memref<8x29x26xf32, #tpu.memory_space<vmem>>, vector<1x16x16xf32>
      %330 = vector.shape_cast %329 : vector<1x16x16xf32> to vector<16x16xf32>
      %331 = arith.index_cast %306 : i32 to index
      %c3_179 = arith.constant 3 : index
      %332 = memref.load %arg4[%331, %c3_179] : memref<64x11xf32, #tpu.memory_space<smem>>
      %333 = vector.broadcast %332 : f32 to vector<16x16xf32>
      %334 = arith.mulf %330, %333 : vector<16x16xf32>
      %335 = arith.addf %328, %334 : vector<16x16xf32>
      %c4_180 = arith.constant 4 : index
      %c8_181 = arith.constant 8 : index
      %c5_182 = arith.constant 5 : index
      %336 = vector.load %arg7[%c4_180, %c8_181, %c5_182] : memref<8x29x26xf32, #tpu.memory_space<vmem>>, vector<1x16x16xf32>
      %337 = vector.shape_cast %336 : vector<1x16x16xf32> to vector<16x16xf32>
      %338 = arith.index_cast %306 : i32 to index
      %c4_183 = arith.constant 4 : index
      %339 = memref.load %arg4[%338, %c4_183] : memref<64x11xf32, #tpu.memory_space<smem>>
      %340 = vector.broadcast %339 : f32 to vector<16x16xf32>
      %341 = arith.mulf %337, %340 : vector<16x16xf32>
      %342 = arith.addf %335, %341 : vector<16x16xf32>
      %c4_184 = arith.constant 4 : index
      %c8_185 = arith.constant 8 : index
      %c6_186 = arith.constant 6 : index
      %343 = vector.load %arg7[%c4_184, %c8_185, %c6_186] : memref<8x29x26xf32, #tpu.memory_space<vmem>>, vector<1x16x16xf32>
      %344 = vector.shape_cast %343 : vector<1x16x16xf32> to vector<16x16xf32>
      %345 = arith.index_cast %306 : i32 to index
      %c5_187 = arith.constant 5 : index
      %346 = memref.load %arg4[%345, %c5_187] : memref<64x11xf32, #tpu.memory_space<smem>>
      %347 = vector.broadcast %346 : f32 to vector<16x16xf32>
      %348 = arith.mulf %344, %347 : vector<16x16xf32>
      %349 = arith.addf %342, %348 : vector<16x16xf32>
      %c4_188 = arith.constant 4 : index
      %c9_189 = arith.constant 9 : index
      %c4_190 = arith.constant 4 : index
      %350 = vector.load %arg7[%c4_188, %c9_189, %c4_190] : memref<8x29x26xf32, #tpu.memory_space<vmem>>, vector<1x16x16xf32>
      %351 = vector.shape_cast %350 : vector<1x16x16xf32> to vector<16x16xf32>
      %352 = arith.index_cast %306 : i32 to index
      %c6_191 = arith.constant 6 : index
      %353 = memref.load %arg4[%352, %c6_191] : memref<64x11xf32, #tpu.memory_space<smem>>
      %354 = vector.broadcast %353 : f32 to vector<16x16xf32>
      %355 = arith.mulf %351, %354 : vector<16x16xf32>
      %356 = arith.addf %349, %355 : vector<16x16xf32>
      %c4_192 = arith.constant 4 : index
      %c9_193 = arith.constant 9 : index
      %c5_194 = arith.constant 5 : index
      %357 = vector.load %arg7[%c4_192, %c9_193, %c5_194] : memref<8x29x26xf32, #tpu.memory_space<vmem>>, vector<1x16x16xf32>
      %358 = vector.shape_cast %357 : vector<1x16x16xf32> to vector<16x16xf32>
      %359 = arith.index_cast %306 : i32 to index
      %c7_195 = arith.constant 7 : index
      %360 = memref.load %arg4[%359, %c7_195] : memref<64x11xf32, #tpu.memory_space<smem>>
      %361 = vector.broadcast %360 : f32 to vector<16x16xf32>
      %362 = arith.mulf %358, %361 : vector<16x16xf32>
      %363 = arith.addf %356, %362 : vector<16x16xf32>
      %c4_196 = arith.constant 4 : index
      %c9_197 = arith.constant 9 : index
      %c6_198 = arith.constant 6 : index
      %364 = vector.load %arg7[%c4_196, %c9_197, %c6_198] : memref<8x29x26xf32, #tpu.memory_space<vmem>>, vector<1x16x16xf32>
      %365 = vector.shape_cast %364 : vector<1x16x16xf32> to vector<16x16xf32>
      %366 = arith.index_cast %306 : i32 to index
      %c8_199 = arith.constant 8 : index
      %367 = memref.load %arg4[%366, %c8_199] : memref<64x11xf32, #tpu.memory_space<smem>>
      %368 = vector.broadcast %367 : f32 to vector<16x16xf32>
      %369 = arith.mulf %365, %368 : vector<16x16xf32>
      %370 = arith.addf %363, %369 : vector<16x16xf32>
      %371 = arith.index_cast %306 : i32 to index
      %372 = memref.load %arg5[%371] : memref<64xf32, #tpu.memory_space<smem>>
      %373 = vector.broadcast %372 : f32 to vector<16x16xf32>
      %374 = arith.addf %370, %373 : vector<16x16xf32>
      %c0_200 = arith.constant 0 : index
      %c4_201 = arith.constant 4 : index
      %c0_202 = arith.constant 0 : index
      %c0_203 = arith.constant 0 : index
      %375 = vector.load %arg6[%c0_200, %c4_201, %c0_202, %c0_203] : memref<1x8x16x16xf32, #tpu.memory_space<vmem>>, vector<1x1x16x16xf32>
      %376 = vector.shape_cast %375 : vector<1x1x16x16xf32> to vector<16x16xf32>
      %377 = vector.shape_cast %374 : vector<16x16xf32> to vector<1x1x16x16xf32>
      tpu.vector_store %arg6[%c0_200, %c4_201, %c0_202, %c0_203], %377 {strides = array<i32>} : memref<1x8x16x16xf32, #tpu.memory_space<vmem>>, vector<1x1x16x16xf32>,
      %c5_i32 = arith.constant 5 : i32
      %378 = arith.addi %2, %c5_i32 : i32
      %cst_204 = arith.constant 0.000000e+00 : f32
      %379 = vector.broadcast %cst_204 : f32 to vector<16x16xf32>
      %c5_205 = arith.constant 5 : index
      %c7_206 = arith.constant 7 : index
      %c4_207 = arith.constant 4 : index
      %380 = vector.load %arg7[%c5_205, %c7_206, %c4_207] : memref<8x29x26xf32, #tpu.memory_space<vmem>>, vector<1x16x16xf32>
      %381 = vector.shape_cast %380 : vector<1x16x16xf32> to vector<16x16xf32>
      %382 = arith.index_cast %378 : i32 to index
      %c0_208 = arith.constant 0 : index
      %383 = memref.load %arg4[%382, %c0_208] : memref<64x11xf32, #tpu.memory_space<smem>>
      %384 = vector.broadcast %383 : f32 to vector<16x16xf32>
      %385 = arith.mulf %381, %384 : vector<16x16xf32>
      %386 = arith.addf %379, %385 : vector<16x16xf32>
      %c5_209 = arith.constant 5 : index
      %c7_210 = arith.constant 7 : index
      %c5_211 = arith.constant 5 : index
      %387 = vector.load %arg7[%c5_209, %c7_210, %c5_211] : memref<8x29x26xf32, #tpu.memory_space<vmem>>, vector<1x16x16xf32>
      %388 = vector.shape_cast %387 : vector<1x16x16xf32> to vector<16x16xf32>
      %389 = arith.index_cast %378 : i32 to index
      %c1_212 = arith.constant 1 : index
      %390 = memref.load %arg4[%389, %c1_212] : memref<64x11xf32, #tpu.memory_space<smem>>
      %391 = vector.broadcast %390 : f32 to vector<16x16xf32>
      %392 = arith.mulf %388, %391 : vector<16x16xf32>
      %393 = arith.addf %386, %392 : vector<16x16xf32>
      %c5_213 = arith.constant 5 : index
      %c7_214 = arith.constant 7 : index
      %c6_215 = arith.constant 6 : index
      %394 = vector.load %arg7[%c5_213, %c7_214, %c6_215] : memref<8x29x26xf32, #tpu.memory_space<vmem>>, vector<1x16x16xf32>
      %395 = vector.shape_cast %394 : vector<1x16x16xf32> to vector<16x16xf32>
      %396 = arith.index_cast %378 : i32 to index
      %c2_216 = arith.constant 2 : index
      %397 = memref.load %arg4[%396, %c2_216] : memref<64x11xf32, #tpu.memory_space<smem>>
      %398 = vector.broadcast %397 : f32 to vector<16x16xf32>
      %399 = arith.mulf %395, %398 : vector<16x16xf32>
      %400 = arith.addf %393, %399 : vector<16x16xf32>
      %c5_217 = arith.constant 5 : index
      %c8_218 = arith.constant 8 : index
      %c4_219 = arith.constant 4 : index
      %401 = vector.load %arg7[%c5_217, %c8_218, %c4_219] : memref<8x29x26xf32, #tpu.memory_space<vmem>>, vector<1x16x16xf32>
      %402 = vector.shape_cast %401 : vector<1x16x16xf32> to vector<16x16xf32>
      %403 = arith.index_cast %378 : i32 to index
      %c3_220 = arith.constant 3 : index
      %404 = memref.load %arg4[%403, %c3_220] : memref<64x11xf32, #tpu.memory_space<smem>>
      %405 = vector.broadcast %404 : f32 to vector<16x16xf32>
      %406 = arith.mulf %402, %405 : vector<16x16xf32>
      %407 = arith.addf %400, %406 : vector<16x16xf32>
      %c5_221 = arith.constant 5 : index
      %c8_222 = arith.constant 8 : index
      %c5_223 = arith.constant 5 : index
      %408 = vector.load %arg7[%c5_221, %c8_222, %c5_223] : memref<8x29x26xf32, #tpu.memory_space<vmem>>, vector<1x16x16xf32>
      %409 = vector.shape_cast %408 : vector<1x16x16xf32> to vector<16x16xf32>
      %410 = arith.index_cast %378 : i32 to index
      %c4_224 = arith.constant 4 : index
      %411 = memref.load %arg4[%410, %c4_224] : memref<64x11xf32, #tpu.memory_space<smem>>
      %412 = vector.broadcast %411 : f32 to vector<16x16xf32>
      %413 = arith.mulf %409, %412 : vector<16x16xf32>
      %414 = arith.addf %407, %413 : vector<16x16xf32>
      %c5_225 = arith.constant 5 : index
      %c8_226 = arith.constant 8 : index
      %c6_227 = arith.constant 6 : index
      %415 = vector.load %arg7[%c5_225, %c8_226, %c6_227] : memref<8x29x26xf32, #tpu.memory_space<vmem>>, vector<1x16x16xf32>
      %416 = vector.shape_cast %415 : vector<1x16x16xf32> to vector<16x16xf32>
      %417 = arith.index_cast %378 : i32 to index
      %c5_228 = arith.constant 5 : index
      %418 = memref.load %arg4[%417, %c5_228] : memref<64x11xf32, #tpu.memory_space<smem>>
      %419 = vector.broadcast %418 : f32 to vector<16x16xf32>
      %420 = arith.mulf %416, %419 : vector<16x16xf32>
      %421 = arith.addf %414, %420 : vector<16x16xf32>
      %c5_229 = arith.constant 5 : index
      %c9_230 = arith.constant 9 : index
      %c4_231 = arith.constant 4 : index
      %422 = vector.load %arg7[%c5_229, %c9_230, %c4_231] : memref<8x29x26xf32, #tpu.memory_space<vmem>>, vector<1x16x16xf32>
      %423 = vector.shape_cast %422 : vector<1x16x16xf32> to vector<16x16xf32>
      %424 = arith.index_cast %378 : i32 to index
      %c6_232 = arith.constant 6 : index
      %425 = memref.load %arg4[%424, %c6_232] : memref<64x11xf32, #tpu.memory_space<smem>>
      %426 = vector.broadcast %425 : f32 to vector<16x16xf32>
      %427 = arith.mulf %423, %426 : vector<16x16xf32>
      %428 = arith.addf %421, %427 : vector<16x16xf32>
      %c5_233 = arith.constant 5 : index
      %c9_234 = arith.constant 9 : index
      %c5_235 = arith.constant 5 : index
      %429 = vector.load %arg7[%c5_233, %c9_234, %c5_235] : memref<8x29x26xf32, #tpu.memory_space<vmem>>, vector<1x16x16xf32>
      %430 = vector.shape_cast %429 : vector<1x16x16xf32> to vector<16x16xf32>
      %431 = arith.index_cast %378 : i32 to index
      %c7_236 = arith.constant 7 : index
      %432 = memref.load %arg4[%431, %c7_236] : memref<64x11xf32, #tpu.memory_space<smem>>
      %433 = vector.broadcast %432 : f32 to vector<16x16xf32>
      %434 = arith.mulf %430, %433 : vector<16x16xf32>
      %435 = arith.addf %428, %434 : vector<16x16xf32>
      %c5_237 = arith.constant 5 : index
      %c9_238 = arith.constant 9 : index
      %c6_239 = arith.constant 6 : index
      %436 = vector.load %arg7[%c5_237, %c9_238, %c6_239] : memref<8x29x26xf32, #tpu.memory_space<vmem>>, vector<1x16x16xf32>
      %437 = vector.shape_cast %436 : vector<1x16x16xf32> to vector<16x16xf32>
      %438 = arith.index_cast %378 : i32 to index
      %c8_240 = arith.constant 8 : index
      %439 = memref.load %arg4[%438, %c8_240] : memref<64x11xf32, #tpu.memory_space<smem>>
      %440 = vector.broadcast %439 : f32 to vector<16x16xf32>
      %441 = arith.mulf %437, %440 : vector<16x16xf32>
      %442 = arith.addf %435, %441 : vector<16x16xf32>
      %443 = arith.index_cast %378 : i32 to index
      %444 = memref.load %arg5[%443] : memref<64xf32, #tpu.memory_space<smem>>
      %445 = vector.broadcast %444 : f32 to vector<16x16xf32>
      %446 = arith.addf %442, %445 : vector<16x16xf32>
      %c0_241 = arith.constant 0 : index
      %c5_242 = arith.constant 5 : index
      %c0_243 = arith.constant 0 : index
      %c0_244 = arith.constant 0 : index
      %447 = vector.load %arg6[%c0_241, %c5_242, %c0_243, %c0_244] : memref<1x8x16x16xf32, #tpu.memory_space<vmem>>, vector<1x1x16x16xf32>
      %448 = vector.shape_cast %447 : vector<1x1x16x16xf32> to vector<16x16xf32>
      %449 = vector.shape_cast %446 : vector<16x16xf32> to vector<1x1x16x16xf32>
      tpu.vector_store %arg6[%c0_241, %c5_242, %c0_243, %c0_244], %449 {strides = array<i32>} : memref<1x8x16x16xf32, #tpu.memory_space<vmem>>, vector<1x1x16x16xf32>,
      %c6_i32 = arith.constant 6 : i32
      %450 = arith.addi %2, %c6_i32 : i32
      %cst_245 = arith.constant 0.000000e+00 : f32
      %451 = vector.broadcast %cst_245 : f32 to vector<16x16xf32>
      %c6_246 = arith.constant 6 : index
      %c7_247 = arith.constant 7 : index
      %c4_248 = arith.constant 4 : index
      %452 = vector.load %arg7[%c6_246, %c7_247, %c4_248] : memref<8x29x26xf32, #tpu.memory_space<vmem>>, vector<1x16x16xf32>
      %453 = vector.shape_cast %452 : vector<1x16x16xf32> to vector<16x16xf32>
      %454 = arith.index_cast %450 : i32 to index
      %c0_249 = arith.constant 0 : index
      %455 = memref.load %arg4[%454, %c0_249] : memref<64x11xf32, #tpu.memory_space<smem>>
      %456 = vector.broadcast %455 : f32 to vector<16x16xf32>
      %457 = arith.mulf %453, %456 : vector<16x16xf32>
      %458 = arith.addf %451, %457 : vector<16x16xf32>
      %c6_250 = arith.constant 6 : index
      %c7_251 = arith.constant 7 : index
      %c5_252 = arith.constant 5 : index
      %459 = vector.load %arg7[%c6_250, %c7_251, %c5_252] : memref<8x29x26xf32, #tpu.memory_space<vmem>>, vector<1x16x16xf32>
      %460 = vector.shape_cast %459 : vector<1x16x16xf32> to vector<16x16xf32>
      %461 = arith.index_cast %450 : i32 to index
      %c1_253 = arith.constant 1 : index
      %462 = memref.load %arg4[%461, %c1_253] : memref<64x11xf32, #tpu.memory_space<smem>>
      %463 = vector.broadcast %462 : f32 to vector<16x16xf32>
      %464 = arith.mulf %460, %463 : vector<16x16xf32>
      %465 = arith.addf %458, %464 : vector<16x16xf32>
      %c6_254 = arith.constant 6 : index
      %c7_255 = arith.constant 7 : index
      %c6_256 = arith.constant 6 : index
      %466 = vector.load %arg7[%c6_254, %c7_255, %c6_256] : memref<8x29x26xf32, #tpu.memory_space<vmem>>, vector<1x16x16xf32>
      %467 = vector.shape_cast %466 : vector<1x16x16xf32> to vector<16x16xf32>
      %468 = arith.index_cast %450 : i32 to index
      %c2_257 = arith.constant 2 : index
      %469 = memref.load %arg4[%468, %c2_257] : memref<64x11xf32, #tpu.memory_space<smem>>
      %470 = vector.broadcast %469 : f32 to vector<16x16xf32>
      %471 = arith.mulf %467, %470 : vector<16x16xf32>
      %472 = arith.addf %465, %471 : vector<16x16xf32>
      %c6_258 = arith.constant 6 : index
      %c8_259 = arith.constant 8 : index
      %c4_260 = arith.constant 4 : index
      %473 = vector.load %arg7[%c6_258, %c8_259, %c4_260] : memref<8x29x26xf32, #tpu.memory_space<vmem>>, vector<1x16x16xf32>
      %474 = vector.shape_cast %473 : vector<1x16x16xf32> to vector<16x16xf32>
      %475 = arith.index_cast %450 : i32 to index
      %c3_261 = arith.constant 3 : index
      %476 = memref.load %arg4[%475, %c3_261] : memref<64x11xf32, #tpu.memory_space<smem>>
      %477 = vector.broadcast %476 : f32 to vector<16x16xf32>
      %478 = arith.mulf %474, %477 : vector<16x16xf32>
      %479 = arith.addf %472, %478 : vector<16x16xf32>
      %c6_262 = arith.constant 6 : index
      %c8_263 = arith.constant 8 : index
      %c5_264 = arith.constant 5 : index
      %480 = vector.load %arg7[%c6_262, %c8_263, %c5_264] : memref<8x29x26xf32, #tpu.memory_space<vmem>>, vector<1x16x16xf32>
      %481 = vector.shape_cast %480 : vector<1x16x16xf32> to vector<16x16xf32>
      %482 = arith.index_cast %450 : i32 to index
      %c4_265 = arith.constant 4 : index
      %483 = memref.load %arg4[%482, %c4_265] : memref<64x11xf32, #tpu.memory_space<smem>>
      %484 = vector.broadcast %483 : f32 to vector<16x16xf32>
      %485 = arith.mulf %481, %484 : vector<16x16xf32>
      %486 = arith.addf %479, %485 : vector<16x16xf32>
      %c6_266 = arith.constant 6 : index
      %c8_267 = arith.constant 8 : index
      %c6_268 = arith.constant 6 : index
      %487 = vector.load %arg7[%c6_266, %c8_267, %c6_268] : memref<8x29x26xf32, #tpu.memory_space<vmem>>, vector<1x16x16xf32>
      %488 = vector.shape_cast %487 : vector<1x16x16xf32> to vector<16x16xf32>
      %489 = arith.index_cast %450 : i32 to index
      %c5_269 = arith.constant 5 : index
      %490 = memref.load %arg4[%489, %c5_269] : memref<64x11xf32, #tpu.memory_space<smem>>
      %491 = vector.broadcast %490 : f32 to vector<16x16xf32>
      %492 = arith.mulf %488, %491 : vector<16x16xf32>
      %493 = arith.addf %486, %492 : vector<16x16xf32>
      %c6_270 = arith.constant 6 : index
      %c9_271 = arith.constant 9 : index
      %c4_272 = arith.constant 4 : index
      %494 = vector.load %arg7[%c6_270, %c9_271, %c4_272] : memref<8x29x26xf32, #tpu.memory_space<vmem>>, vector<1x16x16xf32>
      %495 = vector.shape_cast %494 : vector<1x16x16xf32> to vector<16x16xf32>
      %496 = arith.index_cast %450 : i32 to index
      %c6_273 = arith.constant 6 : index
      %497 = memref.load %arg4[%496, %c6_273] : memref<64x11xf32, #tpu.memory_space<smem>>
      %498 = vector.broadcast %497 : f32 to vector<16x16xf32>
      %499 = arith.mulf %495, %498 : vector<16x16xf32>
      %500 = arith.addf %493, %499 : vector<16x16xf32>
      %c6_274 = arith.constant 6 : index
      %c9_275 = arith.constant 9 : index
      %c5_276 = arith.constant 5 : index
      %501 = vector.load %arg7[%c6_274, %c9_275, %c5_276] : memref<8x29x26xf32, #tpu.memory_space<vmem>>, vector<1x16x16xf32>
      %502 = vector.shape_cast %501 : vector<1x16x16xf32> to vector<16x16xf32>
      %503 = arith.index_cast %450 : i32 to index
      %c7_277 = arith.constant 7 : index
      %504 = memref.load %arg4[%503, %c7_277] : memref<64x11xf32, #tpu.memory_space<smem>>
      %505 = vector.broadcast %504 : f32 to vector<16x16xf32>
      %506 = arith.mulf %502, %505 : vector<16x16xf32>
      %507 = arith.addf %500, %506 : vector<16x16xf32>
      %c6_278 = arith.constant 6 : index
      %c9_279 = arith.constant 9 : index
      %c6_280 = arith.constant 6 : index
      %508 = vector.load %arg7[%c6_278, %c9_279, %c6_280] : memref<8x29x26xf32, #tpu.memory_space<vmem>>, vector<1x16x16xf32>
      %509 = vector.shape_cast %508 : vector<1x16x16xf32> to vector<16x16xf32>
      %510 = arith.index_cast %450 : i32 to index
      %c8_281 = arith.constant 8 : index
      %511 = memref.load %arg4[%510, %c8_281] : memref<64x11xf32, #tpu.memory_space<smem>>
      %512 = vector.broadcast %511 : f32 to vector<16x16xf32>
      %513 = arith.mulf %509, %512 : vector<16x16xf32>
      %514 = arith.addf %507, %513 : vector<16x16xf32>
      %515 = arith.index_cast %450 : i32 to index
      %516 = memref.load %arg5[%515] : memref<64xf32, #tpu.memory_space<smem>>
      %517 = vector.broadcast %516 : f32 to vector<16x16xf32>
      %518 = arith.addf %514, %517 : vector<16x16xf32>
      %c0_282 = arith.constant 0 : index
      %c6_283 = arith.constant 6 : index
      %c0_284 = arith.constant 0 : index
      %c0_285 = arith.constant 0 : index
      %519 = vector.load %arg6[%c0_282, %c6_283, %c0_284, %c0_285] : memref<1x8x16x16xf32, #tpu.memory_space<vmem>>, vector<1x1x16x16xf32>
      %520 = vector.shape_cast %519 : vector<1x1x16x16xf32> to vector<16x16xf32>
      %521 = vector.shape_cast %518 : vector<16x16xf32> to vector<1x1x16x16xf32>
      tpu.vector_store %arg6[%c0_282, %c6_283, %c0_284, %c0_285], %521 {strides = array<i32>} : memref<1x8x16x16xf32, #tpu.memory_space<vmem>>, vector<1x1x16x16xf32>,
      %c7_i32 = arith.constant 7 : i32
      %522 = arith.addi %2, %c7_i32 : i32
      %cst_286 = arith.constant 0.000000e+00 : f32
      %523 = vector.broadcast %cst_286 : f32 to vector<16x16xf32>
      %c7_287 = arith.constant 7 : index
      %c7_288 = arith.constant 7 : index
      %c4_289 = arith.constant 4 : index
      %524 = vector.load %arg7[%c7_287, %c7_288, %c4_289] : memref<8x29x26xf32, #tpu.memory_space<vmem>>, vector<1x16x16xf32>
      %525 = vector.shape_cast %524 : vector<1x16x16xf32> to vector<16x16xf32>
      %526 = arith.index_cast %522 : i32 to index
      %c0_290 = arith.constant 0 : index
      %527 = memref.load %arg4[%526, %c0_290] : memref<64x11xf32, #tpu.memory_space<smem>>
      %528 = vector.broadcast %527 : f32 to vector<16x16xf32>
      %529 = arith.mulf %525, %528 : vector<16x16xf32>
      %530 = arith.addf %523, %529 : vector<16x16xf32>
      %c7_291 = arith.constant 7 : index
      %c7_292 = arith.constant 7 : index
      %c5_293 = arith.constant 5 : index
      %531 = vector.load %arg7[%c7_291, %c7_292, %c5_293] : memref<8x29x26xf32, #tpu.memory_space<vmem>>, vector<1x16x16xf32>
      %532 = vector.shape_cast %531 : vector<1x16x16xf32> to vector<16x16xf32>
      %533 = arith.index_cast %522 : i32 to index
      %c1_294 = arith.constant 1 : index
      %534 = memref.load %arg4[%533, %c1_294] : memref<64x11xf32, #tpu.memory_space<smem>>
      %535 = vector.broadcast %534 : f32 to vector<16x16xf32>
      %536 = arith.mulf %532, %535 : vector<16x16xf32>
      %537 = arith.addf %530, %536 : vector<16x16xf32>
      %c7_295 = arith.constant 7 : index
      %c7_296 = arith.constant 7 : index
      %c6_297 = arith.constant 6 : index
      %538 = vector.load %arg7[%c7_295, %c7_296, %c6_297] : memref<8x29x26xf32, #tpu.memory_space<vmem>>, vector<1x16x16xf32>
      %539 = vector.shape_cast %538 : vector<1x16x16xf32> to vector<16x16xf32>
      %540 = arith.index_cast %522 : i32 to index
      %c2_298 = arith.constant 2 : index
      %541 = memref.load %arg4[%540, %c2_298] : memref<64x11xf32, #tpu.memory_space<smem>>
      %542 = vector.broadcast %541 : f32 to vector<16x16xf32>
      %543 = arith.mulf %539, %542 : vector<16x16xf32>
      %544 = arith.addf %537, %543 : vector<16x16xf32>
      %c7_299 = arith.constant 7 : index
      %c8_300 = arith.constant 8 : index
      %c4_301 = arith.constant 4 : index
      %545 = vector.load %arg7[%c7_299, %c8_300, %c4_301] : memref<8x29x26xf32, #tpu.memory_space<vmem>>, vector<1x16x16xf32>
      %546 = vector.shape_cast %545 : vector<1x16x16xf32> to vector<16x16xf32>
      %547 = arith.index_cast %522 : i32 to index
      %c3_302 = arith.constant 3 : index
      %548 = memref.load %arg4[%547, %c3_302] : memref<64x11xf32, #tpu.memory_space<smem>>
      %549 = vector.broadcast %548 : f32 to vector<16x16xf32>
      %550 = arith.mulf %546, %549 : vector<16x16xf32>
      %551 = arith.addf %544, %550 : vector<16x16xf32>
      %c7_303 = arith.constant 7 : index
      %c8_304 = arith.constant 8 : index
      %c5_305 = arith.constant 5 : index
      %552 = vector.load %arg7[%c7_303, %c8_304, %c5_305] : memref<8x29x26xf32, #tpu.memory_space<vmem>>, vector<1x16x16xf32>
      %553 = vector.shape_cast %552 : vector<1x16x16xf32> to vector<16x16xf32>
      %554 = arith.index_cast %522 : i32 to index
      %c4_306 = arith.constant 4 : index
      %555 = memref.load %arg4[%554, %c4_306] : memref<64x11xf32, #tpu.memory_space<smem>>
      %556 = vector.broadcast %555 : f32 to vector<16x16xf32>
      %557 = arith.mulf %553, %556 : vector<16x16xf32>
      %558 = arith.addf %551, %557 : vector<16x16xf32>
      %c7_307 = arith.constant 7 : index
      %c8_308 = arith.constant 8 : index
      %c6_309 = arith.constant 6 : index
      %559 = vector.load %arg7[%c7_307, %c8_308, %c6_309] : memref<8x29x26xf32, #tpu.memory_space<vmem>>, vector<1x16x16xf32>
      %560 = vector.shape_cast %559 : vector<1x16x16xf32> to vector<16x16xf32>
      %561 = arith.index_cast %522 : i32 to index
      %c5_310 = arith.constant 5 : index
      %562 = memref.load %arg4[%561, %c5_310] : memref<64x11xf32, #tpu.memory_space<smem>>
      %563 = vector.broadcast %562 : f32 to vector<16x16xf32>
      %564 = arith.mulf %560, %563 : vector<16x16xf32>
      %565 = arith.addf %558, %564 : vector<16x16xf32>
      %c7_311 = arith.constant 7 : index
      %c9_312 = arith.constant 9 : index
      %c4_313 = arith.constant 4 : index
      %566 = vector.load %arg7[%c7_311, %c9_312, %c4_313] : memref<8x29x26xf32, #tpu.memory_space<vmem>>, vector<1x16x16xf32>
      %567 = vector.shape_cast %566 : vector<1x16x16xf32> to vector<16x16xf32>
      %568 = arith.index_cast %522 : i32 to index
      %c6_314 = arith.constant 6 : index
      %569 = memref.load %arg4[%568, %c6_314] : memref<64x11xf32, #tpu.memory_space<smem>>
      %570 = vector.broadcast %569 : f32 to vector<16x16xf32>
      %571 = arith.mulf %567, %570 : vector<16x16xf32>
      %572 = arith.addf %565, %571 : vector<16x16xf32>
      %c7_315 = arith.constant 7 : index
      %c9_316 = arith.constant 9 : index
      %c5_317 = arith.constant 5 : index
      %573 = vector.load %arg7[%c7_315, %c9_316, %c5_317] : memref<8x29x26xf32, #tpu.memory_space<vmem>>, vector<1x16x16xf32>
      %574 = vector.shape_cast %573 : vector<1x16x16xf32> to vector<16x16xf32>
      %575 = arith.index_cast %522 : i32 to index
      %c7_318 = arith.constant 7 : index
      %576 = memref.load %arg4[%575, %c7_318] : memref<64x11xf32, #tpu.memory_space<smem>>
      %577 = vector.broadcast %576 : f32 to vector<16x16xf32>
      %578 = arith.mulf %574, %577 : vector<16x16xf32>
      %579 = arith.addf %572, %578 : vector<16x16xf32>
      %c7_319 = arith.constant 7 : index
      %c9_320 = arith.constant 9 : index
      %c6_321 = arith.constant 6 : index
      %580 = vector.load %arg7[%c7_319, %c9_320, %c6_321] : memref<8x29x26xf32, #tpu.memory_space<vmem>>, vector<1x16x16xf32>
      %581 = vector.shape_cast %580 : vector<1x16x16xf32> to vector<16x16xf32>
      %582 = arith.index_cast %522 : i32 to index
      %c8_322 = arith.constant 8 : index
      %583 = memref.load %arg4[%582, %c8_322] : memref<64x11xf32, #tpu.memory_space<smem>>
      %584 = vector.broadcast %583 : f32 to vector<16x16xf32>
      %585 = arith.mulf %581, %584 : vector<16x16xf32>
      %586 = arith.addf %579, %585 : vector<16x16xf32>
      %587 = arith.index_cast %522 : i32 to index
      %588 = memref.load %arg5[%587] : memref<64xf32, #tpu.memory_space<smem>>
      %589 = vector.broadcast %588 : f32 to vector<16x16xf32>
      %590 = arith.addf %586, %589 : vector<16x16xf32>
      %c0_323 = arith.constant 0 : index
      %c7_324 = arith.constant 7 : index
      %c0_325 = arith.constant 0 : index
      %c0_326 = arith.constant 0 : index
      %591 = vector.load %arg6[%c0_323, %c7_324, %c0_325, %c0_326] : memref<1x8x16x16xf32, #tpu.memory_space<vmem>>, vector<1x1x16x16xf32>
      %592 = vector.shape_cast %591 : vector<1x1x16x16xf32> to vector<16x16xf32>
      %593 = vector.shape_cast %590 : vector<16x16xf32> to vector<1x1x16x16xf32>
      tpu.vector_store %arg6[%c0_323, %c7_324, %c0_325, %c0_326], %593 {strides = array<i32>} : memref<1x8x16x16xf32, #tpu.memory_space<vmem>>, vector<1x1x16x16xf32>,
    } else {
    }
    %c2_i32 = arith.constant 2 : i32
    %12 = arith.cmpi eq, %1, %c2_i32 : i32
    %13 = arith.extui %12 : i1 to i32
    %c0_i32_4 = arith.constant 0 : i32
    %14 = arith.cmpi ne, %13, %c0_i32_4 : i32
    scf.if %14 {
      %c0_i32_6 = arith.constant 0 : i32
      %18 = arith.addi %2, %c0_i32_6 : i32
      %cst = arith.constant 0.000000e+00 : f32
      %19 = vector.broadcast %cst : f32 to vector<16x16xf32>
      %c0 = arith.constant 0 : index
      %c8 = arith.constant 8 : index
      %c0_7 = arith.constant 0 : index
      %20 = vector.load %arg7[%c0, %c8, %c0_7] : memref<8x29x26xf32, #tpu.memory_space<vmem>>, vector<1x16x16xf32>
      %21 = vector.shape_cast %20 : vector<1x16x16xf32> to vector<16x16xf32>
      %22 = arith.index_cast %18 : i32 to index
      %c0_8 = arith.constant 0 : index
      %23 = memref.load %arg4[%22, %c0_8] : memref<64x11xf32, #tpu.memory_space<smem>>
      %24 = vector.broadcast %23 : f32 to vector<16x16xf32>
      %25 = arith.mulf %21, %24 : vector<16x16xf32>
      %26 = arith.addf %19, %25 : vector<16x16xf32>
      %c0_9 = arith.constant 0 : index
      %c8_10 = arith.constant 8 : index
      %c1 = arith.constant 1 : index
      %27 = vector.load %arg7[%c0_9, %c8_10, %c1] : memref<8x29x26xf32, #tpu.memory_space<vmem>>, vector<1x16x16xf32>
      %28 = vector.shape_cast %27 : vector<1x16x16xf32> to vector<16x16xf32>
      %29 = arith.index_cast %18 : i32 to index
      %c1_11 = arith.constant 1 : index
      %30 = memref.load %arg4[%29, %c1_11] : memref<64x11xf32, #tpu.memory_space<smem>>
      %31 = vector.broadcast %30 : f32 to vector<16x16xf32>
      %32 = arith.mulf %28, %31 : vector<16x16xf32>
      %33 = arith.addf %26, %32 : vector<16x16xf32>
      %c0_12 = arith.constant 0 : index
      %c8_13 = arith.constant 8 : index
      %c2 = arith.constant 2 : index
      %34 = vector.load %arg7[%c0_12, %c8_13, %c2] : memref<8x29x26xf32, #tpu.memory_space<vmem>>, vector<1x16x16xf32>
      %35 = vector.shape_cast %34 : vector<1x16x16xf32> to vector<16x16xf32>
      %36 = arith.index_cast %18 : i32 to index
      %c2_14 = arith.constant 2 : index
      %37 = memref.load %arg4[%36, %c2_14] : memref<64x11xf32, #tpu.memory_space<smem>>
      %38 = vector.broadcast %37 : f32 to vector<16x16xf32>
      %39 = arith.mulf %35, %38 : vector<16x16xf32>
      %40 = arith.addf %33, %39 : vector<16x16xf32>
      %c0_15 = arith.constant 0 : index
      %c8_16 = arith.constant 8 : index
      %c3 = arith.constant 3 : index
      %41 = vector.load %arg7[%c0_15, %c8_16, %c3] : memref<8x29x26xf32, #tpu.memory_space<vmem>>, vector<1x16x16xf32>
      %42 = vector.shape_cast %41 : vector<1x16x16xf32> to vector<16x16xf32>
      %43 = arith.index_cast %18 : i32 to index
      %c3_17 = arith.constant 3 : index
      %44 = memref.load %arg4[%43, %c3_17] : memref<64x11xf32, #tpu.memory_space<smem>>
      %45 = vector.broadcast %44 : f32 to vector<16x16xf32>
      %46 = arith.mulf %42, %45 : vector<16x16xf32>
      %47 = arith.addf %40, %46 : vector<16x16xf32>
      %c0_18 = arith.constant 0 : index
      %c8_19 = arith.constant 8 : index
      %c4 = arith.constant 4 : index
      %48 = vector.load %arg7[%c0_18, %c8_19, %c4] : memref<8x29x26xf32, #tpu.memory_space<vmem>>, vector<1x16x16xf32>
      %49 = vector.shape_cast %48 : vector<1x16x16xf32> to vector<16x16xf32>
      %50 = arith.index_cast %18 : i32 to index
      %c4_20 = arith.constant 4 : index
      %51 = memref.load %arg4[%50, %c4_20] : memref<64x11xf32, #tpu.memory_space<smem>>
      %52 = vector.broadcast %51 : f32 to vector<16x16xf32>
      %53 = arith.mulf %49, %52 : vector<16x16xf32>
      %54 = arith.addf %47, %53 : vector<16x16xf32>
      %c0_21 = arith.constant 0 : index
      %c8_22 = arith.constant 8 : index
      %c5 = arith.constant 5 : index
      %55 = vector.load %arg7[%c0_21, %c8_22, %c5] : memref<8x29x26xf32, #tpu.memory_space<vmem>>, vector<1x16x16xf32>
      %56 = vector.shape_cast %55 : vector<1x16x16xf32> to vector<16x16xf32>
      %57 = arith.index_cast %18 : i32 to index
      %c5_23 = arith.constant 5 : index
      %58 = memref.load %arg4[%57, %c5_23] : memref<64x11xf32, #tpu.memory_space<smem>>
      %59 = vector.broadcast %58 : f32 to vector<16x16xf32>
      %60 = arith.mulf %56, %59 : vector<16x16xf32>
      %61 = arith.addf %54, %60 : vector<16x16xf32>
      %c0_24 = arith.constant 0 : index
      %c8_25 = arith.constant 8 : index
      %c6 = arith.constant 6 : index
      %62 = vector.load %arg7[%c0_24, %c8_25, %c6] : memref<8x29x26xf32, #tpu.memory_space<vmem>>, vector<1x16x16xf32>
      %63 = vector.shape_cast %62 : vector<1x16x16xf32> to vector<16x16xf32>
      %64 = arith.index_cast %18 : i32 to index
      %c6_26 = arith.constant 6 : index
      %65 = memref.load %arg4[%64, %c6_26] : memref<64x11xf32, #tpu.memory_space<smem>>
      %66 = vector.broadcast %65 : f32 to vector<16x16xf32>
      %67 = arith.mulf %63, %66 : vector<16x16xf32>
      %68 = arith.addf %61, %67 : vector<16x16xf32>
      %c0_27 = arith.constant 0 : index
      %c8_28 = arith.constant 8 : index
      %c7 = arith.constant 7 : index
      %69 = vector.load %arg7[%c0_27, %c8_28, %c7] : memref<8x29x26xf32, #tpu.memory_space<vmem>>, vector<1x16x16xf32>
      %70 = vector.shape_cast %69 : vector<1x16x16xf32> to vector<16x16xf32>
      %71 = arith.index_cast %18 : i32 to index
      %c7_29 = arith.constant 7 : index
      %72 = memref.load %arg4[%71, %c7_29] : memref<64x11xf32, #tpu.memory_space<smem>>
      %73 = vector.broadcast %72 : f32 to vector<16x16xf32>
      %74 = arith.mulf %70, %73 : vector<16x16xf32>
      %75 = arith.addf %68, %74 : vector<16x16xf32>
      %c0_30 = arith.constant 0 : index
      %c8_31 = arith.constant 8 : index
      %c8_32 = arith.constant 8 : index
      %76 = vector.load %arg7[%c0_30, %c8_31, %c8_32] : memref<8x29x26xf32, #tpu.memory_space<vmem>>, vector<1x16x16xf32>
      %77 = vector.shape_cast %76 : vector<1x16x16xf32> to vector<16x16xf32>
      %78 = arith.index_cast %18 : i32 to index
      %c8_33 = arith.constant 8 : index
      %79 = memref.load %arg4[%78, %c8_33] : memref<64x11xf32, #tpu.memory_space<smem>>
      %80 = vector.broadcast %79 : f32 to vector<16x16xf32>
      %81 = arith.mulf %77, %80 : vector<16x16xf32>
      %82 = arith.addf %75, %81 : vector<16x16xf32>
      %c0_34 = arith.constant 0 : index
      %c8_35 = arith.constant 8 : index
      %c9 = arith.constant 9 : index
      %83 = vector.load %arg7[%c0_34, %c8_35, %c9] : memref<8x29x26xf32, #tpu.memory_space<vmem>>, vector<1x16x16xf32>
      %84 = vector.shape_cast %83 : vector<1x16x16xf32> to vector<16x16xf32>
      %85 = arith.index_cast %18 : i32 to index
      %c9_36 = arith.constant 9 : index
      %86 = memref.load %arg4[%85, %c9_36] : memref<64x11xf32, #tpu.memory_space<smem>>
      %87 = vector.broadcast %86 : f32 to vector<16x16xf32>
      %88 = arith.mulf %84, %87 : vector<16x16xf32>
      %89 = arith.addf %82, %88 : vector<16x16xf32>
      %c0_37 = arith.constant 0 : index
      %c8_38 = arith.constant 8 : index
      %c10 = arith.constant 10 : index
      %90 = vector.load %arg7[%c0_37, %c8_38, %c10] : memref<8x29x26xf32, #tpu.memory_space<vmem>>, vector<1x16x16xf32>
      %91 = vector.shape_cast %90 : vector<1x16x16xf32> to vector<16x16xf32>
      %92 = arith.index_cast %18 : i32 to index
      %c10_39 = arith.constant 10 : index
      %93 = memref.load %arg4[%92, %c10_39] : memref<64x11xf32, #tpu.memory_space<smem>>
      %94 = vector.broadcast %93 : f32 to vector<16x16xf32>
      %95 = arith.mulf %91, %94 : vector<16x16xf32>
      %96 = arith.addf %89, %95 : vector<16x16xf32>
      %97 = arith.index_cast %18 : i32 to index
      %98 = memref.load %arg5[%97] : memref<64xf32, #tpu.memory_space<smem>>
      %99 = vector.broadcast %98 : f32 to vector<16x16xf32>
      %100 = arith.addf %96, %99 : vector<16x16xf32>
      %c0_40 = arith.constant 0 : index
      %c0_41 = arith.constant 0 : index
      %c0_42 = arith.constant 0 : index
      %c0_43 = arith.constant 0 : index
      %101 = vector.load %arg6[%c0_40, %c0_41, %c0_42, %c0_43] : memref<1x8x16x16xf32, #tpu.memory_space<vmem>>, vector<1x1x16x16xf32>
      %102 = vector.shape_cast %101 : vector<1x1x16x16xf32> to vector<16x16xf32>
      %103 = vector.shape_cast %100 : vector<16x16xf32> to vector<1x1x16x16xf32>
      tpu.vector_store %arg6[%c0_40, %c0_41, %c0_42, %c0_43], %103 {strides = array<i32>} : memref<1x8x16x16xf32, #tpu.memory_space<vmem>>, vector<1x1x16x16xf32>,
      %c1_i32_44 = arith.constant 1 : i32
      %104 = arith.addi %2, %c1_i32_44 : i32
      %cst_45 = arith.constant 0.000000e+00 : f32
      %105 = vector.broadcast %cst_45 : f32 to vector<16x16xf32>
      %c1_46 = arith.constant 1 : index
      %c8_47 = arith.constant 8 : index
      %c0_48 = arith.constant 0 : index
      %106 = vector.load %arg7[%c1_46, %c8_47, %c0_48] : memref<8x29x26xf32, #tpu.memory_space<vmem>>, vector<1x16x16xf32>
      %107 = vector.shape_cast %106 : vector<1x16x16xf32> to vector<16x16xf32>
      %108 = arith.index_cast %104 : i32 to index
      %c0_49 = arith.constant 0 : index
      %109 = memref.load %arg4[%108, %c0_49] : memref<64x11xf32, #tpu.memory_space<smem>>
      %110 = vector.broadcast %109 : f32 to vector<16x16xf32>
      %111 = arith.mulf %107, %110 : vector<16x16xf32>
      %112 = arith.addf %105, %111 : vector<16x16xf32>
      %c1_50 = arith.constant 1 : index
      %c8_51 = arith.constant 8 : index
      %c1_52 = arith.constant 1 : index
      %113 = vector.load %arg7[%c1_50, %c8_51, %c1_52] : memref<8x29x26xf32, #tpu.memory_space<vmem>>, vector<1x16x16xf32>
      %114 = vector.shape_cast %113 : vector<1x16x16xf32> to vector<16x16xf32>
      %115 = arith.index_cast %104 : i32 to index
      %c1_53 = arith.constant 1 : index
      %116 = memref.load %arg4[%115, %c1_53] : memref<64x11xf32, #tpu.memory_space<smem>>
      %117 = vector.broadcast %116 : f32 to vector<16x16xf32>
      %118 = arith.mulf %114, %117 : vector<16x16xf32>
      %119 = arith.addf %112, %118 : vector<16x16xf32>
      %c1_54 = arith.constant 1 : index
      %c8_55 = arith.constant 8 : index
      %c2_56 = arith.constant 2 : index
      %120 = vector.load %arg7[%c1_54, %c8_55, %c2_56] : memref<8x29x26xf32, #tpu.memory_space<vmem>>, vector<1x16x16xf32>
      %121 = vector.shape_cast %120 : vector<1x16x16xf32> to vector<16x16xf32>
      %122 = arith.index_cast %104 : i32 to index
      %c2_57 = arith.constant 2 : index
      %123 = memref.load %arg4[%122, %c2_57] : memref<64x11xf32, #tpu.memory_space<smem>>
      %124 = vector.broadcast %123 : f32 to vector<16x16xf32>
      %125 = arith.mulf %121, %124 : vector<16x16xf32>
      %126 = arith.addf %119, %125 : vector<16x16xf32>
      %c1_58 = arith.constant 1 : index
      %c8_59 = arith.constant 8 : index
      %c3_60 = arith.constant 3 : index
      %127 = vector.load %arg7[%c1_58, %c8_59, %c3_60] : memref<8x29x26xf32, #tpu.memory_space<vmem>>, vector<1x16x16xf32>
      %128 = vector.shape_cast %127 : vector<1x16x16xf32> to vector<16x16xf32>
      %129 = arith.index_cast %104 : i32 to index
      %c3_61 = arith.constant 3 : index
      %130 = memref.load %arg4[%129, %c3_61] : memref<64x11xf32, #tpu.memory_space<smem>>
      %131 = vector.broadcast %130 : f32 to vector<16x16xf32>
      %132 = arith.mulf %128, %131 : vector<16x16xf32>
      %133 = arith.addf %126, %132 : vector<16x16xf32>
      %c1_62 = arith.constant 1 : index
      %c8_63 = arith.constant 8 : index
      %c4_64 = arith.constant 4 : index
      %134 = vector.load %arg7[%c1_62, %c8_63, %c4_64] : memref<8x29x26xf32, #tpu.memory_space<vmem>>, vector<1x16x16xf32>
      %135 = vector.shape_cast %134 : vector<1x16x16xf32> to vector<16x16xf32>
      %136 = arith.index_cast %104 : i32 to index
      %c4_65 = arith.constant 4 : index
      %137 = memref.load %arg4[%136, %c4_65] : memref<64x11xf32, #tpu.memory_space<smem>>
      %138 = vector.broadcast %137 : f32 to vector<16x16xf32>
      %139 = arith.mulf %135, %138 : vector<16x16xf32>
      %140 = arith.addf %133, %139 : vector<16x16xf32>
      %c1_66 = arith.constant 1 : index
      %c8_67 = arith.constant 8 : index
      %c5_68 = arith.constant 5 : index
      %141 = vector.load %arg7[%c1_66, %c8_67, %c5_68] : memref<8x29x26xf32, #tpu.memory_space<vmem>>, vector<1x16x16xf32>
      %142 = vector.shape_cast %141 : vector<1x16x16xf32> to vector<16x16xf32>
      %143 = arith.index_cast %104 : i32 to index
      %c5_69 = arith.constant 5 : index
      %144 = memref.load %arg4[%143, %c5_69] : memref<64x11xf32, #tpu.memory_space<smem>>
      %145 = vector.broadcast %144 : f32 to vector<16x16xf32>
      %146 = arith.mulf %142, %145 : vector<16x16xf32>
      %147 = arith.addf %140, %146 : vector<16x16xf32>
      %c1_70 = arith.constant 1 : index
      %c8_71 = arith.constant 8 : index
      %c6_72 = arith.constant 6 : index
      %148 = vector.load %arg7[%c1_70, %c8_71, %c6_72] : memref<8x29x26xf32, #tpu.memory_space<vmem>>, vector<1x16x16xf32>
      %149 = vector.shape_cast %148 : vector<1x16x16xf32> to vector<16x16xf32>
      %150 = arith.index_cast %104 : i32 to index
      %c6_73 = arith.constant 6 : index
      %151 = memref.load %arg4[%150, %c6_73] : memref<64x11xf32, #tpu.memory_space<smem>>
      %152 = vector.broadcast %151 : f32 to vector<16x16xf32>
      %153 = arith.mulf %149, %152 : vector<16x16xf32>
      %154 = arith.addf %147, %153 : vector<16x16xf32>
      %c1_74 = arith.constant 1 : index
      %c8_75 = arith.constant 8 : index
      %c7_76 = arith.constant 7 : index
      %155 = vector.load %arg7[%c1_74, %c8_75, %c7_76] : memref<8x29x26xf32, #tpu.memory_space<vmem>>, vector<1x16x16xf32>
      %156 = vector.shape_cast %155 : vector<1x16x16xf32> to vector<16x16xf32>
      %157 = arith.index_cast %104 : i32 to index
      %c7_77 = arith.constant 7 : index
      %158 = memref.load %arg4[%157, %c7_77] : memref<64x11xf32, #tpu.memory_space<smem>>
      %159 = vector.broadcast %158 : f32 to vector<16x16xf32>
      %160 = arith.mulf %156, %159 : vector<16x16xf32>
      %161 = arith.addf %154, %160 : vector<16x16xf32>
      %c1_78 = arith.constant 1 : index
      %c8_79 = arith.constant 8 : index
      %c8_80 = arith.constant 8 : index
      %162 = vector.load %arg7[%c1_78, %c8_79, %c8_80] : memref<8x29x26xf32, #tpu.memory_space<vmem>>, vector<1x16x16xf32>
      %163 = vector.shape_cast %162 : vector<1x16x16xf32> to vector<16x16xf32>
      %164 = arith.index_cast %104 : i32 to index
      %c8_81 = arith.constant 8 : index
      %165 = memref.load %arg4[%164, %c8_81] : memref<64x11xf32, #tpu.memory_space<smem>>
      %166 = vector.broadcast %165 : f32 to vector<16x16xf32>
      %167 = arith.mulf %163, %166 : vector<16x16xf32>
      %168 = arith.addf %161, %167 : vector<16x16xf32>
      %c1_82 = arith.constant 1 : index
      %c8_83 = arith.constant 8 : index
      %c9_84 = arith.constant 9 : index
      %169 = vector.load %arg7[%c1_82, %c8_83, %c9_84] : memref<8x29x26xf32, #tpu.memory_space<vmem>>, vector<1x16x16xf32>
      %170 = vector.shape_cast %169 : vector<1x16x16xf32> to vector<16x16xf32>
      %171 = arith.index_cast %104 : i32 to index
      %c9_85 = arith.constant 9 : index
      %172 = memref.load %arg4[%171, %c9_85] : memref<64x11xf32, #tpu.memory_space<smem>>
      %173 = vector.broadcast %172 : f32 to vector<16x16xf32>
      %174 = arith.mulf %170, %173 : vector<16x16xf32>
      %175 = arith.addf %168, %174 : vector<16x16xf32>
      %c1_86 = arith.constant 1 : index
      %c8_87 = arith.constant 8 : index
      %c10_88 = arith.constant 10 : index
      %176 = vector.load %arg7[%c1_86, %c8_87, %c10_88] : memref<8x29x26xf32, #tpu.memory_space<vmem>>, vector<1x16x16xf32>
      %177 = vector.shape_cast %176 : vector<1x16x16xf32> to vector<16x16xf32>
      %178 = arith.index_cast %104 : i32 to index
      %c10_89 = arith.constant 10 : index
      %179 = memref.load %arg4[%178, %c10_89] : memref<64x11xf32, #tpu.memory_space<smem>>
      %180 = vector.broadcast %179 : f32 to vector<16x16xf32>
      %181 = arith.mulf %177, %180 : vector<16x16xf32>
      %182 = arith.addf %175, %181 : vector<16x16xf32>
      %183 = arith.index_cast %104 : i32 to index
      %184 = memref.load %arg5[%183] : memref<64xf32, #tpu.memory_space<smem>>
      %185 = vector.broadcast %184 : f32 to vector<16x16xf32>
      %186 = arith.addf %182, %185 : vector<16x16xf32>
      %c0_90 = arith.constant 0 : index
      %c1_91 = arith.constant 1 : index
      %c0_92 = arith.constant 0 : index
      %c0_93 = arith.constant 0 : index
      %187 = vector.load %arg6[%c0_90, %c1_91, %c0_92, %c0_93] : memref<1x8x16x16xf32, #tpu.memory_space<vmem>>, vector<1x1x16x16xf32>
      %188 = vector.shape_cast %187 : vector<1x1x16x16xf32> to vector<16x16xf32>
      %189 = vector.shape_cast %186 : vector<16x16xf32> to vector<1x1x16x16xf32>
      tpu.vector_store %arg6[%c0_90, %c1_91, %c0_92, %c0_93], %189 {strides = array<i32>} : memref<1x8x16x16xf32, #tpu.memory_space<vmem>>, vector<1x1x16x16xf32>,
      %c2_i32_94 = arith.constant 2 : i32
      %190 = arith.addi %2, %c2_i32_94 : i32
      %cst_95 = arith.constant 0.000000e+00 : f32
      %191 = vector.broadcast %cst_95 : f32 to vector<16x16xf32>
      %c2_96 = arith.constant 2 : index
      %c8_97 = arith.constant 8 : index
      %c0_98 = arith.constant 0 : index
      %192 = vector.load %arg7[%c2_96, %c8_97, %c0_98] : memref<8x29x26xf32, #tpu.memory_space<vmem>>, vector<1x16x16xf32>
      %193 = vector.shape_cast %192 : vector<1x16x16xf32> to vector<16x16xf32>
      %194 = arith.index_cast %190 : i32 to index
      %c0_99 = arith.constant 0 : index
      %195 = memref.load %arg4[%194, %c0_99] : memref<64x11xf32, #tpu.memory_space<smem>>
      %196 = vector.broadcast %195 : f32 to vector<16x16xf32>
      %197 = arith.mulf %193, %196 : vector<16x16xf32>
      %198 = arith.addf %191, %197 : vector<16x16xf32>
      %c2_100 = arith.constant 2 : index
      %c8_101 = arith.constant 8 : index
      %c1_102 = arith.constant 1 : index
      %199 = vector.load %arg7[%c2_100, %c8_101, %c1_102] : memref<8x29x26xf32, #tpu.memory_space<vmem>>, vector<1x16x16xf32>
      %200 = vector.shape_cast %199 : vector<1x16x16xf32> to vector<16x16xf32>
      %201 = arith.index_cast %190 : i32 to index
      %c1_103 = arith.constant 1 : index
      %202 = memref.load %arg4[%201, %c1_103] : memref<64x11xf32, #tpu.memory_space<smem>>
      %203 = vector.broadcast %202 : f32 to vector<16x16xf32>
      %204 = arith.mulf %200, %203 : vector<16x16xf32>
      %205 = arith.addf %198, %204 : vector<16x16xf32>
      %c2_104 = arith.constant 2 : index
      %c8_105 = arith.constant 8 : index
      %c2_106 = arith.constant 2 : index
      %206 = vector.load %arg7[%c2_104, %c8_105, %c2_106] : memref<8x29x26xf32, #tpu.memory_space<vmem>>, vector<1x16x16xf32>
      %207 = vector.shape_cast %206 : vector<1x16x16xf32> to vector<16x16xf32>
      %208 = arith.index_cast %190 : i32 to index
      %c2_107 = arith.constant 2 : index
      %209 = memref.load %arg4[%208, %c2_107] : memref<64x11xf32, #tpu.memory_space<smem>>
      %210 = vector.broadcast %209 : f32 to vector<16x16xf32>
      %211 = arith.mulf %207, %210 : vector<16x16xf32>
      %212 = arith.addf %205, %211 : vector<16x16xf32>
      %c2_108 = arith.constant 2 : index
      %c8_109 = arith.constant 8 : index
      %c3_110 = arith.constant 3 : index
      %213 = vector.load %arg7[%c2_108, %c8_109, %c3_110] : memref<8x29x26xf32, #tpu.memory_space<vmem>>, vector<1x16x16xf32>
      %214 = vector.shape_cast %213 : vector<1x16x16xf32> to vector<16x16xf32>
      %215 = arith.index_cast %190 : i32 to index
      %c3_111 = arith.constant 3 : index
      %216 = memref.load %arg4[%215, %c3_111] : memref<64x11xf32, #tpu.memory_space<smem>>
      %217 = vector.broadcast %216 : f32 to vector<16x16xf32>
      %218 = arith.mulf %214, %217 : vector<16x16xf32>
      %219 = arith.addf %212, %218 : vector<16x16xf32>
      %c2_112 = arith.constant 2 : index
      %c8_113 = arith.constant 8 : index
      %c4_114 = arith.constant 4 : index
      %220 = vector.load %arg7[%c2_112, %c8_113, %c4_114] : memref<8x29x26xf32, #tpu.memory_space<vmem>>, vector<1x16x16xf32>
      %221 = vector.shape_cast %220 : vector<1x16x16xf32> to vector<16x16xf32>
      %222 = arith.index_cast %190 : i32 to index
      %c4_115 = arith.constant 4 : index
      %223 = memref.load %arg4[%222, %c4_115] : memref<64x11xf32, #tpu.memory_space<smem>>
      %224 = vector.broadcast %223 : f32 to vector<16x16xf32>
      %225 = arith.mulf %221, %224 : vector<16x16xf32>
      %226 = arith.addf %219, %225 : vector<16x16xf32>
      %c2_116 = arith.constant 2 : index
      %c8_117 = arith.constant 8 : index
      %c5_118 = arith.constant 5 : index
      %227 = vector.load %arg7[%c2_116, %c8_117, %c5_118] : memref<8x29x26xf32, #tpu.memory_space<vmem>>, vector<1x16x16xf32>
      %228 = vector.shape_cast %227 : vector<1x16x16xf32> to vector<16x16xf32>
      %229 = arith.index_cast %190 : i32 to index
      %c5_119 = arith.constant 5 : index
      %230 = memref.load %arg4[%229, %c5_119] : memref<64x11xf32, #tpu.memory_space<smem>>
      %231 = vector.broadcast %230 : f32 to vector<16x16xf32>
      %232 = arith.mulf %228, %231 : vector<16x16xf32>
      %233 = arith.addf %226, %232 : vector<16x16xf32>
      %c2_120 = arith.constant 2 : index
      %c8_121 = arith.constant 8 : index
      %c6_122 = arith.constant 6 : index
      %234 = vector.load %arg7[%c2_120, %c8_121, %c6_122] : memref<8x29x26xf32, #tpu.memory_space<vmem>>, vector<1x16x16xf32>
      %235 = vector.shape_cast %234 : vector<1x16x16xf32> to vector<16x16xf32>
      %236 = arith.index_cast %190 : i32 to index
      %c6_123 = arith.constant 6 : index
      %237 = memref.load %arg4[%236, %c6_123] : memref<64x11xf32, #tpu.memory_space<smem>>
      %238 = vector.broadcast %237 : f32 to vector<16x16xf32>
      %239 = arith.mulf %235, %238 : vector<16x16xf32>
      %240 = arith.addf %233, %239 : vector<16x16xf32>
      %c2_124 = arith.constant 2 : index
      %c8_125 = arith.constant 8 : index
      %c7_126 = arith.constant 7 : index
      %241 = vector.load %arg7[%c2_124, %c8_125, %c7_126] : memref<8x29x26xf32, #tpu.memory_space<vmem>>, vector<1x16x16xf32>
      %242 = vector.shape_cast %241 : vector<1x16x16xf32> to vector<16x16xf32>
      %243 = arith.index_cast %190 : i32 to index
      %c7_127 = arith.constant 7 : index
      %244 = memref.load %arg4[%243, %c7_127] : memref<64x11xf32, #tpu.memory_space<smem>>
      %245 = vector.broadcast %244 : f32 to vector<16x16xf32>
      %246 = arith.mulf %242, %245 : vector<16x16xf32>
      %247 = arith.addf %240, %246 : vector<16x16xf32>
      %c2_128 = arith.constant 2 : index
      %c8_129 = arith.constant 8 : index
      %c8_130 = arith.constant 8 : index
      %248 = vector.load %arg7[%c2_128, %c8_129, %c8_130] : memref<8x29x26xf32, #tpu.memory_space<vmem>>, vector<1x16x16xf32>
      %249 = vector.shape_cast %248 : vector<1x16x16xf32> to vector<16x16xf32>
      %250 = arith.index_cast %190 : i32 to index
      %c8_131 = arith.constant 8 : index
      %251 = memref.load %arg4[%250, %c8_131] : memref<64x11xf32, #tpu.memory_space<smem>>
      %252 = vector.broadcast %251 : f32 to vector<16x16xf32>
      %253 = arith.mulf %249, %252 : vector<16x16xf32>
      %254 = arith.addf %247, %253 : vector<16x16xf32>
      %c2_132 = arith.constant 2 : index
      %c8_133 = arith.constant 8 : index
      %c9_134 = arith.constant 9 : index
      %255 = vector.load %arg7[%c2_132, %c8_133, %c9_134] : memref<8x29x26xf32, #tpu.memory_space<vmem>>, vector<1x16x16xf32>
      %256 = vector.shape_cast %255 : vector<1x16x16xf32> to vector<16x16xf32>
      %257 = arith.index_cast %190 : i32 to index
      %c9_135 = arith.constant 9 : index
      %258 = memref.load %arg4[%257, %c9_135] : memref<64x11xf32, #tpu.memory_space<smem>>
      %259 = vector.broadcast %258 : f32 to vector<16x16xf32>
      %260 = arith.mulf %256, %259 : vector<16x16xf32>
      %261 = arith.addf %254, %260 : vector<16x16xf32>
      %c2_136 = arith.constant 2 : index
      %c8_137 = arith.constant 8 : index
      %c10_138 = arith.constant 10 : index
      %262 = vector.load %arg7[%c2_136, %c8_137, %c10_138] : memref<8x29x26xf32, #tpu.memory_space<vmem>>, vector<1x16x16xf32>
      %263 = vector.shape_cast %262 : vector<1x16x16xf32> to vector<16x16xf32>
      %264 = arith.index_cast %190 : i32 to index
      %c10_139 = arith.constant 10 : index
      %265 = memref.load %arg4[%264, %c10_139] : memref<64x11xf32, #tpu.memory_space<smem>>
      %266 = vector.broadcast %265 : f32 to vector<16x16xf32>
      %267 = arith.mulf %263, %266 : vector<16x16xf32>
      %268 = arith.addf %261, %267 : vector<16x16xf32>
      %269 = arith.index_cast %190 : i32 to index
      %270 = memref.load %arg5[%269] : memref<64xf32, #tpu.memory_space<smem>>
      %271 = vector.broadcast %270 : f32 to vector<16x16xf32>
      %272 = arith.addf %268, %271 : vector<16x16xf32>
      %c0_140 = arith.constant 0 : index
      %c2_141 = arith.constant 2 : index
      %c0_142 = arith.constant 0 : index
      %c0_143 = arith.constant 0 : index
      %273 = vector.load %arg6[%c0_140, %c2_141, %c0_142, %c0_143] : memref<1x8x16x16xf32, #tpu.memory_space<vmem>>, vector<1x1x16x16xf32>
      %274 = vector.shape_cast %273 : vector<1x1x16x16xf32> to vector<16x16xf32>
      %275 = vector.shape_cast %272 : vector<16x16xf32> to vector<1x1x16x16xf32>
      tpu.vector_store %arg6[%c0_140, %c2_141, %c0_142, %c0_143], %275 {strides = array<i32>} : memref<1x8x16x16xf32, #tpu.memory_space<vmem>>, vector<1x1x16x16xf32>,
      %c3_i32_144 = arith.constant 3 : i32
      %276 = arith.addi %2, %c3_i32_144 : i32
      %cst_145 = arith.constant 0.000000e+00 : f32
      %277 = vector.broadcast %cst_145 : f32 to vector<16x16xf32>
      %c3_146 = arith.constant 3 : index
      %c8_147 = arith.constant 8 : index
      %c0_148 = arith.constant 0 : index
      %278 = vector.load %arg7[%c3_146, %c8_147, %c0_148] : memref<8x29x26xf32, #tpu.memory_space<vmem>>, vector<1x16x16xf32>
      %279 = vector.shape_cast %278 : vector<1x16x16xf32> to vector<16x16xf32>
      %280 = arith.index_cast %276 : i32 to index
      %c0_149 = arith.constant 0 : index
      %281 = memref.load %arg4[%280, %c0_149] : memref<64x11xf32, #tpu.memory_space<smem>>
      %282 = vector.broadcast %281 : f32 to vector<16x16xf32>
      %283 = arith.mulf %279, %282 : vector<16x16xf32>
      %284 = arith.addf %277, %283 : vector<16x16xf32>
      %c3_150 = arith.constant 3 : index
      %c8_151 = arith.constant 8 : index
      %c1_152 = arith.constant 1 : index
      %285 = vector.load %arg7[%c3_150, %c8_151, %c1_152] : memref<8x29x26xf32, #tpu.memory_space<vmem>>, vector<1x16x16xf32>
      %286 = vector.shape_cast %285 : vector<1x16x16xf32> to vector<16x16xf32>
      %287 = arith.index_cast %276 : i32 to index
      %c1_153 = arith.constant 1 : index
      %288 = memref.load %arg4[%287, %c1_153] : memref<64x11xf32, #tpu.memory_space<smem>>
      %289 = vector.broadcast %288 : f32 to vector<16x16xf32>
      %290 = arith.mulf %286, %289 : vector<16x16xf32>
      %291 = arith.addf %284, %290 : vector<16x16xf32>
      %c3_154 = arith.constant 3 : index
      %c8_155 = arith.constant 8 : index
      %c2_156 = arith.constant 2 : index
      %292 = vector.load %arg7[%c3_154, %c8_155, %c2_156] : memref<8x29x26xf32, #tpu.memory_space<vmem>>, vector<1x16x16xf32>
      %293 = vector.shape_cast %292 : vector<1x16x16xf32> to vector<16x16xf32>
      %294 = arith.index_cast %276 : i32 to index
      %c2_157 = arith.constant 2 : index
      %295 = memref.load %arg4[%294, %c2_157] : memref<64x11xf32, #tpu.memory_space<smem>>
      %296 = vector.broadcast %295 : f32 to vector<16x16xf32>
      %297 = arith.mulf %293, %296 : vector<16x16xf32>
      %298 = arith.addf %291, %297 : vector<16x16xf32>
      %c3_158 = arith.constant 3 : index
      %c8_159 = arith.constant 8 : index
      %c3_160 = arith.constant 3 : index
      %299 = vector.load %arg7[%c3_158, %c8_159, %c3_160] : memref<8x29x26xf32, #tpu.memory_space<vmem>>, vector<1x16x16xf32>
      %300 = vector.shape_cast %299 : vector<1x16x16xf32> to vector<16x16xf32>
      %301 = arith.index_cast %276 : i32 to index
      %c3_161 = arith.constant 3 : index
      %302 = memref.load %arg4[%301, %c3_161] : memref<64x11xf32, #tpu.memory_space<smem>>
      %303 = vector.broadcast %302 : f32 to vector<16x16xf32>
      %304 = arith.mulf %300, %303 : vector<16x16xf32>
      %305 = arith.addf %298, %304 : vector<16x16xf32>
      %c3_162 = arith.constant 3 : index
      %c8_163 = arith.constant 8 : index
      %c4_164 = arith.constant 4 : index
      %306 = vector.load %arg7[%c3_162, %c8_163, %c4_164] : memref<8x29x26xf32, #tpu.memory_space<vmem>>, vector<1x16x16xf32>
      %307 = vector.shape_cast %306 : vector<1x16x16xf32> to vector<16x16xf32>
      %308 = arith.index_cast %276 : i32 to index
      %c4_165 = arith.constant 4 : index
      %309 = memref.load %arg4[%308, %c4_165] : memref<64x11xf32, #tpu.memory_space<smem>>
      %310 = vector.broadcast %309 : f32 to vector<16x16xf32>
      %311 = arith.mulf %307, %310 : vector<16x16xf32>
      %312 = arith.addf %305, %311 : vector<16x16xf32>
      %c3_166 = arith.constant 3 : index
      %c8_167 = arith.constant 8 : index
      %c5_168 = arith.constant 5 : index
      %313 = vector.load %arg7[%c3_166, %c8_167, %c5_168] : memref<8x29x26xf32, #tpu.memory_space<vmem>>, vector<1x16x16xf32>
      %314 = vector.shape_cast %313 : vector<1x16x16xf32> to vector<16x16xf32>
      %315 = arith.index_cast %276 : i32 to index
      %c5_169 = arith.constant 5 : index
      %316 = memref.load %arg4[%315, %c5_169] : memref<64x11xf32, #tpu.memory_space<smem>>
      %317 = vector.broadcast %316 : f32 to vector<16x16xf32>
      %318 = arith.mulf %314, %317 : vector<16x16xf32>
      %319 = arith.addf %312, %318 : vector<16x16xf32>
      %c3_170 = arith.constant 3 : index
      %c8_171 = arith.constant 8 : index
      %c6_172 = arith.constant 6 : index
      %320 = vector.load %arg7[%c3_170, %c8_171, %c6_172] : memref<8x29x26xf32, #tpu.memory_space<vmem>>, vector<1x16x16xf32>
      %321 = vector.shape_cast %320 : vector<1x16x16xf32> to vector<16x16xf32>
      %322 = arith.index_cast %276 : i32 to index
      %c6_173 = arith.constant 6 : index
      %323 = memref.load %arg4[%322, %c6_173] : memref<64x11xf32, #tpu.memory_space<smem>>
      %324 = vector.broadcast %323 : f32 to vector<16x16xf32>
      %325 = arith.mulf %321, %324 : vector<16x16xf32>
      %326 = arith.addf %319, %325 : vector<16x16xf32>
      %c3_174 = arith.constant 3 : index
      %c8_175 = arith.constant 8 : index
      %c7_176 = arith.constant 7 : index
      %327 = vector.load %arg7[%c3_174, %c8_175, %c7_176] : memref<8x29x26xf32, #tpu.memory_space<vmem>>, vector<1x16x16xf32>
      %328 = vector.shape_cast %327 : vector<1x16x16xf32> to vector<16x16xf32>
      %329 = arith.index_cast %276 : i32 to index
      %c7_177 = arith.constant 7 : index
      %330 = memref.load %arg4[%329, %c7_177] : memref<64x11xf32, #tpu.memory_space<smem>>
      %331 = vector.broadcast %330 : f32 to vector<16x16xf32>
      %332 = arith.mulf %328, %331 : vector<16x16xf32>
      %333 = arith.addf %326, %332 : vector<16x16xf32>
      %c3_178 = arith.constant 3 : index
      %c8_179 = arith.constant 8 : index
      %c8_180 = arith.constant 8 : index
      %334 = vector.load %arg7[%c3_178, %c8_179, %c8_180] : memref<8x29x26xf32, #tpu.memory_space<vmem>>, vector<1x16x16xf32>
      %335 = vector.shape_cast %334 : vector<1x16x16xf32> to vector<16x16xf32>
      %336 = arith.index_cast %276 : i32 to index
      %c8_181 = arith.constant 8 : index
      %337 = memref.load %arg4[%336, %c8_181] : memref<64x11xf32, #tpu.memory_space<smem>>
      %338 = vector.broadcast %337 : f32 to vector<16x16xf32>
      %339 = arith.mulf %335, %338 : vector<16x16xf32>
      %340 = arith.addf %333, %339 : vector<16x16xf32>
      %c3_182 = arith.constant 3 : index
      %c8_183 = arith.constant 8 : index
      %c9_184 = arith.constant 9 : index
      %341 = vector.load %arg7[%c3_182, %c8_183, %c9_184] : memref<8x29x26xf32, #tpu.memory_space<vmem>>, vector<1x16x16xf32>
      %342 = vector.shape_cast %341 : vector<1x16x16xf32> to vector<16x16xf32>
      %343 = arith.index_cast %276 : i32 to index
      %c9_185 = arith.constant 9 : index
      %344 = memref.load %arg4[%343, %c9_185] : memref<64x11xf32, #tpu.memory_space<smem>>
      %345 = vector.broadcast %344 : f32 to vector<16x16xf32>
      %346 = arith.mulf %342, %345 : vector<16x16xf32>
      %347 = arith.addf %340, %346 : vector<16x16xf32>
      %c3_186 = arith.constant 3 : index
      %c8_187 = arith.constant 8 : index
      %c10_188 = arith.constant 10 : index
      %348 = vector.load %arg7[%c3_186, %c8_187, %c10_188] : memref<8x29x26xf32, #tpu.memory_space<vmem>>, vector<1x16x16xf32>
      %349 = vector.shape_cast %348 : vector<1x16x16xf32> to vector<16x16xf32>
      %350 = arith.index_cast %276 : i32 to index
      %c10_189 = arith.constant 10 : index
      %351 = memref.load %arg4[%350, %c10_189] : memref<64x11xf32, #tpu.memory_space<smem>>
      %352 = vector.broadcast %351 : f32 to vector<16x16xf32>
      %353 = arith.mulf %349, %352 : vector<16x16xf32>
      %354 = arith.addf %347, %353 : vector<16x16xf32>
      %355 = arith.index_cast %276 : i32 to index
      %356 = memref.load %arg5[%355] : memref<64xf32, #tpu.memory_space<smem>>
      %357 = vector.broadcast %356 : f32 to vector<16x16xf32>
      %358 = arith.addf %354, %357 : vector<16x16xf32>
      %c0_190 = arith.constant 0 : index
      %c3_191 = arith.constant 3 : index
      %c0_192 = arith.constant 0 : index
      %c0_193 = arith.constant 0 : index
      %359 = vector.load %arg6[%c0_190, %c3_191, %c0_192, %c0_193] : memref<1x8x16x16xf32, #tpu.memory_space<vmem>>, vector<1x1x16x16xf32>
      %360 = vector.shape_cast %359 : vector<1x1x16x16xf32> to vector<16x16xf32>
      %361 = vector.shape_cast %358 : vector<16x16xf32> to vector<1x1x16x16xf32>
      tpu.vector_store %arg6[%c0_190, %c3_191, %c0_192, %c0_193], %361 {strides = array<i32>} : memref<1x8x16x16xf32, #tpu.memory_space<vmem>>, vector<1x1x16x16xf32>,
      %c4_i32 = arith.constant 4 : i32
      %362 = arith.addi %2, %c4_i32 : i32
      %cst_194 = arith.constant 0.000000e+00 : f32
      %363 = vector.broadcast %cst_194 : f32 to vector<16x16xf32>
      %c4_195 = arith.constant 4 : index
      %c8_196 = arith.constant 8 : index
      %c0_197 = arith.constant 0 : index
      %364 = vector.load %arg7[%c4_195, %c8_196, %c0_197] : memref<8x29x26xf32, #tpu.memory_space<vmem>>, vector<1x16x16xf32>
      %365 = vector.shape_cast %364 : vector<1x16x16xf32> to vector<16x16xf32>
      %366 = arith.index_cast %362 : i32 to index
      %c0_198 = arith.constant 0 : index
      %367 = memref.load %arg4[%366, %c0_198] : memref<64x11xf32, #tpu.memory_space<smem>>
      %368 = vector.broadcast %367 : f32 to vector<16x16xf32>
      %369 = arith.mulf %365, %368 : vector<16x16xf32>
      %370 = arith.addf %363, %369 : vector<16x16xf32>
      %c4_199 = arith.constant 4 : index
      %c8_200 = arith.constant 8 : index
      %c1_201 = arith.constant 1 : index
      %371 = vector.load %arg7[%c4_199, %c8_200, %c1_201] : memref<8x29x26xf32, #tpu.memory_space<vmem>>, vector<1x16x16xf32>
      %372 = vector.shape_cast %371 : vector<1x16x16xf32> to vector<16x16xf32>
      %373 = arith.index_cast %362 : i32 to index
      %c1_202 = arith.constant 1 : index
      %374 = memref.load %arg4[%373, %c1_202] : memref<64x11xf32, #tpu.memory_space<smem>>
      %375 = vector.broadcast %374 : f32 to vector<16x16xf32>
      %376 = arith.mulf %372, %375 : vector<16x16xf32>
      %377 = arith.addf %370, %376 : vector<16x16xf32>
      %c4_203 = arith.constant 4 : index
      %c8_204 = arith.constant 8 : index
      %c2_205 = arith.constant 2 : index
      %378 = vector.load %arg7[%c4_203, %c8_204, %c2_205] : memref<8x29x26xf32, #tpu.memory_space<vmem>>, vector<1x16x16xf32>
      %379 = vector.shape_cast %378 : vector<1x16x16xf32> to vector<16x16xf32>
      %380 = arith.index_cast %362 : i32 to index
      %c2_206 = arith.constant 2 : index
      %381 = memref.load %arg4[%380, %c2_206] : memref<64x11xf32, #tpu.memory_space<smem>>
      %382 = vector.broadcast %381 : f32 to vector<16x16xf32>
      %383 = arith.mulf %379, %382 : vector<16x16xf32>
      %384 = arith.addf %377, %383 : vector<16x16xf32>
      %c4_207 = arith.constant 4 : index
      %c8_208 = arith.constant 8 : index
      %c3_209 = arith.constant 3 : index
      %385 = vector.load %arg7[%c4_207, %c8_208, %c3_209] : memref<8x29x26xf32, #tpu.memory_space<vmem>>, vector<1x16x16xf32>
      %386 = vector.shape_cast %385 : vector<1x16x16xf32> to vector<16x16xf32>
      %387 = arith.index_cast %362 : i32 to index
      %c3_210 = arith.constant 3 : index
      %388 = memref.load %arg4[%387, %c3_210] : memref<64x11xf32, #tpu.memory_space<smem>>
      %389 = vector.broadcast %388 : f32 to vector<16x16xf32>
      %390 = arith.mulf %386, %389 : vector<16x16xf32>
      %391 = arith.addf %384, %390 : vector<16x16xf32>
      %c4_211 = arith.constant 4 : index
      %c8_212 = arith.constant 8 : index
      %c4_213 = arith.constant 4 : index
      %392 = vector.load %arg7[%c4_211, %c8_212, %c4_213] : memref<8x29x26xf32, #tpu.memory_space<vmem>>, vector<1x16x16xf32>
      %393 = vector.shape_cast %392 : vector<1x16x16xf32> to vector<16x16xf32>
      %394 = arith.index_cast %362 : i32 to index
      %c4_214 = arith.constant 4 : index
      %395 = memref.load %arg4[%394, %c4_214] : memref<64x11xf32, #tpu.memory_space<smem>>
      %396 = vector.broadcast %395 : f32 to vector<16x16xf32>
      %397 = arith.mulf %393, %396 : vector<16x16xf32>
      %398 = arith.addf %391, %397 : vector<16x16xf32>
      %c4_215 = arith.constant 4 : index
      %c8_216 = arith.constant 8 : index
      %c5_217 = arith.constant 5 : index
      %399 = vector.load %arg7[%c4_215, %c8_216, %c5_217] : memref<8x29x26xf32, #tpu.memory_space<vmem>>, vector<1x16x16xf32>
      %400 = vector.shape_cast %399 : vector<1x16x16xf32> to vector<16x16xf32>
      %401 = arith.index_cast %362 : i32 to index
      %c5_218 = arith.constant 5 : index
      %402 = memref.load %arg4[%401, %c5_218] : memref<64x11xf32, #tpu.memory_space<smem>>
      %403 = vector.broadcast %402 : f32 to vector<16x16xf32>
      %404 = arith.mulf %400, %403 : vector<16x16xf32>
      %405 = arith.addf %398, %404 : vector<16x16xf32>
      %c4_219 = arith.constant 4 : index
      %c8_220 = arith.constant 8 : index
      %c6_221 = arith.constant 6 : index
      %406 = vector.load %arg7[%c4_219, %c8_220, %c6_221] : memref<8x29x26xf32, #tpu.memory_space<vmem>>, vector<1x16x16xf32>
      %407 = vector.shape_cast %406 : vector<1x16x16xf32> to vector<16x16xf32>
      %408 = arith.index_cast %362 : i32 to index
      %c6_222 = arith.constant 6 : index
      %409 = memref.load %arg4[%408, %c6_222] : memref<64x11xf32, #tpu.memory_space<smem>>
      %410 = vector.broadcast %409 : f32 to vector<16x16xf32>
      %411 = arith.mulf %407, %410 : vector<16x16xf32>
      %412 = arith.addf %405, %411 : vector<16x16xf32>
      %c4_223 = arith.constant 4 : index
      %c8_224 = arith.constant 8 : index
      %c7_225 = arith.constant 7 : index
      %413 = vector.load %arg7[%c4_223, %c8_224, %c7_225] : memref<8x29x26xf32, #tpu.memory_space<vmem>>, vector<1x16x16xf32>
      %414 = vector.shape_cast %413 : vector<1x16x16xf32> to vector<16x16xf32>
      %415 = arith.index_cast %362 : i32 to index
      %c7_226 = arith.constant 7 : index
      %416 = memref.load %arg4[%415, %c7_226] : memref<64x11xf32, #tpu.memory_space<smem>>
      %417 = vector.broadcast %416 : f32 to vector<16x16xf32>
      %418 = arith.mulf %414, %417 : vector<16x16xf32>
      %419 = arith.addf %412, %418 : vector<16x16xf32>
      %c4_227 = arith.constant 4 : index
      %c8_228 = arith.constant 8 : index
      %c8_229 = arith.constant 8 : index
      %420 = vector.load %arg7[%c4_227, %c8_228, %c8_229] : memref<8x29x26xf32, #tpu.memory_space<vmem>>, vector<1x16x16xf32>
      %421 = vector.shape_cast %420 : vector<1x16x16xf32> to vector<16x16xf32>
      %422 = arith.index_cast %362 : i32 to index
      %c8_230 = arith.constant 8 : index
      %423 = memref.load %arg4[%422, %c8_230] : memref<64x11xf32, #tpu.memory_space<smem>>
      %424 = vector.broadcast %423 : f32 to vector<16x16xf32>
      %425 = arith.mulf %421, %424 : vector<16x16xf32>
      %426 = arith.addf %419, %425 : vector<16x16xf32>
      %c4_231 = arith.constant 4 : index
      %c8_232 = arith.constant 8 : index
      %c9_233 = arith.constant 9 : index
      %427 = vector.load %arg7[%c4_231, %c8_232, %c9_233] : memref<8x29x26xf32, #tpu.memory_space<vmem>>, vector<1x16x16xf32>
      %428 = vector.shape_cast %427 : vector<1x16x16xf32> to vector<16x16xf32>
      %429 = arith.index_cast %362 : i32 to index
      %c9_234 = arith.constant 9 : index
      %430 = memref.load %arg4[%429, %c9_234] : memref<64x11xf32, #tpu.memory_space<smem>>
      %431 = vector.broadcast %430 : f32 to vector<16x16xf32>
      %432 = arith.mulf %428, %431 : vector<16x16xf32>
      %433 = arith.addf %426, %432 : vector<16x16xf32>
      %c4_235 = arith.constant 4 : index
      %c8_236 = arith.constant 8 : index
      %c10_237 = arith.constant 10 : index
      %434 = vector.load %arg7[%c4_235, %c8_236, %c10_237] : memref<8x29x26xf32, #tpu.memory_space<vmem>>, vector<1x16x16xf32>
      %435 = vector.shape_cast %434 : vector<1x16x16xf32> to vector<16x16xf32>
      %436 = arith.index_cast %362 : i32 to index
      %c10_238 = arith.constant 10 : index
      %437 = memref.load %arg4[%436, %c10_238] : memref<64x11xf32, #tpu.memory_space<smem>>
      %438 = vector.broadcast %437 : f32 to vector<16x16xf32>
      %439 = arith.mulf %435, %438 : vector<16x16xf32>
      %440 = arith.addf %433, %439 : vector<16x16xf32>
      %441 = arith.index_cast %362 : i32 to index
      %442 = memref.load %arg5[%441] : memref<64xf32, #tpu.memory_space<smem>>
      %443 = vector.broadcast %442 : f32 to vector<16x16xf32>
      %444 = arith.addf %440, %443 : vector<16x16xf32>
      %c0_239 = arith.constant 0 : index
      %c4_240 = arith.constant 4 : index
      %c0_241 = arith.constant 0 : index
      %c0_242 = arith.constant 0 : index
      %445 = vector.load %arg6[%c0_239, %c4_240, %c0_241, %c0_242] : memref<1x8x16x16xf32, #tpu.memory_space<vmem>>, vector<1x1x16x16xf32>
      %446 = vector.shape_cast %445 : vector<1x1x16x16xf32> to vector<16x16xf32>
      %447 = vector.shape_cast %444 : vector<16x16xf32> to vector<1x1x16x16xf32>
      tpu.vector_store %arg6[%c0_239, %c4_240, %c0_241, %c0_242], %447 {strides = array<i32>} : memref<1x8x16x16xf32, #tpu.memory_space<vmem>>, vector<1x1x16x16xf32>,
      %c5_i32 = arith.constant 5 : i32
      %448 = arith.addi %2, %c5_i32 : i32
      %cst_243 = arith.constant 0.000000e+00 : f32
      %449 = vector.broadcast %cst_243 : f32 to vector<16x16xf32>
      %c5_244 = arith.constant 5 : index
      %c8_245 = arith.constant 8 : index
      %c0_246 = arith.constant 0 : index
      %450 = vector.load %arg7[%c5_244, %c8_245, %c0_246] : memref<8x29x26xf32, #tpu.memory_space<vmem>>, vector<1x16x16xf32>
      %451 = vector.shape_cast %450 : vector<1x16x16xf32> to vector<16x16xf32>
      %452 = arith.index_cast %448 : i32 to index
      %c0_247 = arith.constant 0 : index
      %453 = memref.load %arg4[%452, %c0_247] : memref<64x11xf32, #tpu.memory_space<smem>>
      %454 = vector.broadcast %453 : f32 to vector<16x16xf32>
      %455 = arith.mulf %451, %454 : vector<16x16xf32>
      %456 = arith.addf %449, %455 : vector<16x16xf32>
      %c5_248 = arith.constant 5 : index
      %c8_249 = arith.constant 8 : index
      %c1_250 = arith.constant 1 : index
      %457 = vector.load %arg7[%c5_248, %c8_249, %c1_250] : memref<8x29x26xf32, #tpu.memory_space<vmem>>, vector<1x16x16xf32>
      %458 = vector.shape_cast %457 : vector<1x16x16xf32> to vector<16x16xf32>
      %459 = arith.index_cast %448 : i32 to index
      %c1_251 = arith.constant 1 : index
      %460 = memref.load %arg4[%459, %c1_251] : memref<64x11xf32, #tpu.memory_space<smem>>
      %461 = vector.broadcast %460 : f32 to vector<16x16xf32>
      %462 = arith.mulf %458, %461 : vector<16x16xf32>
      %463 = arith.addf %456, %462 : vector<16x16xf32>
      %c5_252 = arith.constant 5 : index
      %c8_253 = arith.constant 8 : index
      %c2_254 = arith.constant 2 : index
      %464 = vector.load %arg7[%c5_252, %c8_253, %c2_254] : memref<8x29x26xf32, #tpu.memory_space<vmem>>, vector<1x16x16xf32>
      %465 = vector.shape_cast %464 : vector<1x16x16xf32> to vector<16x16xf32>
      %466 = arith.index_cast %448 : i32 to index
      %c2_255 = arith.constant 2 : index
      %467 = memref.load %arg4[%466, %c2_255] : memref<64x11xf32, #tpu.memory_space<smem>>
      %468 = vector.broadcast %467 : f32 to vector<16x16xf32>
      %469 = arith.mulf %465, %468 : vector<16x16xf32>
      %470 = arith.addf %463, %469 : vector<16x16xf32>
      %c5_256 = arith.constant 5 : index
      %c8_257 = arith.constant 8 : index
      %c3_258 = arith.constant 3 : index
      %471 = vector.load %arg7[%c5_256, %c8_257, %c3_258] : memref<8x29x26xf32, #tpu.memory_space<vmem>>, vector<1x16x16xf32>
      %472 = vector.shape_cast %471 : vector<1x16x16xf32> to vector<16x16xf32>
      %473 = arith.index_cast %448 : i32 to index
      %c3_259 = arith.constant 3 : index
      %474 = memref.load %arg4[%473, %c3_259] : memref<64x11xf32, #tpu.memory_space<smem>>
      %475 = vector.broadcast %474 : f32 to vector<16x16xf32>
      %476 = arith.mulf %472, %475 : vector<16x16xf32>
      %477 = arith.addf %470, %476 : vector<16x16xf32>
      %c5_260 = arith.constant 5 : index
      %c8_261 = arith.constant 8 : index
      %c4_262 = arith.constant 4 : index
      %478 = vector.load %arg7[%c5_260, %c8_261, %c4_262] : memref<8x29x26xf32, #tpu.memory_space<vmem>>, vector<1x16x16xf32>
      %479 = vector.shape_cast %478 : vector<1x16x16xf32> to vector<16x16xf32>
      %480 = arith.index_cast %448 : i32 to index
      %c4_263 = arith.constant 4 : index
      %481 = memref.load %arg4[%480, %c4_263] : memref<64x11xf32, #tpu.memory_space<smem>>
      %482 = vector.broadcast %481 : f32 to vector<16x16xf32>
      %483 = arith.mulf %479, %482 : vector<16x16xf32>
      %484 = arith.addf %477, %483 : vector<16x16xf32>
      %c5_264 = arith.constant 5 : index
      %c8_265 = arith.constant 8 : index
      %c5_266 = arith.constant 5 : index
      %485 = vector.load %arg7[%c5_264, %c8_265, %c5_266] : memref<8x29x26xf32, #tpu.memory_space<vmem>>, vector<1x16x16xf32>
      %486 = vector.shape_cast %485 : vector<1x16x16xf32> to vector<16x16xf32>
      %487 = arith.index_cast %448 : i32 to index
      %c5_267 = arith.constant 5 : index
      %488 = memref.load %arg4[%487, %c5_267] : memref<64x11xf32, #tpu.memory_space<smem>>
      %489 = vector.broadcast %488 : f32 to vector<16x16xf32>
      %490 = arith.mulf %486, %489 : vector<16x16xf32>
      %491 = arith.addf %484, %490 : vector<16x16xf32>
      %c5_268 = arith.constant 5 : index
      %c8_269 = arith.constant 8 : index
      %c6_270 = arith.constant 6 : index
      %492 = vector.load %arg7[%c5_268, %c8_269, %c6_270] : memref<8x29x26xf32, #tpu.memory_space<vmem>>, vector<1x16x16xf32>
      %493 = vector.shape_cast %492 : vector<1x16x16xf32> to vector<16x16xf32>
      %494 = arith.index_cast %448 : i32 to index
      %c6_271 = arith.constant 6 : index
      %495 = memref.load %arg4[%494, %c6_271] : memref<64x11xf32, #tpu.memory_space<smem>>
      %496 = vector.broadcast %495 : f32 to vector<16x16xf32>
      %497 = arith.mulf %493, %496 : vector<16x16xf32>
      %498 = arith.addf %491, %497 : vector<16x16xf32>
      %c5_272 = arith.constant 5 : index
      %c8_273 = arith.constant 8 : index
      %c7_274 = arith.constant 7 : index
      %499 = vector.load %arg7[%c5_272, %c8_273, %c7_274] : memref<8x29x26xf32, #tpu.memory_space<vmem>>, vector<1x16x16xf32>
      %500 = vector.shape_cast %499 : vector<1x16x16xf32> to vector<16x16xf32>
      %501 = arith.index_cast %448 : i32 to index
      %c7_275 = arith.constant 7 : index
      %502 = memref.load %arg4[%501, %c7_275] : memref<64x11xf32, #tpu.memory_space<smem>>
      %503 = vector.broadcast %502 : f32 to vector<16x16xf32>
      %504 = arith.mulf %500, %503 : vector<16x16xf32>
      %505 = arith.addf %498, %504 : vector<16x16xf32>
      %c5_276 = arith.constant 5 : index
      %c8_277 = arith.constant 8 : index
      %c8_278 = arith.constant 8 : index
      %506 = vector.load %arg7[%c5_276, %c8_277, %c8_278] : memref<8x29x26xf32, #tpu.memory_space<vmem>>, vector<1x16x16xf32>
      %507 = vector.shape_cast %506 : vector<1x16x16xf32> to vector<16x16xf32>
      %508 = arith.index_cast %448 : i32 to index
      %c8_279 = arith.constant 8 : index
      %509 = memref.load %arg4[%508, %c8_279] : memref<64x11xf32, #tpu.memory_space<smem>>
      %510 = vector.broadcast %509 : f32 to vector<16x16xf32>
      %511 = arith.mulf %507, %510 : vector<16x16xf32>
      %512 = arith.addf %505, %511 : vector<16x16xf32>
      %c5_280 = arith.constant 5 : index
      %c8_281 = arith.constant 8 : index
      %c9_282 = arith.constant 9 : index
      %513 = vector.load %arg7[%c5_280, %c8_281, %c9_282] : memref<8x29x26xf32, #tpu.memory_space<vmem>>, vector<1x16x16xf32>
      %514 = vector.shape_cast %513 : vector<1x16x16xf32> to vector<16x16xf32>
      %515 = arith.index_cast %448 : i32 to index
      %c9_283 = arith.constant 9 : index
      %516 = memref.load %arg4[%515, %c9_283] : memref<64x11xf32, #tpu.memory_space<smem>>
      %517 = vector.broadcast %516 : f32 to vector<16x16xf32>
      %518 = arith.mulf %514, %517 : vector<16x16xf32>
      %519 = arith.addf %512, %518 : vector<16x16xf32>
      %c5_284 = arith.constant 5 : index
      %c8_285 = arith.constant 8 : index
      %c10_286 = arith.constant 10 : index
      %520 = vector.load %arg7[%c5_284, %c8_285, %c10_286] : memref<8x29x26xf32, #tpu.memory_space<vmem>>, vector<1x16x16xf32>
      %521 = vector.shape_cast %520 : vector<1x16x16xf32> to vector<16x16xf32>
      %522 = arith.index_cast %448 : i32 to index
      %c10_287 = arith.constant 10 : index
      %523 = memref.load %arg4[%522, %c10_287] : memref<64x11xf32, #tpu.memory_space<smem>>
      %524 = vector.broadcast %523 : f32 to vector<16x16xf32>
      %525 = arith.mulf %521, %524 : vector<16x16xf32>
      %526 = arith.addf %519, %525 : vector<16x16xf32>
      %527 = arith.index_cast %448 : i32 to index
      %528 = memref.load %arg5[%527] : memref<64xf32, #tpu.memory_space<smem>>
      %529 = vector.broadcast %528 : f32 to vector<16x16xf32>
      %530 = arith.addf %526, %529 : vector<16x16xf32>
      %c0_288 = arith.constant 0 : index
      %c5_289 = arith.constant 5 : index
      %c0_290 = arith.constant 0 : index
      %c0_291 = arith.constant 0 : index
      %531 = vector.load %arg6[%c0_288, %c5_289, %c0_290, %c0_291] : memref<1x8x16x16xf32, #tpu.memory_space<vmem>>, vector<1x1x16x16xf32>
      %532 = vector.shape_cast %531 : vector<1x1x16x16xf32> to vector<16x16xf32>
      %533 = vector.shape_cast %530 : vector<16x16xf32> to vector<1x1x16x16xf32>
      tpu.vector_store %arg6[%c0_288, %c5_289, %c0_290, %c0_291], %533 {strides = array<i32>} : memref<1x8x16x16xf32, #tpu.memory_space<vmem>>, vector<1x1x16x16xf32>,
      %c6_i32 = arith.constant 6 : i32
      %534 = arith.addi %2, %c6_i32 : i32
      %cst_292 = arith.constant 0.000000e+00 : f32
      %535 = vector.broadcast %cst_292 : f32 to vector<16x16xf32>
      %c6_293 = arith.constant 6 : index
      %c8_294 = arith.constant 8 : index
      %c0_295 = arith.constant 0 : index
      %536 = vector.load %arg7[%c6_293, %c8_294, %c0_295] : memref<8x29x26xf32, #tpu.memory_space<vmem>>, vector<1x16x16xf32>
      %537 = vector.shape_cast %536 : vector<1x16x16xf32> to vector<16x16xf32>
      %538 = arith.index_cast %534 : i32 to index
      %c0_296 = arith.constant 0 : index
      %539 = memref.load %arg4[%538, %c0_296] : memref<64x11xf32, #tpu.memory_space<smem>>
      %540 = vector.broadcast %539 : f32 to vector<16x16xf32>
      %541 = arith.mulf %537, %540 : vector<16x16xf32>
      %542 = arith.addf %535, %541 : vector<16x16xf32>
      %c6_297 = arith.constant 6 : index
      %c8_298 = arith.constant 8 : index
      %c1_299 = arith.constant 1 : index
      %543 = vector.load %arg7[%c6_297, %c8_298, %c1_299] : memref<8x29x26xf32, #tpu.memory_space<vmem>>, vector<1x16x16xf32>
      %544 = vector.shape_cast %543 : vector<1x16x16xf32> to vector<16x16xf32>
      %545 = arith.index_cast %534 : i32 to index
      %c1_300 = arith.constant 1 : index
      %546 = memref.load %arg4[%545, %c1_300] : memref<64x11xf32, #tpu.memory_space<smem>>
      %547 = vector.broadcast %546 : f32 to vector<16x16xf32>
      %548 = arith.mulf %544, %547 : vector<16x16xf32>
      %549 = arith.addf %542, %548 : vector<16x16xf32>
      %c6_301 = arith.constant 6 : index
      %c8_302 = arith.constant 8 : index
      %c2_303 = arith.constant 2 : index
      %550 = vector.load %arg7[%c6_301, %c8_302, %c2_303] : memref<8x29x26xf32, #tpu.memory_space<vmem>>, vector<1x16x16xf32>
      %551 = vector.shape_cast %550 : vector<1x16x16xf32> to vector<16x16xf32>
      %552 = arith.index_cast %534 : i32 to index
      %c2_304 = arith.constant 2 : index
      %553 = memref.load %arg4[%552, %c2_304] : memref<64x11xf32, #tpu.memory_space<smem>>
      %554 = vector.broadcast %553 : f32 to vector<16x16xf32>
      %555 = arith.mulf %551, %554 : vector<16x16xf32>
      %556 = arith.addf %549, %555 : vector<16x16xf32>
      %c6_305 = arith.constant 6 : index
      %c8_306 = arith.constant 8 : index
      %c3_307 = arith.constant 3 : index
      %557 = vector.load %arg7[%c6_305, %c8_306, %c3_307] : memref<8x29x26xf32, #tpu.memory_space<vmem>>, vector<1x16x16xf32>
      %558 = vector.shape_cast %557 : vector<1x16x16xf32> to vector<16x16xf32>
      %559 = arith.index_cast %534 : i32 to index
      %c3_308 = arith.constant 3 : index
      %560 = memref.load %arg4[%559, %c3_308] : memref<64x11xf32, #tpu.memory_space<smem>>
      %561 = vector.broadcast %560 : f32 to vector<16x16xf32>
      %562 = arith.mulf %558, %561 : vector<16x16xf32>
      %563 = arith.addf %556, %562 : vector<16x16xf32>
      %c6_309 = arith.constant 6 : index
      %c8_310 = arith.constant 8 : index
      %c4_311 = arith.constant 4 : index
      %564 = vector.load %arg7[%c6_309, %c8_310, %c4_311] : memref<8x29x26xf32, #tpu.memory_space<vmem>>, vector<1x16x16xf32>
      %565 = vector.shape_cast %564 : vector<1x16x16xf32> to vector<16x16xf32>
      %566 = arith.index_cast %534 : i32 to index
      %c4_312 = arith.constant 4 : index
      %567 = memref.load %arg4[%566, %c4_312] : memref<64x11xf32, #tpu.memory_space<smem>>
      %568 = vector.broadcast %567 : f32 to vector<16x16xf32>
      %569 = arith.mulf %565, %568 : vector<16x16xf32>
      %570 = arith.addf %563, %569 : vector<16x16xf32>
      %c6_313 = arith.constant 6 : index
      %c8_314 = arith.constant 8 : index
      %c5_315 = arith.constant 5 : index
      %571 = vector.load %arg7[%c6_313, %c8_314, %c5_315] : memref<8x29x26xf32, #tpu.memory_space<vmem>>, vector<1x16x16xf32>
      %572 = vector.shape_cast %571 : vector<1x16x16xf32> to vector<16x16xf32>
      %573 = arith.index_cast %534 : i32 to index
      %c5_316 = arith.constant 5 : index
      %574 = memref.load %arg4[%573, %c5_316] : memref<64x11xf32, #tpu.memory_space<smem>>
      %575 = vector.broadcast %574 : f32 to vector<16x16xf32>
      %576 = arith.mulf %572, %575 : vector<16x16xf32>
      %577 = arith.addf %570, %576 : vector<16x16xf32>
      %c6_317 = arith.constant 6 : index
      %c8_318 = arith.constant 8 : index
      %c6_319 = arith.constant 6 : index
      %578 = vector.load %arg7[%c6_317, %c8_318, %c6_319] : memref<8x29x26xf32, #tpu.memory_space<vmem>>, vector<1x16x16xf32>
      %579 = vector.shape_cast %578 : vector<1x16x16xf32> to vector<16x16xf32>
      %580 = arith.index_cast %534 : i32 to index
      %c6_320 = arith.constant 6 : index
      %581 = memref.load %arg4[%580, %c6_320] : memref<64x11xf32, #tpu.memory_space<smem>>
      %582 = vector.broadcast %581 : f32 to vector<16x16xf32>
      %583 = arith.mulf %579, %582 : vector<16x16xf32>
      %584 = arith.addf %577, %583 : vector<16x16xf32>
      %c6_321 = arith.constant 6 : index
      %c8_322 = arith.constant 8 : index
      %c7_323 = arith.constant 7 : index
      %585 = vector.load %arg7[%c6_321, %c8_322, %c7_323] : memref<8x29x26xf32, #tpu.memory_space<vmem>>, vector<1x16x16xf32>
      %586 = vector.shape_cast %585 : vector<1x16x16xf32> to vector<16x16xf32>
      %587 = arith.index_cast %534 : i32 to index
      %c7_324 = arith.constant 7 : index
      %588 = memref.load %arg4[%587, %c7_324] : memref<64x11xf32, #tpu.memory_space<smem>>
      %589 = vector.broadcast %588 : f32 to vector<16x16xf32>
      %590 = arith.mulf %586, %589 : vector<16x16xf32>
      %591 = arith.addf %584, %590 : vector<16x16xf32>
      %c6_325 = arith.constant 6 : index
      %c8_326 = arith.constant 8 : index
      %c8_327 = arith.constant 8 : index
      %592 = vector.load %arg7[%c6_325, %c8_326, %c8_327] : memref<8x29x26xf32, #tpu.memory_space<vmem>>, vector<1x16x16xf32>
      %593 = vector.shape_cast %592 : vector<1x16x16xf32> to vector<16x16xf32>
      %594 = arith.index_cast %534 : i32 to index
      %c8_328 = arith.constant 8 : index
      %595 = memref.load %arg4[%594, %c8_328] : memref<64x11xf32, #tpu.memory_space<smem>>
      %596 = vector.broadcast %595 : f32 to vector<16x16xf32>
      %597 = arith.mulf %593, %596 : vector<16x16xf32>
      %598 = arith.addf %591, %597 : vector<16x16xf32>
      %c6_329 = arith.constant 6 : index
      %c8_330 = arith.constant 8 : index
      %c9_331 = arith.constant 9 : index
      %599 = vector.load %arg7[%c6_329, %c8_330, %c9_331] : memref<8x29x26xf32, #tpu.memory_space<vmem>>, vector<1x16x16xf32>
      %600 = vector.shape_cast %599 : vector<1x16x16xf32> to vector<16x16xf32>
      %601 = arith.index_cast %534 : i32 to index
      %c9_332 = arith.constant 9 : index
      %602 = memref.load %arg4[%601, %c9_332] : memref<64x11xf32, #tpu.memory_space<smem>>
      %603 = vector.broadcast %602 : f32 to vector<16x16xf32>
      %604 = arith.mulf %600, %603 : vector<16x16xf32>
      %605 = arith.addf %598, %604 : vector<16x16xf32>
      %c6_333 = arith.constant 6 : index
      %c8_334 = arith.constant 8 : index
      %c10_335 = arith.constant 10 : index
      %606 = vector.load %arg7[%c6_333, %c8_334, %c10_335] : memref<8x29x26xf32, #tpu.memory_space<vmem>>, vector<1x16x16xf32>
      %607 = vector.shape_cast %606 : vector<1x16x16xf32> to vector<16x16xf32>
      %608 = arith.index_cast %534 : i32 to index
      %c10_336 = arith.constant 10 : index
      %609 = memref.load %arg4[%608, %c10_336] : memref<64x11xf32, #tpu.memory_space<smem>>
      %610 = vector.broadcast %609 : f32 to vector<16x16xf32>
      %611 = arith.mulf %607, %610 : vector<16x16xf32>
      %612 = arith.addf %605, %611 : vector<16x16xf32>
      %613 = arith.index_cast %534 : i32 to index
      %614 = memref.load %arg5[%613] : memref<64xf32, #tpu.memory_space<smem>>
      %615 = vector.broadcast %614 : f32 to vector<16x16xf32>
      %616 = arith.addf %612, %615 : vector<16x16xf32>
      %c0_337 = arith.constant 0 : index
      %c6_338 = arith.constant 6 : index
      %c0_339 = arith.constant 0 : index
      %c0_340 = arith.constant 0 : index
      %617 = vector.load %arg6[%c0_337, %c6_338, %c0_339, %c0_340] : memref<1x8x16x16xf32, #tpu.memory_space<vmem>>, vector<1x1x16x16xf32>
      %618 = vector.shape_cast %617 : vector<1x1x16x16xf32> to vector<16x16xf32>
      %619 = vector.shape_cast %616 : vector<16x16xf32> to vector<1x1x16x16xf32>
      tpu.vector_store %arg6[%c0_337, %c6_338, %c0_339, %c0_340], %619 {strides = array<i32>} : memref<1x8x16x16xf32, #tpu.memory_space<vmem>>, vector<1x1x16x16xf32>,
      %c7_i32 = arith.constant 7 : i32
      %620 = arith.addi %2, %c7_i32 : i32
      %cst_341 = arith.constant 0.000000e+00 : f32
      %621 = vector.broadcast %cst_341 : f32 to vector<16x16xf32>
      %c7_342 = arith.constant 7 : index
      %c8_343 = arith.constant 8 : index
      %c0_344 = arith.constant 0 : index
      %622 = vector.load %arg7[%c7_342, %c8_343, %c0_344] : memref<8x29x26xf32, #tpu.memory_space<vmem>>, vector<1x16x16xf32>
      %623 = vector.shape_cast %622 : vector<1x16x16xf32> to vector<16x16xf32>
      %624 = arith.index_cast %620 : i32 to index
      %c0_345 = arith.constant 0 : index
      %625 = memref.load %arg4[%624, %c0_345] : memref<64x11xf32, #tpu.memory_space<smem>>
      %626 = vector.broadcast %625 : f32 to vector<16x16xf32>
      %627 = arith.mulf %623, %626 : vector<16x16xf32>
      %628 = arith.addf %621, %627 : vector<16x16xf32>
      %c7_346 = arith.constant 7 : index
      %c8_347 = arith.constant 8 : index
      %c1_348 = arith.constant 1 : index
      %629 = vector.load %arg7[%c7_346, %c8_347, %c1_348] : memref<8x29x26xf32, #tpu.memory_space<vmem>>, vector<1x16x16xf32>
      %630 = vector.shape_cast %629 : vector<1x16x16xf32> to vector<16x16xf32>
      %631 = arith.index_cast %620 : i32 to index
      %c1_349 = arith.constant 1 : index
      %632 = memref.load %arg4[%631, %c1_349] : memref<64x11xf32, #tpu.memory_space<smem>>
      %633 = vector.broadcast %632 : f32 to vector<16x16xf32>
      %634 = arith.mulf %630, %633 : vector<16x16xf32>
      %635 = arith.addf %628, %634 : vector<16x16xf32>
      %c7_350 = arith.constant 7 : index
      %c8_351 = arith.constant 8 : index
      %c2_352 = arith.constant 2 : index
      %636 = vector.load %arg7[%c7_350, %c8_351, %c2_352] : memref<8x29x26xf32, #tpu.memory_space<vmem>>, vector<1x16x16xf32>
      %637 = vector.shape_cast %636 : vector<1x16x16xf32> to vector<16x16xf32>
      %638 = arith.index_cast %620 : i32 to index
      %c2_353 = arith.constant 2 : index
      %639 = memref.load %arg4[%638, %c2_353] : memref<64x11xf32, #tpu.memory_space<smem>>
      %640 = vector.broadcast %639 : f32 to vector<16x16xf32>
      %641 = arith.mulf %637, %640 : vector<16x16xf32>
      %642 = arith.addf %635, %641 : vector<16x16xf32>
      %c7_354 = arith.constant 7 : index
      %c8_355 = arith.constant 8 : index
      %c3_356 = arith.constant 3 : index
      %643 = vector.load %arg7[%c7_354, %c8_355, %c3_356] : memref<8x29x26xf32, #tpu.memory_space<vmem>>, vector<1x16x16xf32>
      %644 = vector.shape_cast %643 : vector<1x16x16xf32> to vector<16x16xf32>
      %645 = arith.index_cast %620 : i32 to index
      %c3_357 = arith.constant 3 : index
      %646 = memref.load %arg4[%645, %c3_357] : memref<64x11xf32, #tpu.memory_space<smem>>
      %647 = vector.broadcast %646 : f32 to vector<16x16xf32>
      %648 = arith.mulf %644, %647 : vector<16x16xf32>
      %649 = arith.addf %642, %648 : vector<16x16xf32>
      %c7_358 = arith.constant 7 : index
      %c8_359 = arith.constant 8 : index
      %c4_360 = arith.constant 4 : index
      %650 = vector.load %arg7[%c7_358, %c8_359, %c4_360] : memref<8x29x26xf32, #tpu.memory_space<vmem>>, vector<1x16x16xf32>
      %651 = vector.shape_cast %650 : vector<1x16x16xf32> to vector<16x16xf32>
      %652 = arith.index_cast %620 : i32 to index
      %c4_361 = arith.constant 4 : index
      %653 = memref.load %arg4[%652, %c4_361] : memref<64x11xf32, #tpu.memory_space<smem>>
      %654 = vector.broadcast %653 : f32 to vector<16x16xf32>
      %655 = arith.mulf %651, %654 : vector<16x16xf32>
      %656 = arith.addf %649, %655 : vector<16x16xf32>
      %c7_362 = arith.constant 7 : index
      %c8_363 = arith.constant 8 : index
      %c5_364 = arith.constant 5 : index
      %657 = vector.load %arg7[%c7_362, %c8_363, %c5_364] : memref<8x29x26xf32, #tpu.memory_space<vmem>>, vector<1x16x16xf32>
      %658 = vector.shape_cast %657 : vector<1x16x16xf32> to vector<16x16xf32>
      %659 = arith.index_cast %620 : i32 to index
      %c5_365 = arith.constant 5 : index
      %660 = memref.load %arg4[%659, %c5_365] : memref<64x11xf32, #tpu.memory_space<smem>>
      %661 = vector.broadcast %660 : f32 to vector<16x16xf32>
      %662 = arith.mulf %658, %661 : vector<16x16xf32>
      %663 = arith.addf %656, %662 : vector<16x16xf32>
      %c7_366 = arith.constant 7 : index
      %c8_367 = arith.constant 8 : index
      %c6_368 = arith.constant 6 : index
      %664 = vector.load %arg7[%c7_366, %c8_367, %c6_368] : memref<8x29x26xf32, #tpu.memory_space<vmem>>, vector<1x16x16xf32>
      %665 = vector.shape_cast %664 : vector<1x16x16xf32> to vector<16x16xf32>
      %666 = arith.index_cast %620 : i32 to index
      %c6_369 = arith.constant 6 : index
      %667 = memref.load %arg4[%666, %c6_369] : memref<64x11xf32, #tpu.memory_space<smem>>
      %668 = vector.broadcast %667 : f32 to vector<16x16xf32>
      %669 = arith.mulf %665, %668 : vector<16x16xf32>
      %670 = arith.addf %663, %669 : vector<16x16xf32>
      %c7_370 = arith.constant 7 : index
      %c8_371 = arith.constant 8 : index
      %c7_372 = arith.constant 7 : index
      %671 = vector.load %arg7[%c7_370, %c8_371, %c7_372] : memref<8x29x26xf32, #tpu.memory_space<vmem>>, vector<1x16x16xf32>
      %672 = vector.shape_cast %671 : vector<1x16x16xf32> to vector<16x16xf32>
      %673 = arith.index_cast %620 : i32 to index
      %c7_373 = arith.constant 7 : index
      %674 = memref.load %arg4[%673, %c7_373] : memref<64x11xf32, #tpu.memory_space<smem>>
      %675 = vector.broadcast %674 : f32 to vector<16x16xf32>
      %676 = arith.mulf %672, %675 : vector<16x16xf32>
      %677 = arith.addf %670, %676 : vector<16x16xf32>
      %c7_374 = arith.constant 7 : index
      %c8_375 = arith.constant 8 : index
      %c8_376 = arith.constant 8 : index
      %678 = vector.load %arg7[%c7_374, %c8_375, %c8_376] : memref<8x29x26xf32, #tpu.memory_space<vmem>>, vector<1x16x16xf32>
      %679 = vector.shape_cast %678 : vector<1x16x16xf32> to vector<16x16xf32>
      %680 = arith.index_cast %620 : i32 to index
      %c8_377 = arith.constant 8 : index
      %681 = memref.load %arg4[%680, %c8_377] : memref<64x11xf32, #tpu.memory_space<smem>>
      %682 = vector.broadcast %681 : f32 to vector<16x16xf32>
      %683 = arith.mulf %679, %682 : vector<16x16xf32>
      %684 = arith.addf %677, %683 : vector<16x16xf32>
      %c7_378 = arith.constant 7 : index
      %c8_379 = arith.constant 8 : index
      %c9_380 = arith.constant 9 : index
      %685 = vector.load %arg7[%c7_378, %c8_379, %c9_380] : memref<8x29x26xf32, #tpu.memory_space<vmem>>, vector<1x16x16xf32>
      %686 = vector.shape_cast %685 : vector<1x16x16xf32> to vector<16x16xf32>
      %687 = arith.index_cast %620 : i32 to index
      %c9_381 = arith.constant 9 : index
      %688 = memref.load %arg4[%687, %c9_381] : memref<64x11xf32, #tpu.memory_space<smem>>
      %689 = vector.broadcast %688 : f32 to vector<16x16xf32>
      %690 = arith.mulf %686, %689 : vector<16x16xf32>
      %691 = arith.addf %684, %690 : vector<16x16xf32>
      %c7_382 = arith.constant 7 : index
      %c8_383 = arith.constant 8 : index
      %c10_384 = arith.constant 10 : index
      %692 = vector.load %arg7[%c7_382, %c8_383, %c10_384] : memref<8x29x26xf32, #tpu.memory_space<vmem>>, vector<1x16x16xf32>
      %693 = vector.shape_cast %692 : vector<1x16x16xf32> to vector<16x16xf32>
      %694 = arith.index_cast %620 : i32 to index
      %c10_385 = arith.constant 10 : index
      %695 = memref.load %arg4[%694, %c10_385] : memref<64x11xf32, #tpu.memory_space<smem>>
      %696 = vector.broadcast %695 : f32 to vector<16x16xf32>
      %697 = arith.mulf %693, %696 : vector<16x16xf32>
      %698 = arith.addf %691, %697 : vector<16x16xf32>
      %699 = arith.index_cast %620 : i32 to index
      %700 = memref.load %arg5[%699] : memref<64xf32, #tpu.memory_space<smem>>
      %701 = vector.broadcast %700 : f32 to vector<16x16xf32>
      %702 = arith.addf %698, %701 : vector<16x16xf32>
      %c0_386 = arith.constant 0 : index
      %c7_387 = arith.constant 7 : index
      %c0_388 = arith.constant 0 : index
      %c0_389 = arith.constant 0 : index
      %703 = vector.load %arg6[%c0_386, %c7_387, %c0_388, %c0_389] : memref<1x8x16x16xf32, #tpu.memory_space<vmem>>, vector<1x1x16x16xf32>
      %704 = vector.shape_cast %703 : vector<1x1x16x16xf32> to vector<16x16xf32>
      %705 = vector.shape_cast %702 : vector<16x16xf32> to vector<1x1x16x16xf32>
      tpu.vector_store %arg6[%c0_386, %c7_387, %c0_388, %c0_389], %705 {strides = array<i32>} : memref<1x8x16x16xf32, #tpu.memory_space<vmem>>, vector<1x1x16x16xf32>,
    } else {
    }
    %c3_i32 = arith.constant 3 : i32
    %15 = arith.cmpi eq, %1, %c3_i32 : i32
    %16 = arith.extui %15 : i1 to i32
    %c0_i32_5 = arith.constant 0 : i32
    %17 = arith.cmpi ne, %16, %c0_i32_5 : i32
    scf.if %17 {
      %c0_i32_6 = arith.constant 0 : i32
      %18 = arith.addi %2, %c0_i32_6 : i32
      %cst = arith.constant 0.000000e+00 : f32
      %19 = vector.broadcast %cst : f32 to vector<16x16xf32>
      %c0 = arith.constant 0 : index
      %c3 = arith.constant 3 : index
      %c5 = arith.constant 5 : index
      %20 = vector.load %arg7[%c0, %c3, %c5] : memref<8x29x26xf32, #tpu.memory_space<vmem>>, vector<1x16x16xf32>
      %21 = vector.shape_cast %20 : vector<1x16x16xf32> to vector<16x16xf32>
      %22 = arith.index_cast %18 : i32 to index
      %c0_7 = arith.constant 0 : index
      %23 = memref.load %arg4[%22, %c0_7] : memref<64x11xf32, #tpu.memory_space<smem>>
      %24 = vector.broadcast %23 : f32 to vector<16x16xf32>
      %25 = arith.mulf %21, %24 : vector<16x16xf32>
      %26 = arith.addf %19, %25 : vector<16x16xf32>
      %c0_8 = arith.constant 0 : index
      %c4 = arith.constant 4 : index
      %c5_9 = arith.constant 5 : index
      %27 = vector.load %arg7[%c0_8, %c4, %c5_9] : memref<8x29x26xf32, #tpu.memory_space<vmem>>, vector<1x16x16xf32>
      %28 = vector.shape_cast %27 : vector<1x16x16xf32> to vector<16x16xf32>
      %29 = arith.index_cast %18 : i32 to index
      %c1 = arith.constant 1 : index
      %30 = memref.load %arg4[%29, %c1] : memref<64x11xf32, #tpu.memory_space<smem>>
      %31 = vector.broadcast %30 : f32 to vector<16x16xf32>
      %32 = arith.mulf %28, %31 : vector<16x16xf32>
      %33 = arith.addf %26, %32 : vector<16x16xf32>
      %c0_10 = arith.constant 0 : index
      %c5_11 = arith.constant 5 : index
      %c5_12 = arith.constant 5 : index
      %34 = vector.load %arg7[%c0_10, %c5_11, %c5_12] : memref<8x29x26xf32, #tpu.memory_space<vmem>>, vector<1x16x16xf32>
      %35 = vector.shape_cast %34 : vector<1x16x16xf32> to vector<16x16xf32>
      %36 = arith.index_cast %18 : i32 to index
      %c2 = arith.constant 2 : index
      %37 = memref.load %arg4[%36, %c2] : memref<64x11xf32, #tpu.memory_space<smem>>
      %38 = vector.broadcast %37 : f32 to vector<16x16xf32>
      %39 = arith.mulf %35, %38 : vector<16x16xf32>
      %40 = arith.addf %33, %39 : vector<16x16xf32>
      %c0_13 = arith.constant 0 : index
      %c6 = arith.constant 6 : index
      %c5_14 = arith.constant 5 : index
      %41 = vector.load %arg7[%c0_13, %c6, %c5_14] : memref<8x29x26xf32, #tpu.memory_space<vmem>>, vector<1x16x16xf32>
      %42 = vector.shape_cast %41 : vector<1x16x16xf32> to vector<16x16xf32>
      %43 = arith.index_cast %18 : i32 to index
      %c3_15 = arith.constant 3 : index
      %44 = memref.load %arg4[%43, %c3_15] : memref<64x11xf32, #tpu.memory_space<smem>>
      %45 = vector.broadcast %44 : f32 to vector<16x16xf32>
      %46 = arith.mulf %42, %45 : vector<16x16xf32>
      %47 = arith.addf %40, %46 : vector<16x16xf32>
      %c0_16 = arith.constant 0 : index
      %c7 = arith.constant 7 : index
      %c5_17 = arith.constant 5 : index
      %48 = vector.load %arg7[%c0_16, %c7, %c5_17] : memref<8x29x26xf32, #tpu.memory_space<vmem>>, vector<1x16x16xf32>
      %49 = vector.shape_cast %48 : vector<1x16x16xf32> to vector<16x16xf32>
      %50 = arith.index_cast %18 : i32 to index
      %c4_18 = arith.constant 4 : index
      %51 = memref.load %arg4[%50, %c4_18] : memref<64x11xf32, #tpu.memory_space<smem>>
      %52 = vector.broadcast %51 : f32 to vector<16x16xf32>
      %53 = arith.mulf %49, %52 : vector<16x16xf32>
      %54 = arith.addf %47, %53 : vector<16x16xf32>
      %c0_19 = arith.constant 0 : index
      %c8 = arith.constant 8 : index
      %c5_20 = arith.constant 5 : index
      %55 = vector.load %arg7[%c0_19, %c8, %c5_20] : memref<8x29x26xf32, #tpu.memory_space<vmem>>, vector<1x16x16xf32>
      %56 = vector.shape_cast %55 : vector<1x16x16xf32> to vector<16x16xf32>
      %57 = arith.index_cast %18 : i32 to index
      %c5_21 = arith.constant 5 : index
      %58 = memref.load %arg4[%57, %c5_21] : memref<64x11xf32, #tpu.memory_space<smem>>
      %59 = vector.broadcast %58 : f32 to vector<16x16xf32>
      %60 = arith.mulf %56, %59 : vector<16x16xf32>
      %61 = arith.addf %54, %60 : vector<16x16xf32>
      %c0_22 = arith.constant 0 : index
      %c9 = arith.constant 9 : index
      %c5_23 = arith.constant 5 : index
      %62 = vector.load %arg7[%c0_22, %c9, %c5_23] : memref<8x29x26xf32, #tpu.memory_space<vmem>>, vector<1x16x16xf32>
      %63 = vector.shape_cast %62 : vector<1x16x16xf32> to vector<16x16xf32>
      %64 = arith.index_cast %18 : i32 to index
      %c6_24 = arith.constant 6 : index
      %65 = memref.load %arg4[%64, %c6_24] : memref<64x11xf32, #tpu.memory_space<smem>>
      %66 = vector.broadcast %65 : f32 to vector<16x16xf32>
      %67 = arith.mulf %63, %66 : vector<16x16xf32>
      %68 = arith.addf %61, %67 : vector<16x16xf32>
      %c0_25 = arith.constant 0 : index
      %c10 = arith.constant 10 : index
      %c5_26 = arith.constant 5 : index
      %69 = vector.load %arg7[%c0_25, %c10, %c5_26] : memref<8x29x26xf32, #tpu.memory_space<vmem>>, vector<1x16x16xf32>
      %70 = vector.shape_cast %69 : vector<1x16x16xf32> to vector<16x16xf32>
      %71 = arith.index_cast %18 : i32 to index
      %c7_27 = arith.constant 7 : index
      %72 = memref.load %arg4[%71, %c7_27] : memref<64x11xf32, #tpu.memory_space<smem>>
      %73 = vector.broadcast %72 : f32 to vector<16x16xf32>
      %74 = arith.mulf %70, %73 : vector<16x16xf32>
      %75 = arith.addf %68, %74 : vector<16x16xf32>
      %c0_28 = arith.constant 0 : index
      %c11 = arith.constant 11 : index
      %c5_29 = arith.constant 5 : index
      %76 = vector.load %arg7[%c0_28, %c11, %c5_29] : memref<8x29x26xf32, #tpu.memory_space<vmem>>, vector<1x16x16xf32>
      %77 = vector.shape_cast %76 : vector<1x16x16xf32> to vector<16x16xf32>
      %78 = arith.index_cast %18 : i32 to index
      %c8_30 = arith.constant 8 : index
      %79 = memref.load %arg4[%78, %c8_30] : memref<64x11xf32, #tpu.memory_space<smem>>
      %80 = vector.broadcast %79 : f32 to vector<16x16xf32>
      %81 = arith.mulf %77, %80 : vector<16x16xf32>
      %82 = arith.addf %75, %81 : vector<16x16xf32>
      %c0_31 = arith.constant 0 : index
      %c12 = arith.constant 12 : index
      %c5_32 = arith.constant 5 : index
      %83 = vector.load %arg7[%c0_31, %c12, %c5_32] : memref<8x29x26xf32, #tpu.memory_space<vmem>>, vector<1x16x16xf32>
      %84 = vector.shape_cast %83 : vector<1x16x16xf32> to vector<16x16xf32>
      %85 = arith.index_cast %18 : i32 to index
      %c9_33 = arith.constant 9 : index
      %86 = memref.load %arg4[%85, %c9_33] : memref<64x11xf32, #tpu.memory_space<smem>>
      %87 = vector.broadcast %86 : f32 to vector<16x16xf32>
      %88 = arith.mulf %84, %87 : vector<16x16xf32>
      %89 = arith.addf %82, %88 : vector<16x16xf32>
      %c0_34 = arith.constant 0 : index
      %c13 = arith.constant 13 : index
      %c5_35 = arith.constant 5 : index
      %90 = vector.load %arg7[%c0_34, %c13, %c5_35] : memref<8x29x26xf32, #tpu.memory_space<vmem>>, vector<1x16x16xf32>
      %91 = vector.shape_cast %90 : vector<1x16x16xf32> to vector<16x16xf32>
      %92 = arith.index_cast %18 : i32 to index
      %c10_36 = arith.constant 10 : index
      %93 = memref.load %arg4[%92, %c10_36] : memref<64x11xf32, #tpu.memory_space<smem>>
      %94 = vector.broadcast %93 : f32 to vector<16x16xf32>
      %95 = arith.mulf %91, %94 : vector<16x16xf32>
      %96 = arith.addf %89, %95 : vector<16x16xf32>
      %97 = arith.index_cast %18 : i32 to index
      %98 = memref.load %arg5[%97] : memref<64xf32, #tpu.memory_space<smem>>
      %99 = vector.broadcast %98 : f32 to vector<16x16xf32>
      %100 = arith.addf %96, %99 : vector<16x16xf32>
      %c0_37 = arith.constant 0 : index
      %c0_38 = arith.constant 0 : index
      %c0_39 = arith.constant 0 : index
      %c0_40 = arith.constant 0 : index
      %101 = vector.load %arg6[%c0_37, %c0_38, %c0_39, %c0_40] : memref<1x8x16x16xf32, #tpu.memory_space<vmem>>, vector<1x1x16x16xf32>
      %102 = vector.shape_cast %101 : vector<1x1x16x16xf32> to vector<16x16xf32>
      %103 = vector.shape_cast %100 : vector<16x16xf32> to vector<1x1x16x16xf32>
      tpu.vector_store %arg6[%c0_37, %c0_38, %c0_39, %c0_40], %103 {strides = array<i32>} : memref<1x8x16x16xf32, #tpu.memory_space<vmem>>, vector<1x1x16x16xf32>,
      %c1_i32_41 = arith.constant 1 : i32
      %104 = arith.addi %2, %c1_i32_41 : i32
      %cst_42 = arith.constant 0.000000e+00 : f32
      %105 = vector.broadcast %cst_42 : f32 to vector<16x16xf32>
      %c1_43 = arith.constant 1 : index
      %c3_44 = arith.constant 3 : index
      %c5_45 = arith.constant 5 : index
      %106 = vector.load %arg7[%c1_43, %c3_44, %c5_45] : memref<8x29x26xf32, #tpu.memory_space<vmem>>, vector<1x16x16xf32>
      %107 = vector.shape_cast %106 : vector<1x16x16xf32> to vector<16x16xf32>
      %108 = arith.index_cast %104 : i32 to index
      %c0_46 = arith.constant 0 : index
      %109 = memref.load %arg4[%108, %c0_46] : memref<64x11xf32, #tpu.memory_space<smem>>
      %110 = vector.broadcast %109 : f32 to vector<16x16xf32>
      %111 = arith.mulf %107, %110 : vector<16x16xf32>
      %112 = arith.addf %105, %111 : vector<16x16xf32>
      %c1_47 = arith.constant 1 : index
      %c4_48 = arith.constant 4 : index
      %c5_49 = arith.constant 5 : index
      %113 = vector.load %arg7[%c1_47, %c4_48, %c5_49] : memref<8x29x26xf32, #tpu.memory_space<vmem>>, vector<1x16x16xf32>
      %114 = vector.shape_cast %113 : vector<1x16x16xf32> to vector<16x16xf32>
      %115 = arith.index_cast %104 : i32 to index
      %c1_50 = arith.constant 1 : index
      %116 = memref.load %arg4[%115, %c1_50] : memref<64x11xf32, #tpu.memory_space<smem>>
      %117 = vector.broadcast %116 : f32 to vector<16x16xf32>
      %118 = arith.mulf %114, %117 : vector<16x16xf32>
      %119 = arith.addf %112, %118 : vector<16x16xf32>
      %c1_51 = arith.constant 1 : index
      %c5_52 = arith.constant 5 : index
      %c5_53 = arith.constant 5 : index
      %120 = vector.load %arg7[%c1_51, %c5_52, %c5_53] : memref<8x29x26xf32, #tpu.memory_space<vmem>>, vector<1x16x16xf32>
      %121 = vector.shape_cast %120 : vector<1x16x16xf32> to vector<16x16xf32>
      %122 = arith.index_cast %104 : i32 to index
      %c2_54 = arith.constant 2 : index
      %123 = memref.load %arg4[%122, %c2_54] : memref<64x11xf32, #tpu.memory_space<smem>>
      %124 = vector.broadcast %123 : f32 to vector<16x16xf32>
      %125 = arith.mulf %121, %124 : vector<16x16xf32>
      %126 = arith.addf %119, %125 : vector<16x16xf32>
      %c1_55 = arith.constant 1 : index
      %c6_56 = arith.constant 6 : index
      %c5_57 = arith.constant 5 : index
      %127 = vector.load %arg7[%c1_55, %c6_56, %c5_57] : memref<8x29x26xf32, #tpu.memory_space<vmem>>, vector<1x16x16xf32>
      %128 = vector.shape_cast %127 : vector<1x16x16xf32> to vector<16x16xf32>
      %129 = arith.index_cast %104 : i32 to index
      %c3_58 = arith.constant 3 : index
      %130 = memref.load %arg4[%129, %c3_58] : memref<64x11xf32, #tpu.memory_space<smem>>
      %131 = vector.broadcast %130 : f32 to vector<16x16xf32>
      %132 = arith.mulf %128, %131 : vector<16x16xf32>
      %133 = arith.addf %126, %132 : vector<16x16xf32>
      %c1_59 = arith.constant 1 : index
      %c7_60 = arith.constant 7 : index
      %c5_61 = arith.constant 5 : index
      %134 = vector.load %arg7[%c1_59, %c7_60, %c5_61] : memref<8x29x26xf32, #tpu.memory_space<vmem>>, vector<1x16x16xf32>
      %135 = vector.shape_cast %134 : vector<1x16x16xf32> to vector<16x16xf32>
      %136 = arith.index_cast %104 : i32 to index
      %c4_62 = arith.constant 4 : index
      %137 = memref.load %arg4[%136, %c4_62] : memref<64x11xf32, #tpu.memory_space<smem>>
      %138 = vector.broadcast %137 : f32 to vector<16x16xf32>
      %139 = arith.mulf %135, %138 : vector<16x16xf32>
      %140 = arith.addf %133, %139 : vector<16x16xf32>
      %c1_63 = arith.constant 1 : index
      %c8_64 = arith.constant 8 : index
      %c5_65 = arith.constant 5 : index
      %141 = vector.load %arg7[%c1_63, %c8_64, %c5_65] : memref<8x29x26xf32, #tpu.memory_space<vmem>>, vector<1x16x16xf32>
      %142 = vector.shape_cast %141 : vector<1x16x16xf32> to vector<16x16xf32>
      %143 = arith.index_cast %104 : i32 to index
      %c5_66 = arith.constant 5 : index
      %144 = memref.load %arg4[%143, %c5_66] : memref<64x11xf32, #tpu.memory_space<smem>>
      %145 = vector.broadcast %144 : f32 to vector<16x16xf32>
      %146 = arith.mulf %142, %145 : vector<16x16xf32>
      %147 = arith.addf %140, %146 : vector<16x16xf32>
      %c1_67 = arith.constant 1 : index
      %c9_68 = arith.constant 9 : index
      %c5_69 = arith.constant 5 : index
      %148 = vector.load %arg7[%c1_67, %c9_68, %c5_69] : memref<8x29x26xf32, #tpu.memory_space<vmem>>, vector<1x16x16xf32>
      %149 = vector.shape_cast %148 : vector<1x16x16xf32> to vector<16x16xf32>
      %150 = arith.index_cast %104 : i32 to index
      %c6_70 = arith.constant 6 : index
      %151 = memref.load %arg4[%150, %c6_70] : memref<64x11xf32, #tpu.memory_space<smem>>
      %152 = vector.broadcast %151 : f32 to vector<16x16xf32>
      %153 = arith.mulf %149, %152 : vector<16x16xf32>
      %154 = arith.addf %147, %153 : vector<16x16xf32>
      %c1_71 = arith.constant 1 : index
      %c10_72 = arith.constant 10 : index
      %c5_73 = arith.constant 5 : index
      %155 = vector.load %arg7[%c1_71, %c10_72, %c5_73] : memref<8x29x26xf32, #tpu.memory_space<vmem>>, vector<1x16x16xf32>
      %156 = vector.shape_cast %155 : vector<1x16x16xf32> to vector<16x16xf32>
      %157 = arith.index_cast %104 : i32 to index
      %c7_74 = arith.constant 7 : index
      %158 = memref.load %arg4[%157, %c7_74] : memref<64x11xf32, #tpu.memory_space<smem>>
      %159 = vector.broadcast %158 : f32 to vector<16x16xf32>
      %160 = arith.mulf %156, %159 : vector<16x16xf32>
      %161 = arith.addf %154, %160 : vector<16x16xf32>
      %c1_75 = arith.constant 1 : index
      %c11_76 = arith.constant 11 : index
      %c5_77 = arith.constant 5 : index
      %162 = vector.load %arg7[%c1_75, %c11_76, %c5_77] : memref<8x29x26xf32, #tpu.memory_space<vmem>>, vector<1x16x16xf32>
      %163 = vector.shape_cast %162 : vector<1x16x16xf32> to vector<16x16xf32>
      %164 = arith.index_cast %104 : i32 to index
      %c8_78 = arith.constant 8 : index
      %165 = memref.load %arg4[%164, %c8_78] : memref<64x11xf32, #tpu.memory_space<smem>>
      %166 = vector.broadcast %165 : f32 to vector<16x16xf32>
      %167 = arith.mulf %163, %166 : vector<16x16xf32>
      %168 = arith.addf %161, %167 : vector<16x16xf32>
      %c1_79 = arith.constant 1 : index
      %c12_80 = arith.constant 12 : index
      %c5_81 = arith.constant 5 : index
      %169 = vector.load %arg7[%c1_79, %c12_80, %c5_81] : memref<8x29x26xf32, #tpu.memory_space<vmem>>, vector<1x16x16xf32>
      %170 = vector.shape_cast %169 : vector<1x16x16xf32> to vector<16x16xf32>
      %171 = arith.index_cast %104 : i32 to index
      %c9_82 = arith.constant 9 : index
      %172 = memref.load %arg4[%171, %c9_82] : memref<64x11xf32, #tpu.memory_space<smem>>
      %173 = vector.broadcast %172 : f32 to vector<16x16xf32>
      %174 = arith.mulf %170, %173 : vector<16x16xf32>
      %175 = arith.addf %168, %174 : vector<16x16xf32>
      %c1_83 = arith.constant 1 : index
      %c13_84 = arith.constant 13 : index
      %c5_85 = arith.constant 5 : index
      %176 = vector.load %arg7[%c1_83, %c13_84, %c5_85] : memref<8x29x26xf32, #tpu.memory_space<vmem>>, vector<1x16x16xf32>
      %177 = vector.shape_cast %176 : vector<1x16x16xf32> to vector<16x16xf32>
      %178 = arith.index_cast %104 : i32 to index
      %c10_86 = arith.constant 10 : index
      %179 = memref.load %arg4[%178, %c10_86] : memref<64x11xf32, #tpu.memory_space<smem>>
      %180 = vector.broadcast %179 : f32 to vector<16x16xf32>
      %181 = arith.mulf %177, %180 : vector<16x16xf32>
      %182 = arith.addf %175, %181 : vector<16x16xf32>
      %183 = arith.index_cast %104 : i32 to index
      %184 = memref.load %arg5[%183] : memref<64xf32, #tpu.memory_space<smem>>
      %185 = vector.broadcast %184 : f32 to vector<16x16xf32>
      %186 = arith.addf %182, %185 : vector<16x16xf32>
      %c0_87 = arith.constant 0 : index
      %c1_88 = arith.constant 1 : index
      %c0_89 = arith.constant 0 : index
      %c0_90 = arith.constant 0 : index
      %187 = vector.load %arg6[%c0_87, %c1_88, %c0_89, %c0_90] : memref<1x8x16x16xf32, #tpu.memory_space<vmem>>, vector<1x1x16x16xf32>
      %188 = vector.shape_cast %187 : vector<1x1x16x16xf32> to vector<16x16xf32>
      %189 = vector.shape_cast %186 : vector<16x16xf32> to vector<1x1x16x16xf32>
      tpu.vector_store %arg6[%c0_87, %c1_88, %c0_89, %c0_90], %189 {strides = array<i32>} : memref<1x8x16x16xf32, #tpu.memory_space<vmem>>, vector<1x1x16x16xf32>,
      %c2_i32_91 = arith.constant 2 : i32
      %190 = arith.addi %2, %c2_i32_91 : i32
      %cst_92 = arith.constant 0.000000e+00 : f32
      %191 = vector.broadcast %cst_92 : f32 to vector<16x16xf32>
      %c2_93 = arith.constant 2 : index
      %c3_94 = arith.constant 3 : index
      %c5_95 = arith.constant 5 : index
      %192 = vector.load %arg7[%c2_93, %c3_94, %c5_95] : memref<8x29x26xf32, #tpu.memory_space<vmem>>, vector<1x16x16xf32>
      %193 = vector.shape_cast %192 : vector<1x16x16xf32> to vector<16x16xf32>
      %194 = arith.index_cast %190 : i32 to index
      %c0_96 = arith.constant 0 : index
      %195 = memref.load %arg4[%194, %c0_96] : memref<64x11xf32, #tpu.memory_space<smem>>
      %196 = vector.broadcast %195 : f32 to vector<16x16xf32>
      %197 = arith.mulf %193, %196 : vector<16x16xf32>
      %198 = arith.addf %191, %197 : vector<16x16xf32>
      %c2_97 = arith.constant 2 : index
      %c4_98 = arith.constant 4 : index
      %c5_99 = arith.constant 5 : index
      %199 = vector.load %arg7[%c2_97, %c4_98, %c5_99] : memref<8x29x26xf32, #tpu.memory_space<vmem>>, vector<1x16x16xf32>
      %200 = vector.shape_cast %199 : vector<1x16x16xf32> to vector<16x16xf32>
      %201 = arith.index_cast %190 : i32 to index
      %c1_100 = arith.constant 1 : index
      %202 = memref.load %arg4[%201, %c1_100] : memref<64x11xf32, #tpu.memory_space<smem>>
      %203 = vector.broadcast %202 : f32 to vector<16x16xf32>
      %204 = arith.mulf %200, %203 : vector<16x16xf32>
      %205 = arith.addf %198, %204 : vector<16x16xf32>
      %c2_101 = arith.constant 2 : index
      %c5_102 = arith.constant 5 : index
      %c5_103 = arith.constant 5 : index
      %206 = vector.load %arg7[%c2_101, %c5_102, %c5_103] : memref<8x29x26xf32, #tpu.memory_space<vmem>>, vector<1x16x16xf32>
      %207 = vector.shape_cast %206 : vector<1x16x16xf32> to vector<16x16xf32>
      %208 = arith.index_cast %190 : i32 to index
      %c2_104 = arith.constant 2 : index
      %209 = memref.load %arg4[%208, %c2_104] : memref<64x11xf32, #tpu.memory_space<smem>>
      %210 = vector.broadcast %209 : f32 to vector<16x16xf32>
      %211 = arith.mulf %207, %210 : vector<16x16xf32>
      %212 = arith.addf %205, %211 : vector<16x16xf32>
      %c2_105 = arith.constant 2 : index
      %c6_106 = arith.constant 6 : index
      %c5_107 = arith.constant 5 : index
      %213 = vector.load %arg7[%c2_105, %c6_106, %c5_107] : memref<8x29x26xf32, #tpu.memory_space<vmem>>, vector<1x16x16xf32>
      %214 = vector.shape_cast %213 : vector<1x16x16xf32> to vector<16x16xf32>
      %215 = arith.index_cast %190 : i32 to index
      %c3_108 = arith.constant 3 : index
      %216 = memref.load %arg4[%215, %c3_108] : memref<64x11xf32, #tpu.memory_space<smem>>
      %217 = vector.broadcast %216 : f32 to vector<16x16xf32>
      %218 = arith.mulf %214, %217 : vector<16x16xf32>
      %219 = arith.addf %212, %218 : vector<16x16xf32>
      %c2_109 = arith.constant 2 : index
      %c7_110 = arith.constant 7 : index
      %c5_111 = arith.constant 5 : index
      %220 = vector.load %arg7[%c2_109, %c7_110, %c5_111] : memref<8x29x26xf32, #tpu.memory_space<vmem>>, vector<1x16x16xf32>
      %221 = vector.shape_cast %220 : vector<1x16x16xf32> to vector<16x16xf32>
      %222 = arith.index_cast %190 : i32 to index
      %c4_112 = arith.constant 4 : index
      %223 = memref.load %arg4[%222, %c4_112] : memref<64x11xf32, #tpu.memory_space<smem>>
      %224 = vector.broadcast %223 : f32 to vector<16x16xf32>
      %225 = arith.mulf %221, %224 : vector<16x16xf32>
      %226 = arith.addf %219, %225 : vector<16x16xf32>
      %c2_113 = arith.constant 2 : index
      %c8_114 = arith.constant 8 : index
      %c5_115 = arith.constant 5 : index
      %227 = vector.load %arg7[%c2_113, %c8_114, %c5_115] : memref<8x29x26xf32, #tpu.memory_space<vmem>>, vector<1x16x16xf32>
      %228 = vector.shape_cast %227 : vector<1x16x16xf32> to vector<16x16xf32>
      %229 = arith.index_cast %190 : i32 to index
      %c5_116 = arith.constant 5 : index
      %230 = memref.load %arg4[%229, %c5_116] : memref<64x11xf32, #tpu.memory_space<smem>>
      %231 = vector.broadcast %230 : f32 to vector<16x16xf32>
      %232 = arith.mulf %228, %231 : vector<16x16xf32>
      %233 = arith.addf %226, %232 : vector<16x16xf32>
      %c2_117 = arith.constant 2 : index
      %c9_118 = arith.constant 9 : index
      %c5_119 = arith.constant 5 : index
      %234 = vector.load %arg7[%c2_117, %c9_118, %c5_119] : memref<8x29x26xf32, #tpu.memory_space<vmem>>, vector<1x16x16xf32>
      %235 = vector.shape_cast %234 : vector<1x16x16xf32> to vector<16x16xf32>
      %236 = arith.index_cast %190 : i32 to index
      %c6_120 = arith.constant 6 : index
      %237 = memref.load %arg4[%236, %c6_120] : memref<64x11xf32, #tpu.memory_space<smem>>
      %238 = vector.broadcast %237 : f32 to vector<16x16xf32>
      %239 = arith.mulf %235, %238 : vector<16x16xf32>
      %240 = arith.addf %233, %239 : vector<16x16xf32>
      %c2_121 = arith.constant 2 : index
      %c10_122 = arith.constant 10 : index
      %c5_123 = arith.constant 5 : index
      %241 = vector.load %arg7[%c2_121, %c10_122, %c5_123] : memref<8x29x26xf32, #tpu.memory_space<vmem>>, vector<1x16x16xf32>
      %242 = vector.shape_cast %241 : vector<1x16x16xf32> to vector<16x16xf32>
      %243 = arith.index_cast %190 : i32 to index
      %c7_124 = arith.constant 7 : index
      %244 = memref.load %arg4[%243, %c7_124] : memref<64x11xf32, #tpu.memory_space<smem>>
      %245 = vector.broadcast %244 : f32 to vector<16x16xf32>
      %246 = arith.mulf %242, %245 : vector<16x16xf32>
      %247 = arith.addf %240, %246 : vector<16x16xf32>
      %c2_125 = arith.constant 2 : index
      %c11_126 = arith.constant 11 : index
      %c5_127 = arith.constant 5 : index
      %248 = vector.load %arg7[%c2_125, %c11_126, %c5_127] : memref<8x29x26xf32, #tpu.memory_space<vmem>>, vector<1x16x16xf32>
      %249 = vector.shape_cast %248 : vector<1x16x16xf32> to vector<16x16xf32>
      %250 = arith.index_cast %190 : i32 to index
      %c8_128 = arith.constant 8 : index
      %251 = memref.load %arg4[%250, %c8_128] : memref<64x11xf32, #tpu.memory_space<smem>>
      %252 = vector.broadcast %251 : f32 to vector<16x16xf32>
      %253 = arith.mulf %249, %252 : vector<16x16xf32>
      %254 = arith.addf %247, %253 : vector<16x16xf32>
      %c2_129 = arith.constant 2 : index
      %c12_130 = arith.constant 12 : index
      %c5_131 = arith.constant 5 : index
      %255 = vector.load %arg7[%c2_129, %c12_130, %c5_131] : memref<8x29x26xf32, #tpu.memory_space<vmem>>, vector<1x16x16xf32>
      %256 = vector.shape_cast %255 : vector<1x16x16xf32> to vector<16x16xf32>
      %257 = arith.index_cast %190 : i32 to index
      %c9_132 = arith.constant 9 : index
      %258 = memref.load %arg4[%257, %c9_132] : memref<64x11xf32, #tpu.memory_space<smem>>
      %259 = vector.broadcast %258 : f32 to vector<16x16xf32>
      %260 = arith.mulf %256, %259 : vector<16x16xf32>
      %261 = arith.addf %254, %260 : vector<16x16xf32>
      %c2_133 = arith.constant 2 : index
      %c13_134 = arith.constant 13 : index
      %c5_135 = arith.constant 5 : index
      %262 = vector.load %arg7[%c2_133, %c13_134, %c5_135] : memref<8x29x26xf32, #tpu.memory_space<vmem>>, vector<1x16x16xf32>
      %263 = vector.shape_cast %262 : vector<1x16x16xf32> to vector<16x16xf32>
      %264 = arith.index_cast %190 : i32 to index
      %c10_136 = arith.constant 10 : index
      %265 = memref.load %arg4[%264, %c10_136] : memref<64x11xf32, #tpu.memory_space<smem>>
      %266 = vector.broadcast %265 : f32 to vector<16x16xf32>
      %267 = arith.mulf %263, %266 : vector<16x16xf32>
      %268 = arith.addf %261, %267 : vector<16x16xf32>
      %269 = arith.index_cast %190 : i32 to index
      %270 = memref.load %arg5[%269] : memref<64xf32, #tpu.memory_space<smem>>
      %271 = vector.broadcast %270 : f32 to vector<16x16xf32>
      %272 = arith.addf %268, %271 : vector<16x16xf32>
      %c0_137 = arith.constant 0 : index
      %c2_138 = arith.constant 2 : index
      %c0_139 = arith.constant 0 : index
      %c0_140 = arith.constant 0 : index
      %273 = vector.load %arg6[%c0_137, %c2_138, %c0_139, %c0_140] : memref<1x8x16x16xf32, #tpu.memory_space<vmem>>, vector<1x1x16x16xf32>
      %274 = vector.shape_cast %273 : vector<1x1x16x16xf32> to vector<16x16xf32>
      %275 = vector.shape_cast %272 : vector<16x16xf32> to vector<1x1x16x16xf32>
      tpu.vector_store %arg6[%c0_137, %c2_138, %c0_139, %c0_140], %275 {strides = array<i32>} : memref<1x8x16x16xf32, #tpu.memory_space<vmem>>, vector<1x1x16x16xf32>,
      %c3_i32_141 = arith.constant 3 : i32
      %276 = arith.addi %2, %c3_i32_141 : i32
      %cst_142 = arith.constant 0.000000e+00 : f32
      %277 = vector.broadcast %cst_142 : f32 to vector<16x16xf32>
      %c3_143 = arith.constant 3 : index
      %c3_144 = arith.constant 3 : index
      %c5_145 = arith.constant 5 : index
      %278 = vector.load %arg7[%c3_143, %c3_144, %c5_145] : memref<8x29x26xf32, #tpu.memory_space<vmem>>, vector<1x16x16xf32>
      %279 = vector.shape_cast %278 : vector<1x16x16xf32> to vector<16x16xf32>
      %280 = arith.index_cast %276 : i32 to index
      %c0_146 = arith.constant 0 : index
      %281 = memref.load %arg4[%280, %c0_146] : memref<64x11xf32, #tpu.memory_space<smem>>
      %282 = vector.broadcast %281 : f32 to vector<16x16xf32>
      %283 = arith.mulf %279, %282 : vector<16x16xf32>
      %284 = arith.addf %277, %283 : vector<16x16xf32>
      %c3_147 = arith.constant 3 : index
      %c4_148 = arith.constant 4 : index
      %c5_149 = arith.constant 5 : index
      %285 = vector.load %arg7[%c3_147, %c4_148, %c5_149] : memref<8x29x26xf32, #tpu.memory_space<vmem>>, vector<1x16x16xf32>
      %286 = vector.shape_cast %285 : vector<1x16x16xf32> to vector<16x16xf32>
      %287 = arith.index_cast %276 : i32 to index
      %c1_150 = arith.constant 1 : index
      %288 = memref.load %arg4[%287, %c1_150] : memref<64x11xf32, #tpu.memory_space<smem>>
      %289 = vector.broadcast %288 : f32 to vector<16x16xf32>
      %290 = arith.mulf %286, %289 : vector<16x16xf32>
      %291 = arith.addf %284, %290 : vector<16x16xf32>
      %c3_151 = arith.constant 3 : index
      %c5_152 = arith.constant 5 : index
      %c5_153 = arith.constant 5 : index
      %292 = vector.load %arg7[%c3_151, %c5_152, %c5_153] : memref<8x29x26xf32, #tpu.memory_space<vmem>>, vector<1x16x16xf32>
      %293 = vector.shape_cast %292 : vector<1x16x16xf32> to vector<16x16xf32>
      %294 = arith.index_cast %276 : i32 to index
      %c2_154 = arith.constant 2 : index
      %295 = memref.load %arg4[%294, %c2_154] : memref<64x11xf32, #tpu.memory_space<smem>>
      %296 = vector.broadcast %295 : f32 to vector<16x16xf32>
      %297 = arith.mulf %293, %296 : vector<16x16xf32>
      %298 = arith.addf %291, %297 : vector<16x16xf32>
      %c3_155 = arith.constant 3 : index
      %c6_156 = arith.constant 6 : index
      %c5_157 = arith.constant 5 : index
      %299 = vector.load %arg7[%c3_155, %c6_156, %c5_157] : memref<8x29x26xf32, #tpu.memory_space<vmem>>, vector<1x16x16xf32>
      %300 = vector.shape_cast %299 : vector<1x16x16xf32> to vector<16x16xf32>
      %301 = arith.index_cast %276 : i32 to index
      %c3_158 = arith.constant 3 : index
      %302 = memref.load %arg4[%301, %c3_158] : memref<64x11xf32, #tpu.memory_space<smem>>
      %303 = vector.broadcast %302 : f32 to vector<16x16xf32>
      %304 = arith.mulf %300, %303 : vector<16x16xf32>
      %305 = arith.addf %298, %304 : vector<16x16xf32>
      %c3_159 = arith.constant 3 : index
      %c7_160 = arith.constant 7 : index
      %c5_161 = arith.constant 5 : index
      %306 = vector.load %arg7[%c3_159, %c7_160, %c5_161] : memref<8x29x26xf32, #tpu.memory_space<vmem>>, vector<1x16x16xf32>
      %307 = vector.shape_cast %306 : vector<1x16x16xf32> to vector<16x16xf32>
      %308 = arith.index_cast %276 : i32 to index
      %c4_162 = arith.constant 4 : index
      %309 = memref.load %arg4[%308, %c4_162] : memref<64x11xf32, #tpu.memory_space<smem>>
      %310 = vector.broadcast %309 : f32 to vector<16x16xf32>
      %311 = arith.mulf %307, %310 : vector<16x16xf32>
      %312 = arith.addf %305, %311 : vector<16x16xf32>
      %c3_163 = arith.constant 3 : index
      %c8_164 = arith.constant 8 : index
      %c5_165 = arith.constant 5 : index
      %313 = vector.load %arg7[%c3_163, %c8_164, %c5_165] : memref<8x29x26xf32, #tpu.memory_space<vmem>>, vector<1x16x16xf32>
      %314 = vector.shape_cast %313 : vector<1x16x16xf32> to vector<16x16xf32>
      %315 = arith.index_cast %276 : i32 to index
      %c5_166 = arith.constant 5 : index
      %316 = memref.load %arg4[%315, %c5_166] : memref<64x11xf32, #tpu.memory_space<smem>>
      %317 = vector.broadcast %316 : f32 to vector<16x16xf32>
      %318 = arith.mulf %314, %317 : vector<16x16xf32>
      %319 = arith.addf %312, %318 : vector<16x16xf32>
      %c3_167 = arith.constant 3 : index
      %c9_168 = arith.constant 9 : index
      %c5_169 = arith.constant 5 : index
      %320 = vector.load %arg7[%c3_167, %c9_168, %c5_169] : memref<8x29x26xf32, #tpu.memory_space<vmem>>, vector<1x16x16xf32>
      %321 = vector.shape_cast %320 : vector<1x16x16xf32> to vector<16x16xf32>
      %322 = arith.index_cast %276 : i32 to index
      %c6_170 = arith.constant 6 : index
      %323 = memref.load %arg4[%322, %c6_170] : memref<64x11xf32, #tpu.memory_space<smem>>
      %324 = vector.broadcast %323 : f32 to vector<16x16xf32>
      %325 = arith.mulf %321, %324 : vector<16x16xf32>
      %326 = arith.addf %319, %325 : vector<16x16xf32>
      %c3_171 = arith.constant 3 : index
      %c10_172 = arith.constant 10 : index
      %c5_173 = arith.constant 5 : index
      %327 = vector.load %arg7[%c3_171, %c10_172, %c5_173] : memref<8x29x26xf32, #tpu.memory_space<vmem>>, vector<1x16x16xf32>
      %328 = vector.shape_cast %327 : vector<1x16x16xf32> to vector<16x16xf32>
      %329 = arith.index_cast %276 : i32 to index
      %c7_174 = arith.constant 7 : index
      %330 = memref.load %arg4[%329, %c7_174] : memref<64x11xf32, #tpu.memory_space<smem>>
      %331 = vector.broadcast %330 : f32 to vector<16x16xf32>
      %332 = arith.mulf %328, %331 : vector<16x16xf32>
      %333 = arith.addf %326, %332 : vector<16x16xf32>
      %c3_175 = arith.constant 3 : index
      %c11_176 = arith.constant 11 : index
      %c5_177 = arith.constant 5 : index
      %334 = vector.load %arg7[%c3_175, %c11_176, %c5_177] : memref<8x29x26xf32, #tpu.memory_space<vmem>>, vector<1x16x16xf32>
      %335 = vector.shape_cast %334 : vector<1x16x16xf32> to vector<16x16xf32>
      %336 = arith.index_cast %276 : i32 to index
      %c8_178 = arith.constant 8 : index
      %337 = memref.load %arg4[%336, %c8_178] : memref<64x11xf32, #tpu.memory_space<smem>>
      %338 = vector.broadcast %337 : f32 to vector<16x16xf32>
      %339 = arith.mulf %335, %338 : vector<16x16xf32>
      %340 = arith.addf %333, %339 : vector<16x16xf32>
      %c3_179 = arith.constant 3 : index
      %c12_180 = arith.constant 12 : index
      %c5_181 = arith.constant 5 : index
      %341 = vector.load %arg7[%c3_179, %c12_180, %c5_181] : memref<8x29x26xf32, #tpu.memory_space<vmem>>, vector<1x16x16xf32>
      %342 = vector.shape_cast %341 : vector<1x16x16xf32> to vector<16x16xf32>
      %343 = arith.index_cast %276 : i32 to index
      %c9_182 = arith.constant 9 : index
      %344 = memref.load %arg4[%343, %c9_182] : memref<64x11xf32, #tpu.memory_space<smem>>
      %345 = vector.broadcast %344 : f32 to vector<16x16xf32>
      %346 = arith.mulf %342, %345 : vector<16x16xf32>
      %347 = arith.addf %340, %346 : vector<16x16xf32>
      %c3_183 = arith.constant 3 : index
      %c13_184 = arith.constant 13 : index
      %c5_185 = arith.constant 5 : index
      %348 = vector.load %arg7[%c3_183, %c13_184, %c5_185] : memref<8x29x26xf32, #tpu.memory_space<vmem>>, vector<1x16x16xf32>
      %349 = vector.shape_cast %348 : vector<1x16x16xf32> to vector<16x16xf32>
      %350 = arith.index_cast %276 : i32 to index
      %c10_186 = arith.constant 10 : index
      %351 = memref.load %arg4[%350, %c10_186] : memref<64x11xf32, #tpu.memory_space<smem>>
      %352 = vector.broadcast %351 : f32 to vector<16x16xf32>
      %353 = arith.mulf %349, %352 : vector<16x16xf32>
      %354 = arith.addf %347, %353 : vector<16x16xf32>
      %355 = arith.index_cast %276 : i32 to index
      %356 = memref.load %arg5[%355] : memref<64xf32, #tpu.memory_space<smem>>
      %357 = vector.broadcast %356 : f32 to vector<16x16xf32>
      %358 = arith.addf %354, %357 : vector<16x16xf32>
      %c0_187 = arith.constant 0 : index
      %c3_188 = arith.constant 3 : index
      %c0_189 = arith.constant 0 : index
      %c0_190 = arith.constant 0 : index
      %359 = vector.load %arg6[%c0_187, %c3_188, %c0_189, %c0_190] : memref<1x8x16x16xf32, #tpu.memory_space<vmem>>, vector<1x1x16x16xf32>
      %360 = vector.shape_cast %359 : vector<1x1x16x16xf32> to vector<16x16xf32>
      %361 = vector.shape_cast %358 : vector<16x16xf32> to vector<1x1x16x16xf32>
      tpu.vector_store %arg6[%c0_187, %c3_188, %c0_189, %c0_190], %361 {strides = array<i32>} : memref<1x8x16x16xf32, #tpu.memory_space<vmem>>, vector<1x1x16x16xf32>,
      %c4_i32 = arith.constant 4 : i32
      %362 = arith.addi %2, %c4_i32 : i32
      %cst_191 = arith.constant 0.000000e+00 : f32
      %363 = vector.broadcast %cst_191 : f32 to vector<16x16xf32>
      %c4_192 = arith.constant 4 : index
      %c3_193 = arith.constant 3 : index
      %c5_194 = arith.constant 5 : index
      %364 = vector.load %arg7[%c4_192, %c3_193, %c5_194] : memref<8x29x26xf32, #tpu.memory_space<vmem>>, vector<1x16x16xf32>
      %365 = vector.shape_cast %364 : vector<1x16x16xf32> to vector<16x16xf32>
      %366 = arith.index_cast %362 : i32 to index
      %c0_195 = arith.constant 0 : index
      %367 = memref.load %arg4[%366, %c0_195] : memref<64x11xf32, #tpu.memory_space<smem>>
      %368 = vector.broadcast %367 : f32 to vector<16x16xf32>
      %369 = arith.mulf %365, %368 : vector<16x16xf32>
      %370 = arith.addf %363, %369 : vector<16x16xf32>
      %c4_196 = arith.constant 4 : index
      %c4_197 = arith.constant 4 : index
      %c5_198 = arith.constant 5 : index
      %371 = vector.load %arg7[%c4_196, %c4_197, %c5_198] : memref<8x29x26xf32, #tpu.memory_space<vmem>>, vector<1x16x16xf32>
      %372 = vector.shape_cast %371 : vector<1x16x16xf32> to vector<16x16xf32>
      %373 = arith.index_cast %362 : i32 to index
      %c1_199 = arith.constant 1 : index
      %374 = memref.load %arg4[%373, %c1_199] : memref<64x11xf32, #tpu.memory_space<smem>>
      %375 = vector.broadcast %374 : f32 to vector<16x16xf32>
      %376 = arith.mulf %372, %375 : vector<16x16xf32>
      %377 = arith.addf %370, %376 : vector<16x16xf32>
      %c4_200 = arith.constant 4 : index
      %c5_201 = arith.constant 5 : index
      %c5_202 = arith.constant 5 : index
      %378 = vector.load %arg7[%c4_200, %c5_201, %c5_202] : memref<8x29x26xf32, #tpu.memory_space<vmem>>, vector<1x16x16xf32>
      %379 = vector.shape_cast %378 : vector<1x16x16xf32> to vector<16x16xf32>
      %380 = arith.index_cast %362 : i32 to index
      %c2_203 = arith.constant 2 : index
      %381 = memref.load %arg4[%380, %c2_203] : memref<64x11xf32, #tpu.memory_space<smem>>
      %382 = vector.broadcast %381 : f32 to vector<16x16xf32>
      %383 = arith.mulf %379, %382 : vector<16x16xf32>
      %384 = arith.addf %377, %383 : vector<16x16xf32>
      %c4_204 = arith.constant 4 : index
      %c6_205 = arith.constant 6 : index
      %c5_206 = arith.constant 5 : index
      %385 = vector.load %arg7[%c4_204, %c6_205, %c5_206] : memref<8x29x26xf32, #tpu.memory_space<vmem>>, vector<1x16x16xf32>
      %386 = vector.shape_cast %385 : vector<1x16x16xf32> to vector<16x16xf32>
      %387 = arith.index_cast %362 : i32 to index
      %c3_207 = arith.constant 3 : index
      %388 = memref.load %arg4[%387, %c3_207] : memref<64x11xf32, #tpu.memory_space<smem>>
      %389 = vector.broadcast %388 : f32 to vector<16x16xf32>
      %390 = arith.mulf %386, %389 : vector<16x16xf32>
      %391 = arith.addf %384, %390 : vector<16x16xf32>
      %c4_208 = arith.constant 4 : index
      %c7_209 = arith.constant 7 : index
      %c5_210 = arith.constant 5 : index
      %392 = vector.load %arg7[%c4_208, %c7_209, %c5_210] : memref<8x29x26xf32, #tpu.memory_space<vmem>>, vector<1x16x16xf32>
      %393 = vector.shape_cast %392 : vector<1x16x16xf32> to vector<16x16xf32>
      %394 = arith.index_cast %362 : i32 to index
      %c4_211 = arith.constant 4 : index
      %395 = memref.load %arg4[%394, %c4_211] : memref<64x11xf32, #tpu.memory_space<smem>>
      %396 = vector.broadcast %395 : f32 to vector<16x16xf32>
      %397 = arith.mulf %393, %396 : vector<16x16xf32>
      %398 = arith.addf %391, %397 : vector<16x16xf32>
      %c4_212 = arith.constant 4 : index
      %c8_213 = arith.constant 8 : index
      %c5_214 = arith.constant 5 : index
      %399 = vector.load %arg7[%c4_212, %c8_213, %c5_214] : memref<8x29x26xf32, #tpu.memory_space<vmem>>, vector<1x16x16xf32>
      %400 = vector.shape_cast %399 : vector<1x16x16xf32> to vector<16x16xf32>
      %401 = arith.index_cast %362 : i32 to index
      %c5_215 = arith.constant 5 : index
      %402 = memref.load %arg4[%401, %c5_215] : memref<64x11xf32, #tpu.memory_space<smem>>
      %403 = vector.broadcast %402 : f32 to vector<16x16xf32>
      %404 = arith.mulf %400, %403 : vector<16x16xf32>
      %405 = arith.addf %398, %404 : vector<16x16xf32>
      %c4_216 = arith.constant 4 : index
      %c9_217 = arith.constant 9 : index
      %c5_218 = arith.constant 5 : index
      %406 = vector.load %arg7[%c4_216, %c9_217, %c5_218] : memref<8x29x26xf32, #tpu.memory_space<vmem>>, vector<1x16x16xf32>
      %407 = vector.shape_cast %406 : vector<1x16x16xf32> to vector<16x16xf32>
      %408 = arith.index_cast %362 : i32 to index
      %c6_219 = arith.constant 6 : index
      %409 = memref.load %arg4[%408, %c6_219] : memref<64x11xf32, #tpu.memory_space<smem>>
      %410 = vector.broadcast %409 : f32 to vector<16x16xf32>
      %411 = arith.mulf %407, %410 : vector<16x16xf32>
      %412 = arith.addf %405, %411 : vector<16x16xf32>
      %c4_220 = arith.constant 4 : index
      %c10_221 = arith.constant 10 : index
      %c5_222 = arith.constant 5 : index
      %413 = vector.load %arg7[%c4_220, %c10_221, %c5_222] : memref<8x29x26xf32, #tpu.memory_space<vmem>>, vector<1x16x16xf32>
      %414 = vector.shape_cast %413 : vector<1x16x16xf32> to vector<16x16xf32>
      %415 = arith.index_cast %362 : i32 to index
      %c7_223 = arith.constant 7 : index
      %416 = memref.load %arg4[%415, %c7_223] : memref<64x11xf32, #tpu.memory_space<smem>>
      %417 = vector.broadcast %416 : f32 to vector<16x16xf32>
      %418 = arith.mulf %414, %417 : vector<16x16xf32>
      %419 = arith.addf %412, %418 : vector<16x16xf32>
      %c4_224 = arith.constant 4 : index
      %c11_225 = arith.constant 11 : index
      %c5_226 = arith.constant 5 : index
      %420 = vector.load %arg7[%c4_224, %c11_225, %c5_226] : memref<8x29x26xf32, #tpu.memory_space<vmem>>, vector<1x16x16xf32>
      %421 = vector.shape_cast %420 : vector<1x16x16xf32> to vector<16x16xf32>
      %422 = arith.index_cast %362 : i32 to index
      %c8_227 = arith.constant 8 : index
      %423 = memref.load %arg4[%422, %c8_227] : memref<64x11xf32, #tpu.memory_space<smem>>
      %424 = vector.broadcast %423 : f32 to vector<16x16xf32>
      %425 = arith.mulf %421, %424 : vector<16x16xf32>
      %426 = arith.addf %419, %425 : vector<16x16xf32>
      %c4_228 = arith.constant 4 : index
      %c12_229 = arith.constant 12 : index
      %c5_230 = arith.constant 5 : index
      %427 = vector.load %arg7[%c4_228, %c12_229, %c5_230] : memref<8x29x26xf32, #tpu.memory_space<vmem>>, vector<1x16x16xf32>
      %428 = vector.shape_cast %427 : vector<1x16x16xf32> to vector<16x16xf32>
      %429 = arith.index_cast %362 : i32 to index
      %c9_231 = arith.constant 9 : index
      %430 = memref.load %arg4[%429, %c9_231] : memref<64x11xf32, #tpu.memory_space<smem>>
      %431 = vector.broadcast %430 : f32 to vector<16x16xf32>
      %432 = arith.mulf %428, %431 : vector<16x16xf32>
      %433 = arith.addf %426, %432 : vector<16x16xf32>
      %c4_232 = arith.constant 4 : index
      %c13_233 = arith.constant 13 : index
      %c5_234 = arith.constant 5 : index
      %434 = vector.load %arg7[%c4_232, %c13_233, %c5_234] : memref<8x29x26xf32, #tpu.memory_space<vmem>>, vector<1x16x16xf32>
      %435 = vector.shape_cast %434 : vector<1x16x16xf32> to vector<16x16xf32>
      %436 = arith.index_cast %362 : i32 to index
      %c10_235 = arith.constant 10 : index
      %437 = memref.load %arg4[%436, %c10_235] : memref<64x11xf32, #tpu.memory_space<smem>>
      %438 = vector.broadcast %437 : f32 to vector<16x16xf32>
      %439 = arith.mulf %435, %438 : vector<16x16xf32>
      %440 = arith.addf %433, %439 : vector<16x16xf32>
      %441 = arith.index_cast %362 : i32 to index
      %442 = memref.load %arg5[%441] : memref<64xf32, #tpu.memory_space<smem>>
      %443 = vector.broadcast %442 : f32 to vector<16x16xf32>
      %444 = arith.addf %440, %443 : vector<16x16xf32>
      %c0_236 = arith.constant 0 : index
      %c4_237 = arith.constant 4 : index
      %c0_238 = arith.constant 0 : index
      %c0_239 = arith.constant 0 : index
      %445 = vector.load %arg6[%c0_236, %c4_237, %c0_238, %c0_239] : memref<1x8x16x16xf32, #tpu.memory_space<vmem>>, vector<1x1x16x16xf32>
      %446 = vector.shape_cast %445 : vector<1x1x16x16xf32> to vector<16x16xf32>
      %447 = vector.shape_cast %444 : vector<16x16xf32> to vector<1x1x16x16xf32>
      tpu.vector_store %arg6[%c0_236, %c4_237, %c0_238, %c0_239], %447 {strides = array<i32>} : memref<1x8x16x16xf32, #tpu.memory_space<vmem>>, vector<1x1x16x16xf32>,
      %c5_i32 = arith.constant 5 : i32
      %448 = arith.addi %2, %c5_i32 : i32
      %cst_240 = arith.constant 0.000000e+00 : f32
      %449 = vector.broadcast %cst_240 : f32 to vector<16x16xf32>
      %c5_241 = arith.constant 5 : index
      %c3_242 = arith.constant 3 : index
      %c5_243 = arith.constant 5 : index
      %450 = vector.load %arg7[%c5_241, %c3_242, %c5_243] : memref<8x29x26xf32, #tpu.memory_space<vmem>>, vector<1x16x16xf32>
      %451 = vector.shape_cast %450 : vector<1x16x16xf32> to vector<16x16xf32>
      %452 = arith.index_cast %448 : i32 to index
      %c0_244 = arith.constant 0 : index
      %453 = memref.load %arg4[%452, %c0_244] : memref<64x11xf32, #tpu.memory_space<smem>>
      %454 = vector.broadcast %453 : f32 to vector<16x16xf32>
      %455 = arith.mulf %451, %454 : vector<16x16xf32>
      %456 = arith.addf %449, %455 : vector<16x16xf32>
      %c5_245 = arith.constant 5 : index
      %c4_246 = arith.constant 4 : index
      %c5_247 = arith.constant 5 : index
      %457 = vector.load %arg7[%c5_245, %c4_246, %c5_247] : memref<8x29x26xf32, #tpu.memory_space<vmem>>, vector<1x16x16xf32>
      %458 = vector.shape_cast %457 : vector<1x16x16xf32> to vector<16x16xf32>
      %459 = arith.index_cast %448 : i32 to index
      %c1_248 = arith.constant 1 : index
      %460 = memref.load %arg4[%459, %c1_248] : memref<64x11xf32, #tpu.memory_space<smem>>
      %461 = vector.broadcast %460 : f32 to vector<16x16xf32>
      %462 = arith.mulf %458, %461 : vector<16x16xf32>
      %463 = arith.addf %456, %462 : vector<16x16xf32>
      %c5_249 = arith.constant 5 : index
      %c5_250 = arith.constant 5 : index
      %c5_251 = arith.constant 5 : index
      %464 = vector.load %arg7[%c5_249, %c5_250, %c5_251] : memref<8x29x26xf32, #tpu.memory_space<vmem>>, vector<1x16x16xf32>
      %465 = vector.shape_cast %464 : vector<1x16x16xf32> to vector<16x16xf32>
      %466 = arith.index_cast %448 : i32 to index
      %c2_252 = arith.constant 2 : index
      %467 = memref.load %arg4[%466, %c2_252] : memref<64x11xf32, #tpu.memory_space<smem>>
      %468 = vector.broadcast %467 : f32 to vector<16x16xf32>
      %469 = arith.mulf %465, %468 : vector<16x16xf32>
      %470 = arith.addf %463, %469 : vector<16x16xf32>
      %c5_253 = arith.constant 5 : index
      %c6_254 = arith.constant 6 : index
      %c5_255 = arith.constant 5 : index
      %471 = vector.load %arg7[%c5_253, %c6_254, %c5_255] : memref<8x29x26xf32, #tpu.memory_space<vmem>>, vector<1x16x16xf32>
      %472 = vector.shape_cast %471 : vector<1x16x16xf32> to vector<16x16xf32>
      %473 = arith.index_cast %448 : i32 to index
      %c3_256 = arith.constant 3 : index
      %474 = memref.load %arg4[%473, %c3_256] : memref<64x11xf32, #tpu.memory_space<smem>>
      %475 = vector.broadcast %474 : f32 to vector<16x16xf32>
      %476 = arith.mulf %472, %475 : vector<16x16xf32>
      %477 = arith.addf %470, %476 : vector<16x16xf32>
      %c5_257 = arith.constant 5 : index
      %c7_258 = arith.constant 7 : index
      %c5_259 = arith.constant 5 : index
      %478 = vector.load %arg7[%c5_257, %c7_258, %c5_259] : memref<8x29x26xf32, #tpu.memory_space<vmem>>, vector<1x16x16xf32>
      %479 = vector.shape_cast %478 : vector<1x16x16xf32> to vector<16x16xf32>
      %480 = arith.index_cast %448 : i32 to index
      %c4_260 = arith.constant 4 : index
      %481 = memref.load %arg4[%480, %c4_260] : memref<64x11xf32, #tpu.memory_space<smem>>
      %482 = vector.broadcast %481 : f32 to vector<16x16xf32>
      %483 = arith.mulf %479, %482 : vector<16x16xf32>
      %484 = arith.addf %477, %483 : vector<16x16xf32>
      %c5_261 = arith.constant 5 : index
      %c8_262 = arith.constant 8 : index
      %c5_263 = arith.constant 5 : index
      %485 = vector.load %arg7[%c5_261, %c8_262, %c5_263] : memref<8x29x26xf32, #tpu.memory_space<vmem>>, vector<1x16x16xf32>
      %486 = vector.shape_cast %485 : vector<1x16x16xf32> to vector<16x16xf32>
      %487 = arith.index_cast %448 : i32 to index
      %c5_264 = arith.constant 5 : index
      %488 = memref.load %arg4[%487, %c5_264] : memref<64x11xf32, #tpu.memory_space<smem>>
      %489 = vector.broadcast %488 : f32 to vector<16x16xf32>
      %490 = arith.mulf %486, %489 : vector<16x16xf32>
      %491 = arith.addf %484, %490 : vector<16x16xf32>
      %c5_265 = arith.constant 5 : index
      %c9_266 = arith.constant 9 : index
      %c5_267 = arith.constant 5 : index
      %492 = vector.load %arg7[%c5_265, %c9_266, %c5_267] : memref<8x29x26xf32, #tpu.memory_space<vmem>>, vector<1x16x16xf32>
      %493 = vector.shape_cast %492 : vector<1x16x16xf32> to vector<16x16xf32>
      %494 = arith.index_cast %448 : i32 to index
      %c6_268 = arith.constant 6 : index
      %495 = memref.load %arg4[%494, %c6_268] : memref<64x11xf32, #tpu.memory_space<smem>>
      %496 = vector.broadcast %495 : f32 to vector<16x16xf32>
      %497 = arith.mulf %493, %496 : vector<16x16xf32>
      %498 = arith.addf %491, %497 : vector<16x16xf32>
      %c5_269 = arith.constant 5 : index
      %c10_270 = arith.constant 10 : index
      %c5_271 = arith.constant 5 : index
      %499 = vector.load %arg7[%c5_269, %c10_270, %c5_271] : memref<8x29x26xf32, #tpu.memory_space<vmem>>, vector<1x16x16xf32>
      %500 = vector.shape_cast %499 : vector<1x16x16xf32> to vector<16x16xf32>
      %501 = arith.index_cast %448 : i32 to index
      %c7_272 = arith.constant 7 : index
      %502 = memref.load %arg4[%501, %c7_272] : memref<64x11xf32, #tpu.memory_space<smem>>
      %503 = vector.broadcast %502 : f32 to vector<16x16xf32>
      %504 = arith.mulf %500, %503 : vector<16x16xf32>
      %505 = arith.addf %498, %504 : vector<16x16xf32>
      %c5_273 = arith.constant 5 : index
      %c11_274 = arith.constant 11 : index
      %c5_275 = arith.constant 5 : index
      %506 = vector.load %arg7[%c5_273, %c11_274, %c5_275] : memref<8x29x26xf32, #tpu.memory_space<vmem>>, vector<1x16x16xf32>
      %507 = vector.shape_cast %506 : vector<1x16x16xf32> to vector<16x16xf32>
      %508 = arith.index_cast %448 : i32 to index
      %c8_276 = arith.constant 8 : index
      %509 = memref.load %arg4[%508, %c8_276] : memref<64x11xf32, #tpu.memory_space<smem>>
      %510 = vector.broadcast %509 : f32 to vector<16x16xf32>
      %511 = arith.mulf %507, %510 : vector<16x16xf32>
      %512 = arith.addf %505, %511 : vector<16x16xf32>
      %c5_277 = arith.constant 5 : index
      %c12_278 = arith.constant 12 : index
      %c5_279 = arith.constant 5 : index
      %513 = vector.load %arg7[%c5_277, %c12_278, %c5_279] : memref<8x29x26xf32, #tpu.memory_space<vmem>>, vector<1x16x16xf32>
      %514 = vector.shape_cast %513 : vector<1x16x16xf32> to vector<16x16xf32>
      %515 = arith.index_cast %448 : i32 to index
      %c9_280 = arith.constant 9 : index
      %516 = memref.load %arg4[%515, %c9_280] : memref<64x11xf32, #tpu.memory_space<smem>>
      %517 = vector.broadcast %516 : f32 to vector<16x16xf32>
      %518 = arith.mulf %514, %517 : vector<16x16xf32>
      %519 = arith.addf %512, %518 : vector<16x16xf32>
      %c5_281 = arith.constant 5 : index
      %c13_282 = arith.constant 13 : index
      %c5_283 = arith.constant 5 : index
      %520 = vector.load %arg7[%c5_281, %c13_282, %c5_283] : memref<8x29x26xf32, #tpu.memory_space<vmem>>, vector<1x16x16xf32>
      %521 = vector.shape_cast %520 : vector<1x16x16xf32> to vector<16x16xf32>
      %522 = arith.index_cast %448 : i32 to index
      %c10_284 = arith.constant 10 : index
      %523 = memref.load %arg4[%522, %c10_284] : memref<64x11xf32, #tpu.memory_space<smem>>
      %524 = vector.broadcast %523 : f32 to vector<16x16xf32>
      %525 = arith.mulf %521, %524 : vector<16x16xf32>
      %526 = arith.addf %519, %525 : vector<16x16xf32>
      %527 = arith.index_cast %448 : i32 to index
      %528 = memref.load %arg5[%527] : memref<64xf32, #tpu.memory_space<smem>>
      %529 = vector.broadcast %528 : f32 to vector<16x16xf32>
      %530 = arith.addf %526, %529 : vector<16x16xf32>
      %c0_285 = arith.constant 0 : index
      %c5_286 = arith.constant 5 : index
      %c0_287 = arith.constant 0 : index
      %c0_288 = arith.constant 0 : index
      %531 = vector.load %arg6[%c0_285, %c5_286, %c0_287, %c0_288] : memref<1x8x16x16xf32, #tpu.memory_space<vmem>>, vector<1x1x16x16xf32>
      %532 = vector.shape_cast %531 : vector<1x1x16x16xf32> to vector<16x16xf32>
      %533 = vector.shape_cast %530 : vector<16x16xf32> to vector<1x1x16x16xf32>
      tpu.vector_store %arg6[%c0_285, %c5_286, %c0_287, %c0_288], %533 {strides = array<i32>} : memref<1x8x16x16xf32, #tpu.memory_space<vmem>>, vector<1x1x16x16xf32>,
      %c6_i32 = arith.constant 6 : i32
      %534 = arith.addi %2, %c6_i32 : i32
      %cst_289 = arith.constant 0.000000e+00 : f32
      %535 = vector.broadcast %cst_289 : f32 to vector<16x16xf32>
      %c6_290 = arith.constant 6 : index
      %c3_291 = arith.constant 3 : index
      %c5_292 = arith.constant 5 : index
      %536 = vector.load %arg7[%c6_290, %c3_291, %c5_292] : memref<8x29x26xf32, #tpu.memory_space<vmem>>, vector<1x16x16xf32>
      %537 = vector.shape_cast %536 : vector<1x16x16xf32> to vector<16x16xf32>
      %538 = arith.index_cast %534 : i32 to index
      %c0_293 = arith.constant 0 : index
      %539 = memref.load %arg4[%538, %c0_293] : memref<64x11xf32, #tpu.memory_space<smem>>
      %540 = vector.broadcast %539 : f32 to vector<16x16xf32>
      %541 = arith.mulf %537, %540 : vector<16x16xf32>
      %542 = arith.addf %535, %541 : vector<16x16xf32>
      %c6_294 = arith.constant 6 : index
      %c4_295 = arith.constant 4 : index
      %c5_296 = arith.constant 5 : index
      %543 = vector.load %arg7[%c6_294, %c4_295, %c5_296] : memref<8x29x26xf32, #tpu.memory_space<vmem>>, vector<1x16x16xf32>
      %544 = vector.shape_cast %543 : vector<1x16x16xf32> to vector<16x16xf32>
      %545 = arith.index_cast %534 : i32 to index
      %c1_297 = arith.constant 1 : index
      %546 = memref.load %arg4[%545, %c1_297] : memref<64x11xf32, #tpu.memory_space<smem>>
      %547 = vector.broadcast %546 : f32 to vector<16x16xf32>
      %548 = arith.mulf %544, %547 : vector<16x16xf32>
      %549 = arith.addf %542, %548 : vector<16x16xf32>
      %c6_298 = arith.constant 6 : index
      %c5_299 = arith.constant 5 : index
      %c5_300 = arith.constant 5 : index
      %550 = vector.load %arg7[%c6_298, %c5_299, %c5_300] : memref<8x29x26xf32, #tpu.memory_space<vmem>>, vector<1x16x16xf32>
      %551 = vector.shape_cast %550 : vector<1x16x16xf32> to vector<16x16xf32>
      %552 = arith.index_cast %534 : i32 to index
      %c2_301 = arith.constant 2 : index
      %553 = memref.load %arg4[%552, %c2_301] : memref<64x11xf32, #tpu.memory_space<smem>>
      %554 = vector.broadcast %553 : f32 to vector<16x16xf32>
      %555 = arith.mulf %551, %554 : vector<16x16xf32>
      %556 = arith.addf %549, %555 : vector<16x16xf32>
      %c6_302 = arith.constant 6 : index
      %c6_303 = arith.constant 6 : index
      %c5_304 = arith.constant 5 : index
      %557 = vector.load %arg7[%c6_302, %c6_303, %c5_304] : memref<8x29x26xf32, #tpu.memory_space<vmem>>, vector<1x16x16xf32>
      %558 = vector.shape_cast %557 : vector<1x16x16xf32> to vector<16x16xf32>
      %559 = arith.index_cast %534 : i32 to index
      %c3_305 = arith.constant 3 : index
      %560 = memref.load %arg4[%559, %c3_305] : memref<64x11xf32, #tpu.memory_space<smem>>
      %561 = vector.broadcast %560 : f32 to vector<16x16xf32>
      %562 = arith.mulf %558, %561 : vector<16x16xf32>
      %563 = arith.addf %556, %562 : vector<16x16xf32>
      %c6_306 = arith.constant 6 : index
      %c7_307 = arith.constant 7 : index
      %c5_308 = arith.constant 5 : index
      %564 = vector.load %arg7[%c6_306, %c7_307, %c5_308] : memref<8x29x26xf32, #tpu.memory_space<vmem>>, vector<1x16x16xf32>
      %565 = vector.shape_cast %564 : vector<1x16x16xf32> to vector<16x16xf32>
      %566 = arith.index_cast %534 : i32 to index
      %c4_309 = arith.constant 4 : index
      %567 = memref.load %arg4[%566, %c4_309] : memref<64x11xf32, #tpu.memory_space<smem>>
      %568 = vector.broadcast %567 : f32 to vector<16x16xf32>
      %569 = arith.mulf %565, %568 : vector<16x16xf32>
      %570 = arith.addf %563, %569 : vector<16x16xf32>
      %c6_310 = arith.constant 6 : index
      %c8_311 = arith.constant 8 : index
      %c5_312 = arith.constant 5 : index
      %571 = vector.load %arg7[%c6_310, %c8_311, %c5_312] : memref<8x29x26xf32, #tpu.memory_space<vmem>>, vector<1x16x16xf32>
      %572 = vector.shape_cast %571 : vector<1x16x16xf32> to vector<16x16xf32>
      %573 = arith.index_cast %534 : i32 to index
      %c5_313 = arith.constant 5 : index
      %574 = memref.load %arg4[%573, %c5_313] : memref<64x11xf32, #tpu.memory_space<smem>>
      %575 = vector.broadcast %574 : f32 to vector<16x16xf32>
      %576 = arith.mulf %572, %575 : vector<16x16xf32>
      %577 = arith.addf %570, %576 : vector<16x16xf32>
      %c6_314 = arith.constant 6 : index
      %c9_315 = arith.constant 9 : index
      %c5_316 = arith.constant 5 : index
      %578 = vector.load %arg7[%c6_314, %c9_315, %c5_316] : memref<8x29x26xf32, #tpu.memory_space<vmem>>, vector<1x16x16xf32>
      %579 = vector.shape_cast %578 : vector<1x16x16xf32> to vector<16x16xf32>
      %580 = arith.index_cast %534 : i32 to index
      %c6_317 = arith.constant 6 : index
      %581 = memref.load %arg4[%580, %c6_317] : memref<64x11xf32, #tpu.memory_space<smem>>
      %582 = vector.broadcast %581 : f32 to vector<16x16xf32>
      %583 = arith.mulf %579, %582 : vector<16x16xf32>
      %584 = arith.addf %577, %583 : vector<16x16xf32>
      %c6_318 = arith.constant 6 : index
      %c10_319 = arith.constant 10 : index
      %c5_320 = arith.constant 5 : index
      %585 = vector.load %arg7[%c6_318, %c10_319, %c5_320] : memref<8x29x26xf32, #tpu.memory_space<vmem>>, vector<1x16x16xf32>
      %586 = vector.shape_cast %585 : vector<1x16x16xf32> to vector<16x16xf32>
      %587 = arith.index_cast %534 : i32 to index
      %c7_321 = arith.constant 7 : index
      %588 = memref.load %arg4[%587, %c7_321] : memref<64x11xf32, #tpu.memory_space<smem>>
      %589 = vector.broadcast %588 : f32 to vector<16x16xf32>
      %590 = arith.mulf %586, %589 : vector<16x16xf32>
      %591 = arith.addf %584, %590 : vector<16x16xf32>
      %c6_322 = arith.constant 6 : index
      %c11_323 = arith.constant 11 : index
      %c5_324 = arith.constant 5 : index
      %592 = vector.load %arg7[%c6_322, %c11_323, %c5_324] : memref<8x29x26xf32, #tpu.memory_space<vmem>>, vector<1x16x16xf32>
      %593 = vector.shape_cast %592 : vector<1x16x16xf32> to vector<16x16xf32>
      %594 = arith.index_cast %534 : i32 to index
      %c8_325 = arith.constant 8 : index
      %595 = memref.load %arg4[%594, %c8_325] : memref<64x11xf32, #tpu.memory_space<smem>>
      %596 = vector.broadcast %595 : f32 to vector<16x16xf32>
      %597 = arith.mulf %593, %596 : vector<16x16xf32>
      %598 = arith.addf %591, %597 : vector<16x16xf32>
      %c6_326 = arith.constant 6 : index
      %c12_327 = arith.constant 12 : index
      %c5_328 = arith.constant 5 : index
      %599 = vector.load %arg7[%c6_326, %c12_327, %c5_328] : memref<8x29x26xf32, #tpu.memory_space<vmem>>, vector<1x16x16xf32>
      %600 = vector.shape_cast %599 : vector<1x16x16xf32> to vector<16x16xf32>
      %601 = arith.index_cast %534 : i32 to index
      %c9_329 = arith.constant 9 : index
      %602 = memref.load %arg4[%601, %c9_329] : memref<64x11xf32, #tpu.memory_space<smem>>
      %603 = vector.broadcast %602 : f32 to vector<16x16xf32>
      %604 = arith.mulf %600, %603 : vector<16x16xf32>
      %605 = arith.addf %598, %604 : vector<16x16xf32>
      %c6_330 = arith.constant 6 : index
      %c13_331 = arith.constant 13 : index
      %c5_332 = arith.constant 5 : index
      %606 = vector.load %arg7[%c6_330, %c13_331, %c5_332] : memref<8x29x26xf32, #tpu.memory_space<vmem>>, vector<1x16x16xf32>
      %607 = vector.shape_cast %606 : vector<1x16x16xf32> to vector<16x16xf32>
      %608 = arith.index_cast %534 : i32 to index
      %c10_333 = arith.constant 10 : index
      %609 = memref.load %arg4[%608, %c10_333] : memref<64x11xf32, #tpu.memory_space<smem>>
      %610 = vector.broadcast %609 : f32 to vector<16x16xf32>
      %611 = arith.mulf %607, %610 : vector<16x16xf32>
      %612 = arith.addf %605, %611 : vector<16x16xf32>
      %613 = arith.index_cast %534 : i32 to index
      %614 = memref.load %arg5[%613] : memref<64xf32, #tpu.memory_space<smem>>
      %615 = vector.broadcast %614 : f32 to vector<16x16xf32>
      %616 = arith.addf %612, %615 : vector<16x16xf32>
      %c0_334 = arith.constant 0 : index
      %c6_335 = arith.constant 6 : index
      %c0_336 = arith.constant 0 : index
      %c0_337 = arith.constant 0 : index
      %617 = vector.load %arg6[%c0_334, %c6_335, %c0_336, %c0_337] : memref<1x8x16x16xf32, #tpu.memory_space<vmem>>, vector<1x1x16x16xf32>
      %618 = vector.shape_cast %617 : vector<1x1x16x16xf32> to vector<16x16xf32>
      %619 = vector.shape_cast %616 : vector<16x16xf32> to vector<1x1x16x16xf32>
      tpu.vector_store %arg6[%c0_334, %c6_335, %c0_336, %c0_337], %619 {strides = array<i32>} : memref<1x8x16x16xf32, #tpu.memory_space<vmem>>, vector<1x1x16x16xf32>,
      %c7_i32 = arith.constant 7 : i32
      %620 = arith.addi %2, %c7_i32 : i32
      %cst_338 = arith.constant 0.000000e+00 : f32
      %621 = vector.broadcast %cst_338 : f32 to vector<16x16xf32>
      %c7_339 = arith.constant 7 : index
      %c3_340 = arith.constant 3 : index
      %c5_341 = arith.constant 5 : index
      %622 = vector.load %arg7[%c7_339, %c3_340, %c5_341] : memref<8x29x26xf32, #tpu.memory_space<vmem>>, vector<1x16x16xf32>
      %623 = vector.shape_cast %622 : vector<1x16x16xf32> to vector<16x16xf32>
      %624 = arith.index_cast %620 : i32 to index
      %c0_342 = arith.constant 0 : index
      %625 = memref.load %arg4[%624, %c0_342] : memref<64x11xf32, #tpu.memory_space<smem>>
      %626 = vector.broadcast %625 : f32 to vector<16x16xf32>
      %627 = arith.mulf %623, %626 : vector<16x16xf32>
      %628 = arith.addf %621, %627 : vector<16x16xf32>
      %c7_343 = arith.constant 7 : index
      %c4_344 = arith.constant 4 : index
      %c5_345 = arith.constant 5 : index
      %629 = vector.load %arg7[%c7_343, %c4_344, %c5_345] : memref<8x29x26xf32, #tpu.memory_space<vmem>>, vector<1x16x16xf32>
      %630 = vector.shape_cast %629 : vector<1x16x16xf32> to vector<16x16xf32>
      %631 = arith.index_cast %620 : i32 to index
      %c1_346 = arith.constant 1 : index
      %632 = memref.load %arg4[%631, %c1_346] : memref<64x11xf32, #tpu.memory_space<smem>>
      %633 = vector.broadcast %632 : f32 to vector<16x16xf32>
      %634 = arith.mulf %630, %633 : vector<16x16xf32>
      %635 = arith.addf %628, %634 : vector<16x16xf32>
      %c7_347 = arith.constant 7 : index
      %c5_348 = arith.constant 5 : index
      %c5_349 = arith.constant 5 : index
      %636 = vector.load %arg7[%c7_347, %c5_348, %c5_349] : memref<8x29x26xf32, #tpu.memory_space<vmem>>, vector<1x16x16xf32>
      %637 = vector.shape_cast %636 : vector<1x16x16xf32> to vector<16x16xf32>
      %638 = arith.index_cast %620 : i32 to index
      %c2_350 = arith.constant 2 : index
      %639 = memref.load %arg4[%638, %c2_350] : memref<64x11xf32, #tpu.memory_space<smem>>
      %640 = vector.broadcast %639 : f32 to vector<16x16xf32>
      %641 = arith.mulf %637, %640 : vector<16x16xf32>
      %642 = arith.addf %635, %641 : vector<16x16xf32>
      %c7_351 = arith.constant 7 : index
      %c6_352 = arith.constant 6 : index
      %c5_353 = arith.constant 5 : index
      %643 = vector.load %arg7[%c7_351, %c6_352, %c5_353] : memref<8x29x26xf32, #tpu.memory_space<vmem>>, vector<1x16x16xf32>
      %644 = vector.shape_cast %643 : vector<1x16x16xf32> to vector<16x16xf32>
      %645 = arith.index_cast %620 : i32 to index
      %c3_354 = arith.constant 3 : index
      %646 = memref.load %arg4[%645, %c3_354] : memref<64x11xf32, #tpu.memory_space<smem>>
      %647 = vector.broadcast %646 : f32 to vector<16x16xf32>
      %648 = arith.mulf %644, %647 : vector<16x16xf32>
      %649 = arith.addf %642, %648 : vector<16x16xf32>
      %c7_355 = arith.constant 7 : index
      %c7_356 = arith.constant 7 : index
      %c5_357 = arith.constant 5 : index
      %650 = vector.load %arg7[%c7_355, %c7_356, %c5_357] : memref<8x29x26xf32, #tpu.memory_space<vmem>>, vector<1x16x16xf32>
      %651 = vector.shape_cast %650 : vector<1x16x16xf32> to vector<16x16xf32>
      %652 = arith.index_cast %620 : i32 to index
      %c4_358 = arith.constant 4 : index
      %653 = memref.load %arg4[%652, %c4_358] : memref<64x11xf32, #tpu.memory_space<smem>>
      %654 = vector.broadcast %653 : f32 to vector<16x16xf32>
      %655 = arith.mulf %651, %654 : vector<16x16xf32>
      %656 = arith.addf %649, %655 : vector<16x16xf32>
      %c7_359 = arith.constant 7 : index
      %c8_360 = arith.constant 8 : index
      %c5_361 = arith.constant 5 : index
      %657 = vector.load %arg7[%c7_359, %c8_360, %c5_361] : memref<8x29x26xf32, #tpu.memory_space<vmem>>, vector<1x16x16xf32>
      %658 = vector.shape_cast %657 : vector<1x16x16xf32> to vector<16x16xf32>
      %659 = arith.index_cast %620 : i32 to index
      %c5_362 = arith.constant 5 : index
      %660 = memref.load %arg4[%659, %c5_362] : memref<64x11xf32, #tpu.memory_space<smem>>
      %661 = vector.broadcast %660 : f32 to vector<16x16xf32>
      %662 = arith.mulf %658, %661 : vector<16x16xf32>
      %663 = arith.addf %656, %662 : vector<16x16xf32>
      %c7_363 = arith.constant 7 : index
      %c9_364 = arith.constant 9 : index
      %c5_365 = arith.constant 5 : index
      %664 = vector.load %arg7[%c7_363, %c9_364, %c5_365] : memref<8x29x26xf32, #tpu.memory_space<vmem>>, vector<1x16x16xf32>
      %665 = vector.shape_cast %664 : vector<1x16x16xf32> to vector<16x16xf32>
      %666 = arith.index_cast %620 : i32 to index
      %c6_366 = arith.constant 6 : index
      %667 = memref.load %arg4[%666, %c6_366] : memref<64x11xf32, #tpu.memory_space<smem>>
      %668 = vector.broadcast %667 : f32 to vector<16x16xf32>
      %669 = arith.mulf %665, %668 : vector<16x16xf32>
      %670 = arith.addf %663, %669 : vector<16x16xf32>
      %c7_367 = arith.constant 7 : index
      %c10_368 = arith.constant 10 : index
      %c5_369 = arith.constant 5 : index
      %671 = vector.load %arg7[%c7_367, %c10_368, %c5_369] : memref<8x29x26xf32, #tpu.memory_space<vmem>>, vector<1x16x16xf32>
      %672 = vector.shape_cast %671 : vector<1x16x16xf32> to vector<16x16xf32>
      %673 = arith.index_cast %620 : i32 to index
      %c7_370 = arith.constant 7 : index
      %674 = memref.load %arg4[%673, %c7_370] : memref<64x11xf32, #tpu.memory_space<smem>>
      %675 = vector.broadcast %674 : f32 to vector<16x16xf32>
      %676 = arith.mulf %672, %675 : vector<16x16xf32>
      %677 = arith.addf %670, %676 : vector<16x16xf32>
      %c7_371 = arith.constant 7 : index
      %c11_372 = arith.constant 11 : index
      %c5_373 = arith.constant 5 : index
      %678 = vector.load %arg7[%c7_371, %c11_372, %c5_373] : memref<8x29x26xf32, #tpu.memory_space<vmem>>, vector<1x16x16xf32>
      %679 = vector.shape_cast %678 : vector<1x16x16xf32> to vector<16x16xf32>
      %680 = arith.index_cast %620 : i32 to index
      %c8_374 = arith.constant 8 : index
      %681 = memref.load %arg4[%680, %c8_374] : memref<64x11xf32, #tpu.memory_space<smem>>
      %682 = vector.broadcast %681 : f32 to vector<16x16xf32>
      %683 = arith.mulf %679, %682 : vector<16x16xf32>
      %684 = arith.addf %677, %683 : vector<16x16xf32>
      %c7_375 = arith.constant 7 : index
      %c12_376 = arith.constant 12 : index
      %c5_377 = arith.constant 5 : index
      %685 = vector.load %arg7[%c7_375, %c12_376, %c5_377] : memref<8x29x26xf32, #tpu.memory_space<vmem>>, vector<1x16x16xf32>
      %686 = vector.shape_cast %685 : vector<1x16x16xf32> to vector<16x16xf32>
      %687 = arith.index_cast %620 : i32 to index
      %c9_378 = arith.constant 9 : index
      %688 = memref.load %arg4[%687, %c9_378] : memref<64x11xf32, #tpu.memory_space<smem>>
      %689 = vector.broadcast %688 : f32 to vector<16x16xf32>
      %690 = arith.mulf %686, %689 : vector<16x16xf32>
      %691 = arith.addf %684, %690 : vector<16x16xf32>
      %c7_379 = arith.constant 7 : index
      %c13_380 = arith.constant 13 : index
      %c5_381 = arith.constant 5 : index
      %692 = vector.load %arg7[%c7_379, %c13_380, %c5_381] : memref<8x29x26xf32, #tpu.memory_space<vmem>>, vector<1x16x16xf32>
      %693 = vector.shape_cast %692 : vector<1x16x16xf32> to vector<16x16xf32>
      %694 = arith.index_cast %620 : i32 to index
      %c10_382 = arith.constant 10 : index
      %695 = memref.load %arg4[%694, %c10_382] : memref<64x11xf32, #tpu.memory_space<smem>>
      %696 = vector.broadcast %695 : f32 to vector<16x16xf32>
      %697 = arith.mulf %693, %696 : vector<16x16xf32>
      %698 = arith.addf %691, %697 : vector<16x16xf32>
      %699 = arith.index_cast %620 : i32 to index
      %700 = memref.load %arg5[%699] : memref<64xf32, #tpu.memory_space<smem>>
      %701 = vector.broadcast %700 : f32 to vector<16x16xf32>
      %702 = arith.addf %698, %701 : vector<16x16xf32>
      %c0_383 = arith.constant 0 : index
      %c7_384 = arith.constant 7 : index
      %c0_385 = arith.constant 0 : index
      %c0_386 = arith.constant 0 : index
      %703 = vector.load %arg6[%c0_383, %c7_384, %c0_385, %c0_386] : memref<1x8x16x16xf32, #tpu.memory_space<vmem>>, vector<1x1x16x16xf32>
      %704 = vector.shape_cast %703 : vector<1x1x16x16xf32> to vector<16x16xf32>
      %705 = vector.shape_cast %702 : vector<16x16xf32> to vector<1x1x16x16xf32>
      tpu.vector_store %arg6[%c0_383, %c7_384, %c0_385, %c0_386], %705 {strides = array<i32>} : memref<1x8x16x16xf32, #tpu.memory_space<vmem>>, vector<1x1x16x16xf32>,
    } else {
    }
    return
  }
  func.func @transform_0(%arg0: i32, %arg1: i32) -> (i32, i32, i32, i32) {
    %c0_i32 = arith.constant 0 : i32
    %c0_i32_0 = arith.constant 0 : i32
    %c0_i32_1 = arith.constant 0 : i32
    return %arg0, %arg1, %c0_i32, %c0_i32_0 : i32, i32, i32, i32
  }
  func.func @transform_1(%arg0: i32, %arg1: i32) -> i32 {
    %c0_i32 = arith.constant 0 : i32
    %c0_i32_0 = arith.constant 0 : i32
    return %c0_i32 : i32
  }
  func.func @transform_2(%arg0: i32, %arg1: i32) -> (i32, i32) {
    %c0_i32 = arith.constant 0 : i32
    %c0_i32_0 = arith.constant 0 : i32
    %c0_i32_1 = arith.constant 0 : i32
    return %c0_i32, %c0_i32_0 : i32, i32
  }
  func.func @transform_3(%arg0: i32, %arg1: i32) -> i32 {
    %c0_i32 = arith.constant 0 : i32
    %c0_i32_0 = arith.constant 0 : i32
    return %c0_i32 : i32
  }
  func.func @transform_4(%arg0: i32, %arg1: i32) -> (i32, i32, i32, i32) {
    %c0_i32 = arith.constant 0 : i32
    %c0_i32_0 = arith.constant 0 : i32
    %c0_i32_1 = arith.constant 0 : i32
    return %arg0, %arg1, %c0_i32, %c0_i32_0 : i32, i32, i32, i32
  }
}

</mosaic_0001>

<llo_original>
// kernel: inception_dw_conv2d.1
$region0: #{inception_dw_conv2d.1}
  #allocation0 [shape = 'u32[]', space=smem, size = 0x4, offset = 0x4, fixed_abs, tag = 'smem constant byte address 0x4 - core index']
  #allocation1 [shape = 'u32[144,128]{1,0:T(1,128)}', space=vmem, size = 0x12000, scoped, tag = 'internal scratch']
  #allocation2 [shape = 'f32[8,29,26]{2,1,0:T(8,128)}', space=vmem, size = 0x20000, scoped, tag = 'scratch operand']
  %s0 = inlined_call_operand.vmem [shape: f32[2,64,16,16], index: 0, kind: input, shape index: {}]
  %s1 = inlined_call_operand.vmem [shape: s32[8], index: 1, kind: input, shape index: {}]
  %s2 = inlined_call_operand.vmem [shape: f32[64,11], index: 2, kind: input, shape index: {}]
  %s3 = inlined_call_operand.vmem [shape: f32[64], index: 3, kind: input, shape index: {}]
  %s4 = inlined_call_operand.vmem [shape: f32[2,64,16,16], index: 4, kind: output, shape index: {}]
  %s5 = sld [smem:[#allocation0]]
  $region81: #{inception_dw_conv2d.1} parent=0
    _
  %s7 = ssub.s32 1, %s5
  %s8 = scalar_select 0, %s7, %s5
  $region1: #{inception_dw_conv2d.1} parent=0
    #allocation3 [shape = 'u8[512]{0}', space=smem, size = 0x200, scoped, tag = 'input window, operand 1, single buffered']
    #allocation4 [shape = 's32[2]{0}', space=sflag, size = 0x8, scoped, tag = 'scoped memory for inception_dw_conv2d.1']
    #allocation5 [shape = 'u8[32768]{0}', space=smem, size = 0x8000, scoped, tag = 'input window, operand 2, single buffered']
    #allocation6 [shape = 's32[1]{0}', space=sflag, size = 0x4, scoped, tag = 'scoped memory for inception_dw_conv2d.1']
    #allocation7 [shape = 'u8[512]{0}', space=smem, size = 0x200, scoped, tag = 'input window, operand 3, single buffered']
    %9 = vsyncpa [#allocation4], 0
    %10 = vsyncpa [#allocation6], 0
    loop: start=0, step=1, limit=18
    $region2: #{inception_dw_conv2d.1} parent=1 // loop_pre_header
      _
    $region3: #{inception_dw_conv2d.1} parent=1 // loop_header
      %s12 = sphi 0, %s16
      %p13 = scmp.ge.s32.totalorder %s12, 18
      %s19 = sphi 0, %s31
      %s20 = sphi 0, %s27
      %s21 = sphi 0, %s19
      %s22 = sphi 0, %s20
      %s23 = sphi 0, %s21
      %s24 = sphi 0, %s22
      %s36 = sphi 0, %s38
      %s39 = sphi 0, %s36
      %s40 = sphi 0, %s39
      %s56 = sphi 0, %s40
      %s60 = sphi 0, %s60
      %s62 = sphi 0, %s60
      %s63 = sphi 0, %s62
      %s77 = sphi 0, %s63
      %s81 = sphi 0, %s81
      %s83 = sphi 0, %s81
      %s84 = sphi 0, %s83
      %s98 = sphi 0, %s84
      %s102 = sphi 0, %s102
      %s104 = sphi 0, %s102
      %s105 = sphi 0, %s104
      %s119 = sphi 0, %s105
      %s127 = sphi 0, %s129
      %s130 = sphi 0, %s127
      %s131 = sphi 0, %s130
      %s147 = sphi 0, %s131
    $region4: #{inception_dw_conv2d.1} parent=1 // loop_header_branch
      %15 = sbr.rel (%p13) target = $region8
    $region5: #{inception_dw_conv2d.1} parent=1 // loop_body
      %s17 = ssub.s32 %s12, 1
      %s18 = ssub.s32 %s12, 2
      %s25 = sadd.s32 1, %s20
      %p26 = scmp.ge.s32.totalorder %s25, 8
      %s27 = scalar_select %p26, 0, %s25
      %s28 = sadd.s32 1, %s19
      %s29 = scalar_select %p26, %s28, %s19
      %p30 = scmp.ge.s32.totalorder %s29, 2
      %s31 = scalar_select %p30, 0, %s29
      %s32 = ssub.s32 %s19, %s31
      %s33 = ssub.s32 %s20, %s27
      %s34 = sor.u32 %s32, %s33
      %p35 = scmp.eq.s32.totalorder %s34, 0
      %s37 = sadd.s32 %s36, 1
      %s38 = scalar_select %p35, %s36, %s37
      %p41 = pneg %p35
      %p42 = scmp.eq.s32.totalorder %s12, 15
      %p43 = por %p41, %p42
      %p44 = scmp.ne.s32.totalorder %s36, %s39
      %p45 = scmp.eq.s32.totalorder %s12, 0
      %p46 = por %p44, %p45
      %p47 = scmp.ne.s32.totalorder %s36, %s39
      %p48 = scmp.eq.s32.totalorder %s17, 15
      %p49 = por %p47, %p48
      %p50 = scmp.ne.s32.totalorder %s39, %s40
      %p51 = scmp.eq.s32.totalorder %s17, 0
      %p52 = por %p50, %p51
      %p53 = scmp.ne.s32.totalorder %s39, %s40
      %p54 = scmp.eq.s32.totalorder %s18, 15
      %p55 = por %p53, %p54
      %p57 = scmp.ne.s32.totalorder %s40, %s56
      %p58 = scmp.eq.s32.totalorder %s18, 0
      %p59 = por %p57, %p58
      %s61 = sadd.s32 %s60, 1
      %p64 = scmp.eq.s32.totalorder %s12, 15
      %p65 = scmp.ne.s32.totalorder %s60, %s62
      %p66 = scmp.eq.s32.totalorder %s12, 0
      %p67 = por %p65, %p66
      %p68 = scmp.ne.s32.totalorder %s60, %s62
      %p69 = scmp.eq.s32.totalorder %s17, 15
      %p70 = por %p68, %p69
      %p71 = scmp.ne.s32.totalorder %s62, %s63
      %p72 = scmp.eq.s32.totalorder %s17, 0
      %p73 = por %p71, %p72
      %p74 = scmp.ne.s32.totalorder %s62, %s63
      %p75 = scmp.eq.s32.totalorder %s18, 15
      %p76 = por %p74, %p75
      %p78 = scmp.ne.s32.totalorder %s63, %s77
      %p79 = scmp.eq.s32.totalorder %s18, 0
      %p80 = por %p78, %p79
      %s82 = sadd.s32 %s81, 1
      %p85 = scmp.eq.s32.totalorder %s12, 15
      %p86 = scmp.ne.s32.totalorder %s81, %s83
      %p87 = scmp.eq.s32.totalorder %s12, 0
      %p88 = por %p86, %p87
      %p89 = scmp.ne.s32.totalorder %s81, %s83
      %p90 = scmp.eq.s32.totalorder %s17, 15
      %p91 = por %p89, %p90
      %p92 = scmp.ne.s32.totalorder %s83, %s84
      %p93 = scmp.eq.s32.totalorder %s17, 0
      %p94 = por %p92, %p93
      %p95 = scmp.ne.s32.totalorder %s83, %s84
      %p96 = scmp.eq.s32.totalorder %s18, 15
      %p97 = por %p95, %p96
      %p99 = scmp.ne.s32.totalorder %s84, %s98
      %p100 = scmp.eq.s32.totalorder %s18, 0
      %p101 = por %p99, %p100
      %s103 = sadd.s32 %s102, 1
      %p106 = scmp.eq.s32.totalorder %s12, 15
      %p107 = scmp.ne.s32.totalorder %s102, %s104
      %p108 = scmp.eq.s32.totalorder %s12, 0
      %p109 = por %p107, %p108
      %p110 = scmp.ne.s32.totalorder %s102, %s104
      %p111 = scmp.eq.s32.totalorder %s17, 15
      %p112 = por %p110, %p111
      %p113 = scmp.ne.s32.totalorder %s104, %s105
      %p114 = scmp.eq.s32.totalorder %s17, 0
      %p115 = por %p113, %p114
      %p116 = scmp.ne.s32.totalorder %s104, %s105
      %p117 = scmp.eq.s32.totalorder %s18, 15
      %p118 = por %p116, %p117
      %p120 = scmp.ne.s32.totalorder %s105, %s119
      %p121 = scmp.eq.s32.totalorder %s18, 0
      %p122 = por %p120, %p121
      %s123 = ssub.s32 %s19, %s31
      %s124 = ssub.s32 %s20, %s27
      %s125 = sor.u32 %s123, %s124
      %p126 = scmp.eq.s32.totalorder %s125, 0
      %s128 = sadd.s32 %s127, 1
      %s129 = scalar_select %p126, %s127, %s128
      %p132 = pneg %p126
      %p133 = scmp.eq.s32.totalorder %s12, 15
      %p134 = por %p132, %p133
      %p135 = scmp.ne.s32.totalorder %s127, %s130
      %p136 = scmp.eq.s32.totalorder %s12, 0
      %p137 = por %p135, %p136
      %p138 = scmp.ne.s32.totalorder %s127, %s130
      %p139 = scmp.eq.s32.totalorder %s17, 15
      %p140 = por %p138, %p139
      %p141 = scmp.ne.s32.totalorder %s130, %s131
      %p142 = scmp.eq.s32.totalorder %s17, 0
      %p143 = por %p141, %p142
      %p144 = scmp.ne.s32.totalorder %s130, %s131
      %p145 = scmp.eq.s32.totalorder %s18, 15
      %p146 = por %p144, %p145
      %p148 = scmp.ne.s32.totalorder %s131, %s147
      %p149 = scmp.eq.s32.totalorder %s18, 0
      %p150 = por %p148, %p149
      %p151 = scmp.le.s32.totalorder 1, %s12
      %p152 = scmp.lt.s32.totalorder %s12, 17
      %p153 = pnand %p151, %p152
      %p154 = pneg %p153
      // Predicated region
      $region9: #{inception_dw_conv2d.1} parent=5 // pred_check
        _
      $region10: #{inception_dw_conv2d.1} parent=5 // pred_check_branch
        %156 = sbr.rel (%p153) target = $region12
      $region11: #{inception_dw_conv2d.1} parent=5 // pred_region
        %s157 = ssub.s32 %s12, 1
        // Predicated region
        $region13: #{inception_dw_conv2d.1} parent=11 // pred_check
          %p158 = pneg %p73
        $region14: #{inception_dw_conv2d.1} parent=11 // pred_check_branch
          %160 = sbr.rel (%p158) target = $region16
        $region15: #{inception_dw_conv2d.1} parent=11 // pred_region
          %s162 = ssub.s32 16, 16
          %163 = vsyncadd [#allocation4], %s162
          %s165 = sshll.u32 %s1, 4
          %s166 = int_to_ptr.vmem [resolvable:$true] %s165
          %168 = dma.vmem_to_smem %s166, 16, [#allocation3], [#allocation4]
        $region16: #{inception_dw_conv2d.1} parent=11 // pred_fallthru
          _
        // Predicated region
        $region17: #{inception_dw_conv2d.1} parent=11 // pred_check
          %p169 = pneg %p94
        $region18: #{inception_dw_conv2d.1} parent=11 // pred_check_branch
          %171 = sbr.rel (%p169) target = $region20
        $region19: #{inception_dw_conv2d.1} parent=11 // pred_region
          %s173 = ssub.s32 1024, 1024
          %174 = vsyncadd [#allocation6], %s173
          %s175 = sshll.u32 %s2, 4
          %s176 = int_to_ptr.vmem [resolvable:$true] %s175
          %181 = dma.vmem_to_smem %s176, 1024, [#allocation5], [#allocation6], 128, 128, 8
        $region20: #{inception_dw_conv2d.1} parent=11 // pred_fallthru
          _
        // Predicated region
        $region21: #{inception_dw_conv2d.1} parent=11 // pred_check
          %p182 = pneg %p115
        $region22: #{inception_dw_conv2d.1} parent=11 // pred_check_branch
          %184 = sbr.rel (%p182) target = $region24
        $region23: #{inception_dw_conv2d.1} parent=11 // pred_region
          %s186 = ssub.s32 16, 16
          %187 = vsyncadd [#allocation6], %s186
          %s189 = sshll.u32 %s3, 4
          %s190 = int_to_ptr.vmem [resolvable:$true] %s189
          %192 = dma.vmem_to_smem %s190, 16, [#allocation7], [#allocation6]
        $region24: #{inception_dw_conv2d.1} parent=11 // pred_fallthru
          _
      $region12: #{inception_dw_conv2d.1} parent=5 // pred_fallthru
        _
      %p193 = scmp.lt.s32.totalorder %s12, 16
      // Predicated region
      $region25: #{inception_dw_conv2d.1} parent=5 // pred_check
        %p194 = pneg %p193
      $region26: #{inception_dw_conv2d.1} parent=5 // pred_check_branch
        %196 = sbr.rel (%p194) target = $region28
      $region27: #{inception_dw_conv2d.1} parent=5 // pred_region
        // Predicated region
        $region29: #{inception_dw_conv2d.1} parent=27 // pred_check
          %p197 = pneg %p46
        $region30: #{inception_dw_conv2d.1} parent=27 // pred_check_branch
          %199 = sbr.rel (%p197) target = $region32
        $region31: #{inception_dw_conv2d.1} parent=27 // pred_region
          %s200 = smul.u32 8, %s20
          %p201 = scmp.lt.s32.totalorder %s19, 1
          %s202 = scalar_select %p201, %s19, 1
          %p203 = scmp.lt.s32.totalorder %s200, 63
          %s204 = scalar_select %p203, %s200, 63
          %s205 = smul.addr %s204, 2
          %s206 = smul.addr %s202, 128
          %s207 = sadd.s32 %s205, %s206
          %s208 = smul.addr %s207, 8
          %s209 = scalar_lea.vmem %s0, %s208
          %s210 = smul.u32 8, %s20
        $region32: #{inception_dw_conv2d.1} parent=27 // pred_fallthru
          _
      $region28: #{inception_dw_conv2d.1} parent=5 // pred_fallthru
        _
      %p211 = scmp.le.s32.totalorder 1, %s12
      %p212 = scmp.lt.s32.totalorder %s12, 17
      %p213 = pnand %p211, %p212
      %p214 = pneg %p213
      // Predicated region
      $region33: #{inception_dw_conv2d.1} parent=5 // pred_check
        _
      $region34: #{inception_dw_conv2d.1} parent=5 // pred_check_branch
        %216 = sbr.rel (%p213) target = $region36
      $region35: #{inception_dw_conv2d.1} parent=5 // pred_region
        %s217 = ssub.s32 %s12, 1
        // Predicated region
        $region37: #{inception_dw_conv2d.1} parent=35 // pred_check
          %p218 = pneg %p73
        $region38: #{inception_dw_conv2d.1} parent=35 // pred_check_branch
          %220 = sbr.rel (%p218) target = $region40
        $region39: #{inception_dw_conv2d.1} parent=35 // pred_region
          %221 = dma.done [#allocation4], 16
        $region40: #{inception_dw_conv2d.1} parent=35 // pred_fallthru
          _
        // Predicated region
        $region41: #{inception_dw_conv2d.1} parent=35 // pred_check
          %p222 = pneg %p94
        $region42: #{inception_dw_conv2d.1} parent=35 // pred_check_branch
          %224 = sbr.rel (%p222) target = $region44
        $region43: #{inception_dw_conv2d.1} parent=35 // pred_region
          %225 = dma.done [#allocation6], 1024
        $region44: #{inception_dw_conv2d.1} parent=35 // pred_fallthru
          _
        // Predicated region
        $region45: #{inception_dw_conv2d.1} parent=35 // pred_check
          %p226 = pneg %p115
        $region46: #{inception_dw_conv2d.1} parent=35 // pred_check_branch
          %228 = sbr.rel (%p226) target = $region48
        $region47: #{inception_dw_conv2d.1} parent=35 // pred_region
          %229 = dma.done [#allocation6], 16
        $region48: #{inception_dw_conv2d.1} parent=35 // pred_fallthru
          _
        %230 = sfence
        %s231 = smul.u32 8, %s22
        %p232 = scmp.lt.s32.totalorder %s21, 1
        %s233 = scalar_select %p232, %s21, 1
        %p234 = scmp.lt.s32.totalorder %s231, 63
        %s235 = scalar_select %p234, %s231, 63
        %s236 = smul.addr %s235, 2
        %s237 = smul.addr %s233, 128
        %s238 = sadd.s32 %s236, %s237
        %s239 = smul.addr %s238, 8
        %s240 = scalar_lea.vmem %s0, %s239
        %p241 = pneg %p52
        %p242 = pneg %p49
        %p243 = pneg %p73
        %p244 = pneg %p70
        %p245 = pneg %p94
        %p246 = pneg %p91
        %p247 = pneg %p115
        %p248 = pneg %p112
        %p249 = pneg %p143
        %p250 = pneg %p140
        %s251 = smul.u32 8, %s22
        %p252 = scmp.lt.s32.totalorder %s21, 1
        %s253 = scalar_select %p252, %s21, 1
        %p254 = scmp.lt.s32.totalorder %s251, 63
        %s255 = scalar_select %p254, %s251, 63
        %s256 = smul.addr %s255, 2
        %s257 = smul.addr %s253, 128
        %s258 = sadd.s32 %s256, %s257
        %s259 = smul.addr %s258, 8
        %s260 = scalar_lea.vmem %s4, %s259
        %s261 = smul.u32 8, %s22
        %p262 = scmp.lt.s32.totalorder %s21, 1
        %s263 = scalar_select %p262, %s21, 1
        %p264 = scmp.lt.s32.totalorder %s261, 63
        %s265 = scalar_select %p264, %s261, 63
        %s266 = smul.addr %s265, 2
        %s267 = smul.addr %s263, 128
        %s268 = sadd.s32 %s266, %s267
        %s269 = smul.addr %s268, 8
        %s270 = scalar_lea.vmem %s0, %s269
        %s271 = smul.u32 8, %s22
        %s272 = smul.u32 8, %s22
        %p273 = scmp.lt.s32.totalorder %s21, 1
        %s274 = scalar_select %p273, %s21, 1
        %p275 = scmp.lt.s32.totalorder %s272, 63
        %s276 = scalar_select %p275, %s272, 63
        %s277 = smul.addr %s276, 2
        %s278 = smul.addr %s274, 128
        %s279 = sadd.s32 %s277, %s278
        %s280 = smul.addr %s279, 8
        %s281 = scalar_lea.vmem %s4, %s280
        %s282 = smul.u32 8, %s22
        %s283 = sld [smem:[#allocation3 + %s22]]
        %s284 = smul.u32 %s22, 8
        %p285 = scmp.eq.s32.totalorder %s283, 0
        // Predicated region
        $region49: #{inception_dw_conv2d.1} parent=35 // pred_check
          %p286 = pneg %p285
        $region50: #{inception_dw_conv2d.1} parent=35 // pred_check_branch
          %288 = sbr.rel (%p286) target = $region52
        $region51: #{inception_dw_conv2d.1} parent=35 // pred_region
          %v289 = vld [vmem:[%s270] sm:$0xff]
          %v290 = vld [vmem:[%s270 + $0x8] sm:$0xff]
          %v291 = vld [vmem:[%s270 + $0x10] sm:$0xff]
          %v292 = vld [vmem:[%s270 + $0x18] sm:$0xff]
          %v293 = vld [vmem:[%s270 + $0x20] sm:$0xff]
          %v294 = vld [vmem:[%s270 + $0x28] sm:$0xff]
          %v295 = vld [vmem:[%s270 + $0x30] sm:$0xff]
          %v296 = vld [vmem:[%s270 + $0x38] sm:$0xff]
          %v297 = vld [vmem:[%s270 + $0x40] sm:$0xff]
          %v298 = vld [vmem:[%s270 + $0x48] sm:$0xff]
          %v299 = vld [vmem:[%s270 + $0x50] sm:$0xff]
          %v300 = vld [vmem:[%s270 + $0x58] sm:$0xff]
          %v301 = vld [vmem:[%s270 + $0x60] sm:$0xff]
          %v302 = vld [vmem:[%s270 + $0x68] sm:$0xff]
          %v303 = vld [vmem:[%s270 + $0x70] sm:$0xff]
          %v304 = vld [vmem:[%s270 + $0x78] sm:$0xff]
          %vm305 = vcmask 130048
          %306 = vst.msk [vmem:[%s281] sm:$0xff] %vm305, %v289
          %307 = vst.msk [vmem:[%s281 + $0x8] sm:$0xff] %vm305, %v290
          %308 = vst.msk [vmem:[%s281 + $0x10] sm:$0xff] %vm305, %v291
          %309 = vst.msk [vmem:[%s281 + $0x18] sm:$0xff] %vm305, %v292
          %310 = vst.msk [vmem:[%s281 + $0x20] sm:$0xff] %vm305, %v293
          %311 = vst.msk [vmem:[%s281 + $0x28] sm:$0xff] %vm305, %v294
          %312 = vst.msk [vmem:[%s281 + $0x30] sm:$0xff] %vm305, %v295
          %313 = vst.msk [vmem:[%s281 + $0x38] sm:$0xff] %vm305, %v296
          %314 = vst.msk [vmem:[%s281 + $0x40] sm:$0xff] %vm305, %v297
          %315 = vst.msk [vmem:[%s281 + $0x48] sm:$0xff] %vm305, %v298
          %316 = vst.msk [vmem:[%s281 + $0x50] sm:$0xff] %vm305, %v299
          %317 = vst.msk [vmem:[%s281 + $0x58] sm:$0xff] %vm305, %v300
          %318 = vst.msk [vmem:[%s281 + $0x60] sm:$0xff] %vm305, %v301
          %319 = vst.msk [vmem:[%s281 + $0x68] sm:$0xff] %vm305, %v302
          %320 = vst.msk [vmem:[%s281 + $0x70] sm:$0xff] %vm305, %v303
          %321 = vst.msk [vmem:[%s281 + $0x78] sm:$0xff] %vm305, %v304
        $region52: #{inception_dw_conv2d.1} parent=35 // pred_fallthru
          _
        %p322 = scmp.ne.s32.totalorder %s283, 0
        // Predicated region
        $region53: #{inception_dw_conv2d.1} parent=35 // pred_check
          %p323 = pneg %p322
        $region54: #{inception_dw_conv2d.1} parent=35 // pred_check_branch
          %325 = sbr.rel (%p323) target = $region56
        $region55: #{inception_dw_conv2d.1} parent=35 // pred_region
          %vm326 = vcmask 208896
          %327 = vst.msk [vmem:[#allocation2 + $0x3] sm:$0x1f] %vm326, 0.0
          %328 = vst.msk [vmem:[#allocation2 + $0x23] sm:$0x1f] %vm326, 0.0
          %329 = vst.msk [vmem:[#allocation2 + $0x43] sm:$0x1f] %vm326, 0.0
          %330 = vst.msk [vmem:[#allocation2 + $0x63] sm:$0x1f] %vm326, 0.0
          %331 = vst.msk [vmem:[#allocation2 + $0x83] sm:$0x1f] %vm326, 0.0
          %332 = vst.msk [vmem:[#allocation2 + $0xa3] sm:$0x1f] %vm326, 0.0
          %333 = vst.msk [vmem:[#allocation2 + $0xc3] sm:$0x1f] %vm326, 0.0
          %334 = vst.msk [vmem:[#allocation2 + $0xe3] sm:$0x1f] %vm326, 0.0
          %335 = vst.msk [vmem:[#allocation2 + $0x18] sm:$0x1f] %vm326, 0.0
          %336 = vst.msk [vmem:[#allocation2 + $0x38] sm:$0x1f] %vm326, 0.0
          %337 = vst.msk [vmem:[#allocation2 + $0x58] sm:$0x1f] %vm326, 0.0
          %338 = vst.msk [vmem:[#allocation2 + $0x78] sm:$0x1f] %vm326, 0.0
          %339 = vst.msk [vmem:[#allocation2 + $0x98] sm:$0x1f] %vm326, 0.0
          %340 = vst.msk [vmem:[#allocation2 + $0xb8] sm:$0x1f] %vm326, 0.0
          %341 = vst.msk [vmem:[#allocation2 + $0xd8] sm:$0x1f] %vm326, 0.0
          %342 = vst.msk [vmem:[#allocation2 + $0xf8] sm:$0x1f] %vm326, 0.0
          %vm343 = vcmask 39936
          %344 = vst.msk [vmem:[#allocation2 + $0x8] sm:$0xff] %vm343, 0.0
          %345 = vst.msk [vmem:[#allocation2 + $0x10] sm:$0xff] %vm343, 0.0
          %346 = vst.msk [vmem:[#allocation2 + $0x28] sm:$0xff] %vm343, 0.0
          %347 = vst.msk [vmem:[#allocation2 + $0x30] sm:$0xff] %vm343, 0.0
          %348 = vst.msk [vmem:[#allocation2 + $0x48] sm:$0xff] %vm343, 0.0
          %349 = vst.msk [vmem:[#allocation2 + $0x50] sm:$0xff] %vm343, 0.0
          %350 = vst.msk [vmem:[#allocation2 + $0x68] sm:$0xff] %vm343, 0.0
          %351 = vst.msk [vmem:[#allocation2 + $0x70] sm:$0xff] %vm343, 0.0
          %352 = vst.msk [vmem:[#allocation2 + $0x88] sm:$0xff] %vm343, 0.0
          %353 = vst.msk [vmem:[#allocation2 + $0x90] sm:$0xff] %vm343, 0.0
          %354 = vst.msk [vmem:[#allocation2 + $0xa8] sm:$0xff] %vm343, 0.0
          %355 = vst.msk [vmem:[#allocation2 + $0xb0] sm:$0xff] %vm343, 0.0
          %356 = vst.msk [vmem:[#allocation2 + $0xc8] sm:$0xff] %vm343, 0.0
          %357 = vst.msk [vmem:[#allocation2 + $0xd0] sm:$0xff] %vm343, 0.0
          %358 = vst.msk [vmem:[#allocation2 + $0xe8] sm:$0xff] %vm343, 0.0
          %359 = vst.msk [vmem:[#allocation2 + $0xf0] sm:$0xff] %vm343, 0.0
          %vm360 = vcmask 212136
          %361 = vst.msk [vmem:[#allocation2 + $0x8] sm:$0xff] %vm360, 0.0
          %362 = vst.msk [vmem:[#allocation2 + $0x10] sm:$0xff] %vm360, 0.0
          %363 = vst.msk [vmem:[#allocation2 + $0x28] sm:$0xff] %vm360, 0.0
          %364 = vst.msk [vmem:[#allocation2 + $0x30] sm:$0xff] %vm360, 0.0
          %365 = vst.msk [vmem:[#allocation2 + $0x48] sm:$0xff] %vm360, 0.0
          %366 = vst.msk [vmem:[#allocation2 + $0x50] sm:$0xff] %vm360, 0.0
          %367 = vst.msk [vmem:[#allocation2 + $0x68] sm:$0xff] %vm360, 0.0
          %368 = vst.msk [vmem:[#allocation2 + $0x70] sm:$0xff] %vm360, 0.0
          %369 = vst.msk [vmem:[#allocation2 + $0x88] sm:$0xff] %vm360, 0.0
          %370 = vst.msk [vmem:[#allocation2 + $0x90] sm:$0xff] %vm360, 0.0
          %371 = vst.msk [vmem:[#allocation2 + $0xa8] sm:$0xff] %vm360, 0.0
          %372 = vst.msk [vmem:[#allocation2 + $0xb0] sm:$0xff] %vm360, 0.0
          %373 = vst.msk [vmem:[#allocation2 + $0xc8] sm:$0xff] %vm360, 0.0
          %374 = vst.msk [vmem:[#allocation2 + $0xd0] sm:$0xff] %vm360, 0.0
          %375 = vst.msk [vmem:[#allocation2 + $0xe8] sm:$0xff] %vm360, 0.0
          %376 = vst.msk [vmem:[#allocation2 + $0xf0] sm:$0xff] %vm360, 0.0
          %v377 = vld [vmem:[%s270] sm:$0xff]
          %v378 = vld [vmem:[%s270 + $0x8] sm:$0xff]
          %v379 = vld [vmem:[%s270 + $0x10] sm:$0xff]
          %v380 = vld [vmem:[%s270 + $0x18] sm:$0xff]
          %v381 = vld [vmem:[%s270 + $0x20] sm:$0xff]
          %v382 = vld [vmem:[%s270 + $0x28] sm:$0xff]
          %v383 = vld [vmem:[%s270 + $0x30] sm:$0xff]
          %v384 = vld [vmem:[%s270 + $0x38] sm:$0xff]
          %v385 = vld [vmem:[%s270 + $0x40] sm:$0xff]
          %v386 = vld [vmem:[%s270 + $0x48] sm:$0xff]
          %v387 = vld [vmem:[%s270 + $0x50] sm:$0xff]
          %v388 = vld [vmem:[%s270 + $0x58] sm:$0xff]
          %v389 = vld [vmem:[%s270 + $0x60] sm:$0xff]
          %v390 = vld [vmem:[%s270 + $0x68] sm:$0xff]
          %v391 = vld [vmem:[%s270 + $0x70] sm:$0xff]
          %v392 = vld [vmem:[%s270 + $0x78] sm:$0xff]
          %409 = vrot.lane.b32.xlu0 %v377, 5
          %v410 = vpop.permute.xlu0 %409
          %411 = vrot.lane.b32.xlu0 %v378, 5
          %v412 = vpop.permute.xlu0 %411
          %413 = vrot.lane.b32.xlu0 %v379, 5
          %v414 = vpop.permute.xlu0 %413
          %415 = vrot.lane.b32.xlu0 %v380, 5
          %v416 = vpop.permute.xlu0 %415
          %417 = vrot.lane.b32.xlu0 %v381, 5
          %v418 = vpop.permute.xlu0 %417
          %419 = vrot.lane.b32.xlu0 %v382, 5
          %v420 = vpop.permute.xlu0 %419
          %421 = vrot.lane.b32.xlu0 %v383, 5
          %v422 = vpop.permute.xlu0 %421
          %423 = vrot.lane.b32.xlu0 %v384, 5
          %v424 = vpop.permute.xlu0 %423
          %425 = vrot.lane.b32.xlu0 %v385, 5
          %v426 = vpop.permute.xlu0 %425
          %427 = vrot.lane.b32.xlu0 %v386, 5
          %v428 = vpop.permute.xlu0 %427
          %429 = vrot.lane.b32.xlu0 %v387, 5
          %v430 = vpop.permute.xlu0 %429
          %431 = vrot.lane.b32.xlu0 %v388, 5
          %v432 = vpop.permute.xlu0 %431
          %433 = vrot.lane.b32.xlu0 %v389, 5
          %v434 = vpop.permute.xlu0 %433
          %435 = vrot.lane.b32.xlu0 %v390, 5
          %v436 = vpop.permute.xlu0 %435
          %437 = vrot.lane.b32.xlu0 %v391, 5
          %v438 = vpop.permute.xlu0 %437
          %439 = vrot.lane.b32.xlu0 %v392, 5
          %v440 = vpop.permute.xlu0 %439
          %vm457 = vcmask 171048
          %458 = vst.msk [vmem:[#allocation2 + $0x8] sm:$0xff] %vm457, %v410
          %459 = vst.msk [vmem:[#allocation2 + $0x10] sm:$0xff] %vm457, %v412
          %460 = vst.msk [vmem:[#allocation2 + $0x28] sm:$0xff] %vm457, %v414
          %461 = vst.msk [vmem:[#allocation2 + $0x30] sm:$0xff] %vm457, %v416
          %462 = vst.msk [vmem:[#allocation2 + $0x48] sm:$0xff] %vm457, %v418
          %463 = vst.msk [vmem:[#allocation2 + $0x50] sm:$0xff] %vm457, %v420
          %464 = vst.msk [vmem:[#allocation2 + $0x68] sm:$0xff] %vm457, %v422
          %465 = vst.msk [vmem:[#allocation2 + $0x70] sm:$0xff] %vm457, %v424
          %466 = vst.msk [vmem:[#allocation2 + $0x88] sm:$0xff] %vm457, %v426
          %467 = vst.msk [vmem:[#allocation2 + $0x90] sm:$0xff] %vm457, %v428
          %468 = vst.msk [vmem:[#allocation2 + $0xa8] sm:$0xff] %vm457, %v430
          %469 = vst.msk [vmem:[#allocation2 + $0xb0] sm:$0xff] %vm457, %v432
          %470 = vst.msk [vmem:[#allocation2 + $0xc8] sm:$0xff] %vm457, %v434
          %471 = vst.msk [vmem:[#allocation2 + $0xd0] sm:$0xff] %vm457, %v436
          %472 = vst.msk [vmem:[#allocation2 + $0xe8] sm:$0xff] %vm457, %v438
          %473 = vst.msk [vmem:[#allocation2 + $0xf0] sm:$0xff] %vm457, %v440
        $region56: #{inception_dw_conv2d.1} parent=35 // pred_fallthru
          _
        %p474 = scmp.eq.s32.totalorder %s283, 1
        // Predicated region
        $region57: #{inception_dw_conv2d.1} parent=35 // pred_check
          %p475 = pneg %p474
        $region58: #{inception_dw_conv2d.1} parent=35 // pred_check_branch
          %477 = sbr.rel (%p475) target = $region60
        $region59: #{inception_dw_conv2d.1} parent=35 // pred_region
          %v478 = vld [vmem:[#allocation2 + $0x7] sm:$0xff]
          %v479 = vld [vmem:[#allocation2 + $0xf] sm:$0xff]
          %s480 = smul.u32 %s284, 128
          %s481 = sld [smem:[#allocation5 + %s480]]
          %v482 = vstv %s481
          %v483 = vmul.f32 %v478, %v482
          %v484 = vmul.f32 %v479, %v482
          %v485 = vadd.f32 %v483, 0.0
          %v486 = vadd.f32 %v484, 0.0
          %s487 = sadd.s32 %s480, 1
          %s488 = sld [smem:[#allocation5 + %s487]]
          %v489 = vstv %s488
          %v490 = vmul.f32 %v478, %v489
          %v491 = vmul.f32 %v479, %v489
          %494 = vrot.lane.b32.xlu0 %v490, 127
          %v495 = vpop.permute.xlu0 %494
          %496 = vrot.lane.b32.xlu0 %v491, 127
          %v497 = vpop.permute.xlu0 %496
          %v500 = vadd.f32 %v485, %v495
          %v501 = vadd.f32 %v486, %v497
          %s502 = sadd.s32 %s480, 2
          %s503 = sld [smem:[#allocation5 + %s502]]
          %v504 = vstv %s503
          %v505 = vmul.f32 %v478, %v504
          %v506 = vmul.f32 %v479, %v504
          %509 = vrot.lane.b32.xlu0 %v505, 126
          %v510 = vpop.permute.xlu0 %509
          %511 = vrot.lane.b32.xlu0 %v506, 126
          %v512 = vpop.permute.xlu0 %511
          %v515 = vadd.f32 %v500, %v510
          %v516 = vadd.f32 %v501, %v512
          %v517 = vld [vmem:[#allocation2 + $0x8] sm:$0xff]
          %v518 = vld [vmem:[#allocation2 + $0x10] sm:$0xff]
          %s519 = sadd.s32 %s480, 3
          %s520 = sld [smem:[#allocation5 + %s519]]
          %v521 = vstv %s520
          %v522 = vmul.f32 %v517, %v521
          %v523 = vmul.f32 %v518, %v521
          %v524 = vadd.f32 %v515, %v522
          %v525 = vadd.f32 %v516, %v523
          %s526 = sadd.s32 %s480, 4
          %s527 = sld [smem:[#allocation5 + %s526]]
          %v528 = vstv %s527
          %v529 = vmul.f32 %v517, %v528
          %v530 = vmul.f32 %v518, %v528
          %533 = vrot.lane.b32.xlu0 %v529, 127
          %v534 = vpop.permute.xlu0 %533
          %535 = vrot.lane.b32.xlu0 %v530, 127
          %v536 = vpop.permute.xlu0 %535
          %v539 = vadd.f32 %v524, %v534
          %v540 = vadd.f32 %v525, %v536
          %s541 = sadd.s32 %s480, 5
          %s542 = sld [smem:[#allocation5 + %s541]]
          %v543 = vstv %s542
          %v544 = vmul.f32 %v517, %v543
          %v545 = vmul.f32 %v518, %v543
          %548 = vrot.lane.b32.xlu0 %v544, 126
          %v549 = vpop.permute.xlu0 %548
          %550 = vrot.lane.b32.xlu0 %v545, 126
          %v551 = vpop.permute.xlu0 %550
          %v554 = vadd.f32 %v539, %v549
          %v555 = vadd.f32 %v540, %v551
          %v556 = vld [vmem:[#allocation2 + $0x9] sm:$0xff]
          %v557 = vld [vmem:[#allocation2 + $0x11] sm:$0xff]
          %s558 = sadd.s32 %s480, 6
          %s559 = sld [smem:[#allocation5 + %s558]]
          %v560 = vstv %s559
          %v561 = vmul.f32 %v556, %v560
          %v562 = vmul.f32 %v557, %v560
          %v563 = vadd.f32 %v554, %v561
          %v564 = vadd.f32 %v555, %v562
          %s565 = sadd.s32 %s480, 7
          %s566 = sld [smem:[#allocation5 + %s565]]
          %v567 = vstv %s566
          %v568 = vmul.f32 %v556, %v567
          %v569 = vmul.f32 %v557, %v567
          %572 = vrot.lane.b32.xlu0 %v568, 127
          %v573 = vpop.permute.xlu0 %572
          %574 = vrot.lane.b32.xlu0 %v569, 127
          %v575 = vpop.permute.xlu0 %574
          %v578 = vadd.f32 %v563, %v573
          %v579 = vadd.f32 %v564, %v575
          %s580 = sadd.s32 %s480, 8
          %s581 = sld [smem:[#allocation5 + %s580]]
          %v582 = vstv %s581
          %v583 = vmul.f32 %v556, %v582
          %v584 = vmul.f32 %v557, %v582
          %587 = vrot.lane.b32.xlu0 %v583, 126
          %v588 = vpop.permute.xlu0 %587
          %589 = vrot.lane.b32.xlu0 %v584, 126
          %v590 = vpop.permute.xlu0 %589
          %v593 = vadd.f32 %v578, %v588
          %v594 = vadd.f32 %v579, %v590
          %s595 = sld [smem:[#allocation7 + %s284]]
          %v596 = vstv %s595
          %v597 = vadd.f32 %v593, %v596
          %v598 = vadd.f32 %v594, %v596
          %601 = vrot.lane.b32.xlu0 %v597, 124
          %v602 = vpop.permute.xlu0 %601
          %603 = vrot.lane.b32.xlu0 %v598, 124
          %v604 = vpop.permute.xlu0 %603
          %vm607 = vcmask 130048
          %608 = vst.msk [vmem:[%s281] sm:$0xff] %vm607, %v602
          %609 = vst.msk [vmem:[%s281 + $0x8] sm:$0xff] %vm607, %v604
          %s610 = sadd.s32 %s284, 1
          %s611 = scalar_lea.vmem [#allocation2], 32
          %v612 = vld [vmem:[%s611 + $0x7] sm:$0xff]
          %v613 = vld [vmem:[%s611 + $0xf] sm:$0xff]
          %s614 = smul.u32 %s610, 128
          %s615 = sld [smem:[#allocation5 + %s614]]
          %v616 = vstv %s615
          %v617 = vmul.f32 %v612, %v616
          %v618 = vmul.f32 %v613, %v616
          %v619 = vadd.f32 %v617, 0.0
          %v620 = vadd.f32 %v618, 0.0
          %s621 = sadd.s32 %s614, 1
          %s622 = sld [smem:[#allocation5 + %s621]]
          %v623 = vstv %s622
          %v624 = vmul.f32 %v612, %v623
          %v625 = vmul.f32 %v613, %v623
          %628 = vrot.lane.b32.xlu0 %v624, 127
          %v629 = vpop.permute.xlu0 %628
          %630 = vrot.lane.b32.xlu0 %v625, 127
          %v631 = vpop.permute.xlu0 %630
          %v634 = vadd.f32 %v619, %v629
          %v635 = vadd.f32 %v620, %v631
          %s636 = sadd.s32 %s614, 2
          %s637 = sld [smem:[#allocation5 + %s636]]
          %v638 = vstv %s637
          %v639 = vmul.f32 %v612, %v638
          %v640 = vmul.f32 %v613, %v638
          %643 = vrot.lane.b32.xlu0 %v639, 126
          %v644 = vpop.permute.xlu0 %643
          %645 = vrot.lane.b32.xlu0 %v640, 126
          %v646 = vpop.permute.xlu0 %645
          %v649 = vadd.f32 %v634, %v644
          %v650 = vadd.f32 %v635, %v646
          %v651 = vld [vmem:[%s611 + $0x8] sm:$0xff]
          %v652 = vld [vmem:[%s611 + $0x10] sm:$0xff]
          %s653 = sadd.s32 %s614, 3
          %s654 = sld [smem:[#allocation5 + %s653]]
          %v655 = vstv %s654
          %v656 = vmul.f32 %v651, %v655
          %v657 = vmul.f32 %v652, %v655
          %v658 = vadd.f32 %v649, %v656
          %v659 = vadd.f32 %v650, %v657
          %s660 = sadd.s32 %s614, 4
          %s661 = sld [smem:[#allocation5 + %s660]]
          %v662 = vstv %s661
          %v663 = vmul.f32 %v651, %v662
          %v664 = vmul.f32 %v652, %v662
          %667 = vrot.lane.b32.xlu0 %v663, 127
          %v668 = vpop.permute.xlu0 %667
          %669 = vrot.lane.b32.xlu0 %v664, 127
          %v670 = vpop.permute.xlu0 %669
          %v673 = vadd.f32 %v658, %v668
          %v674 = vadd.f32 %v659, %v670
          %s675 = sadd.s32 %s614, 5
          %s676 = sld [smem:[#allocation5 + %s675]]
          %v677 = vstv %s676
          %v678 = vmul.f32 %v651, %v677
          %v679 = vmul.f32 %v652, %v677
          %682 = vrot.lane.b32.xlu0 %v678, 126
          %v683 = vpop.permute.xlu0 %682
          %684 = vrot.lane.b32.xlu0 %v679, 126
          %v685 = vpop.permute.xlu0 %684
          %v688 = vadd.f32 %v673, %v683
          %v689 = vadd.f32 %v674, %v685
          %v690 = vld [vmem:[%s611 + $0x9] sm:$0xff]
          %v691 = vld [vmem:[%s611 + $0x11] sm:$0xff]
          %s692 = sadd.s32 %s614, 6
          %s693 = sld [smem:[#allocation5 + %s692]]
          %v694 = vstv %s693
          %v695 = vmul.f32 %v690, %v694
          %v696 = vmul.f32 %v691, %v694
          %v697 = vadd.f32 %v688, %v695
          %v698 = vadd.f32 %v689, %v696
          %s699 = sadd.s32 %s614, 7
          %s700 = sld [smem:[#allocation5 + %s699]]
          %v701 = vstv %s700
          %v702 = vmul.f32 %v690, %v701
          %v703 = vmul.f32 %v691, %v701
          %706 = vrot.lane.b32.xlu0 %v702, 127
          %v707 = vpop.permute.xlu0 %706
          %708 = vrot.lane.b32.xlu0 %v703, 127
          %v709 = vpop.permute.xlu0 %708
          %v712 = vadd.f32 %v697, %v707
          %v713 = vadd.f32 %v698, %v709
          %s714 = sadd.s32 %s614, 8
          %s715 = sld [smem:[#allocation5 + %s714]]
          %v716 = vstv %s715
          %v717 = vmul.f32 %v690, %v716
          %v718 = vmul.f32 %v691, %v716
          %721 = vrot.lane.b32.xlu0 %v717, 126
          %v722 = vpop.permute.xlu0 %721
          %723 = vrot.lane.b32.xlu0 %v718, 126
          %v724 = vpop.permute.xlu0 %723
          %v727 = vadd.f32 %v712, %v722
          %v728 = vadd.f32 %v713, %v724
          %s729 = sld [smem:[#allocation7 + %s610]]
          %v730 = vstv %s729
          %v731 = vadd.f32 %v727, %v730
          %v732 = vadd.f32 %v728, %v730
          %735 = vrot.lane.b32.xlu0 %v731, 124
          %v736 = vpop.permute.xlu0 %735
          %737 = vrot.lane.b32.xlu0 %v732, 124
          %v738 = vpop.permute.xlu0 %737
          %s741 = scalar_lea.vmem %s281, 16
          %742 = vst.msk [vmem:[%s741] sm:$0xff] %vm607, %v736
          %743 = vst.msk [vmem:[%s741 + $0x8] sm:$0xff] %vm607, %v738
          %s744 = sadd.s32 %s284, 2
          %s745 = scalar_lea.vmem [#allocation2], 64
          %v746 = vld [vmem:[%s745 + $0x7] sm:$0xff]
          %v747 = vld [vmem:[%s745 + $0xf] sm:$0xff]
          %s748 = smul.u32 %s744, 128
          %s749 = sld [smem:[#allocation5 + %s748]]
          %v750 = vstv %s749
          %v751 = vmul.f32 %v746, %v750
          %v752 = vmul.f32 %v747, %v750
          %v753 = vadd.f32 %v751, 0.0
          %v754 = vadd.f32 %v752, 0.0
          %s755 = sadd.s32 %s748, 1
          %s756 = sld [smem:[#allocation5 + %s755]]
          %v757 = vstv %s756
          %v758 = vmul.f32 %v746, %v757
          %v759 = vmul.f32 %v747, %v757
          %762 = vrot.lane.b32.xlu0 %v758, 127
          %v763 = vpop.permute.xlu0 %762
          %764 = vrot.lane.b32.xlu0 %v759, 127
          %v765 = vpop.permute.xlu0 %764
          %v768 = vadd.f32 %v753, %v763
          %v769 = vadd.f32 %v754, %v765
          %s770 = sadd.s32 %s748, 2
          %s771 = sld [smem:[#allocation5 + %s770]]
          %v772 = vstv %s771
          %v773 = vmul.f32 %v746, %v772
          %v774 = vmul.f32 %v747, %v772
          %777 = vrot.lane.b32.xlu0 %v773, 126
          %v778 = vpop.permute.xlu0 %777
          %779 = vrot.lane.b32.xlu0 %v774, 126
          %v780 = vpop.permute.xlu0 %779
          %v783 = vadd.f32 %v768, %v778
          %v784 = vadd.f32 %v769, %v780
          %v785 = vld [vmem:[%s745 + $0x8] sm:$0xff]
          %v786 = vld [vmem:[%s745 + $0x10] sm:$0xff]
          %s787 = sadd.s32 %s748, 3
          %s788 = sld [smem:[#allocation5 + %s787]]
          %v789 = vstv %s788
          %v790 = vmul.f32 %v785, %v789
          %v791 = vmul.f32 %v786, %v789
          %v792 = vadd.f32 %v783, %v790
          %v793 = vadd.f32 %v784, %v791
          %s794 = sadd.s32 %s748, 4
          %s795 = sld [smem:[#allocation5 + %s794]]
          %v796 = vstv %s795
          %v797 = vmul.f32 %v785, %v796
          %v798 = vmul.f32 %v786, %v796
          %801 = vrot.lane.b32.xlu0 %v797, 127
          %v802 = vpop.permute.xlu0 %801
          %803 = vrot.lane.b32.xlu0 %v798, 127
          %v804 = vpop.permute.xlu0 %803
          %v807 = vadd.f32 %v792, %v802
          %v808 = vadd.f32 %v793, %v804
          %s809 = sadd.s32 %s748, 5
          %s810 = sld [smem:[#allocation5 + %s809]]
          %v811 = vstv %s810
          %v812 = vmul.f32 %v785, %v811
          %v813 = vmul.f32 %v786, %v811
          %816 = vrot.lane.b32.xlu0 %v812, 126
          %v817 = vpop.permute.xlu0 %816
          %818 = vrot.lane.b32.xlu0 %v813, 126
          %v819 = vpop.permute.xlu0 %818
          %v822 = vadd.f32 %v807, %v817
          %v823 = vadd.f32 %v808, %v819
          %v824 = vld [vmem:[%s745 + $0x9] sm:$0xff]
          %v825 = vld [vmem:[%s745 + $0x11] sm:$0xff]
          %s826 = sadd.s32 %s748, 6
          %s827 = sld [smem:[#allocation5 + %s826]]
          %v828 = vstv %s827
          %v829 = vmul.f32 %v824, %v828
          %v830 = vmul.f32 %v825, %v828
          %v831 = vadd.f32 %v822, %v829
          %v832 = vadd.f32 %v823, %v830
          %s833 = sadd.s32 %s748, 7
          %s834 = sld [smem:[#allocation5 + %s833]]
          %v835 = vstv %s834
          %v836 = vmul.f32 %v824, %v835
          %v837 = vmul.f32 %v825, %v835
          %840 = vrot.lane.b32.xlu0 %v836, 127
          %v841 = vpop.permute.xlu0 %840
          %842 = vrot.lane.b32.xlu0 %v837, 127
          %v843 = vpop.permute.xlu0 %842
          %v846 = vadd.f32 %v831, %v841
          %v847 = vadd.f32 %v832, %v843
          %s848 = sadd.s32 %s748, 8
          %s849 = sld [smem:[#allocation5 + %s848]]
          %v850 = vstv %s849
          %v851 = vmul.f32 %v824, %v850
          %v852 = vmul.f32 %v825, %v850
          %855 = vrot.lane.b32.xlu0 %v851, 126
          %v856 = vpop.permute.xlu0 %855
          %857 = vrot.lane.b32.xlu0 %v852, 126
          %v858 = vpop.permute.xlu0 %857
          %v861 = vadd.f32 %v846, %v856
          %v862 = vadd.f32 %v847, %v858
          %s863 = sld [smem:[#allocation7 + %s744]]
          %v864 = vstv %s863
          %v865 = vadd.f32 %v861, %v864
          %v866 = vadd.f32 %v862, %v864
          %869 = vrot.lane.b32.xlu0 %v865, 124
          %v870 = vpop.permute.xlu0 %869
          %871 = vrot.lane.b32.xlu0 %v866, 124
          %v872 = vpop.permute.xlu0 %871
          %s875 = scalar_lea.vmem %s281, 32
          %876 = vst.msk [vmem:[%s875] sm:$0xff] %vm607, %v870
          %877 = vst.msk [vmem:[%s875 + $0x8] sm:$0xff] %vm607, %v872
          %s878 = sadd.s32 %s284, 3
          %s879 = scalar_lea.vmem [#allocation2], 96
          %v880 = vld [vmem:[%s879 + $0x7] sm:$0xff]
          %v881 = vld [vmem:[%s879 + $0xf] sm:$0xff]
          %s882 = smul.u32 %s878, 128
          %s883 = sld [smem:[#allocation5 + %s882]]
          %v884 = vstv %s883
          %v885 = vmul.f32 %v880, %v884
          %v886 = vmul.f32 %v881, %v884
          %v887 = vadd.f32 %v885, 0.0
          %v888 = vadd.f32 %v886, 0.0
          %s889 = sadd.s32 %s882, 1
          %s890 = sld [smem:[#allocation5 + %s889]]
          %v891 = vstv %s890
          %v892 = vmul.f32 %v880, %v891
          %v893 = vmul.f32 %v881, %v891
          %896 = vrot.lane.b32.xlu0 %v892, 127
          %v897 = vpop.permute.xlu0 %896
          %898 = vrot.lane.b32.xlu0 %v893, 127
          %v899 = vpop.permute.xlu0 %898
          %v902 = vadd.f32 %v887, %v897
          %v903 = vadd.f32 %v888, %v899
          %s904 = sadd.s32 %s882, 2
          %s905 = sld [smem:[#allocation5 + %s904]]
          %v906 = vstv %s905
          %v907 = vmul.f32 %v880, %v906
          %v908 = vmul.f32 %v881, %v906
          %911 = vrot.lane.b32.xlu0 %v907, 126
          %v912 = vpop.permute.xlu0 %911
          %913 = vrot.lane.b32.xlu0 %v908, 126
          %v914 = vpop.permute.xlu0 %913
          %v917 = vadd.f32 %v902, %v912
          %v918 = vadd.f32 %v903, %v914
          %v919 = vld [vmem:[%s879 + $0x8] sm:$0xff]
          %v920 = vld [vmem:[%s879 + $0x10] sm:$0xff]
          %s921 = sadd.s32 %s882, 3
          %s922 = sld [smem:[#allocation5 + %s921]]
          %v923 = vstv %s922
          %v924 = vmul.f32 %v919, %v923
          %v925 = vmul.f32 %v920, %v923
          %v926 = vadd.f32 %v917, %v924
          %v927 = vadd.f32 %v918, %v925
          %s928 = sadd.s32 %s882, 4
          %s929 = sld [smem:[#allocation5 + %s928]]
          %v930 = vstv %s929
          %v931 = vmul.f32 %v919, %v930
          %v932 = vmul.f32 %v920, %v930
          %935 = vrot.lane.b32.xlu0 %v931, 127
          %v936 = vpop.permute.xlu0 %935
          %937 = vrot.lane.b32.xlu0 %v932, 127
          %v938 = vpop.permute.xlu0 %937
          %v941 = vadd.f32 %v926, %v936
          %v942 = vadd.f32 %v927, %v938
          %s943 = sadd.s32 %s882, 5
          %s944 = sld [smem:[#allocation5 + %s943]]
          %v945 = vstv %s944
          %v946 = vmul.f32 %v919, %v945
          %v947 = vmul.f32 %v920, %v945
          %950 = vrot.lane.b32.xlu0 %v946, 126
          %v951 = vpop.permute.xlu0 %950
          %952 = vrot.lane.b32.xlu0 %v947, 126
          %v953 = vpop.permute.xlu0 %952
          %v956 = vadd.f32 %v941, %v951
          %v957 = vadd.f32 %v942, %v953
          %v958 = vld [vmem:[%s879 + $0x9] sm:$0xff]
          %v959 = vld [vmem:[%s879 + $0x11] sm:$0xff]
          %s960 = sadd.s32 %s882, 6
          %s961 = sld [smem:[#allocation5 + %s960]]
          %v962 = vstv %s961
          %v963 = vmul.f32 %v958, %v962
          %v964 = vmul.f32 %v959, %v962
          %v965 = vadd.f32 %v956, %v963
          %v966 = vadd.f32 %v957, %v964
          %s967 = sadd.s32 %s882, 7
          %s968 = sld [smem:[#allocation5 + %s967]]
          %v969 = vstv %s968
          %v970 = vmul.f32 %v958, %v969
          %v971 = vmul.f32 %v959, %v969
          %974 = vrot.lane.b32.xlu0 %v970, 127
          %v975 = vpop.permute.xlu0 %974
          %976 = vrot.lane.b32.xlu0 %v971, 127
          %v977 = vpop.permute.xlu0 %976
          %v980 = vadd.f32 %v965, %v975
          %v981 = vadd.f32 %v966, %v977
          %s982 = sadd.s32 %s882, 8
          %s983 = sld [smem:[#allocation5 + %s982]]
          %v984 = vstv %s983
          %v985 = vmul.f32 %v958, %v984
          %v986 = vmul.f32 %v959, %v984
          %989 = vrot.lane.b32.xlu0 %v985, 126
          %v990 = vpop.permute.xlu0 %989
          %991 = vrot.lane.b32.xlu0 %v986, 126
          %v992 = vpop.permute.xlu0 %991
          %v995 = vadd.f32 %v980, %v990
          %v996 = vadd.f32 %v981, %v992
          %s997 = sld [smem:[#allocation7 + %s878]]
          %v998 = vstv %s997
          %v999 = vadd.f32 %v995, %v998
          %v1000 = vadd.f32 %v996, %v998
          %1003 = vrot.lane.b32.xlu0 %v999, 124
          %v1004 = vpop.permute.xlu0 %1003
          %1005 = vrot.lane.b32.xlu0 %v1000, 124
          %v1006 = vpop.permute.xlu0 %1005
          %s1009 = scalar_lea.vmem %s281, 48
          %1010 = vst.msk [vmem:[%s1009] sm:$0xff] %vm607, %v1004
          %1011 = vst.msk [vmem:[%s1009 + $0x8] sm:$0xff] %vm607, %v1006
          %s1012 = sadd.s32 %s284, 4
          %s1013 = scalar_lea.vmem [#allocation2], 128
          %v1014 = vld [vmem:[%s1013 + $0x7] sm:$0xff]
          %v1015 = vld [vmem:[%s1013 + $0xf] sm:$0xff]
          %s1016 = smul.u32 %s1012, 128
          %s1017 = sld [smem:[#allocation5 + %s1016]]
          %v1018 = vstv %s1017
          %v1019 = vmul.f32 %v1014, %v1018
          %v1020 = vmul.f32 %v1015, %v1018
          %v1021 = vadd.f32 %v1019, 0.0
          %v1022 = vadd.f32 %v1020, 0.0
          %s1023 = sadd.s32 %s1016, 1
          %s1024 = sld [smem:[#allocation5 + %s1023]]
          %v1025 = vstv %s1024
          %v1026 = vmul.f32 %v1014, %v1025
          %v1027 = vmul.f32 %v1015, %v1025
          %1030 = vrot.lane.b32.xlu0 %v1026, 127
          %v1031 = vpop.permute.xlu0 %1030
          %1032 = vrot.lane.b32.xlu0 %v1027, 127
          %v1033 = vpop.permute.xlu0 %1032
          %v1036 = vadd.f32 %v1021, %v1031
          %v1037 = vadd.f32 %v1022, %v1033
          %s1038 = sadd.s32 %s1016, 2
          %s1039 = sld [smem:[#allocation5 + %s1038]]
          %v1040 = vstv %s1039
          %v1041 = vmul.f32 %v1014, %v1040
          %v1042 = vmul.f32 %v1015, %v1040
          %1045 = vrot.lane.b32.xlu0 %v1041, 126
          %v1046 = vpop.permute.xlu0 %1045
          %1047 = vrot.lane.b32.xlu0 %v1042, 126
          %v1048 = vpop.permute.xlu0 %1047
          %v1051 = vadd.f32 %v1036, %v1046
          %v1052 = vadd.f32 %v1037, %v1048
          %v1053 = vld [vmem:[%s1013 + $0x8] sm:$0xff]
          %v1054 = vld [vmem:[%s1013 + $0x10] sm:$0xff]
          %s1055 = sadd.s32 %s1016, 3
          %s1056 = sld [smem:[#allocation5 + %s1055]]
          %v1057 = vstv %s1056
          %v1058 = vmul.f32 %v1053, %v1057
          %v1059 = vmul.f32 %v1054, %v1057
          %v1060 = vadd.f32 %v1051, %v1058
          %v1061 = vadd.f32 %v1052, %v1059
          %s1062 = sadd.s32 %s1016, 4
          %s1063 = sld [smem:[#allocation5 + %s1062]]
          %v1064 = vstv %s1063
          %v1065 = vmul.f32 %v1053, %v1064
          %v1066 = vmul.f32 %v1054, %v1064
          %1069 = vrot.lane.b32.xlu0 %v1065, 127
          %v1070 = vpop.permute.xlu0 %1069
          %1071 = vrot.lane.b32.xlu0 %v1066, 127
          %v1072 = vpop.permute.xlu0 %1071
          %v1075 = vadd.f32 %v1060, %v1070
          %v1076 = vadd.f32 %v1061, %v1072
          %s1077 = sadd.s32 %s1016, 5
          %s1078 = sld [smem:[#allocation5 + %s1077]]
          %v1079 = vstv %s1078
          %v1080 = vmul.f32 %v1053, %v1079
          %v1081 = vmul.f32 %v1054, %v1079
          %1084 = vrot.lane.b32.xlu0 %v1080, 126
          %v1085 = vpop.permute.xlu0 %1084
          %1086 = vrot.lane.b32.xlu0 %v1081, 126
          %v1087 = vpop.permute.xlu0 %1086
          %v1090 = vadd.f32 %v1075, %v1085
          %v1091 = vadd.f32 %v1076, %v1087
          %v1092 = vld [vmem:[%s1013 + $0x9] sm:$0xff]
          %v1093 = vld [vmem:[%s1013 + $0x11] sm:$0xff]
          %s1094 = sadd.s32 %s1016, 6
          %s1095 = sld [smem:[#allocation5 + %s1094]]
          %v1096 = vstv %s1095
          %v1097 = vmul.f32 %v1092, %v1096
          %v1098 = vmul.f32 %v1093, %v1096
          %v1099 = vadd.f32 %v1090, %v1097
          %v1100 = vadd.f32 %v1091, %v1098
          %s1101 = sadd.s32 %s1016, 7
          %s1102 = sld [smem:[#allocation5 + %s1101]]
          %v1103 = vstv %s1102
          %v1104 = vmul.f32 %v1092, %v1103
          %v1105 = vmul.f32 %v1093, %v1103
          %1108 = vrot.lane.b32.xlu0 %v1104, 127
          %v1109 = vpop.permute.xlu0 %1108
          %1110 = vrot.lane.b32.xlu0 %v1105, 127
          %v1111 = vpop.permute.xlu0 %1110
          %v1114 = vadd.f32 %v1099, %v1109
          %v1115 = vadd.f32 %v1100, %v1111
          %s1116 = sadd.s32 %s1016, 8
          %s1117 = sld [smem:[#allocation5 + %s1116]]
          %v1118 = vstv %s1117
          %v1119 = vmul.f32 %v1092, %v1118
          %v1120 = vmul.f32 %v1093, %v1118
          %1123 = vrot.lane.b32.xlu0 %v1119, 126
          %v1124 = vpop.permute.xlu0 %1123
          %1125 = vrot.lane.b32.xlu0 %v1120, 126
          %v1126 = vpop.permute.xlu0 %1125
          %v1129 = vadd.f32 %v1114, %v1124
          %v1130 = vadd.f32 %v1115, %v1126
          %s1131 = sld [smem:[#allocation7 + %s1012]]
          %v1132 = vstv %s1131
          %v1133 = vadd.f32 %v1129, %v1132
          %v1134 = vadd.f32 %v1130, %v1132
          %1137 = vrot.lane.b32.xlu0 %v1133, 124
          %v1138 = vpop.permute.xlu0 %1137
          %1139 = vrot.lane.b32.xlu0 %v1134, 124
          %v1140 = vpop.permute.xlu0 %1139
          %s1143 = scalar_lea.vmem %s281, 64
          %1144 = vst.msk [vmem:[%s1143] sm:$0xff] %vm607, %v1138
          %1145 = vst.msk [vmem:[%s1143 + $0x8] sm:$0xff] %vm607, %v1140
          %s1146 = sadd.s32 %s284, 5
          %s1147 = scalar_lea.vmem [#allocation2], 160
          %v1148 = vld [vmem:[%s1147 + $0x7] sm:$0xff]
          %v1149 = vld [vmem:[%s1147 + $0xf] sm:$0xff]
          %s1150 = smul.u32 %s1146, 128
          %s1151 = sld [smem:[#allocation5 + %s1150]]
          %v1152 = vstv %s1151
          %v1153 = vmul.f32 %v1148, %v1152
          %v1154 = vmul.f32 %v1149, %v1152
          %v1155 = vadd.f32 %v1153, 0.0
          %v1156 = vadd.f32 %v1154, 0.0
          %s1157 = sadd.s32 %s1150, 1
          %s1158 = sld [smem:[#allocation5 + %s1157]]
          %v1159 = vstv %s1158
          %v1160 = vmul.f32 %v1148, %v1159
          %v1161 = vmul.f32 %v1149, %v1159
          %1164 = vrot.lane.b32.xlu0 %v1160, 127
          %v1165 = vpop.permute.xlu0 %1164
          %1166 = vrot.lane.b32.xlu0 %v1161, 127
          %v1167 = vpop.permute.xlu0 %1166
          %v1170 = vadd.f32 %v1155, %v1165
          %v1171 = vadd.f32 %v1156, %v1167
          %s1172 = sadd.s32 %s1150, 2
          %s1173 = sld [smem:[#allocation5 + %s1172]]
          %v1174 = vstv %s1173
          %v1175 = vmul.f32 %v1148, %v1174
          %v1176 = vmul.f32 %v1149, %v1174
          %1179 = vrot.lane.b32.xlu0 %v1175, 126
          %v1180 = vpop.permute.xlu0 %1179
          %1181 = vrot.lane.b32.xlu0 %v1176, 126
          %v1182 = vpop.permute.xlu0 %1181
          %v1185 = vadd.f32 %v1170, %v1180
          %v1186 = vadd.f32 %v1171, %v1182
          %v1187 = vld [vmem:[%s1147 + $0x8] sm:$0xff]
          %v1188 = vld [vmem:[%s1147 + $0x10] sm:$0xff]
          %s1189 = sadd.s32 %s1150, 3
          %s1190 = sld [smem:[#allocation5 + %s1189]]
          %v1191 = vstv %s1190
          %v1192 = vmul.f32 %v1187, %v1191
          %v1193 = vmul.f32 %v1188, %v1191
          %v1194 = vadd.f32 %v1185, %v1192
          %v1195 = vadd.f32 %v1186, %v1193
          %s1196 = sadd.s32 %s1150, 4
          %s1197 = sld [smem:[#allocation5 + %s1196]]
          %v1198 = vstv %s1197
          %v1199 = vmul.f32 %v1187, %v1198
          %v1200 = vmul.f32 %v1188, %v1198
          %1203 = vrot.lane.b32.xlu0 %v1199, 127
          %v1204 = vpop.permute.xlu0 %1203
          %1205 = vrot.lane.b32.xlu0 %v1200, 127
          %v1206 = vpop.permute.xlu0 %1205
          %v1209 = vadd.f32 %v1194, %v1204
          %v1210 = vadd.f32 %v1195, %v1206
          %s1211 = sadd.s32 %s1150, 5
          %s1212 = sld [smem:[#allocation5 + %s1211]]
          %v1213 = vstv %s1212
          %v1214 = vmul.f32 %v1187, %v1213
          %v1215 = vmul.f32 %v1188, %v1213
          %1218 = vrot.lane.b32.xlu0 %v1214, 126
          %v1219 = vpop.permute.xlu0 %1218
          %1220 = vrot.lane.b32.xlu0 %v1215, 126
          %v1221 = vpop.permute.xlu0 %1220
          %v1224 = vadd.f32 %v1209, %v1219
          %v1225 = vadd.f32 %v1210, %v1221
          %v1226 = vld [vmem:[%s1147 + $0x9] sm:$0xff]
          %v1227 = vld [vmem:[%s1147 + $0x11] sm:$0xff]
          %s1228 = sadd.s32 %s1150, 6
          %s1229 = sld [smem:[#allocation5 + %s1228]]
          %v1230 = vstv %s1229
          %v1231 = vmul.f32 %v1226, %v1230
          %v1232 = vmul.f32 %v1227, %v1230
          %v1233 = vadd.f32 %v1224, %v1231
          %v1234 = vadd.f32 %v1225, %v1232
          %s1235 = sadd.s32 %s1150, 7
          %s1236 = sld [smem:[#allocation5 + %s1235]]
          %v1237 = vstv %s1236
          %v1238 = vmul.f32 %v1226, %v1237
          %v1239 = vmul.f32 %v1227, %v1237
          %1242 = vrot.lane.b32.xlu0 %v1238, 127
          %v1243 = vpop.permute.xlu0 %1242
          %1244 = vrot.lane.b32.xlu0 %v1239, 127
          %v1245 = vpop.permute.xlu0 %1244
          %v1248 = vadd.f32 %v1233, %v1243
          %v1249 = vadd.f32 %v1234, %v1245
          %s1250 = sadd.s32 %s1150, 8
          %s1251 = sld [smem:[#allocation5 + %s1250]]
          %v1252 = vstv %s1251
          %v1253 = vmul.f32 %v1226, %v1252
          %v1254 = vmul.f32 %v1227, %v1252
          %1257 = vrot.lane.b32.xlu0 %v1253, 126
          %v1258 = vpop.permute.xlu0 %1257
          %1259 = vrot.lane.b32.xlu0 %v1254, 126
          %v1260 = vpop.permute.xlu0 %1259
          %v1263 = vadd.f32 %v1248, %v1258
          %v1264 = vadd.f32 %v1249, %v1260
          %s1265 = sld [smem:[#allocation7 + %s1146]]
          %v1266 = vstv %s1265
          %v1267 = vadd.f32 %v1263, %v1266
          %v1268 = vadd.f32 %v1264, %v1266
          %1271 = vrot.lane.b32.xlu0 %v1267, 124
          %v1272 = vpop.permute.xlu0 %1271
          %1273 = vrot.lane.b32.xlu0 %v1268, 124
          %v1274 = vpop.permute.xlu0 %1273
          %s1277 = scalar_lea.vmem %s281, 80
          %1278 = vst.msk [vmem:[%s1277] sm:$0xff] %vm607, %v1272
          %1279 = vst.msk [vmem:[%s1277 + $0x8] sm:$0xff] %vm607, %v1274
          %s1280 = sadd.s32 %s284, 6
          %s1281 = scalar_lea.vmem [#allocation2], 192
          %v1282 = vld [vmem:[%s1281 + $0x7] sm:$0xff]
          %v1283 = vld [vmem:[%s1281 + $0xf] sm:$0xff]
          %s1284 = smul.u32 %s1280, 128
          %s1285 = sld [smem:[#allocation5 + %s1284]]
          %v1286 = vstv %s1285
          %v1287 = vmul.f32 %v1282, %v1286
          %v1288 = vmul.f32 %v1283, %v1286
          %v1289 = vadd.f32 %v1287, 0.0
          %v1290 = vadd.f32 %v1288, 0.0
          %s1291 = sadd.s32 %s1284, 1
          %s1292 = sld [smem:[#allocation5 + %s1291]]
          %v1293 = vstv %s1292
          %v1294 = vmul.f32 %v1282, %v1293
          %v1295 = vmul.f32 %v1283, %v1293
          %1298 = vrot.lane.b32.xlu0 %v1294, 127
          %v1299 = vpop.permute.xlu0 %1298
          %1300 = vrot.lane.b32.xlu0 %v1295, 127
          %v1301 = vpop.permute.xlu0 %1300
          %v1304 = vadd.f32 %v1289, %v1299
          %v1305 = vadd.f32 %v1290, %v1301
          %s1306 = sadd.s32 %s1284, 2
          %s1307 = sld [smem:[#allocation5 + %s1306]]
          %v1308 = vstv %s1307
          %v1309 = vmul.f32 %v1282, %v1308
          %v1310 = vmul.f32 %v1283, %v1308
          %1313 = vrot.lane.b32.xlu0 %v1309, 126
          %v1314 = vpop.permute.xlu0 %1313
          %1315 = vrot.lane.b32.xlu0 %v1310, 126
          %v1316 = vpop.permute.xlu0 %1315
          %v1319 = vadd.f32 %v1304, %v1314
          %v1320 = vadd.f32 %v1305, %v1316
          %v1321 = vld [vmem:[%s1281 + $0x8] sm:$0xff]
          %v1322 = vld [vmem:[%s1281 + $0x10] sm:$0xff]
          %s1323 = sadd.s32 %s1284, 3
          %s1324 = sld [smem:[#allocation5 + %s1323]]
          %v1325 = vstv %s1324
          %v1326 = vmul.f32 %v1321, %v1325
          %v1327 = vmul.f32 %v1322, %v1325
          %v1328 = vadd.f32 %v1319, %v1326
          %v1329 = vadd.f32 %v1320, %v1327
          %s1330 = sadd.s32 %s1284, 4
          %s1331 = sld [smem:[#allocation5 + %s1330]]
          %v1332 = vstv %s1331
          %v1333 = vmul.f32 %v1321, %v1332
          %v1334 = vmul.f32 %v1322, %v1332
          %1337 = vrot.lane.b32.xlu0 %v1333, 127
          %v1338 = vpop.permute.xlu0 %1337
          %1339 = vrot.lane.b32.xlu0 %v1334, 127
          %v1340 = vpop.permute.xlu0 %1339
          %v1343 = vadd.f32 %v1328, %v1338
          %v1344 = vadd.f32 %v1329, %v1340
          %s1345 = sadd.s32 %s1284, 5
          %s1346 = sld [smem:[#allocation5 + %s1345]]
          %v1347 = vstv %s1346
          %v1348 = vmul.f32 %v1321, %v1347
          %v1349 = vmul.f32 %v1322, %v1347
          %1352 = vrot.lane.b32.xlu0 %v1348, 126
          %v1353 = vpop.permute.xlu0 %1352
          %1354 = vrot.lane.b32.xlu0 %v1349, 126
          %v1355 = vpop.permute.xlu0 %1354
          %v1358 = vadd.f32 %v1343, %v1353
          %v1359 = vadd.f32 %v1344, %v1355
          %v1360 = vld [vmem:[%s1281 + $0x9] sm:$0xff]
          %v1361 = vld [vmem:[%s1281 + $0x11] sm:$0xff]
          %s1362 = sadd.s32 %s1284, 6
          %s1363 = sld [smem:[#allocation5 + %s1362]]
          %v1364 = vstv %s1363
          %v1365 = vmul.f32 %v1360, %v1364
          %v1366 = vmul.f32 %v1361, %v1364
          %v1367 = vadd.f32 %v1358, %v1365
          %v1368 = vadd.f32 %v1359, %v1366
          %s1369 = sadd.s32 %s1284, 7
          %s1370 = sld [smem:[#allocation5 + %s1369]]
          %v1371 = vstv %s1370
          %v1372 = vmul.f32 %v1360, %v1371
          %v1373 = vmul.f32 %v1361, %v1371
          %1376 = vrot.lane.b32.xlu0 %v1372, 127
          %v1377 = vpop.permute.xlu0 %1376
          %1378 = vrot.lane.b32.xlu0 %v1373, 127
          %v1379 = vpop.permute.xlu0 %1378
          %v1382 = vadd.f32 %v1367, %v1377
          %v1383 = vadd.f32 %v1368, %v1379
          %s1384 = sadd.s32 %s1284, 8
          %s1385 = sld [smem:[#allocation5 + %s1384]]
          %v1386 = vstv %s1385
          %v1387 = vmul.f32 %v1360, %v1386
          %v1388 = vmul.f32 %v1361, %v1386
          %1391 = vrot.lane.b32.xlu0 %v1387, 126
          %v1392 = vpop.permute.xlu0 %1391
          %1393 = vrot.lane.b32.xlu0 %v1388, 126
          %v1394 = vpop.permute.xlu0 %1393
          %v1397 = vadd.f32 %v1382, %v1392
          %v1398 = vadd.f32 %v1383, %v1394
          %s1399 = sld [smem:[#allocation7 + %s1280]]
          %v1400 = vstv %s1399
          %v1401 = vadd.f32 %v1397, %v1400
          %v1402 = vadd.f32 %v1398, %v1400
          %1405 = vrot.lane.b32.xlu0 %v1401, 124
          %v1406 = vpop.permute.xlu0 %1405
          %1407 = vrot.lane.b32.xlu0 %v1402, 124
          %v1408 = vpop.permute.xlu0 %1407
          %s1411 = scalar_lea.vmem %s281, 96
          %1412 = vst.msk [vmem:[%s1411] sm:$0xff] %vm607, %v1406
          %1413 = vst.msk [vmem:[%s1411 + $0x8] sm:$0xff] %vm607, %v1408
          %s1414 = sadd.s32 %s284, 7
          %s1415 = scalar_lea.vmem [#allocation2], 224
          %v1416 = vld [vmem:[%s1415 + $0x7] sm:$0xff]
          %v1417 = vld [vmem:[%s1415 + $0xf] sm:$0xff]
          %s1418 = smul.u32 %s1414, 128
          %s1419 = sld [smem:[#allocation5 + %s1418]]
          %v1420 = vstv %s1419
          %v1421 = vmul.f32 %v1416, %v1420
          %v1422 = vmul.f32 %v1417, %v1420
          %v1423 = vadd.f32 %v1421, 0.0
          %v1424 = vadd.f32 %v1422, 0.0
          %s1425 = sadd.s32 %s1418, 1
          %s1426 = sld [smem:[#allocation5 + %s1425]]
          %v1427 = vstv %s1426
          %v1428 = vmul.f32 %v1416, %v1427
          %v1429 = vmul.f32 %v1417, %v1427
          %1432 = vrot.lane.b32.xlu0 %v1428, 127
          %v1433 = vpop.permute.xlu0 %1432
          %1434 = vrot.lane.b32.xlu0 %v1429, 127
          %v1435 = vpop.permute.xlu0 %1434
          %v1438 = vadd.f32 %v1423, %v1433
          %v1439 = vadd.f32 %v1424, %v1435
          %s1440 = sadd.s32 %s1418, 2
          %s1441 = sld [smem:[#allocation5 + %s1440]]
          %v1442 = vstv %s1441
          %v1443 = vmul.f32 %v1416, %v1442
          %v1444 = vmul.f32 %v1417, %v1442
          %1447 = vrot.lane.b32.xlu0 %v1443, 126
          %v1448 = vpop.permute.xlu0 %1447
          %1449 = vrot.lane.b32.xlu0 %v1444, 126
          %v1450 = vpop.permute.xlu0 %1449
          %v1453 = vadd.f32 %v1438, %v1448
          %v1454 = vadd.f32 %v1439, %v1450
          %v1455 = vld [vmem:[%s1415 + $0x8] sm:$0xff]
          %v1456 = vld [vmem:[%s1415 + $0x10] sm:$0xff]
          %s1457 = sadd.s32 %s1418, 3
          %s1458 = sld [smem:[#allocation5 + %s1457]]
          %v1459 = vstv %s1458
          %v1460 = vmul.f32 %v1455, %v1459
          %v1461 = vmul.f32 %v1456, %v1459
          %v1462 = vadd.f32 %v1453, %v1460
          %v1463 = vadd.f32 %v1454, %v1461
          %s1464 = sadd.s32 %s1418, 4
          %s1465 = sld [smem:[#allocation5 + %s1464]]
          %v1466 = vstv %s1465
          %v1467 = vmul.f32 %v1455, %v1466
          %v1468 = vmul.f32 %v1456, %v1466
          %1471 = vrot.lane.b32.xlu0 %v1467, 127
          %v1472 = vpop.permute.xlu0 %1471
          %1473 = vrot.lane.b32.xlu0 %v1468, 127
          %v1474 = vpop.permute.xlu0 %1473
          %v1477 = vadd.f32 %v1462, %v1472
          %v1478 = vadd.f32 %v1463, %v1474
          %s1479 = sadd.s32 %s1418, 5
          %s1480 = sld [smem:[#allocation5 + %s1479]]
          %v1481 = vstv %s1480
          %v1482 = vmul.f32 %v1455, %v1481
          %v1483 = vmul.f32 %v1456, %v1481
          %1486 = vrot.lane.b32.xlu0 %v1482, 126
          %v1487 = vpop.permute.xlu0 %1486
          %1488 = vrot.lane.b32.xlu0 %v1483, 126
          %v1489 = vpop.permute.xlu0 %1488
          %v1492 = vadd.f32 %v1477, %v1487
          %v1493 = vadd.f32 %v1478, %v1489
          %v1494 = vld [vmem:[%s1415 + $0x9] sm:$0xff]
          %v1495 = vld [vmem:[%s1415 + $0x11] sm:$0xff]
          %s1496 = sadd.s32 %s1418, 6
          %s1497 = sld [smem:[#allocation5 + %s1496]]
          %v1498 = vstv %s1497
          %v1499 = vmul.f32 %v1494, %v1498
          %v1500 = vmul.f32 %v1495, %v1498
          %v1501 = vadd.f32 %v1492, %v1499
          %v1502 = vadd.f32 %v1493, %v1500
          %s1503 = sadd.s32 %s1418, 7
          %s1504 = sld [smem:[#allocation5 + %s1503]]
          %v1505 = vstv %s1504
          %v1506 = vmul.f32 %v1494, %v1505
          %v1507 = vmul.f32 %v1495, %v1505
          %1510 = vrot.lane.b32.xlu0 %v1506, 127
          %v1511 = vpop.permute.xlu0 %1510
          %1512 = vrot.lane.b32.xlu0 %v1507, 127
          %v1513 = vpop.permute.xlu0 %1512
          %v1516 = vadd.f32 %v1501, %v1511
          %v1517 = vadd.f32 %v1502, %v1513
          %s1518 = sadd.s32 %s1418, 8
          %s1519 = sld [smem:[#allocation5 + %s1518]]
          %v1520 = vstv %s1519
          %v1521 = vmul.f32 %v1494, %v1520
          %v1522 = vmul.f32 %v1495, %v1520
          %1525 = vrot.lane.b32.xlu0 %v1521, 126
          %v1526 = vpop.permute.xlu0 %1525
          %1527 = vrot.lane.b32.xlu0 %v1522, 126
          %v1528 = vpop.permute.xlu0 %1527
          %v1531 = vadd.f32 %v1516, %v1526
          %v1532 = vadd.f32 %v1517, %v1528
          %s1533 = sld [smem:[#allocation7 + %s1414]]
          %v1534 = vstv %s1533
          %v1535 = vadd.f32 %v1531, %v1534
          %v1536 = vadd.f32 %v1532, %v1534
          %1539 = vrot.lane.b32.xlu0 %v1535, 124
          %v1540 = vpop.permute.xlu0 %1539
          %1541 = vrot.lane.b32.xlu0 %v1536, 124
          %v1542 = vpop.permute.xlu0 %1541
          %s1545 = scalar_lea.vmem %s281, 112
          %1546 = vst.msk [vmem:[%s1545] sm:$0xff] %vm607, %v1540
          %1547 = vst.msk [vmem:[%s1545 + $0x8] sm:$0xff] %vm607, %v1542
        $region60: #{inception_dw_conv2d.1} parent=35 // pred_fallthru
          _
        %p1548 = scmp.eq.s32.totalorder %s283, 2
        // Predicated region
        $region61: #{inception_dw_conv2d.1} parent=35 // pred_check
          %p1549 = pneg %p1548
        $region62: #{inception_dw_conv2d.1} parent=35 // pred_check_branch
          %1551 = sbr.rel (%p1549) target = $region64
        $region63: #{inception_dw_conv2d.1} parent=35 // pred_region
          %v1552 = vld [vmem:[#allocation2 + $0x8] sm:$0xff]
          %v1553 = vld [vmem:[#allocation2 + $0x10] sm:$0xff]
          %s1554 = smul.u32 %s284, 128
          %s1555 = sld [smem:[#allocation5 + %s1554]]
          %v1556 = vstv %s1555
          %v1557 = vmul.f32 %v1552, %v1556
          %v1558 = vmul.f32 %v1553, %v1556
          %v1559 = vadd.f32 %v1557, 0.0
          %v1560 = vadd.f32 %v1558, 0.0
          %s1561 = sadd.s32 %s1554, 1
          %s1562 = sld [smem:[#allocation5 + %s1561]]
          %v1563 = vstv %s1562
          %v1564 = vmul.f32 %v1552, %v1563
          %v1565 = vmul.f32 %v1553, %v1563
          %1568 = vrot.lane.b32.xlu0 %v1564, 127
          %v1569 = vpop.permute.xlu0 %1568
          %1570 = vrot.lane.b32.xlu0 %v1565, 127
          %v1571 = vpop.permute.xlu0 %1570
          %v1574 = vadd.f32 %v1559, %v1569
          %v1575 = vadd.f32 %v1560, %v1571
          %s1576 = sadd.s32 %s1554, 2
          %s1577 = sld [smem:[#allocation5 + %s1576]]
          %v1578 = vstv %s1577
          %v1579 = vmul.f32 %v1552, %v1578
          %v1580 = vmul.f32 %v1553, %v1578
          %1583 = vrot.lane.b32.xlu0 %v1579, 126
          %v1584 = vpop.permute.xlu0 %1583
          %1585 = vrot.lane.b32.xlu0 %v1580, 126
          %v1586 = vpop.permute.xlu0 %1585
          %v1589 = vadd.f32 %v1574, %v1584
          %v1590 = vadd.f32 %v1575, %v1586
          %s1591 = sadd.s32 %s1554, 3
          %s1592 = sld [smem:[#allocation5 + %s1591]]
          %v1593 = vstv %s1592
          %v1594 = vmul.f32 %v1552, %v1593
          %v1595 = vmul.f32 %v1553, %v1593
          %1598 = vrot.lane.b32.xlu0 %v1594, 125
          %v1599 = vpop.permute.xlu0 %1598
          %1600 = vrot.lane.b32.xlu0 %v1595, 125
          %v1601 = vpop.permute.xlu0 %1600
          %v1604 = vadd.f32 %v1589, %v1599
          %v1605 = vadd.f32 %v1590, %v1601
          %s1606 = sadd.s32 %s1554, 4
          %s1607 = sld [smem:[#allocation5 + %s1606]]
          %v1608 = vstv %s1607
          %v1609 = vmul.f32 %v1552, %v1608
          %v1610 = vmul.f32 %v1553, %v1608
          %1613 = vrot.lane.b32.xlu0 %v1609, 124
          %v1614 = vpop.permute.xlu0 %1613
          %1615 = vrot.lane.b32.xlu0 %v1610, 124
          %v1616 = vpop.permute.xlu0 %1615
          %v1619 = vadd.f32 %v1604, %v1614
          %v1620 = vadd.f32 %v1605, %v1616
          %s1621 = sadd.s32 %s1554, 5
          %s1622 = sld [smem:[#allocation5 + %s1621]]
          %v1623 = vstv %s1622
          %v1624 = vmul.f32 %v1552, %v1623
          %v1625 = vmul.f32 %v1553, %v1623
          %1628 = vrot.lane.b32.xlu0 %v1624, 123
          %v1629 = vpop.permute.xlu0 %1628
          %1630 = vrot.lane.b32.xlu0 %v1625, 123
          %v1631 = vpop.permute.xlu0 %1630
          %v1634 = vadd.f32 %v1619, %v1629
          %v1635 = vadd.f32 %v1620, %v1631
          %s1636 = sadd.s32 %s1554, 6
          %s1637 = sld [smem:[#allocation5 + %s1636]]
          %v1638 = vstv %s1637
          %v1639 = vmul.f32 %v1552, %v1638
          %v1640 = vmul.f32 %v1553, %v1638
          %1643 = vrot.lane.b32.xlu0 %v1639, 122
          %v1644 = vpop.permute.xlu0 %1643
          %1645 = vrot.lane.b32.xlu0 %v1640, 122
          %v1646 = vpop.permute.xlu0 %1645
          %v1649 = vadd.f32 %v1634, %v1644
          %v1650 = vadd.f32 %v1635, %v1646
          %s1651 = sadd.s32 %s1554, 7
          %s1652 = sld [smem:[#allocation5 + %s1651]]
          %v1653 = vstv %s1652
          %v1654 = vmul.f32 %v1552, %v1653
          %v1655 = vmul.f32 %v1553, %v1653
          %1658 = vrot.lane.b32.xlu0 %v1654, 121
          %v1659 = vpop.permute.xlu0 %1658
          %1660 = vrot.lane.b32.xlu0 %v1655, 121
          %v1661 = vpop.permute.xlu0 %1660
          %v1664 = vadd.f32 %v1649, %v1659
          %v1665 = vadd.f32 %v1650, %v1661
          %s1666 = sadd.s32 %s1554, 8
          %s1667 = sld [smem:[#allocation5 + %s1666]]
          %v1668 = vstv %s1667
          %v1669 = vmul.f32 %v1552, %v1668
          %v1670 = vmul.f32 %v1553, %v1668
          %1673 = vrot.lane.b32.xlu0 %v1669, 120
          %v1674 = vpop.permute.xlu0 %1673
          %1675 = vrot.lane.b32.xlu0 %v1670, 120
          %v1676 = vpop.permute.xlu0 %1675
          %v1679 = vadd.f32 %v1664, %v1674
          %v1680 = vadd.f32 %v1665, %v1676
          %s1681 = sadd.s32 %s1554, 9
          %s1682 = sld [smem:[#allocation5 + %s1681]]
          %v1683 = vstv %s1682
          %v1684 = vmul.f32 %v1552, %v1683
          %v1685 = vmul.f32 %v1553, %v1683
          %1688 = vrot.lane.b32.xlu0 %v1684, 119
          %v1689 = vpop.permute.xlu0 %1688
          %1690 = vrot.lane.b32.xlu0 %v1685, 119
          %v1691 = vpop.permute.xlu0 %1690
          %v1694 = vadd.f32 %v1679, %v1689
          %v1695 = vadd.f32 %v1680, %v1691
          %s1696 = sadd.s32 %s1554, 10
          %s1697 = sld [smem:[#allocation5 + %s1696]]
          %v1698 = vstv %s1697
          %v1699 = vmul.f32 %v1552, %v1698
          %v1700 = vmul.f32 %v1553, %v1698
          %1703 = vrot.lane.b32.xlu0 %v1699, 118
          %v1704 = vpop.permute.xlu0 %1703
          %1705 = vrot.lane.b32.xlu0 %v1700, 118
          %v1706 = vpop.permute.xlu0 %1705
          %v1709 = vadd.f32 %v1694, %v1704
          %v1710 = vadd.f32 %v1695, %v1706
          %s1711 = sld [smem:[#allocation7 + %s284]]
          %v1712 = vstv %s1711
          %v1713 = vadd.f32 %v1709, %v1712
          %v1714 = vadd.f32 %v1710, %v1712
          %vm1715 = vcmask 130048
          %1716 = vst.msk [vmem:[%s281] sm:$0xff] %vm1715, %v1713
          %1717 = vst.msk [vmem:[%s281 + $0x8] sm:$0xff] %vm1715, %v1714
          %s1718 = sadd.s32 %s284, 1
          %s1719 = scalar_lea.vmem [#allocation2], 32
          %v1720 = vld [vmem:[%s1719 + $0x8] sm:$0xff]
          %v1721 = vld [vmem:[%s1719 + $0x10] sm:$0xff]
          %s1722 = smul.u32 %s1718, 128
          %s1723 = sld [smem:[#allocation5 + %s1722]]
          %v1724 = vstv %s1723
          %v1725 = vmul.f32 %v1720, %v1724
          %v1726 = vmul.f32 %v1721, %v1724
          %v1727 = vadd.f32 %v1725, 0.0
          %v1728 = vadd.f32 %v1726, 0.0
          %s1729 = sadd.s32 %s1722, 1
          %s1730 = sld [smem:[#allocation5 + %s1729]]
          %v1731 = vstv %s1730
          %v1732 = vmul.f32 %v1720, %v1731
          %v1733 = vmul.f32 %v1721, %v1731
          %1736 = vrot.lane.b32.xlu0 %v1732, 127
          %v1737 = vpop.permute.xlu0 %1736
          %1738 = vrot.lane.b32.xlu0 %v1733, 127
          %v1739 = vpop.permute.xlu0 %1738
          %v1742 = vadd.f32 %v1727, %v1737
          %v1743 = vadd.f32 %v1728, %v1739
          %s1744 = sadd.s32 %s1722, 2
          %s1745 = sld [smem:[#allocation5 + %s1744]]
          %v1746 = vstv %s1745
          %v1747 = vmul.f32 %v1720, %v1746
          %v1748 = vmul.f32 %v1721, %v1746
          %1751 = vrot.lane.b32.xlu0 %v1747, 126
          %v1752 = vpop.permute.xlu0 %1751
          %1753 = vrot.lane.b32.xlu0 %v1748, 126
          %v1754 = vpop.permute.xlu0 %1753
          %v1757 = vadd.f32 %v1742, %v1752
          %v1758 = vadd.f32 %v1743, %v1754
          %s1759 = sadd.s32 %s1722, 3
          %s1760 = sld [smem:[#allocation5 + %s1759]]
          %v1761 = vstv %s1760
          %v1762 = vmul.f32 %v1720, %v1761
          %v1763 = vmul.f32 %v1721, %v1761
          %1766 = vrot.lane.b32.xlu0 %v1762, 125
          %v1767 = vpop.permute.xlu0 %1766
          %1768 = vrot.lane.b32.xlu0 %v1763, 125
          %v1769 = vpop.permute.xlu0 %1768
          %v1772 = vadd.f32 %v1757, %v1767
          %v1773 = vadd.f32 %v1758, %v1769
          %s1774 = sadd.s32 %s1722, 4
          %s1775 = sld [smem:[#allocation5 + %s1774]]
          %v1776 = vstv %s1775
          %v1777 = vmul.f32 %v1720, %v1776
          %v1778 = vmul.f32 %v1721, %v1776
          %1781 = vrot.lane.b32.xlu0 %v1777, 124
          %v1782 = vpop.permute.xlu0 %1781
          %1783 = vrot.lane.b32.xlu0 %v1778, 124
          %v1784 = vpop.permute.xlu0 %1783
          %v1787 = vadd.f32 %v1772, %v1782
          %v1788 = vadd.f32 %v1773, %v1784
          %s1789 = sadd.s32 %s1722, 5
          %s1790 = sld [smem:[#allocation5 + %s1789]]
          %v1791 = vstv %s1790
          %v1792 = vmul.f32 %v1720, %v1791
          %v1793 = vmul.f32 %v1721, %v1791
          %1796 = vrot.lane.b32.xlu0 %v1792, 123
          %v1797 = vpop.permute.xlu0 %1796
          %1798 = vrot.lane.b32.xlu0 %v1793, 123
          %v1799 = vpop.permute.xlu0 %1798
          %v1802 = vadd.f32 %v1787, %v1797
          %v1803 = vadd.f32 %v1788, %v1799
          %s1804 = sadd.s32 %s1722, 6
          %s1805 = sld [smem:[#allocation5 + %s1804]]
          %v1806 = vstv %s1805
          %v1807 = vmul.f32 %v1720, %v1806
          %v1808 = vmul.f32 %v1721, %v1806
          %1811 = vrot.lane.b32.xlu0 %v1807, 122
          %v1812 = vpop.permute.xlu0 %1811
          %1813 = vrot.lane.b32.xlu0 %v1808, 122
          %v1814 = vpop.permute.xlu0 %1813
          %v1817 = vadd.f32 %v1802, %v1812
          %v1818 = vadd.f32 %v1803, %v1814
          %s1819 = sadd.s32 %s1722, 7
          %s1820 = sld [smem:[#allocation5 + %s1819]]
          %v1821 = vstv %s1820
          %v1822 = vmul.f32 %v1720, %v1821
          %v1823 = vmul.f32 %v1721, %v1821
          %1826 = vrot.lane.b32.xlu0 %v1822, 121
          %v1827 = vpop.permute.xlu0 %1826
          %1828 = vrot.lane.b32.xlu0 %v1823, 121
          %v1829 = vpop.permute.xlu0 %1828
          %v1832 = vadd.f32 %v1817, %v1827
          %v1833 = vadd.f32 %v1818, %v1829
          %s1834 = sadd.s32 %s1722, 8
          %s1835 = sld [smem:[#allocation5 + %s1834]]
          %v1836 = vstv %s1835
          %v1837 = vmul.f32 %v1720, %v1836
          %v1838 = vmul.f32 %v1721, %v1836
          %1841 = vrot.lane.b32.xlu0 %v1837, 120
          %v1842 = vpop.permute.xlu0 %1841
          %1843 = vrot.lane.b32.xlu0 %v1838, 120
          %v1844 = vpop.permute.xlu0 %1843
          %v1847 = vadd.f32 %v1832, %v1842
          %v1848 = vadd.f32 %v1833, %v1844
          %s1849 = sadd.s32 %s1722, 9
          %s1850 = sld [smem:[#allocation5 + %s1849]]
          %v1851 = vstv %s1850
          %v1852 = vmul.f32 %v1720, %v1851
          %v1853 = vmul.f32 %v1721, %v1851
          %1856 = vrot.lane.b32.xlu0 %v1852, 119
          %v1857 = vpop.permute.xlu0 %1856
          %1858 = vrot.lane.b32.xlu0 %v1853, 119
          %v1859 = vpop.permute.xlu0 %1858
          %v1862 = vadd.f32 %v1847, %v1857
          %v1863 = vadd.f32 %v1848, %v1859
          %s1864 = sadd.s32 %s1722, 10
          %s1865 = sld [smem:[#allocation5 + %s1864]]
          %v1866 = vstv %s1865
          %v1867 = vmul.f32 %v1720, %v1866
          %v1868 = vmul.f32 %v1721, %v1866
          %1871 = vrot.lane.b32.xlu0 %v1867, 118
          %v1872 = vpop.permute.xlu0 %1871
          %1873 = vrot.lane.b32.xlu0 %v1868, 118
          %v1874 = vpop.permute.xlu0 %1873
          %v1877 = vadd.f32 %v1862, %v1872
          %v1878 = vadd.f32 %v1863, %v1874
          %s1879 = sld [smem:[#allocation7 + %s1718]]
          %v1880 = vstv %s1879
          %v1881 = vadd.f32 %v1877, %v1880
          %v1882 = vadd.f32 %v1878, %v1880
          %s1883 = scalar_lea.vmem %s281, 16
          %1884 = vst.msk [vmem:[%s1883] sm:$0xff] %vm1715, %v1881
          %1885 = vst.msk [vmem:[%s1883 + $0x8] sm:$0xff] %vm1715, %v1882
          %s1886 = sadd.s32 %s284, 2
          %s1887 = scalar_lea.vmem [#allocation2], 64
          %v1888 = vld [vmem:[%s1887 + $0x8] sm:$0xff]
          %v1889 = vld [vmem:[%s1887 + $0x10] sm:$0xff]
          %s1890 = smul.u32 %s1886, 128
          %s1891 = sld [smem:[#allocation5 + %s1890]]
          %v1892 = vstv %s1891
          %v1893 = vmul.f32 %v1888, %v1892
          %v1894 = vmul.f32 %v1889, %v1892
          %v1895 = vadd.f32 %v1893, 0.0
          %v1896 = vadd.f32 %v1894, 0.0
          %s1897 = sadd.s32 %s1890, 1
          %s1898 = sld [smem:[#allocation5 + %s1897]]
          %v1899 = vstv %s1898
          %v1900 = vmul.f32 %v1888, %v1899
          %v1901 = vmul.f32 %v1889, %v1899
          %1904 = vrot.lane.b32.xlu0 %v1900, 127
          %v1905 = vpop.permute.xlu0 %1904
          %1906 = vrot.lane.b32.xlu0 %v1901, 127
          %v1907 = vpop.permute.xlu0 %1906
          %v1910 = vadd.f32 %v1895, %v1905
          %v1911 = vadd.f32 %v1896, %v1907
          %s1912 = sadd.s32 %s1890, 2
          %s1913 = sld [smem:[#allocation5 + %s1912]]
          %v1914 = vstv %s1913
          %v1915 = vmul.f32 %v1888, %v1914
          %v1916 = vmul.f32 %v1889, %v1914
          %1919 = vrot.lane.b32.xlu0 %v1915, 126
          %v1920 = vpop.permute.xlu0 %1919
          %1921 = vrot.lane.b32.xlu0 %v1916, 126
          %v1922 = vpop.permute.xlu0 %1921
          %v1925 = vadd.f32 %v1910, %v1920
          %v1926 = vadd.f32 %v1911, %v1922
          %s1927 = sadd.s32 %s1890, 3
          %s1928 = sld [smem:[#allocation5 + %s1927]]
          %v1929 = vstv %s1928
          %v1930 = vmul.f32 %v1888, %v1929
          %v1931 = vmul.f32 %v1889, %v1929
          %1934 = vrot.lane.b32.xlu0 %v1930, 125
          %v1935 = vpop.permute.xlu0 %1934
          %1936 = vrot.lane.b32.xlu0 %v1931, 125
          %v1937 = vpop.permute.xlu0 %1936
          %v1940 = vadd.f32 %v1925, %v1935
          %v1941 = vadd.f32 %v1926, %v1937
          %s1942 = sadd.s32 %s1890, 4
          %s1943 = sld [smem:[#allocation5 + %s1942]]
          %v1944 = vstv %s1943
          %v1945 = vmul.f32 %v1888, %v1944
          %v1946 = vmul.f32 %v1889, %v1944
          %1949 = vrot.lane.b32.xlu0 %v1945, 124
          %v1950 = vpop.permute.xlu0 %1949
          %1951 = vrot.lane.b32.xlu0 %v1946, 124
          %v1952 = vpop.permute.xlu0 %1951
          %v1955 = vadd.f32 %v1940, %v1950
          %v1956 = vadd.f32 %v1941, %v1952
          %s1957 = sadd.s32 %s1890, 5
          %s1958 = sld [smem:[#allocation5 + %s1957]]
          %v1959 = vstv %s1958
          %v1960 = vmul.f32 %v1888, %v1959
          %v1961 = vmul.f32 %v1889, %v1959
          %1964 = vrot.lane.b32.xlu0 %v1960, 123
          %v1965 = vpop.permute.xlu0 %1964
          %1966 = vrot.lane.b32.xlu0 %v1961, 123
          %v1967 = vpop.permute.xlu0 %1966
          %v1970 = vadd.f32 %v1955, %v1965
          %v1971 = vadd.f32 %v1956, %v1967
          %s1972 = sadd.s32 %s1890, 6
          %s1973 = sld [smem:[#allocation5 + %s1972]]
          %v1974 = vstv %s1973
          %v1975 = vmul.f32 %v1888, %v1974
          %v1976 = vmul.f32 %v1889, %v1974
          %1979 = vrot.lane.b32.xlu0 %v1975, 122
          %v1980 = vpop.permute.xlu0 %1979
          %1981 = vrot.lane.b32.xlu0 %v1976, 122
          %v1982 = vpop.permute.xlu0 %1981
          %v1985 = vadd.f32 %v1970, %v1980
          %v1986 = vadd.f32 %v1971, %v1982
          %s1987 = sadd.s32 %s1890, 7
          %s1988 = sld [smem:[#allocation5 + %s1987]]
          %v1989 = vstv %s1988
          %v1990 = vmul.f32 %v1888, %v1989
          %v1991 = vmul.f32 %v1889, %v1989
          %1994 = vrot.lane.b32.xlu0 %v1990, 121
          %v1995 = vpop.permute.xlu0 %1994
          %1996 = vrot.lane.b32.xlu0 %v1991, 121
          %v1997 = vpop.permute.xlu0 %1996
          %v2000 = vadd.f32 %v1985, %v1995
          %v2001 = vadd.f32 %v1986, %v1997
          %s2002 = sadd.s32 %s1890, 8
          %s2003 = sld [smem:[#allocation5 + %s2002]]
          %v2004 = vstv %s2003
          %v2005 = vmul.f32 %v1888, %v2004
          %v2006 = vmul.f32 %v1889, %v2004
          %2009 = vrot.lane.b32.xlu0 %v2005, 120
          %v2010 = vpop.permute.xlu0 %2009
          %2011 = vrot.lane.b32.xlu0 %v2006, 120
          %v2012 = vpop.permute.xlu0 %2011
          %v2015 = vadd.f32 %v2000, %v2010
          %v2016 = vadd.f32 %v2001, %v2012
          %s2017 = sadd.s32 %s1890, 9
          %s2018 = sld [smem:[#allocation5 + %s2017]]
          %v2019 = vstv %s2018
          %v2020 = vmul.f32 %v1888, %v2019
          %v2021 = vmul.f32 %v1889, %v2019
          %2024 = vrot.lane.b32.xlu0 %v2020, 119
          %v2025 = vpop.permute.xlu0 %2024
          %2026 = vrot.lane.b32.xlu0 %v2021, 119
          %v2027 = vpop.permute.xlu0 %2026
          %v2030 = vadd.f32 %v2015, %v2025
          %v2031 = vadd.f32 %v2016, %v2027
          %s2032 = sadd.s32 %s1890, 10
          %s2033 = sld [smem:[#allocation5 + %s2032]]
          %v2034 = vstv %s2033
          %v2035 = vmul.f32 %v1888, %v2034
          %v2036 = vmul.f32 %v1889, %v2034
          %2039 = vrot.lane.b32.xlu0 %v2035, 118
          %v2040 = vpop.permute.xlu0 %2039
          %2041 = vrot.lane.b32.xlu0 %v2036, 118
          %v2042 = vpop.permute.xlu0 %2041
          %v2045 = vadd.f32 %v2030, %v2040
          %v2046 = vadd.f32 %v2031, %v2042
          %s2047 = sld [smem:[#allocation7 + %s1886]]
          %v2048 = vstv %s2047
          %v2049 = vadd.f32 %v2045, %v2048
          %v2050 = vadd.f32 %v2046, %v2048
          %s2051 = scalar_lea.vmem %s281, 32
          %2052 = vst.msk [vmem:[%s2051] sm:$0xff] %vm1715, %v2049
          %2053 = vst.msk [vmem:[%s2051 + $0x8] sm:$0xff] %vm1715, %v2050
          %s2054 = sadd.s32 %s284, 3
          %s2055 = scalar_lea.vmem [#allocation2], 96
          %v2056 = vld [vmem:[%s2055 + $0x8] sm:$0xff]
          %v2057 = vld [vmem:[%s2055 + $0x10] sm:$0xff]
          %s2058 = smul.u32 %s2054, 128
          %s2059 = sld [smem:[#allocation5 + %s2058]]
          %v2060 = vstv %s2059
          %v2061 = vmul.f32 %v2056, %v2060
          %v2062 = vmul.f32 %v2057, %v2060
          %v2063 = vadd.f32 %v2061, 0.0
          %v2064 = vadd.f32 %v2062, 0.0
          %s2065 = sadd.s32 %s2058, 1
          %s2066 = sld [smem:[#allocation5 + %s2065]]
          %v2067 = vstv %s2066
          %v2068 = vmul.f32 %v2056, %v2067
          %v2069 = vmul.f32 %v2057, %v2067
          %2072 = vrot.lane.b32.xlu0 %v2068, 127
          %v2073 = vpop.permute.xlu0 %2072
          %2074 = vrot.lane.b32.xlu0 %v2069, 127
          %v2075 = vpop.permute.xlu0 %2074
          %v2078 = vadd.f32 %v2063, %v2073
          %v2079 = vadd.f32 %v2064, %v2075
          %s2080 = sadd.s32 %s2058, 2
          %s2081 = sld [smem:[#allocation5 + %s2080]]
          %v2082 = vstv %s2081
          %v2083 = vmul.f32 %v2056, %v2082
          %v2084 = vmul.f32 %v2057, %v2082
          %2087 = vrot.lane.b32.xlu0 %v2083, 126
          %v2088 = vpop.permute.xlu0 %2087
          %2089 = vrot.lane.b32.xlu0 %v2084, 126
          %v2090 = vpop.permute.xlu0 %2089
          %v2093 = vadd.f32 %v2078, %v2088
          %v2094 = vadd.f32 %v2079, %v2090
          %s2095 = sadd.s32 %s2058, 3
          %s2096 = sld [smem:[#allocation5 + %s2095]]
          %v2097 = vstv %s2096
          %v2098 = vmul.f32 %v2056, %v2097
          %v2099 = vmul.f32 %v2057, %v2097
          %2102 = vrot.lane.b32.xlu0 %v2098, 125
          %v2103 = vpop.permute.xlu0 %2102
          %2104 = vrot.lane.b32.xlu0 %v2099, 125
          %v2105 = vpop.permute.xlu0 %2104
          %v2108 = vadd.f32 %v2093, %v2103
          %v2109 = vadd.f32 %v2094, %v2105
          %s2110 = sadd.s32 %s2058, 4
          %s2111 = sld [smem:[#allocation5 + %s2110]]
          %v2112 = vstv %s2111
          %v2113 = vmul.f32 %v2056, %v2112
          %v2114 = vmul.f32 %v2057, %v2112
          %2117 = vrot.lane.b32.xlu0 %v2113, 124
          %v2118 = vpop.permute.xlu0 %2117
          %2119 = vrot.lane.b32.xlu0 %v2114, 124
          %v2120 = vpop.permute.xlu0 %2119
          %v2123 = vadd.f32 %v2108, %v2118
          %v2124 = vadd.f32 %v2109, %v2120
          %s2125 = sadd.s32 %s2058, 5
          %s2126 = sld [smem:[#allocation5 + %s2125]]
          %v2127 = vstv %s2126
          %v2128 = vmul.f32 %v2056, %v2127
          %v2129 = vmul.f32 %v2057, %v2127
          %2132 = vrot.lane.b32.xlu0 %v2128, 123
          %v2133 = vpop.permute.xlu0 %2132
          %2134 = vrot.lane.b32.xlu0 %v2129, 123
          %v2135 = vpop.permute.xlu0 %2134
          %v2138 = vadd.f32 %v2123, %v2133
          %v2139 = vadd.f32 %v2124, %v2135
          %s2140 = sadd.s32 %s2058, 6
          %s2141 = sld [smem:[#allocation5 + %s2140]]
          %v2142 = vstv %s2141
          %v2143 = vmul.f32 %v2056, %v2142
          %v2144 = vmul.f32 %v2057, %v2142
          %2147 = vrot.lane.b32.xlu0 %v2143, 122
          %v2148 = vpop.permute.xlu0 %2147
          %2149 = vrot.lane.b32.xlu0 %v2144, 122
          %v2150 = vpop.permute.xlu0 %2149
          %v2153 = vadd.f32 %v2138, %v2148
          %v2154 = vadd.f32 %v2139, %v2150
          %s2155 = sadd.s32 %s2058, 7
          %s2156 = sld [smem:[#allocation5 + %s2155]]
          %v2157 = vstv %s2156
          %v2158 = vmul.f32 %v2056, %v2157
          %v2159 = vmul.f32 %v2057, %v2157
          %2162 = vrot.lane.b32.xlu0 %v2158, 121
          %v2163 = vpop.permute.xlu0 %2162
          %2164 = vrot.lane.b32.xlu0 %v2159, 121
          %v2165 = vpop.permute.xlu0 %2164
          %v2168 = vadd.f32 %v2153, %v2163
          %v2169 = vadd.f32 %v2154, %v2165
          %s2170 = sadd.s32 %s2058, 8
          %s2171 = sld [smem:[#allocation5 + %s2170]]
          %v2172 = vstv %s2171
          %v2173 = vmul.f32 %v2056, %v2172
          %v2174 = vmul.f32 %v2057, %v2172
          %2177 = vrot.lane.b32.xlu0 %v2173, 120
          %v2178 = vpop.permute.xlu0 %2177
          %2179 = vrot.lane.b32.xlu0 %v2174, 120
          %v2180 = vpop.permute.xlu0 %2179
          %v2183 = vadd.f32 %v2168, %v2178
          %v2184 = vadd.f32 %v2169, %v2180
          %s2185 = sadd.s32 %s2058, 9
          %s2186 = sld [smem:[#allocation5 + %s2185]]
          %v2187 = vstv %s2186
          %v2188 = vmul.f32 %v2056, %v2187
          %v2189 = vmul.f32 %v2057, %v2187
          %2192 = vrot.lane.b32.xlu0 %v2188, 119
          %v2193 = vpop.permute.xlu0 %2192
          %2194 = vrot.lane.b32.xlu0 %v2189, 119
          %v2195 = vpop.permute.xlu0 %2194
          %v2198 = vadd.f32 %v2183, %v2193
          %v2199 = vadd.f32 %v2184, %v2195
          %s2200 = sadd.s32 %s2058, 10
          %s2201 = sld [smem:[#allocation5 + %s2200]]
          %v2202 = vstv %s2201
          %v2203 = vmul.f32 %v2056, %v2202
          %v2204 = vmul.f32 %v2057, %v2202
          %2207 = vrot.lane.b32.xlu0 %v2203, 118
          %v2208 = vpop.permute.xlu0 %2207
          %2209 = vrot.lane.b32.xlu0 %v2204, 118
          %v2210 = vpop.permute.xlu0 %2209
          %v2213 = vadd.f32 %v2198, %v2208
          %v2214 = vadd.f32 %v2199, %v2210
          %s2215 = sld [smem:[#allocation7 + %s2054]]
          %v2216 = vstv %s2215
          %v2217 = vadd.f32 %v2213, %v2216
          %v2218 = vadd.f32 %v2214, %v2216
          %s2219 = scalar_lea.vmem %s281, 48
          %2220 = vst.msk [vmem:[%s2219] sm:$0xff] %vm1715, %v2217
          %2221 = vst.msk [vmem:[%s2219 + $0x8] sm:$0xff] %vm1715, %v2218
          %s2222 = sadd.s32 %s284, 4
          %s2223 = scalar_lea.vmem [#allocation2], 128
          %v2224 = vld [vmem:[%s2223 + $0x8] sm:$0xff]
          %v2225 = vld [vmem:[%s2223 + $0x10] sm:$0xff]
          %s2226 = smul.u32 %s2222, 128
          %s2227 = sld [smem:[#allocation5 + %s2226]]
          %v2228 = vstv %s2227
          %v2229 = vmul.f32 %v2224, %v2228
          %v2230 = vmul.f32 %v2225, %v2228
          %v2231 = vadd.f32 %v2229, 0.0
          %v2232 = vadd.f32 %v2230, 0.0
          %s2233 = sadd.s32 %s2226, 1
          %s2234 = sld [smem:[#allocation5 + %s2233]]
          %v2235 = vstv %s2234
          %v2236 = vmul.f32 %v2224, %v2235
          %v2237 = vmul.f32 %v2225, %v2235
          %2240 = vrot.lane.b32.xlu0 %v2236, 127
          %v2241 = vpop.permute.xlu0 %2240
          %2242 = vrot.lane.b32.xlu0 %v2237, 127
          %v2243 = vpop.permute.xlu0 %2242
          %v2246 = vadd.f32 %v2231, %v2241
          %v2247 = vadd.f32 %v2232, %v2243
          %s2248 = sadd.s32 %s2226, 2
          %s2249 = sld [smem:[#allocation5 + %s2248]]
          %v2250 = vstv %s2249
          %v2251 = vmul.f32 %v2224, %v2250
          %v2252 = vmul.f32 %v2225, %v2250
          %2255 = vrot.lane.b32.xlu0 %v2251, 126
          %v2256 = vpop.permute.xlu0 %2255
          %2257 = vrot.lane.b32.xlu0 %v2252, 126
          %v2258 = vpop.permute.xlu0 %2257
          %v2261 = vadd.f32 %v2246, %v2256
          %v2262 = vadd.f32 %v2247, %v2258
          %s2263 = sadd.s32 %s2226, 3
          %s2264 = sld [smem:[#allocation5 + %s2263]]
          %v2265 = vstv %s2264
          %v2266 = vmul.f32 %v2224, %v2265
          %v2267 = vmul.f32 %v2225, %v2265
          %2270 = vrot.lane.b32.xlu0 %v2266, 125
          %v2271 = vpop.permute.xlu0 %2270
          %2272 = vrot.lane.b32.xlu0 %v2267, 125
          %v2273 = vpop.permute.xlu0 %2272
          %v2276 = vadd.f32 %v2261, %v2271
          %v2277 = vadd.f32 %v2262, %v2273
          %s2278 = sadd.s32 %s2226, 4
          %s2279 = sld [smem:[#allocation5 + %s2278]]
          %v2280 = vstv %s2279
          %v2281 = vmul.f32 %v2224, %v2280
          %v2282 = vmul.f32 %v2225, %v2280
          %2285 = vrot.lane.b32.xlu0 %v2281, 124
          %v2286 = vpop.permute.xlu0 %2285
          %2287 = vrot.lane.b32.xlu0 %v2282, 124
          %v2288 = vpop.permute.xlu0 %2287
          %v2291 = vadd.f32 %v2276, %v2286
          %v2292 = vadd.f32 %v2277, %v2288
          %s2293 = sadd.s32 %s2226, 5
          %s2294 = sld [smem:[#allocation5 + %s2293]]
          %v2295 = vstv %s2294
          %v2296 = vmul.f32 %v2224, %v2295
          %v2297 = vmul.f32 %v2225, %v2295
          %2300 = vrot.lane.b32.xlu0 %v2296, 123
          %v2301 = vpop.permute.xlu0 %2300
          %2302 = vrot.lane.b32.xlu0 %v2297, 123
          %v2303 = vpop.permute.xlu0 %2302
          %v2306 = vadd.f32 %v2291, %v2301
          %v2307 = vadd.f32 %v2292, %v2303
          %s2308 = sadd.s32 %s2226, 6
          %s2309 = sld [smem:[#allocation5 + %s2308]]
          %v2310 = vstv %s2309
          %v2311 = vmul.f32 %v2224, %v2310
          %v2312 = vmul.f32 %v2225, %v2310
          %2315 = vrot.lane.b32.xlu0 %v2311, 122
          %v2316 = vpop.permute.xlu0 %2315
          %2317 = vrot.lane.b32.xlu0 %v2312, 122
          %v2318 = vpop.permute.xlu0 %2317
          %v2321 = vadd.f32 %v2306, %v2316
          %v2322 = vadd.f32 %v2307, %v2318
          %s2323 = sadd.s32 %s2226, 7
          %s2324 = sld [smem:[#allocation5 + %s2323]]
          %v2325 = vstv %s2324
          %v2326 = vmul.f32 %v2224, %v2325
          %v2327 = vmul.f32 %v2225, %v2325
          %2330 = vrot.lane.b32.xlu0 %v2326, 121
          %v2331 = vpop.permute.xlu0 %2330
          %2332 = vrot.lane.b32.xlu0 %v2327, 121
          %v2333 = vpop.permute.xlu0 %2332
          %v2336 = vadd.f32 %v2321, %v2331
          %v2337 = vadd.f32 %v2322, %v2333
          %s2338 = sadd.s32 %s2226, 8
          %s2339 = sld [smem:[#allocation5 + %s2338]]
          %v2340 = vstv %s2339
          %v2341 = vmul.f32 %v2224, %v2340
          %v2342 = vmul.f32 %v2225, %v2340
          %2345 = vrot.lane.b32.xlu0 %v2341, 120
          %v2346 = vpop.permute.xlu0 %2345
          %2347 = vrot.lane.b32.xlu0 %v2342, 120
          %v2348 = vpop.permute.xlu0 %2347
          %v2351 = vadd.f32 %v2336, %v2346
          %v2352 = vadd.f32 %v2337, %v2348
          %s2353 = sadd.s32 %s2226, 9
          %s2354 = sld [smem:[#allocation5 + %s2353]]
          %v2355 = vstv %s2354
          %v2356 = vmul.f32 %v2224, %v2355
          %v2357 = vmul.f32 %v2225, %v2355
          %2360 = vrot.lane.b32.xlu0 %v2356, 119
          %v2361 = vpop.permute.xlu0 %2360
          %2362 = vrot.lane.b32.xlu0 %v2357, 119
          %v2363 = vpop.permute.xlu0 %2362
          %v2366 = vadd.f32 %v2351, %v2361
          %v2367 = vadd.f32 %v2352, %v2363
          %s2368 = sadd.s32 %s2226, 10
          %s2369 = sld [smem:[#allocation5 + %s2368]]
          %v2370 = vstv %s2369
          %v2371 = vmul.f32 %v2224, %v2370
          %v2372 = vmul.f32 %v2225, %v2370
          %2375 = vrot.lane.b32.xlu0 %v2371, 118
          %v2376 = vpop.permute.xlu0 %2375
          %2377 = vrot.lane.b32.xlu0 %v2372, 118
          %v2378 = vpop.permute.xlu0 %2377
          %v2381 = vadd.f32 %v2366, %v2376
          %v2382 = vadd.f32 %v2367, %v2378
          %s2383 = sld [smem:[#allocation7 + %s2222]]
          %v2384 = vstv %s2383
          %v2385 = vadd.f32 %v2381, %v2384
          %v2386 = vadd.f32 %v2382, %v2384
          %s2387 = scalar_lea.vmem %s281, 64
          %2388 = vst.msk [vmem:[%s2387] sm:$0xff] %vm1715, %v2385
          %2389 = vst.msk [vmem:[%s2387 + $0x8] sm:$0xff] %vm1715, %v2386
          %s2390 = sadd.s32 %s284, 5
          %s2391 = scalar_lea.vmem [#allocation2], 160
          %v2392 = vld [vmem:[%s2391 + $0x8] sm:$0xff]
          %v2393 = vld [vmem:[%s2391 + $0x10] sm:$0xff]
          %s2394 = smul.u32 %s2390, 128
          %s2395 = sld [smem:[#allocation5 + %s2394]]
          %v2396 = vstv %s2395
          %v2397 = vmul.f32 %v2392, %v2396
          %v2398 = vmul.f32 %v2393, %v2396
          %v2399 = vadd.f32 %v2397, 0.0
          %v2400 = vadd.f32 %v2398, 0.0
          %s2401 = sadd.s32 %s2394, 1
          %s2402 = sld [smem:[#allocation5 + %s2401]]
          %v2403 = vstv %s2402
          %v2404 = vmul.f32 %v2392, %v2403
          %v2405 = vmul.f32 %v2393, %v2403
          %2408 = vrot.lane.b32.xlu0 %v2404, 127
          %v2409 = vpop.permute.xlu0 %2408
          %2410 = vrot.lane.b32.xlu0 %v2405, 127
          %v2411 = vpop.permute.xlu0 %2410
          %v2414 = vadd.f32 %v2399, %v2409
          %v2415 = vadd.f32 %v2400, %v2411
          %s2416 = sadd.s32 %s2394, 2
          %s2417 = sld [smem:[#allocation5 + %s2416]]
          %v2418 = vstv %s2417
          %v2419 = vmul.f32 %v2392, %v2418
          %v2420 = vmul.f32 %v2393, %v2418
          %2423 = vrot.lane.b32.xlu0 %v2419, 126
          %v2424 = vpop.permute.xlu0 %2423
          %2425 = vrot.lane.b32.xlu0 %v2420, 126
          %v2426 = vpop.permute.xlu0 %2425
          %v2429 = vadd.f32 %v2414, %v2424
          %v2430 = vadd.f32 %v2415, %v2426
          %s2431 = sadd.s32 %s2394, 3
          %s2432 = sld [smem:[#allocation5 + %s2431]]
          %v2433 = vstv %s2432
          %v2434 = vmul.f32 %v2392, %v2433
          %v2435 = vmul.f32 %v2393, %v2433
          %2438 = vrot.lane.b32.xlu0 %v2434, 125
          %v2439 = vpop.permute.xlu0 %2438
          %2440 = vrot.lane.b32.xlu0 %v2435, 125
          %v2441 = vpop.permute.xlu0 %2440
          %v2444 = vadd.f32 %v2429, %v2439
          %v2445 = vadd.f32 %v2430, %v2441
          %s2446 = sadd.s32 %s2394, 4
          %s2447 = sld [smem:[#allocation5 + %s2446]]
          %v2448 = vstv %s2447
          %v2449 = vmul.f32 %v2392, %v2448
          %v2450 = vmul.f32 %v2393, %v2448
          %2453 = vrot.lane.b32.xlu0 %v2449, 124
          %v2454 = vpop.permute.xlu0 %2453
          %2455 = vrot.lane.b32.xlu0 %v2450, 124
          %v2456 = vpop.permute.xlu0 %2455
          %v2459 = vadd.f32 %v2444, %v2454
          %v2460 = vadd.f32 %v2445, %v2456
          %s2461 = sadd.s32 %s2394, 5
          %s2462 = sld [smem:[#allocation5 + %s2461]]
          %v2463 = vstv %s2462
          %v2464 = vmul.f32 %v2392, %v2463
          %v2465 = vmul.f32 %v2393, %v2463
          %2468 = vrot.lane.b32.xlu0 %v2464, 123
          %v2469 = vpop.permute.xlu0 %2468
          %2470 = vrot.lane.b32.xlu0 %v2465, 123
          %v2471 = vpop.permute.xlu0 %2470
          %v2474 = vadd.f32 %v2459, %v2469
          %v2475 = vadd.f32 %v2460, %v2471
          %s2476 = sadd.s32 %s2394, 6
          %s2477 = sld [smem:[#allocation5 + %s2476]]
          %v2478 = vstv %s2477
          %v2479 = vmul.f32 %v2392, %v2478
          %v2480 = vmul.f32 %v2393, %v2478
          %2483 = vrot.lane.b32.xlu0 %v2479, 122
          %v2484 = vpop.permute.xlu0 %2483
          %2485 = vrot.lane.b32.xlu0 %v2480, 122
          %v2486 = vpop.permute.xlu0 %2485
          %v2489 = vadd.f32 %v2474, %v2484
          %v2490 = vadd.f32 %v2475, %v2486
          %s2491 = sadd.s32 %s2394, 7
          %s2492 = sld [smem:[#allocation5 + %s2491]]
          %v2493 = vstv %s2492
          %v2494 = vmul.f32 %v2392, %v2493
          %v2495 = vmul.f32 %v2393, %v2493
          %2498 = vrot.lane.b32.xlu0 %v2494, 121
          %v2499 = vpop.permute.xlu0 %2498
          %2500 = vrot.lane.b32.xlu0 %v2495, 121
          %v2501 = vpop.permute.xlu0 %2500
          %v2504 = vadd.f32 %v2489, %v2499
          %v2505 = vadd.f32 %v2490, %v2501
          %s2506 = sadd.s32 %s2394, 8
          %s2507 = sld [smem:[#allocation5 + %s2506]]
          %v2508 = vstv %s2507
          %v2509 = vmul.f32 %v2392, %v2508
          %v2510 = vmul.f32 %v2393, %v2508
          %2513 = vrot.lane.b32.xlu0 %v2509, 120
          %v2514 = vpop.permute.xlu0 %2513
          %2515 = vrot.lane.b32.xlu0 %v2510, 120
          %v2516 = vpop.permute.xlu0 %2515
          %v2519 = vadd.f32 %v2504, %v2514
          %v2520 = vadd.f32 %v2505, %v2516
          %s2521 = sadd.s32 %s2394, 9
          %s2522 = sld [smem:[#allocation5 + %s2521]]
          %v2523 = vstv %s2522
          %v2524 = vmul.f32 %v2392, %v2523
          %v2525 = vmul.f32 %v2393, %v2523
          %2528 = vrot.lane.b32.xlu0 %v2524, 119
          %v2529 = vpop.permute.xlu0 %2528
          %2530 = vrot.lane.b32.xlu0 %v2525, 119
          %v2531 = vpop.permute.xlu0 %2530
          %v2534 = vadd.f32 %v2519, %v2529
          %v2535 = vadd.f32 %v2520, %v2531
          %s2536 = sadd.s32 %s2394, 10
          %s2537 = sld [smem:[#allocation5 + %s2536]]
          %v2538 = vstv %s2537
          %v2539 = vmul.f32 %v2392, %v2538
          %v2540 = vmul.f32 %v2393, %v2538
          %2543 = vrot.lane.b32.xlu0 %v2539, 118
          %v2544 = vpop.permute.xlu0 %2543
          %2545 = vrot.lane.b32.xlu0 %v2540, 118
          %v2546 = vpop.permute.xlu0 %2545
          %v2549 = vadd.f32 %v2534, %v2544
          %v2550 = vadd.f32 %v2535, %v2546
          %s2551 = sld [smem:[#allocation7 + %s2390]]
          %v2552 = vstv %s2551
          %v2553 = vadd.f32 %v2549, %v2552
          %v2554 = vadd.f32 %v2550, %v2552
          %s2555 = scalar_lea.vmem %s281, 80
          %2556 = vst.msk [vmem:[%s2555] sm:$0xff] %vm1715, %v2553
          %2557 = vst.msk [vmem:[%s2555 + $0x8] sm:$0xff] %vm1715, %v2554
          %s2558 = sadd.s32 %s284, 6
          %s2559 = scalar_lea.vmem [#allocation2], 192
          %v2560 = vld [vmem:[%s2559 + $0x8] sm:$0xff]
          %v2561 = vld [vmem:[%s2559 + $0x10] sm:$0xff]
          %s2562 = smul.u32 %s2558, 128
          %s2563 = sld [smem:[#allocation5 + %s2562]]
          %v2564 = vstv %s2563
          %v2565 = vmul.f32 %v2560, %v2564
          %v2566 = vmul.f32 %v2561, %v2564
          %v2567 = vadd.f32 %v2565, 0.0
          %v2568 = vadd.f32 %v2566, 0.0
          %s2569 = sadd.s32 %s2562, 1
          %s2570 = sld [smem:[#allocation5 + %s2569]]
          %v2571 = vstv %s2570
          %v2572 = vmul.f32 %v2560, %v2571
          %v2573 = vmul.f32 %v2561, %v2571
          %2576 = vrot.lane.b32.xlu0 %v2572, 127
          %v2577 = vpop.permute.xlu0 %2576
          %2578 = vrot.lane.b32.xlu0 %v2573, 127
          %v2579 = vpop.permute.xlu0 %2578
          %v2582 = vadd.f32 %v2567, %v2577
          %v2583 = vadd.f32 %v2568, %v2579
          %s2584 = sadd.s32 %s2562, 2
          %s2585 = sld [smem:[#allocation5 + %s2584]]
          %v2586 = vstv %s2585
          %v2587 = vmul.f32 %v2560, %v2586
          %v2588 = vmul.f32 %v2561, %v2586
          %2591 = vrot.lane.b32.xlu0 %v2587, 126
          %v2592 = vpop.permute.xlu0 %2591
          %2593 = vrot.lane.b32.xlu0 %v2588, 126
          %v2594 = vpop.permute.xlu0 %2593
          %v2597 = vadd.f32 %v2582, %v2592
          %v2598 = vadd.f32 %v2583, %v2594
          %s2599 = sadd.s32 %s2562, 3
          %s2600 = sld [smem:[#allocation5 + %s2599]]
          %v2601 = vstv %s2600
          %v2602 = vmul.f32 %v2560, %v2601
          %v2603 = vmul.f32 %v2561, %v2601
          %2606 = vrot.lane.b32.xlu0 %v2602, 125
          %v2607 = vpop.permute.xlu0 %2606
          %2608 = vrot.lane.b32.xlu0 %v2603, 125
          %v2609 = vpop.permute.xlu0 %2608
          %v2612 = vadd.f32 %v2597, %v2607
          %v2613 = vadd.f32 %v2598, %v2609
          %s2614 = sadd.s32 %s2562, 4
          %s2615 = sld [smem:[#allocation5 + %s2614]]
          %v2616 = vstv %s2615
          %v2617 = vmul.f32 %v2560, %v2616
          %v2618 = vmul.f32 %v2561, %v2616
          %2621 = vrot.lane.b32.xlu0 %v2617, 124
          %v2622 = vpop.permute.xlu0 %2621
          %2623 = vrot.lane.b32.xlu0 %v2618, 124
          %v2624 = vpop.permute.xlu0 %2623
          %v2627 = vadd.f32 %v2612, %v2622
          %v2628 = vadd.f32 %v2613, %v2624
          %s2629 = sadd.s32 %s2562, 5
          %s2630 = sld [smem:[#allocation5 + %s2629]]
          %v2631 = vstv %s2630
          %v2632 = vmul.f32 %v2560, %v2631
          %v2633 = vmul.f32 %v2561, %v2631
          %2636 = vrot.lane.b32.xlu0 %v2632, 123
          %v2637 = vpop.permute.xlu0 %2636
          %2638 = vrot.lane.b32.xlu0 %v2633, 123
          %v2639 = vpop.permute.xlu0 %2638
          %v2642 = vadd.f32 %v2627, %v2637
          %v2643 = vadd.f32 %v2628, %v2639
          %s2644 = sadd.s32 %s2562, 6
          %s2645 = sld [smem:[#allocation5 + %s2644]]
          %v2646 = vstv %s2645
          %v2647 = vmul.f32 %v2560, %v2646
          %v2648 = vmul.f32 %v2561, %v2646
          %2651 = vrot.lane.b32.xlu0 %v2647, 122
          %v2652 = vpop.permute.xlu0 %2651
          %2653 = vrot.lane.b32.xlu0 %v2648, 122
          %v2654 = vpop.permute.xlu0 %2653
          %v2657 = vadd.f32 %v2642, %v2652
          %v2658 = vadd.f32 %v2643, %v2654
          %s2659 = sadd.s32 %s2562, 7
          %s2660 = sld [smem:[#allocation5 + %s2659]]
          %v2661 = vstv %s2660
          %v2662 = vmul.f32 %v2560, %v2661
          %v2663 = vmul.f32 %v2561, %v2661
          %2666 = vrot.lane.b32.xlu0 %v2662, 121
          %v2667 = vpop.permute.xlu0 %2666
          %2668 = vrot.lane.b32.xlu0 %v2663, 121
          %v2669 = vpop.permute.xlu0 %2668
          %v2672 = vadd.f32 %v2657, %v2667
          %v2673 = vadd.f32 %v2658, %v2669
          %s2674 = sadd.s32 %s2562, 8
          %s2675 = sld [smem:[#allocation5 + %s2674]]
          %v2676 = vstv %s2675
          %v2677 = vmul.f32 %v2560, %v2676
          %v2678 = vmul.f32 %v2561, %v2676
          %2681 = vrot.lane.b32.xlu0 %v2677, 120
          %v2682 = vpop.permute.xlu0 %2681
          %2683 = vrot.lane.b32.xlu0 %v2678, 120
          %v2684 = vpop.permute.xlu0 %2683
          %v2687 = vadd.f32 %v2672, %v2682
          %v2688 = vadd.f32 %v2673, %v2684
          %s2689 = sadd.s32 %s2562, 9
          %s2690 = sld [smem:[#allocation5 + %s2689]]
          %v2691 = vstv %s2690
          %v2692 = vmul.f32 %v2560, %v2691
          %v2693 = vmul.f32 %v2561, %v2691
          %2696 = vrot.lane.b32.xlu0 %v2692, 119
          %v2697 = vpop.permute.xlu0 %2696
          %2698 = vrot.lane.b32.xlu0 %v2693, 119
          %v2699 = vpop.permute.xlu0 %2698
          %v2702 = vadd.f32 %v2687, %v2697
          %v2703 = vadd.f32 %v2688, %v2699
          %s2704 = sadd.s32 %s2562, 10
          %s2705 = sld [smem:[#allocation5 + %s2704]]
          %v2706 = vstv %s2705
          %v2707 = vmul.f32 %v2560, %v2706
          %v2708 = vmul.f32 %v2561, %v2706
          %2711 = vrot.lane.b32.xlu0 %v2707, 118
          %v2712 = vpop.permute.xlu0 %2711
          %2713 = vrot.lane.b32.xlu0 %v2708, 118
          %v2714 = vpop.permute.xlu0 %2713
          %v2717 = vadd.f32 %v2702, %v2712
          %v2718 = vadd.f32 %v2703, %v2714
          %s2719 = sld [smem:[#allocation7 + %s2558]]
          %v2720 = vstv %s2719
          %v2721 = vadd.f32 %v2717, %v2720
          %v2722 = vadd.f32 %v2718, %v2720
          %s2723 = scalar_lea.vmem %s281, 96
          %2724 = vst.msk [vmem:[%s2723] sm:$0xff] %vm1715, %v2721
          %2725 = vst.msk [vmem:[%s2723 + $0x8] sm:$0xff] %vm1715, %v2722
          %s2726 = sadd.s32 %s284, 7
          %s2727 = scalar_lea.vmem [#allocation2], 224
          %v2728 = vld [vmem:[%s2727 + $0x8] sm:$0xff]
          %v2729 = vld [vmem:[%s2727 + $0x10] sm:$0xff]
          %s2730 = smul.u32 %s2726, 128
          %s2731 = sld [smem:[#allocation5 + %s2730]]
          %v2732 = vstv %s2731
          %v2733 = vmul.f32 %v2728, %v2732
          %v2734 = vmul.f32 %v2729, %v2732
          %v2735 = vadd.f32 %v2733, 0.0
          %v2736 = vadd.f32 %v2734, 0.0
          %s2737 = sadd.s32 %s2730, 1
          %s2738 = sld [smem:[#allocation5 + %s2737]]
          %v2739 = vstv %s2738
          %v2740 = vmul.f32 %v2728, %v2739
          %v2741 = vmul.f32 %v2729, %v2739
          %2744 = vrot.lane.b32.xlu0 %v2740, 127
          %v2745 = vpop.permute.xlu0 %2744
          %2746 = vrot.lane.b32.xlu0 %v2741, 127
          %v2747 = vpop.permute.xlu0 %2746
          %v2750 = vadd.f32 %v2735, %v2745
          %v2751 = vadd.f32 %v2736, %v2747
          %s2752 = sadd.s32 %s2730, 2
          %s2753 = sld [smem:[#allocation5 + %s2752]]
          %v2754 = vstv %s2753
          %v2755 = vmul.f32 %v2728, %v2754
          %v2756 = vmul.f32 %v2729, %v2754
          %2759 = vrot.lane.b32.xlu0 %v2755, 126
          %v2760 = vpop.permute.xlu0 %2759
          %2761 = vrot.lane.b32.xlu0 %v2756, 126
          %v2762 = vpop.permute.xlu0 %2761
          %v2765 = vadd.f32 %v2750, %v2760
          %v2766 = vadd.f32 %v2751, %v2762
          %s2767 = sadd.s32 %s2730, 3
          %s2768 = sld [smem:[#allocation5 + %s2767]]
          %v2769 = vstv %s2768
          %v2770 = vmul.f32 %v2728, %v2769
          %v2771 = vmul.f32 %v2729, %v2769
          %2774 = vrot.lane.b32.xlu0 %v2770, 125
          %v2775 = vpop.permute.xlu0 %2774
          %2776 = vrot.lane.b32.xlu0 %v2771, 125
          %v2777 = vpop.permute.xlu0 %2776
          %v2780 = vadd.f32 %v2765, %v2775
          %v2781 = vadd.f32 %v2766, %v2777
          %s2782 = sadd.s32 %s2730, 4
          %s2783 = sld [smem:[#allocation5 + %s2782]]
          %v2784 = vstv %s2783
          %v2785 = vmul.f32 %v2728, %v2784
          %v2786 = vmul.f32 %v2729, %v2784
          %2789 = vrot.lane.b32.xlu0 %v2785, 124
          %v2790 = vpop.permute.xlu0 %2789
          %2791 = vrot.lane.b32.xlu0 %v2786, 124
          %v2792 = vpop.permute.xlu0 %2791
          %v2795 = vadd.f32 %v2780, %v2790
          %v2796 = vadd.f32 %v2781, %v2792
          %s2797 = sadd.s32 %s2730, 5
          %s2798 = sld [smem:[#allocation5 + %s2797]]
          %v2799 = vstv %s2798
          %v2800 = vmul.f32 %v2728, %v2799
          %v2801 = vmul.f32 %v2729, %v2799
          %2804 = vrot.lane.b32.xlu0 %v2800, 123
          %v2805 = vpop.permute.xlu0 %2804
          %2806 = vrot.lane.b32.xlu0 %v2801, 123
          %v2807 = vpop.permute.xlu0 %2806
          %v2810 = vadd.f32 %v2795, %v2805
          %v2811 = vadd.f32 %v2796, %v2807
          %s2812 = sadd.s32 %s2730, 6
          %s2813 = sld [smem:[#allocation5 + %s2812]]
          %v2814 = vstv %s2813
          %v2815 = vmul.f32 %v2728, %v2814
          %v2816 = vmul.f32 %v2729, %v2814
          %2819 = vrot.lane.b32.xlu0 %v2815, 122
          %v2820 = vpop.permute.xlu0 %2819
          %2821 = vrot.lane.b32.xlu0 %v2816, 122
          %v2822 = vpop.permute.xlu0 %2821
          %v2825 = vadd.f32 %v2810, %v2820
          %v2826 = vadd.f32 %v2811, %v2822
          %s2827 = sadd.s32 %s2730, 7
          %s2828 = sld [smem:[#allocation5 + %s2827]]
          %v2829 = vstv %s2828
          %v2830 = vmul.f32 %v2728, %v2829
          %v2831 = vmul.f32 %v2729, %v2829
          %2834 = vrot.lane.b32.xlu0 %v2830, 121
          %v2835 = vpop.permute.xlu0 %2834
          %2836 = vrot.lane.b32.xlu0 %v2831, 121
          %v2837 = vpop.permute.xlu0 %2836
          %v2840 = vadd.f32 %v2825, %v2835
          %v2841 = vadd.f32 %v2826, %v2837
          %s2842 = sadd.s32 %s2730, 8
          %s2843 = sld [smem:[#allocation5 + %s2842]]
          %v2844 = vstv %s2843
          %v2845 = vmul.f32 %v2728, %v2844
          %v2846 = vmul.f32 %v2729, %v2844
          %2849 = vrot.lane.b32.xlu0 %v2845, 120
          %v2850 = vpop.permute.xlu0 %2849
          %2851 = vrot.lane.b32.xlu0 %v2846, 120
          %v2852 = vpop.permute.xlu0 %2851
          %v2855 = vadd.f32 %v2840, %v2850
          %v2856 = vadd.f32 %v2841, %v2852
          %s2857 = sadd.s32 %s2730, 9
          %s2858 = sld [smem:[#allocation5 + %s2857]]
          %v2859 = vstv %s2858
          %v2860 = vmul.f32 %v2728, %v2859
          %v2861 = vmul.f32 %v2729, %v2859
          %2864 = vrot.lane.b32.xlu0 %v2860, 119
          %v2865 = vpop.permute.xlu0 %2864
          %2866 = vrot.lane.b32.xlu0 %v2861, 119
          %v2867 = vpop.permute.xlu0 %2866
          %v2870 = vadd.f32 %v2855, %v2865
          %v2871 = vadd.f32 %v2856, %v2867
          %s2872 = sadd.s32 %s2730, 10
          %s2873 = sld [smem:[#allocation5 + %s2872]]
          %v2874 = vstv %s2873
          %v2875 = vmul.f32 %v2728, %v2874
          %v2876 = vmul.f32 %v2729, %v2874
          %2879 = vrot.lane.b32.xlu0 %v2875, 118
          %v2880 = vpop.permute.xlu0 %2879
          %2881 = vrot.lane.b32.xlu0 %v2876, 118
          %v2882 = vpop.permute.xlu0 %2881
          %v2885 = vadd.f32 %v2870, %v2880
          %v2886 = vadd.f32 %v2871, %v2882
          %s2887 = sld [smem:[#allocation7 + %s2726]]
          %v2888 = vstv %s2887
          %v2889 = vadd.f32 %v2885, %v2888
          %v2890 = vadd.f32 %v2886, %v2888
          %s2891 = scalar_lea.vmem %s281, 112
          %2892 = vst.msk [vmem:[%s2891] sm:$0xff] %vm1715, %v2889
          %2893 = vst.msk [vmem:[%s2891 + $0x8] sm:$0xff] %vm1715, %v2890
        $region64: #{inception_dw_conv2d.1} parent=35 // pred_fallthru
          _
        %p2894 = scmp.eq.s32.totalorder %s283, 3
        // Predicated region
        $region65: #{inception_dw_conv2d.1} parent=35 // pred_check
          %p2895 = pneg %p2894
        $region66: #{inception_dw_conv2d.1} parent=35 // pred_check_branch
          %2897 = sbr.rel (%p2895) target = $region68
        $region67: #{inception_dw_conv2d.1} parent=35 // pred_region
          %v2898 = vld [vmem:[#allocation2 + $0x3] sm:$0xff]
          %v2899 = vld [vmem:[#allocation2 + $0xb] sm:$0xff]
          %s2900 = smul.u32 %s284, 128
          %s2901 = sld [smem:[#allocation5 + %s2900]]
          %v2902 = vstv %s2901
          %v2903 = vmul.f32 %v2898, %v2902
          %v2904 = vmul.f32 %v2899, %v2902
          %v2905 = vadd.f32 %v2903, 0.0
          %v2906 = vadd.f32 %v2904, 0.0
          %v2907 = vld [vmem:[#allocation2 + $0x4] sm:$0xff]
          %v2908 = vld [vmem:[#allocation2 + $0xc] sm:$0xff]
          %s2909 = sadd.s32 %s2900, 1
          %s2910 = sld [smem:[#allocation5 + %s2909]]
          %v2911 = vstv %s2910
          %v2912 = vmul.f32 %v2907, %v2911
          %v2913 = vmul.f32 %v2908, %v2911
          %v2914 = vadd.f32 %v2905, %v2912
          %v2915 = vadd.f32 %v2906, %v2913
          %v2916 = vld [vmem:[#allocation2 + $0x5] sm:$0xff]
          %v2917 = vld [vmem:[#allocation2 + $0xd] sm:$0xff]
          %s2918 = sadd.s32 %s2900, 2
          %s2919 = sld [smem:[#allocation5 + %s2918]]
          %v2920 = vstv %s2919
          %v2921 = vmul.f32 %v2916, %v2920
          %v2922 = vmul.f32 %v2917, %v2920
          %v2923 = vadd.f32 %v2914, %v2921
          %v2924 = vadd.f32 %v2915, %v2922
          %v2925 = vld [vmem:[#allocation2 + $0x6] sm:$0xff]
          %v2926 = vld [vmem:[#allocation2 + $0xe] sm:$0xff]
          %s2927 = sadd.s32 %s2900, 3
          %s2928 = sld [smem:[#allocation5 + %s2927]]
          %v2929 = vstv %s2928
          %v2930 = vmul.f32 %v2925, %v2929
          %v2931 = vmul.f32 %v2926, %v2929
          %v2932 = vadd.f32 %v2923, %v2930
          %v2933 = vadd.f32 %v2924, %v2931
          %v2934 = vld [vmem:[#allocation2 + $0x7] sm:$0xff]
          %v2935 = vld [vmem:[#allocation2 + $0xf] sm:$0xff]
          %s2936 = sadd.s32 %s2900, 4
          %s2937 = sld [smem:[#allocation5 + %s2936]]
          %v2938 = vstv %s2937
          %v2939 = vmul.f32 %v2934, %v2938
          %v2940 = vmul.f32 %v2935, %v2938
          %v2941 = vadd.f32 %v2932, %v2939
          %v2942 = vadd.f32 %v2933, %v2940
          %v2943 = vld [vmem:[#allocation2 + $0x8] sm:$0xff]
          %v2944 = vld [vmem:[#allocation2 + $0x10] sm:$0xff]
          %s2945 = sadd.s32 %s2900, 5
          %s2946 = sld [smem:[#allocation5 + %s2945]]
          %v2947 = vstv %s2946
          %v2948 = vmul.f32 %v2943, %v2947
          %v2949 = vmul.f32 %v2944, %v2947
          %v2950 = vadd.f32 %v2941, %v2948
          %v2951 = vadd.f32 %v2942, %v2949
          %v2952 = vld [vmem:[#allocation2 + $0x9] sm:$0xff]
          %v2953 = vld [vmem:[#allocation2 + $0x11] sm:$0xff]
          %s2954 = sadd.s32 %s2900, 6
          %s2955 = sld [smem:[#allocation5 + %s2954]]
          %v2956 = vstv %s2955
          %v2957 = vmul.f32 %v2952, %v2956
          %v2958 = vmul.f32 %v2953, %v2956
          %v2959 = vadd.f32 %v2950, %v2957
          %v2960 = vadd.f32 %v2951, %v2958
          %v2961 = vld [vmem:[#allocation2 + $0xa] sm:$0xff]
          %v2962 = vld [vmem:[#allocation2 + $0x12] sm:$0xff]
          %s2963 = sadd.s32 %s2900, 7
          %s2964 = sld [smem:[#allocation5 + %s2963]]
          %v2965 = vstv %s2964
          %v2966 = vmul.f32 %v2961, %v2965
          %v2967 = vmul.f32 %v2962, %v2965
          %v2968 = vadd.f32 %v2959, %v2966
          %v2969 = vadd.f32 %v2960, %v2967
          %v2970 = vld [vmem:[#allocation2 + $0xb] sm:$0xff]
          %v2971 = vld [vmem:[#allocation2 + $0x13] sm:$0xff]
          %s2972 = sadd.s32 %s2900, 8
          %s2973 = sld [smem:[#allocation5 + %s2972]]
          %v2974 = vstv %s2973
          %v2975 = vmul.f32 %v2970, %v2974
          %v2976 = vmul.f32 %v2971, %v2974
          %v2977 = vadd.f32 %v2968, %v2975
          %v2978 = vadd.f32 %v2969, %v2976
          %v2979 = vld [vmem:[#allocation2 + $0xc] sm:$0xff]
          %v2980 = vld [vmem:[#allocation2 + $0x14] sm:$0xff]
          %s2981 = sadd.s32 %s2900, 9
          %s2982 = sld [smem:[#allocation5 + %s2981]]
          %v2983 = vstv %s2982
          %v2984 = vmul.f32 %v2979, %v2983
          %v2985 = vmul.f32 %v2980, %v2983
          %v2986 = vadd.f32 %v2977, %v2984
          %v2987 = vadd.f32 %v2978, %v2985
          %v2988 = vld [vmem:[#allocation2 + $0xd] sm:$0xff]
          %v2989 = vld [vmem:[#allocation2 + $0x15] sm:$0xff]
          %s2990 = sadd.s32 %s2900, 10
          %s2991 = sld [smem:[#allocation5 + %s2990]]
          %v2992 = vstv %s2991
          %v2993 = vmul.f32 %v2988, %v2992
          %v2994 = vmul.f32 %v2989, %v2992
          %v2995 = vadd.f32 %v2986, %v2993
          %v2996 = vadd.f32 %v2987, %v2994
          %s2997 = sld [smem:[#allocation7 + %s284]]
          %v2998 = vstv %s2997
          %v2999 = vadd.f32 %v2995, %v2998
          %v3000 = vadd.f32 %v2996, %v2998
          %3003 = vrot.lane.b32.xlu0 %v2999, 123
          %v3004 = vpop.permute.xlu0 %3003
          %3005 = vrot.lane.b32.xlu0 %v3000, 123
          %v3006 = vpop.permute.xlu0 %3005
          %vm3009 = vcmask 130048
          %3010 = vst.msk [vmem:[%s281] sm:$0xff] %vm3009, %v3004
          %3011 = vst.msk [vmem:[%s281 + $0x8] sm:$0xff] %vm3009, %v3006
          %s3012 = sadd.s32 %s284, 1
          %s3013 = scalar_lea.vmem [#allocation2], 32
          %v3014 = vld [vmem:[%s3013 + $0x3] sm:$0xff]
          %v3015 = vld [vmem:[%s3013 + $0xb] sm:$0xff]
          %s3016 = smul.u32 %s3012, 128
          %s3017 = sld [smem:[#allocation5 + %s3016]]
          %v3018 = vstv %s3017
          %v3019 = vmul.f32 %v3014, %v3018
          %v3020 = vmul.f32 %v3015, %v3018
          %v3021 = vadd.f32 %v3019, 0.0
          %v3022 = vadd.f32 %v3020, 0.0
          %v3023 = vld [vmem:[%s3013 + $0x4] sm:$0xff]
          %v3024 = vld [vmem:[%s3013 + $0xc] sm:$0xff]
          %s3025 = sadd.s32 %s3016, 1
          %s3026 = sld [smem:[#allocation5 + %s3025]]
          %v3027 = vstv %s3026
          %v3028 = vmul.f32 %v3023, %v3027
          %v3029 = vmul.f32 %v3024, %v3027
          %v3030 = vadd.f32 %v3021, %v3028
          %v3031 = vadd.f32 %v3022, %v3029
          %v3032 = vld [vmem:[%s3013 + $0x5] sm:$0xff]
          %v3033 = vld [vmem:[%s3013 + $0xd] sm:$0xff]
          %s3034 = sadd.s32 %s3016, 2
          %s3035 = sld [smem:[#allocation5 + %s3034]]
          %v3036 = vstv %s3035
          %v3037 = vmul.f32 %v3032, %v3036
          %v3038 = vmul.f32 %v3033, %v3036
          %v3039 = vadd.f32 %v3030, %v3037
          %v3040 = vadd.f32 %v3031, %v3038
          %v3041 = vld [vmem:[%s3013 + $0x6] sm:$0xff]
          %v3042 = vld [vmem:[%s3013 + $0xe] sm:$0xff]
          %s3043 = sadd.s32 %s3016, 3
          %s3044 = sld [smem:[#allocation5 + %s3043]]
          %v3045 = vstv %s3044
          %v3046 = vmul.f32 %v3041, %v3045
          %v3047 = vmul.f32 %v3042, %v3045
          %v3048 = vadd.f32 %v3039, %v3046
          %v3049 = vadd.f32 %v3040, %v3047
          %v3050 = vld [vmem:[%s3013 + $0x7] sm:$0xff]
          %v3051 = vld [vmem:[%s3013 + $0xf] sm:$0xff]
          %s3052 = sadd.s32 %s3016, 4
          %s3053 = sld [smem:[#allocation5 + %s3052]]
          %v3054 = vstv %s3053
          %v3055 = vmul.f32 %v3050, %v3054
          %v3056 = vmul.f32 %v3051, %v3054
          %v3057 = vadd.f32 %v3048, %v3055
          %v3058 = vadd.f32 %v3049, %v3056
          %v3059 = vld [vmem:[%s3013 + $0x8] sm:$0xff]
          %v3060 = vld [vmem:[%s3013 + $0x10] sm:$0xff]
          %s3061 = sadd.s32 %s3016, 5
          %s3062 = sld [smem:[#allocation5 + %s3061]]
          %v3063 = vstv %s3062
          %v3064 = vmul.f32 %v3059, %v3063
          %v3065 = vmul.f32 %v3060, %v3063
          %v3066 = vadd.f32 %v3057, %v3064
          %v3067 = vadd.f32 %v3058, %v3065
          %v3068 = vld [vmem:[%s3013 + $0x9] sm:$0xff]
          %v3069 = vld [vmem:[%s3013 + $0x11] sm:$0xff]
          %s3070 = sadd.s32 %s3016, 6
          %s3071 = sld [smem:[#allocation5 + %s3070]]
          %v3072 = vstv %s3071
          %v3073 = vmul.f32 %v3068, %v3072
          %v3074 = vmul.f32 %v3069, %v3072
          %v3075 = vadd.f32 %v3066, %v3073
          %v3076 = vadd.f32 %v3067, %v3074
          %v3077 = vld [vmem:[%s3013 + $0xa] sm:$0xff]
          %v3078 = vld [vmem:[%s3013 + $0x12] sm:$0xff]
          %s3079 = sadd.s32 %s3016, 7
          %s3080 = sld [smem:[#allocation5 + %s3079]]
          %v3081 = vstv %s3080
          %v3082 = vmul.f32 %v3077, %v3081
          %v3083 = vmul.f32 %v3078, %v3081
          %v3084 = vadd.f32 %v3075, %v3082
          %v3085 = vadd.f32 %v3076, %v3083
          %v3086 = vld [vmem:[%s3013 + $0xb] sm:$0xff]
          %v3087 = vld [vmem:[%s3013 + $0x13] sm:$0xff]
          %s3088 = sadd.s32 %s3016, 8
          %s3089 = sld [smem:[#allocation5 + %s3088]]
          %v3090 = vstv %s3089
          %v3091 = vmul.f32 %v3086, %v3090
          %v3092 = vmul.f32 %v3087, %v3090
          %v3093 = vadd.f32 %v3084, %v3091
          %v3094 = vadd.f32 %v3085, %v3092
          %v3095 = vld [vmem:[%s3013 + $0xc] sm:$0xff]
          %v3096 = vld [vmem:[%s3013 + $0x14] sm:$0xff]
          %s3097 = sadd.s32 %s3016, 9
          %s3098 = sld [smem:[#allocation5 + %s3097]]
          %v3099 = vstv %s3098
          %v3100 = vmul.f32 %v3095, %v3099
          %v3101 = vmul.f32 %v3096, %v3099
          %v3102 = vadd.f32 %v3093, %v3100
          %v3103 = vadd.f32 %v3094, %v3101
          %v3104 = vld [vmem:[%s3013 + $0xd] sm:$0xff]
          %v3105 = vld [vmem:[%s3013 + $0x15] sm:$0xff]
          %s3106 = sadd.s32 %s3016, 10
          %s3107 = sld [smem:[#allocation5 + %s3106]]
          %v3108 = vstv %s3107
          %v3109 = vmul.f32 %v3104, %v3108
          %v3110 = vmul.f32 %v3105, %v3108
          %v3111 = vadd.f32 %v3102, %v3109
          %v3112 = vadd.f32 %v3103, %v3110
          %s3113 = sld [smem:[#allocation7 + %s3012]]
          %v3114 = vstv %s3113
          %v3115 = vadd.f32 %v3111, %v3114
          %v3116 = vadd.f32 %v3112, %v3114
          %3119 = vrot.lane.b32.xlu0 %v3115, 123
          %v3120 = vpop.permute.xlu0 %3119
          %3121 = vrot.lane.b32.xlu0 %v3116, 123
          %v3122 = vpop.permute.xlu0 %3121
          %s3125 = scalar_lea.vmem %s281, 16
          %3126 = vst.msk [vmem:[%s3125] sm:$0xff] %vm3009, %v3120
          %3127 = vst.msk [vmem:[%s3125 + $0x8] sm:$0xff] %vm3009, %v3122
          %s3128 = sadd.s32 %s284, 2
          %s3129 = scalar_lea.vmem [#allocation2], 64
          %v3130 = vld [vmem:[%s3129 + $0x3] sm:$0xff]
          %v3131 = vld [vmem:[%s3129 + $0xb] sm:$0xff]
          %s3132 = smul.u32 %s3128, 128
          %s3133 = sld [smem:[#allocation5 + %s3132]]
          %v3134 = vstv %s3133
          %v3135 = vmul.f32 %v3130, %v3134
          %v3136 = vmul.f32 %v3131, %v3134
          %v3137 = vadd.f32 %v3135, 0.0
          %v3138 = vadd.f32 %v3136, 0.0
          %v3139 = vld [vmem:[%s3129 + $0x4] sm:$0xff]
          %v3140 = vld [vmem:[%s3129 + $0xc] sm:$0xff]
          %s3141 = sadd.s32 %s3132, 1
          %s3142 = sld [smem:[#allocation5 + %s3141]]
          %v3143 = vstv %s3142
          %v3144 = vmul.f32 %v3139, %v3143
          %v3145 = vmul.f32 %v3140, %v3143
          %v3146 = vadd.f32 %v3137, %v3144
          %v3147 = vadd.f32 %v3138, %v3145
          %v3148 = vld [vmem:[%s3129 + $0x5] sm:$0xff]
          %v3149 = vld [vmem:[%s3129 + $0xd] sm:$0xff]
          %s3150 = sadd.s32 %s3132, 2
          %s3151 = sld [smem:[#allocation5 + %s3150]]
          %v3152 = vstv %s3151
          %v3153 = vmul.f32 %v3148, %v3152
          %v3154 = vmul.f32 %v3149, %v3152
          %v3155 = vadd.f32 %v3146, %v3153
          %v3156 = vadd.f32 %v3147, %v3154
          %v3157 = vld [vmem:[%s3129 + $0x6] sm:$0xff]
          %v3158 = vld [vmem:[%s3129 + $0xe] sm:$0xff]
          %s3159 = sadd.s32 %s3132, 3
          %s3160 = sld [smem:[#allocation5 + %s3159]]
          %v3161 = vstv %s3160
          %v3162 = vmul.f32 %v3157, %v3161
          %v3163 = vmul.f32 %v3158, %v3161
          %v3164 = vadd.f32 %v3155, %v3162
          %v3165 = vadd.f32 %v3156, %v3163
          %v3166 = vld [vmem:[%s3129 + $0x7] sm:$0xff]
          %v3167 = vld [vmem:[%s3129 + $0xf] sm:$0xff]
          %s3168 = sadd.s32 %s3132, 4
          %s3169 = sld [smem:[#allocation5 + %s3168]]
          %v3170 = vstv %s3169
          %v3171 = vmul.f32 %v3166, %v3170
          %v3172 = vmul.f32 %v3167, %v3170
          %v3173 = vadd.f32 %v3164, %v3171
          %v3174 = vadd.f32 %v3165, %v3172
          %v3175 = vld [vmem:[%s3129 + $0x8] sm:$0xff]
          %v3176 = vld [vmem:[%s3129 + $0x10] sm:$0xff]
          %s3177 = sadd.s32 %s3132, 5
          %s3178 = sld [smem:[#allocation5 + %s3177]]
          %v3179 = vstv %s3178
          %v3180 = vmul.f32 %v3175, %v3179
          %v3181 = vmul.f32 %v3176, %v3179
          %v3182 = vadd.f32 %v3173, %v3180
          %v3183 = vadd.f32 %v3174, %v3181
          %v3184 = vld [vmem:[%s3129 + $0x9] sm:$0xff]
          %v3185 = vld [vmem:[%s3129 + $0x11] sm:$0xff]
          %s3186 = sadd.s32 %s3132, 6
          %s3187 = sld [smem:[#allocation5 + %s3186]]
          %v3188 = vstv %s3187
          %v3189 = vmul.f32 %v3184, %v3188
          %v3190 = vmul.f32 %v3185, %v3188
          %v3191 = vadd.f32 %v3182, %v3189
          %v3192 = vadd.f32 %v3183, %v3190
          %v3193 = vld [vmem:[%s3129 + $0xa] sm:$0xff]
          %v3194 = vld [vmem:[%s3129 + $0x12] sm:$0xff]
          %s3195 = sadd.s32 %s3132, 7
          %s3196 = sld [smem:[#allocation5 + %s3195]]
          %v3197 = vstv %s3196
          %v3198 = vmul.f32 %v3193, %v3197
          %v3199 = vmul.f32 %v3194, %v3197
          %v3200 = vadd.f32 %v3191, %v3198
          %v3201 = vadd.f32 %v3192, %v3199
          %v3202 = vld [vmem:[%s3129 + $0xb] sm:$0xff]
          %v3203 = vld [vmem:[%s3129 + $0x13] sm:$0xff]
          %s3204 = sadd.s32 %s3132, 8
          %s3205 = sld [smem:[#allocation5 + %s3204]]
          %v3206 = vstv %s3205
          %v3207 = vmul.f32 %v3202, %v3206
          %v3208 = vmul.f32 %v3203, %v3206
          %v3209 = vadd.f32 %v3200, %v3207
          %v3210 = vadd.f32 %v3201, %v3208
          %v3211 = vld [vmem:[%s3129 + $0xc] sm:$0xff]
          %v3212 = vld [vmem:[%s3129 + $0x14] sm:$0xff]
          %s3213 = sadd.s32 %s3132, 9
          %s3214 = sld [smem:[#allocation5 + %s3213]]
          %v3215 = vstv %s3214
          %v3216 = vmul.f32 %v3211, %v3215
          %v3217 = vmul.f32 %v3212, %v3215
          %v3218 = vadd.f32 %v3209, %v3216
          %v3219 = vadd.f32 %v3210, %v3217
          %v3220 = vld [vmem:[%s3129 + $0xd] sm:$0xff]
          %v3221 = vld [vmem:[%s3129 + $0x15] sm:$0xff]
          %s3222 = sadd.s32 %s3132, 10
          %s3223 = sld [smem:[#allocation5 + %s3222]]
          %v3224 = vstv %s3223
          %v3225 = vmul.f32 %v3220, %v3224
          %v3226 = vmul.f32 %v3221, %v3224
          %v3227 = vadd.f32 %v3218, %v3225
          %v3228 = vadd.f32 %v3219, %v3226
          %s3229 = sld [smem:[#allocation7 + %s3128]]
          %v3230 = vstv %s3229
          %v3231 = vadd.f32 %v3227, %v3230
          %v3232 = vadd.f32 %v3228, %v3230
          %3235 = vrot.lane.b32.xlu0 %v3231, 123
          %v3236 = vpop.permute.xlu0 %3235
          %3237 = vrot.lane.b32.xlu0 %v3232, 123
          %v3238 = vpop.permute.xlu0 %3237
          %s3241 = scalar_lea.vmem %s281, 32
          %3242 = vst.msk [vmem:[%s3241] sm:$0xff] %vm3009, %v3236
          %3243 = vst.msk [vmem:[%s3241 + $0x8] sm:$0xff] %vm3009, %v3238
          %s3244 = sadd.s32 %s284, 3
          %s3245 = scalar_lea.vmem [#allocation2], 96
          %v3246 = vld [vmem:[%s3245 + $0x3] sm:$0xff]
          %v3247 = vld [vmem:[%s3245 + $0xb] sm:$0xff]
          %s3248 = smul.u32 %s3244, 128
          %s3249 = sld [smem:[#allocation5 + %s3248]]
          %v3250 = vstv %s3249
          %v3251 = vmul.f32 %v3246, %v3250
          %v3252 = vmul.f32 %v3247, %v3250
          %v3253 = vadd.f32 %v3251, 0.0
          %v3254 = vadd.f32 %v3252, 0.0
          %v3255 = vld [vmem:[%s3245 + $0x4] sm:$0xff]
          %v3256 = vld [vmem:[%s3245 + $0xc] sm:$0xff]
          %s3257 = sadd.s32 %s3248, 1
          %s3258 = sld [smem:[#allocation5 + %s3257]]
          %v3259 = vstv %s3258
          %v3260 = vmul.f32 %v3255, %v3259
          %v3261 = vmul.f32 %v3256, %v3259
          %v3262 = vadd.f32 %v3253, %v3260
          %v3263 = vadd.f32 %v3254, %v3261
          %v3264 = vld [vmem:[%s3245 + $0x5] sm:$0xff]
          %v3265 = vld [vmem:[%s3245 + $0xd] sm:$0xff]
          %s3266 = sadd.s32 %s3248, 2
          %s3267 = sld [smem:[#allocation5 + %s3266]]
          %v3268 = vstv %s3267
          %v3269 = vmul.f32 %v3264, %v3268
          %v3270 = vmul.f32 %v3265, %v3268
          %v3271 = vadd.f32 %v3262, %v3269
          %v3272 = vadd.f32 %v3263, %v3270
          %v3273 = vld [vmem:[%s3245 + $0x6] sm:$0xff]
          %v3274 = vld [vmem:[%s3245 + $0xe] sm:$0xff]
          %s3275 = sadd.s32 %s3248, 3
          %s3276 = sld [smem:[#allocation5 + %s3275]]
          %v3277 = vstv %s3276
          %v3278 = vmul.f32 %v3273, %v3277
          %v3279 = vmul.f32 %v3274, %v3277
          %v3280 = vadd.f32 %v3271, %v3278
          %v3281 = vadd.f32 %v3272, %v3279
          %v3282 = vld [vmem:[%s3245 + $0x7] sm:$0xff]
          %v3283 = vld [vmem:[%s3245 + $0xf] sm:$0xff]
          %s3284 = sadd.s32 %s3248, 4
          %s3285 = sld [smem:[#allocation5 + %s3284]]
          %v3286 = vstv %s3285
          %v3287 = vmul.f32 %v3282, %v3286
          %v3288 = vmul.f32 %v3283, %v3286
          %v3289 = vadd.f32 %v3280, %v3287
          %v3290 = vadd.f32 %v3281, %v3288
          %v3291 = vld [vmem:[%s3245 + $0x8] sm:$0xff]
          %v3292 = vld [vmem:[%s3245 + $0x10] sm:$0xff]
          %s3293 = sadd.s32 %s3248, 5
          %s3294 = sld [smem:[#allocation5 + %s3293]]
          %v3295 = vstv %s3294
          %v3296 = vmul.f32 %v3291, %v3295
          %v3297 = vmul.f32 %v3292, %v3295
          %v3298 = vadd.f32 %v3289, %v3296
          %v3299 = vadd.f32 %v3290, %v3297
          %v3300 = vld [vmem:[%s3245 + $0x9] sm:$0xff]
          %v3301 = vld [vmem:[%s3245 + $0x11] sm:$0xff]
          %s3302 = sadd.s32 %s3248, 6
          %s3303 = sld [smem:[#allocation5 + %s3302]]
          %v3304 = vstv %s3303
          %v3305 = vmul.f32 %v3300, %v3304
          %v3306 = vmul.f32 %v3301, %v3304
          %v3307 = vadd.f32 %v3298, %v3305
          %v3308 = vadd.f32 %v3299, %v3306
          %v3309 = vld [vmem:[%s3245 + $0xa] sm:$0xff]
          %v3310 = vld [vmem:[%s3245 + $0x12] sm:$0xff]
          %s3311 = sadd.s32 %s3248, 7
          %s3312 = sld [smem:[#allocation5 + %s3311]]
          %v3313 = vstv %s3312
          %v3314 = vmul.f32 %v3309, %v3313
          %v3315 = vmul.f32 %v3310, %v3313
          %v3316 = vadd.f32 %v3307, %v3314
          %v3317 = vadd.f32 %v3308, %v3315
          %v3318 = vld [vmem:[%s3245 + $0xb] sm:$0xff]
          %v3319 = vld [vmem:[%s3245 + $0x13] sm:$0xff]
          %s3320 = sadd.s32 %s3248, 8
          %s3321 = sld [smem:[#allocation5 + %s3320]]
          %v3322 = vstv %s3321
          %v3323 = vmul.f32 %v3318, %v3322
          %v3324 = vmul.f32 %v3319, %v3322
          %v3325 = vadd.f32 %v3316, %v3323
          %v3326 = vadd.f32 %v3317, %v3324
          %v3327 = vld [vmem:[%s3245 + $0xc] sm:$0xff]
          %v3328 = vld [vmem:[%s3245 + $0x14] sm:$0xff]
          %s3329 = sadd.s32 %s3248, 9
          %s3330 = sld [smem:[#allocation5 + %s3329]]
          %v3331 = vstv %s3330
          %v3332 = vmul.f32 %v3327, %v3331
          %v3333 = vmul.f32 %v3328, %v3331
          %v3334 = vadd.f32 %v3325, %v3332
          %v3335 = vadd.f32 %v3326, %v3333
          %v3336 = vld [vmem:[%s3245 + $0xd] sm:$0xff]
          %v3337 = vld [vmem:[%s3245 + $0x15] sm:$0xff]
          %s3338 = sadd.s32 %s3248, 10
          %s3339 = sld [smem:[#allocation5 + %s3338]]
          %v3340 = vstv %s3339
          %v3341 = vmul.f32 %v3336, %v3340
          %v3342 = vmul.f32 %v3337, %v3340
          %v3343 = vadd.f32 %v3334, %v3341
          %v3344 = vadd.f32 %v3335, %v3342
          %s3345 = sld [smem:[#allocation7 + %s3244]]
          %v3346 = vstv %s3345
          %v3347 = vadd.f32 %v3343, %v3346
          %v3348 = vadd.f32 %v3344, %v3346
          %3351 = vrot.lane.b32.xlu0 %v3347, 123
          %v3352 = vpop.permute.xlu0 %3351
          %3353 = vrot.lane.b32.xlu0 %v3348, 123
          %v3354 = vpop.permute.xlu0 %3353
          %s3357 = scalar_lea.vmem %s281, 48
          %3358 = vst.msk [vmem:[%s3357] sm:$0xff] %vm3009, %v3352
          %3359 = vst.msk [vmem:[%s3357 + $0x8] sm:$0xff] %vm3009, %v3354
          %s3360 = sadd.s32 %s284, 4
          %s3361 = scalar_lea.vmem [#allocation2], 128
          %v3362 = vld [vmem:[%s3361 + $0x3] sm:$0xff]
          %v3363 = vld [vmem:[%s3361 + $0xb] sm:$0xff]
          %s3364 = smul.u32 %s3360, 128
          %s3365 = sld [smem:[#allocation5 + %s3364]]
          %v3366 = vstv %s3365
          %v3367 = vmul.f32 %v3362, %v3366
          %v3368 = vmul.f32 %v3363, %v3366
          %v3369 = vadd.f32 %v3367, 0.0
          %v3370 = vadd.f32 %v3368, 0.0
          %v3371 = vld [vmem:[%s3361 + $0x4] sm:$0xff]
          %v3372 = vld [vmem:[%s3361 + $0xc] sm:$0xff]
          %s3373 = sadd.s32 %s3364, 1
          %s3374 = sld [smem:[#allocation5 + %s3373]]
          %v3375 = vstv %s3374
          %v3376 = vmul.f32 %v3371, %v3375
          %v3377 = vmul.f32 %v3372, %v3375
          %v3378 = vadd.f32 %v3369, %v3376
          %v3379 = vadd.f32 %v3370, %v3377
          %v3380 = vld [vmem:[%s3361 + $0x5] sm:$0xff]
          %v3381 = vld [vmem:[%s3361 + $0xd] sm:$0xff]
          %s3382 = sadd.s32 %s3364, 2
          %s3383 = sld [smem:[#allocation5 + %s3382]]
          %v3384 = vstv %s3383
          %v3385 = vmul.f32 %v3380, %v3384
          %v3386 = vmul.f32 %v3381, %v3384
          %v3387 = vadd.f32 %v3378, %v3385
          %v3388 = vadd.f32 %v3379, %v3386
          %v3389 = vld [vmem:[%s3361 + $0x6] sm:$0xff]
          %v3390 = vld [vmem:[%s3361 + $0xe] sm:$0xff]
          %s3391 = sadd.s32 %s3364, 3
          %s3392 = sld [smem:[#allocation5 + %s3391]]
          %v3393 = vstv %s3392
          %v3394 = vmul.f32 %v3389, %v3393
          %v3395 = vmul.f32 %v3390, %v3393
          %v3396 = vadd.f32 %v3387, %v3394
          %v3397 = vadd.f32 %v3388, %v3395
          %v3398 = vld [vmem:[%s3361 + $0x7] sm:$0xff]
          %v3399 = vld [vmem:[%s3361 + $0xf] sm:$0xff]
          %s3400 = sadd.s32 %s3364, 4
          %s3401 = sld [smem:[#allocation5 + %s3400]]
          %v3402 = vstv %s3401
          %v3403 = vmul.f32 %v3398, %v3402
          %v3404 = vmul.f32 %v3399, %v3402
          %v3405 = vadd.f32 %v3396, %v3403
          %v3406 = vadd.f32 %v3397, %v3404
          %v3407 = vld [vmem:[%s3361 + $0x8] sm:$0xff]
          %v3408 = vld [vmem:[%s3361 + $0x10] sm:$0xff]
          %s3409 = sadd.s32 %s3364, 5
          %s3410 = sld [smem:[#allocation5 + %s3409]]
          %v3411 = vstv %s3410
          %v3412 = vmul.f32 %v3407, %v3411
          %v3413 = vmul.f32 %v3408, %v3411
          %v3414 = vadd.f32 %v3405, %v3412
          %v3415 = vadd.f32 %v3406, %v3413
          %v3416 = vld [vmem:[%s3361 + $0x9] sm:$0xff]
          %v3417 = vld [vmem:[%s3361 + $0x11] sm:$0xff]
          %s3418 = sadd.s32 %s3364, 6
          %s3419 = sld [smem:[#allocation5 + %s3418]]
          %v3420 = vstv %s3419
          %v3421 = vmul.f32 %v3416, %v3420
          %v3422 = vmul.f32 %v3417, %v3420
          %v3423 = vadd.f32 %v3414, %v3421
          %v3424 = vadd.f32 %v3415, %v3422
          %v3425 = vld [vmem:[%s3361 + $0xa] sm:$0xff]
          %v3426 = vld [vmem:[%s3361 + $0x12] sm:$0xff]
          %s3427 = sadd.s32 %s3364, 7
          %s3428 = sld [smem:[#allocation5 + %s3427]]
          %v3429 = vstv %s3428
          %v3430 = vmul.f32 %v3425, %v3429
          %v3431 = vmul.f32 %v3426, %v3429
          %v3432 = vadd.f32 %v3423, %v3430
          %v3433 = vadd.f32 %v3424, %v3431
          %v3434 = vld [vmem:[%s3361 + $0xb] sm:$0xff]
          %v3435 = vld [vmem:[%s3361 + $0x13] sm:$0xff]
          %s3436 = sadd.s32 %s3364, 8
          %s3437 = sld [smem:[#allocation5 + %s3436]]
          %v3438 = vstv %s3437
          %v3439 = vmul.f32 %v3434, %v3438
          %v3440 = vmul.f32 %v3435, %v3438
          %v3441 = vadd.f32 %v3432, %v3439
          %v3442 = vadd.f32 %v3433, %v3440
          %v3443 = vld [vmem:[%s3361 + $0xc] sm:$0xff]
          %v3444 = vld [vmem:[%s3361 + $0x14] sm:$0xff]
          %s3445 = sadd.s32 %s3364, 9
          %s3446 = sld [smem:[#allocation5 + %s3445]]
          %v3447 = vstv %s3446
          %v3448 = vmul.f32 %v3443, %v3447
          %v3449 = vmul.f32 %v3444, %v3447
          %v3450 = vadd.f32 %v3441, %v3448
          %v3451 = vadd.f32 %v3442, %v3449
          %v3452 = vld [vmem:[%s3361 + $0xd] sm:$0xff]
          %v3453 = vld [vmem:[%s3361 + $0x15] sm:$0xff]
          %s3454 = sadd.s32 %s3364, 10
          %s3455 = sld [smem:[#allocation5 + %s3454]]
          %v3456 = vstv %s3455
          %v3457 = vmul.f32 %v3452, %v3456
          %v3458 = vmul.f32 %v3453, %v3456
          %v3459 = vadd.f32 %v3450, %v3457
          %v3460 = vadd.f32 %v3451, %v3458
          %s3461 = sld [smem:[#allocation7 + %s3360]]
          %v3462 = vstv %s3461
          %v3463 = vadd.f32 %v3459, %v3462
          %v3464 = vadd.f32 %v3460, %v3462
          %3467 = vrot.lane.b32.xlu0 %v3463, 123
          %v3468 = vpop.permute.xlu0 %3467
          %3469 = vrot.lane.b32.xlu0 %v3464, 123
          %v3470 = vpop.permute.xlu0 %3469
          %s3473 = scalar_lea.vmem %s281, 64
          %3474 = vst.msk [vmem:[%s3473] sm:$0xff] %vm3009, %v3468
          %3475 = vst.msk [vmem:[%s3473 + $0x8] sm:$0xff] %vm3009, %v3470
          %s3476 = sadd.s32 %s284, 5
          %s3477 = scalar_lea.vmem [#allocation2], 160
          %v3478 = vld [vmem:[%s3477 + $0x3] sm:$0xff]
          %v3479 = vld [vmem:[%s3477 + $0xb] sm:$0xff]
          %s3480 = smul.u32 %s3476, 128
          %s3481 = sld [smem:[#allocation5 + %s3480]]
          %v3482 = vstv %s3481
          %v3483 = vmul.f32 %v3478, %v3482
          %v3484 = vmul.f32 %v3479, %v3482
          %v3485 = vadd.f32 %v3483, 0.0
          %v3486 = vadd.f32 %v3484, 0.0
          %v3487 = vld [vmem:[%s3477 + $0x4] sm:$0xff]
          %v3488 = vld [vmem:[%s3477 + $0xc] sm:$0xff]
          %s3489 = sadd.s32 %s3480, 1
          %s3490 = sld [smem:[#allocation5 + %s3489]]
          %v3491 = vstv %s3490
          %v3492 = vmul.f32 %v3487, %v3491
          %v3493 = vmul.f32 %v3488, %v3491
          %v3494 = vadd.f32 %v3485, %v3492
          %v3495 = vadd.f32 %v3486, %v3493
          %v3496 = vld [vmem:[%s3477 + $0x5] sm:$0xff]
          %v3497 = vld [vmem:[%s3477 + $0xd] sm:$0xff]
          %s3498 = sadd.s32 %s3480, 2
          %s3499 = sld [smem:[#allocation5 + %s3498]]
          %v3500 = vstv %s3499
          %v3501 = vmul.f32 %v3496, %v3500
          %v3502 = vmul.f32 %v3497, %v3500
          %v3503 = vadd.f32 %v3494, %v3501
          %v3504 = vadd.f32 %v3495, %v3502
          %v3505 = vld [vmem:[%s3477 + $0x6] sm:$0xff]
          %v3506 = vld [vmem:[%s3477 + $0xe] sm:$0xff]
          %s3507 = sadd.s32 %s3480, 3
          %s3508 = sld [smem:[#allocation5 + %s3507]]
          %v3509 = vstv %s3508
          %v3510 = vmul.f32 %v3505, %v3509
          %v3511 = vmul.f32 %v3506, %v3509
          %v3512 = vadd.f32 %v3503, %v3510
          %v3513 = vadd.f32 %v3504, %v3511
          %v3514 = vld [vmem:[%s3477 + $0x7] sm:$0xff]
          %v3515 = vld [vmem:[%s3477 + $0xf] sm:$0xff]
          %s3516 = sadd.s32 %s3480, 4
          %s3517 = sld [smem:[#allocation5 + %s3516]]
          %v3518 = vstv %s3517
          %v3519 = vmul.f32 %v3514, %v3518
          %v3520 = vmul.f32 %v3515, %v3518
          %v3521 = vadd.f32 %v3512, %v3519
          %v3522 = vadd.f32 %v3513, %v3520
          %v3523 = vld [vmem:[%s3477 + $0x8] sm:$0xff]
          %v3524 = vld [vmem:[%s3477 + $0x10] sm:$0xff]
          %s3525 = sadd.s32 %s3480, 5
          %s3526 = sld [smem:[#allocation5 + %s3525]]
          %v3527 = vstv %s3526
          %v3528 = vmul.f32 %v3523, %v3527
          %v3529 = vmul.f32 %v3524, %v3527
          %v3530 = vadd.f32 %v3521, %v3528
          %v3531 = vadd.f32 %v3522, %v3529
          %v3532 = vld [vmem:[%s3477 + $0x9] sm:$0xff]
          %v3533 = vld [vmem:[%s3477 + $0x11] sm:$0xff]
          %s3534 = sadd.s32 %s3480, 6
          %s3535 = sld [smem:[#allocation5 + %s3534]]
          %v3536 = vstv %s3535
          %v3537 = vmul.f32 %v3532, %v3536
          %v3538 = vmul.f32 %v3533, %v3536
          %v3539 = vadd.f32 %v3530, %v3537
          %v3540 = vadd.f32 %v3531, %v3538
          %v3541 = vld [vmem:[%s3477 + $0xa] sm:$0xff]
          %v3542 = vld [vmem:[%s3477 + $0x12] sm:$0xff]
          %s3543 = sadd.s32 %s3480, 7
          %s3544 = sld [smem:[#allocation5 + %s3543]]
          %v3545 = vstv %s3544
          %v3546 = vmul.f32 %v3541, %v3545
          %v3547 = vmul.f32 %v3542, %v3545
          %v3548 = vadd.f32 %v3539, %v3546
          %v3549 = vadd.f32 %v3540, %v3547
          %v3550 = vld [vmem:[%s3477 + $0xb] sm:$0xff]
          %v3551 = vld [vmem:[%s3477 + $0x13] sm:$0xff]
          %s3552 = sadd.s32 %s3480, 8
          %s3553 = sld [smem:[#allocation5 + %s3552]]
          %v3554 = vstv %s3553
          %v3555 = vmul.f32 %v3550, %v3554
          %v3556 = vmul.f32 %v3551, %v3554
          %v3557 = vadd.f32 %v3548, %v3555
          %v3558 = vadd.f32 %v3549, %v3556
          %v3559 = vld [vmem:[%s3477 + $0xc] sm:$0xff]
          %v3560 = vld [vmem:[%s3477 + $0x14] sm:$0xff]
          %s3561 = sadd.s32 %s3480, 9
          %s3562 = sld [smem:[#allocation5 + %s3561]]
          %v3563 = vstv %s3562
          %v3564 = vmul.f32 %v3559, %v3563
          %v3565 = vmul.f32 %v3560, %v3563
          %v3566 = vadd.f32 %v3557, %v3564
          %v3567 = vadd.f32 %v3558, %v3565
          %v3568 = vld [vmem:[%s3477 + $0xd] sm:$0xff]
          %v3569 = vld [vmem:[%s3477 + $0x15] sm:$0xff]
          %s3570 = sadd.s32 %s3480, 10
          %s3571 = sld [smem:[#allocation5 + %s3570]]
          %v3572 = vstv %s3571
          %v3573 = vmul.f32 %v3568, %v3572
          %v3574 = vmul.f32 %v3569, %v3572
          %v3575 = vadd.f32 %v3566, %v3573
          %v3576 = vadd.f32 %v3567, %v3574
          %s3577 = sld [smem:[#allocation7 + %s3476]]
          %v3578 = vstv %s3577
          %v3579 = vadd.f32 %v3575, %v3578
          %v3580 = vadd.f32 %v3576, %v3578
          %3583 = vrot.lane.b32.xlu0 %v3579, 123
          %v3584 = vpop.permute.xlu0 %3583
          %3585 = vrot.lane.b32.xlu0 %v3580, 123
          %v3586 = vpop.permute.xlu0 %3585
          %s3589 = scalar_lea.vmem %s281, 80
          %3590 = vst.msk [vmem:[%s3589] sm:$0xff] %vm3009, %v3584
          %3591 = vst.msk [vmem:[%s3589 + $0x8] sm:$0xff] %vm3009, %v3586
          %s3592 = sadd.s32 %s284, 6
          %s3593 = scalar_lea.vmem [#allocation2], 192
          %v3594 = vld [vmem:[%s3593 + $0x3] sm:$0xff]
          %v3595 = vld [vmem:[%s3593 + $0xb] sm:$0xff]
          %s3596 = smul.u32 %s3592, 128
          %s3597 = sld [smem:[#allocation5 + %s3596]]
          %v3598 = vstv %s3597
          %v3599 = vmul.f32 %v3594, %v3598
          %v3600 = vmul.f32 %v3595, %v3598
          %v3601 = vadd.f32 %v3599, 0.0
          %v3602 = vadd.f32 %v3600, 0.0
          %v3603 = vld [vmem:[%s3593 + $0x4] sm:$0xff]
          %v3604 = vld [vmem:[%s3593 + $0xc] sm:$0xff]
          %s3605 = sadd.s32 %s3596, 1
          %s3606 = sld [smem:[#allocation5 + %s3605]]
          %v3607 = vstv %s3606
          %v3608 = vmul.f32 %v3603, %v3607
          %v3609 = vmul.f32 %v3604, %v3607
          %v3610 = vadd.f32 %v3601, %v3608
          %v3611 = vadd.f32 %v3602, %v3609
          %v3612 = vld [vmem:[%s3593 + $0x5] sm:$0xff]
          %v3613 = vld [vmem:[%s3593 + $0xd] sm:$0xff]
          %s3614 = sadd.s32 %s3596, 2
          %s3615 = sld [smem:[#allocation5 + %s3614]]
          %v3616 = vstv %s3615
          %v3617 = vmul.f32 %v3612, %v3616
          %v3618 = vmul.f32 %v3613, %v3616
          %v3619 = vadd.f32 %v3610, %v3617
          %v3620 = vadd.f32 %v3611, %v3618
          %v3621 = vld [vmem:[%s3593 + $0x6] sm:$0xff]
          %v3622 = vld [vmem:[%s3593 + $0xe] sm:$0xff]
          %s3623 = sadd.s32 %s3596, 3
          %s3624 = sld [smem:[#allocation5 + %s3623]]
          %v3625 = vstv %s3624
          %v3626 = vmul.f32 %v3621, %v3625
          %v3627 = vmul.f32 %v3622, %v3625
          %v3628 = vadd.f32 %v3619, %v3626
          %v3629 = vadd.f32 %v3620, %v3627
          %v3630 = vld [vmem:[%s3593 + $0x7] sm:$0xff]
          %v3631 = vld [vmem:[%s3593 + $0xf] sm:$0xff]
          %s3632 = sadd.s32 %s3596, 4
          %s3633 = sld [smem:[#allocation5 + %s3632]]
          %v3634 = vstv %s3633
          %v3635 = vmul.f32 %v3630, %v3634
          %v3636 = vmul.f32 %v3631, %v3634
          %v3637 = vadd.f32 %v3628, %v3635
          %v3638 = vadd.f32 %v3629, %v3636
          %v3639 = vld [vmem:[%s3593 + $0x8] sm:$0xff]
          %v3640 = vld [vmem:[%s3593 + $0x10] sm:$0xff]
          %s3641 = sadd.s32 %s3596, 5
          %s3642 = sld [smem:[#allocation5 + %s3641]]
          %v3643 = vstv %s3642
          %v3644 = vmul.f32 %v3639, %v3643
          %v3645 = vmul.f32 %v3640, %v3643
          %v3646 = vadd.f32 %v3637, %v3644
          %v3647 = vadd.f32 %v3638, %v3645
          %v3648 = vld [vmem:[%s3593 + $0x9] sm:$0xff]
          %v3649 = vld [vmem:[%s3593 + $0x11] sm:$0xff]
          %s3650 = sadd.s32 %s3596, 6
          %s3651 = sld [smem:[#allocation5 + %s3650]]
          %v3652 = vstv %s3651
          %v3653 = vmul.f32 %v3648, %v3652
          %v3654 = vmul.f32 %v3649, %v3652
          %v3655 = vadd.f32 %v3646, %v3653
          %v3656 = vadd.f32 %v3647, %v3654
          %v3657 = vld [vmem:[%s3593 + $0xa] sm:$0xff]
          %v3658 = vld [vmem:[%s3593 + $0x12] sm:$0xff]
          %s3659 = sadd.s32 %s3596, 7
          %s3660 = sld [smem:[#allocation5 + %s3659]]
          %v3661 = vstv %s3660
          %v3662 = vmul.f32 %v3657, %v3661
          %v3663 = vmul.f32 %v3658, %v3661
          %v3664 = vadd.f32 %v3655, %v3662
          %v3665 = vadd.f32 %v3656, %v3663
          %v3666 = vld [vmem:[%s3593 + $0xb] sm:$0xff]
          %v3667 = vld [vmem:[%s3593 + $0x13] sm:$0xff]
          %s3668 = sadd.s32 %s3596, 8
          %s3669 = sld [smem:[#allocation5 + %s3668]]
          %v3670 = vstv %s3669
          %v3671 = vmul.f32 %v3666, %v3670
          %v3672 = vmul.f32 %v3667, %v3670
          %v3673 = vadd.f32 %v3664, %v3671
          %v3674 = vadd.f32 %v3665, %v3672
          %v3675 = vld [vmem:[%s3593 + $0xc] sm:$0xff]
          %v3676 = vld [vmem:[%s3593 + $0x14] sm:$0xff]
          %s3677 = sadd.s32 %s3596, 9
          %s3678 = sld [smem:[#allocation5 + %s3677]]
          %v3679 = vstv %s3678
          %v3680 = vmul.f32 %v3675, %v3679
          %v3681 = vmul.f32 %v3676, %v3679
          %v3682 = vadd.f32 %v3673, %v3680
          %v3683 = vadd.f32 %v3674, %v3681
          %v3684 = vld [vmem:[%s3593 + $0xd] sm:$0xff]
          %v3685 = vld [vmem:[%s3593 + $0x15] sm:$0xff]
          %s3686 = sadd.s32 %s3596, 10
          %s3687 = sld [smem:[#allocation5 + %s3686]]
          %v3688 = vstv %s3687
          %v3689 = vmul.f32 %v3684, %v3688
          %v3690 = vmul.f32 %v3685, %v3688
          %v3691 = vadd.f32 %v3682, %v3689
          %v3692 = vadd.f32 %v3683, %v3690
          %s3693 = sld [smem:[#allocation7 + %s3592]]
          %v3694 = vstv %s3693
          %v3695 = vadd.f32 %v3691, %v3694
          %v3696 = vadd.f32 %v3692, %v3694
          %3699 = vrot.lane.b32.xlu0 %v3695, 123
          %v3700 = vpop.permute.xlu0 %3699
          %3701 = vrot.lane.b32.xlu0 %v3696, 123
          %v3702 = vpop.permute.xlu0 %3701
          %s3705 = scalar_lea.vmem %s281, 96
          %3706 = vst.msk [vmem:[%s3705] sm:$0xff] %vm3009, %v3700
          %3707 = vst.msk [vmem:[%s3705 + $0x8] sm:$0xff] %vm3009, %v3702
          %s3708 = sadd.s32 %s284, 7
          %s3709 = scalar_lea.vmem [#allocation2], 224
          %v3710 = vld [vmem:[%s3709 + $0x3] sm:$0xff]
          %v3711 = vld [vmem:[%s3709 + $0xb] sm:$0xff]
          %s3712 = smul.u32 %s3708, 128
          %s3713 = sld [smem:[#allocation5 + %s3712]]
          %v3714 = vstv %s3713
          %v3715 = vmul.f32 %v3710, %v3714
          %v3716 = vmul.f32 %v3711, %v3714
          %v3717 = vadd.f32 %v3715, 0.0
          %v3718 = vadd.f32 %v3716, 0.0
          %v3719 = vld [vmem:[%s3709 + $0x4] sm:$0xff]
          %v3720 = vld [vmem:[%s3709 + $0xc] sm:$0xff]
          %s3721 = sadd.s32 %s3712, 1
          %s3722 = sld [smem:[#allocation5 + %s3721]]
          %v3723 = vstv %s3722
          %v3724 = vmul.f32 %v3719, %v3723
          %v3725 = vmul.f32 %v3720, %v3723
          %v3726 = vadd.f32 %v3717, %v3724
          %v3727 = vadd.f32 %v3718, %v3725
          %v3728 = vld [vmem:[%s3709 + $0x5] sm:$0xff]
          %v3729 = vld [vmem:[%s3709 + $0xd] sm:$0xff]
          %s3730 = sadd.s32 %s3712, 2
          %s3731 = sld [smem:[#allocation5 + %s3730]]
          %v3732 = vstv %s3731
          %v3733 = vmul.f32 %v3728, %v3732
          %v3734 = vmul.f32 %v3729, %v3732
          %v3735 = vadd.f32 %v3726, %v3733
          %v3736 = vadd.f32 %v3727, %v3734
          %v3737 = vld [vmem:[%s3709 + $0x6] sm:$0xff]
          %v3738 = vld [vmem:[%s3709 + $0xe] sm:$0xff]
          %s3739 = sadd.s32 %s3712, 3
          %s3740 = sld [smem:[#allocation5 + %s3739]]
          %v3741 = vstv %s3740
          %v3742 = vmul.f32 %v3737, %v3741
          %v3743 = vmul.f32 %v3738, %v3741
          %v3744 = vadd.f32 %v3735, %v3742
          %v3745 = vadd.f32 %v3736, %v3743
          %v3746 = vld [vmem:[%s3709 + $0x7] sm:$0xff]
          %v3747 = vld [vmem:[%s3709 + $0xf] sm:$0xff]
          %s3748 = sadd.s32 %s3712, 4
          %s3749 = sld [smem:[#allocation5 + %s3748]]
          %v3750 = vstv %s3749
          %v3751 = vmul.f32 %v3746, %v3750
          %v3752 = vmul.f32 %v3747, %v3750
          %v3753 = vadd.f32 %v3744, %v3751
          %v3754 = vadd.f32 %v3745, %v3752
          %v3755 = vld [vmem:[%s3709 + $0x8] sm:$0xff]
          %v3756 = vld [vmem:[%s3709 + $0x10] sm:$0xff]
          %s3757 = sadd.s32 %s3712, 5
          %s3758 = sld [smem:[#allocation5 + %s3757]]
          %v3759 = vstv %s3758
          %v3760 = vmul.f32 %v3755, %v3759
          %v3761 = vmul.f32 %v3756, %v3759
          %v3762 = vadd.f32 %v3753, %v3760
          %v3763 = vadd.f32 %v3754, %v3761
          %v3764 = vld [vmem:[%s3709 + $0x9] sm:$0xff]
          %v3765 = vld [vmem:[%s3709 + $0x11] sm:$0xff]
          %s3766 = sadd.s32 %s3712, 6
          %s3767 = sld [smem:[#allocation5 + %s3766]]
          %v3768 = vstv %s3767
          %v3769 = vmul.f32 %v3764, %v3768
          %v3770 = vmul.f32 %v3765, %v3768
          %v3771 = vadd.f32 %v3762, %v3769
          %v3772 = vadd.f32 %v3763, %v3770
          %v3773 = vld [vmem:[%s3709 + $0xa] sm:$0xff]
          %v3774 = vld [vmem:[%s3709 + $0x12] sm:$0xff]
          %s3775 = sadd.s32 %s3712, 7
          %s3776 = sld [smem:[#allocation5 + %s3775]]
          %v3777 = vstv %s3776
          %v3778 = vmul.f32 %v3773, %v3777
          %v3779 = vmul.f32 %v3774, %v3777
          %v3780 = vadd.f32 %v3771, %v3778
          %v3781 = vadd.f32 %v3772, %v3779
          %v3782 = vld [vmem:[%s3709 + $0xb] sm:$0xff]
          %v3783 = vld [vmem:[%s3709 + $0x13] sm:$0xff]
          %s3784 = sadd.s32 %s3712, 8
          %s3785 = sld [smem:[#allocation5 + %s3784]]
          %v3786 = vstv %s3785
          %v3787 = vmul.f32 %v3782, %v3786
          %v3788 = vmul.f32 %v3783, %v3786
          %v3789 = vadd.f32 %v3780, %v3787
          %v3790 = vadd.f32 %v3781, %v3788
          %v3791 = vld [vmem:[%s3709 + $0xc] sm:$0xff]
          %v3792 = vld [vmem:[%s3709 + $0x14] sm:$0xff]
          %s3793 = sadd.s32 %s3712, 9
          %s3794 = sld [smem:[#allocation5 + %s3793]]
          %v3795 = vstv %s3794
          %v3796 = vmul.f32 %v3791, %v3795
          %v3797 = vmul.f32 %v3792, %v3795
          %v3798 = vadd.f32 %v3789, %v3796
          %v3799 = vadd.f32 %v3790, %v3797
          %v3800 = vld [vmem:[%s3709 + $0xd] sm:$0xff]
          %v3801 = vld [vmem:[%s3709 + $0x15] sm:$0xff]
          %s3802 = sadd.s32 %s3712, 10
          %s3803 = sld [smem:[#allocation5 + %s3802]]
          %v3804 = vstv %s3803
          %v3805 = vmul.f32 %v3800, %v3804
          %v3806 = vmul.f32 %v3801, %v3804
          %v3807 = vadd.f32 %v3798, %v3805
          %v3808 = vadd.f32 %v3799, %v3806
          %s3809 = sld [smem:[#allocation7 + %s3708]]
          %v3810 = vstv %s3809
          %v3811 = vadd.f32 %v3807, %v3810
          %v3812 = vadd.f32 %v3808, %v3810
          %3815 = vrot.lane.b32.xlu0 %v3811, 123
          %v3816 = vpop.permute.xlu0 %3815
          %3817 = vrot.lane.b32.xlu0 %v3812, 123
          %v3818 = vpop.permute.xlu0 %3817
          %s3821 = scalar_lea.vmem %s281, 112
          %3822 = vst.msk [vmem:[%s3821] sm:$0xff] %vm3009, %v3816
          %3823 = vst.msk [vmem:[%s3821 + $0x8] sm:$0xff] %vm3009, %v3818
        $region68: #{inception_dw_conv2d.1} parent=35 // pred_fallthru
          _
        %s3824 = smul.u32 8, %s22
        %p3825 = scmp.lt.s32.totalorder %s21, 1
        %s3826 = scalar_select %p3825, %s21, 1
        %p3827 = scmp.lt.s32.totalorder %s3824, 63
        %s3828 = scalar_select %p3827, %s3824, 63
        %s3829 = smul.addr %s3828, 2
        %s3830 = smul.addr %s3826, 128
        %s3831 = sadd.s32 %s3829, %s3830
        %s3832 = smul.addr %s3831, 8
        %s3833 = scalar_lea.vmem %s4, %s3832
        // Predicated region
        $region69: #{inception_dw_conv2d.1} parent=35 // pred_check
          %p3834 = pneg %p140
        $region70: #{inception_dw_conv2d.1} parent=35 // pred_check_branch
          %3836 = sbr.rel (%p3834) target = $region72
        $region71: #{inception_dw_conv2d.1} parent=35 // pred_region
          %s3837 = smul.u32 8, %s22
        $region72: #{inception_dw_conv2d.1} parent=35 // pred_fallthru
          _
      $region36: #{inception_dw_conv2d.1} parent=5 // pred_fallthru
        _
      %p3838 = scmp.le.s32.totalorder 2, %s12
      // Predicated region
      $region73: #{inception_dw_conv2d.1} parent=5 // pred_check
        %p3839 = pneg %p3838
      $region74: #{inception_dw_conv2d.1} parent=5 // pred_check_branch
        %3841 = sbr.rel (%p3839) target = $region76
      $region75: #{inception_dw_conv2d.1} parent=5 // pred_region
        %s3842 = ssub.s32 %s12, 2
        // Predicated region
        $region77: #{inception_dw_conv2d.1} parent=75 // pred_check
          %p3843 = pneg %p146
        $region78: #{inception_dw_conv2d.1} parent=75 // pred_check_branch
          %3845 = sbr.rel (%p3843) target = $region80
        $region79: #{inception_dw_conv2d.1} parent=75 // pred_region
          %s3846 = smul.u32 8, %s24
          %p3847 = scmp.lt.s32.totalorder %s23, 1
          %s3848 = scalar_select %p3847, %s23, 1
          %p3849 = scmp.lt.s32.totalorder %s3846, 63
          %s3850 = scalar_select %p3849, %s3846, 63
          %s3851 = smul.addr %s3850, 2
          %s3852 = smul.addr %s3848, 128
          %s3853 = sadd.s32 %s3851, %s3852
          %s3854 = smul.addr %s3853, 8
          %s3855 = scalar_lea.vmem %s4, %s3854
        $region80: #{inception_dw_conv2d.1} parent=75 // pred_fallthru
          _
      $region76: #{inception_dw_conv2d.1} parent=5 // pred_fallthru
        _
    $region6: #{inception_dw_conv2d.1} parent=1 // loop_footer
      %s16 = sadd.s32 1, %s12
    $region7: #{inception_dw_conv2d.1} parent=1 // loop_footer_branch
      %11 = sbr.rel target = $region3
    $region8: #{inception_dw_conv2d.1} parent=1 // loop_exit
      _
    %3856 = vsyncpa [#allocation4], 1
    %s3857 = scalar_lea.sflag [#allocation4], 1
    %3858 = vsyncpa %s3857, 1
    %3859 = vsyncpa [#allocation6], 1

</llo_original>
